<compile_context>
chip_gen: v6e
topology: v6e:2x2x1
jax: 0.10.0
libtpu: 0.0.40
codegen_flags: <defaults>
</compile_context>

<pallas_src>
import functools
import math

import jax
import jax.numpy as jnp
from jax.experimental import pallas as pl
from jax.experimental.pallas import tpu as pltpu


# ----------------------------- in-kernel helpers ----------------------------

def _layer_norm(y, g, b):
    mean = jnp.mean(y, axis=-1, keepdims=True)
    var = jnp.mean((y - mean) ** 2, axis=-1, keepdims=True)
    return (y - mean) * jax.lax.rsqrt(var + 1e-12) * g + b


def _attn_ln(x_q, x_kv, bias, wq, bq, wkv, bkv, wo, bo, g, beta, n_head):
    """Fused: Q / fused-KV projection -> masked softmax attention over all heads
    -> output projection -> residual add -> LayerNorm.  All 2-D (per batch)."""
    D = x_q.shape[-1]
    dh = D // n_head
    scale = 1.0 / math.sqrt(dh)

    # 1/sqrt(dh) folded into Q (one VPU mul instead of scaling every score).
    q = (jnp.dot(x_q, wq, preferred_element_type=jnp.float32) + bq) * scale   # (Sq, D)
    kv = jnp.dot(x_kv, wkv, preferred_element_type=jnp.float32) + bkv         # (Sk, 2D)
    k = kv[:, :D]
    v = kv[:, D:]

    heads = []
    for h in range(n_head):                 # static unroll, in-kernel head slicing
        sl = slice(h * dh, (h + 1) * dh)
        s = jnp.einsum('qd,kd->qk', q[:, sl], k[:, sl],
                       preferred_element_type=jnp.float32) + bias
        s = s - jnp.max(s, axis=-1, keepdims=True)
        p = jnp.exp(s)
        p = p * pl.reciprocal(jnp.sum(p, axis=-1, keepdims=True), approx=True)
        heads.append(jnp.dot(p, v[:, sl], preferred_element_type=jnp.float32))
    attn = jnp.concatenate(heads, axis=-1)                                    # (Sq, D)

    out = jnp.dot(attn, wo, preferred_element_type=jnp.float32) + bo
    return _layer_norm(x_q + out, g, beta)


# --------------------------- fused per-layer kernel --------------------------

def _decoder_layer_kernel(x_ref, enc_ref, tb_ref, sb_ref,
                          wq1_ref, bq1_ref, wkv1_ref, bkv1_ref, wo1_ref, bo1_ref,
                          g1_ref, be1_ref,
                          wq2_ref, bq2_ref, wkv2_ref, bkv2_ref, wo2_ref, bo2_ref,
                          g2_ref, be2_ref,
                          w1_ref, b1_ref, w2_ref, b2_ref, g3_ref, be3_ref,
                          o_ref, *, n_head):
    x = x_ref[...]                                            # (St, D)
    enc = enc_ref[...]                                        # (Ss, D)

    # masked self-attention + residual + LN
    x = _attn_ln(x, x, tb_ref[...],
                 wq1_ref[...], bq1_ref[...], wkv1_ref[...], bkv1_ref[...],
                 wo1_ref[...], bo1_ref[...], g1_ref[...], be1_ref[...], n_head)
    # encoder-decoder cross-attention + residual + LN
    x = _attn_ln(x, enc, sb_ref[...],
                 wq2_ref[...], bq2_ref[...], wkv2_ref[...], bkv2_ref[...],
                 wo2_ref[...], bo2_ref[...], g2_ref[...], be2_ref[...], n_head)
    # position-wise FFN + residual + LN
    h = jnp.maximum(jnp.dot(x, w1_ref[...], preferred_element_type=jnp.float32)
                    + b1_ref[...], 0.0)
    y = x + jnp.dot(h, w2_ref[...], preferred_element_type=jnp.float32) + b2_ref[...]
    o_ref[...] = _layer_norm(y, g3_ref[...], be3_ref[...])


def decoder_layer_block(x, enc_src, trg_bias, src_bias, lp, n_head):
    """x: (B,St,D), enc_src: (B,Ss,D), *_bias: (B,St,S*) additive (0 / -1e4)."""
    B, St, D = x.shape
    Ss = enc_src.shape[1]
    F = lp["ffn_w1"].shape[1]
    sa, ca = lp["self_attn"], lp["cross_attn"]

    def full(shape):
        return pl.BlockSpec(shape, lambda b: (0,) * len(shape))

    def batch3(s1, s2):
        return pl.BlockSpec((pl.Squeezed(), s1, s2), lambda b: (b, 0, 0))

    attn_specs = [full((D, D)), full((1, D)),            # wq, bq
                  full((D, 2 * D)), full((1, 2 * D)),    # wkv, bkv (fused K|V)
                  full((D, D)), full((1, D)),            # wo, bo
                  full((1, D)), full((1, D))]            # ln gamma, beta

    return pl.pallas_call(
        functools.partial(_decoder_layer_kernel, n_head=n_head),
        out_shape=jax.ShapeDtypeStruct((B, St, D), jnp.float32),
        grid=(B,),
        in_specs=[batch3(St, D), batch3(Ss, D), batch3(St, St), batch3(St, Ss)]
                 + attn_specs + attn_specs
                 + [full((D, F)), full((1, F)), full((F, D)), full((1, D)),
                    full((1, D)), full((1, D))],
        out_specs=batch3(St, D),
        compiler_params=pltpu.CompilerParams(dimension_semantics=("parallel",)),
    )(x, enc_src, trg_bias, src_bias,
      sa["wq"], sa["bq"], sa["wkv"], sa["bkv"], sa["wo"], sa["bo"],
      lp["ln1_g"], lp["ln1_b"],
      ca["wq"], ca["bq"], ca["wkv"], ca["bkv"], ca["wo"], ca["bo"],
      lp["ln2_g"], lp["ln2_b"],
      lp["ffn_w1"], lp["ffn_b1"], lp["ffn_w2"], lp["ffn_b2"],
      lp["ln3_g"], lp["ln3_b"])


# ----------------------------- final projection ------------------------------

def _linear_kernel(x_ref, w_ref, b_ref, o_ref):
    o_ref[...] = jnp.dot(x_ref[...], w_ref[...],
                         preferred_element_type=jnp.float32) + b_ref[...]


def linear_out(x, w_pad, b_pad):
    """Final vocab projection; w_pad/b_pad are pre-padded to a 128-multiple so
    the output store is lane-dense (unmasked vst)."""
    B, S, D = x.shape
    M = B * S
    Vp = w_pad.shape[1]
    tm = 8 if M % 8 == 0 else M            # row tiles -> parallel grid axis
    out = pl.pallas_call(
        _linear_kernel,
        out_shape=jax.ShapeDtypeStruct((M, Vp), jnp.float32),
        grid=(M // tm,),
        in_specs=[pl.BlockSpec((tm, D), lambda i: (i, 0)),
                  pl.BlockSpec((D, Vp), lambda i: (0, 0)),
                  pl.BlockSpec((1, Vp), lambda i: (0, 0))],
        out_specs=pl.BlockSpec((tm, Vp), lambda i: (i, 0)),
        compiler_params=pltpu.CompilerParams(dimension_semantics=("parallel",)),
    )(x.reshape(M, D), w_pad, b_pad)
    return out.reshape(B, S, Vp)


# ------------------------------ model glue ----------------------------------

def sinusoidal_pe(max_len, d_model):
    pos = jnp.arange(max_len, dtype=jnp.float32)[:, None]
    i2 = jnp.arange(0, d_model, 2, dtype=jnp.float32)
    angle = pos / jnp.power(10000.0, i2 / d_model)
    pe = jnp.zeros((max_len, d_model), dtype=jnp.float32)
    pe = pe.at[:, 0::2].set(jnp.sin(angle))
    pe = pe.at[:, 1::2].set(jnp.cos(angle))
    return pe


def decoder_forward(params, trg, enc_src, trg_mask, src_mask, *, n_head, vocab):
    # TransformerEmbedding: token lookup + sinusoidal positions (gather = glue);
    # dropout is identity at inference.
    x = params["tok_emb"][trg] + params["pos_enc"][: trg.shape[1]][None]
    # Precompute additive mask biases once (replaces per-step compare+select).
    trg_bias = jnp.where(trg_mask == 0, -10000.0, 0.0)[:, 0]   # (B, St, St)
    src_bias = jnp.where(src_mask == 0, -10000.0, 0.0)[:, 0]   # (B, St, Ss)
    for lp in params["layers"]:
        x = decoder_layer_block(x, enc_src, trg_bias, src_bias, lp, n_head)
    logits = linear_out(x, params["out_w"], params["out_b"])
    return logits[..., :vocab]


# ------------------------- deterministic parameters -------------------------

def init_params(key, vocab, d_model, ffn_hidden, n_layers, max_len):
    keys = jax.random.split(key, 2 + n_layers)

    def dense(k, din, dout):
        kw, kb = jax.random.split(k)
        return (0.02 * jax.random.normal(kw, (din, dout), jnp.float32),
                0.02 * jax.random.normal(kb, (dout,), jnp.float32))

    def attn_p(k):
        k1, k2, k3, k4 = jax.random.split(k, 4)
        wq, bq = dense(k1, d_model, d_model)
        wk, bk = dense(k2, d_model, d_model)
        wv, bv = dense(k3, d_model, d_model)
        wo, bo = dense(k4, d_model, d_model)
        return dict(wq=wq, bq=bq, wk=wk, bk=bk, wv=wv, bv=bv, wo=wo, bo=bo)

    layers = []
    for l in range(n_layers):
        ka, kc, kf1, kf2 = jax.random.split(keys[2 + l], 4)
        w1, b1 = dense(kf1, d_model, ffn_hidden)
        w2, b2 = dense(kf2, ffn_hidden, d_model)
        layers.append(dict(
            self_attn=attn_p(ka), cross_attn=attn_p(kc),
            ln1_g=jnp.ones((d_model,), jnp.float32), ln1_b=jnp.zeros((d_model,), jnp.float32),
            ln2_g=jnp.ones((d_model,), jnp.float32), ln2_b=jnp.zeros((d_model,), jnp.float32),
            ln3_g=jnp.ones((d_model,), jnp.float32), ln3_b=jnp.zeros((d_model,), jnp.float32),
            ffn_w1=w1, ffn_b1=b1, ffn_w2=w2, ffn_b2=b2))

    out_w, out_b = dense(keys[0], d_model, vocab)
    tok_emb = 0.02 * jax.random.normal(keys[1], (vocab, d_model), jnp.float32)
    return dict(tok_emb=tok_emb, pos_enc=sinusoidal_pe(max_len, d_model),
                layers=layers, out_w=out_w, out_b=out_b)


def prepare_pallas_params(params):
    """One-time repack for the fused kernels: concatenate K|V projection weights,
    reshape 1-D biases/LN params to (1, N) rows, and pad the output projection
    to a 128-multiple vocab (lane-dense stores)."""
    D, V = params["out_w"].shape
    Vp = ((V + 127) // 128) * 128

    def row(v):
        return v.reshape(1, -1)

    def fuse_attn(p):
        return dict(wq=p["wq"], bq=row(p["bq"]),
                    wkv=jnp.concatenate([p["wk"], p["wv"]], axis=1),
                    bkv=row(jnp.concatenate([p["bk"], p["bv"]])),
                    wo=p["wo"], bo=row(p["bo"]))

    layers = []
    for lp in params["layers"]:
        layers.append(dict(
            self_attn=fuse_attn(lp["self_attn"]),
            cross_attn=fuse_attn(lp["cross_attn"]),
            ln1_g=row(lp["ln1_g"]), ln1_b=row(lp["ln1_b"]),
            ln2_g=row(lp["ln2_g"]), ln2_b=row(lp["ln2_b"]),
            ln3_g=row(lp["ln3_g"]), ln3_b=row(lp["ln3_b"]),
            ffn_w1=lp["ffn_w1"], ffn_b1=row(lp["ffn_b1"]),
            ffn_w2=lp["ffn_w2"], ffn_b2=row(lp["ffn_b2"])))

    out_w_pad = jnp.zeros((D, Vp), jnp.float32).at[:, :V].set(params["out_w"])
    out_b_pad = jnp.zeros((1, Vp), jnp.float32).at[0, :V].set(params["out_b"])
    return dict(tok_emb=params["tok_emb"], pos_enc=params["pos_enc"],
                layers=layers, out_w=out_w_pad, out_b=out_b_pad)


# ----------------------------- pure-JAX reference ---------------------------

def _ref_mha(x_q, x_kv, mask, p, n_head):
    B, Sq, D = x_q.shape
    Sk = x_kv.shape[1]
    dh = D // n_head
    q = (x_q @ p["wq"] + p["bq"]).reshape(B, Sq, n_head, dh).transpose(0, 2, 1, 3)
    k = (x_kv @ p["wk"] + p["bk"]).reshape(B, Sk, n_head, dh).transpose(0, 2, 1, 3)
    v = (x_kv @ p["wv"] + p["bv"]).reshape(B, Sk, n_head, dh).transpose(0, 2, 1, 3)
    s = jnp.einsum("bhqd,bhkd->bhqk", q, k) / math.sqrt(dh)
    s = jnp.where(mask == 0, -10000.0, s)
    a = jax.nn.softmax(s, axis=-1)
    o = jnp.einsum("bhqk,bhkd->bhqd", a, v).transpose(0, 2, 1, 3).reshape(B, Sq, D)
    return o @ p["wo"] + p["bo"]


def _ref_ln(y, g, b):
    mean = jnp.mean(y, axis=-1, keepdims=True)
    var = jnp.mean((y - mean) ** 2, axis=-1, keepdims=True)
    return (y - mean) / jnp.sqrt(var + 1e-12) * g + b


def decoder_forward_ref(params, trg, enc_src, trg_mask, src_mask, n_head):
    x = params["tok_emb"][trg] + params["pos_enc"][: trg.shape[1]][None]
    for lp in params["layers"]:
        x = _ref_ln(x + _ref_mha(x, x, trg_mask, lp["self_attn"], n_head),
                    lp["ln1_g"], lp["ln1_b"])
        x = _ref_ln(x + _ref_mha(x, enc_src, src_mask, lp["cross_attn"], n_head),
                    lp["ln2_g"], lp["ln2_b"])
        h = jnp.maximum(x @ lp["ffn_w1"] + lp["ffn_b1"], 0.0)
        x = _ref_ln(x + (h @ lp["ffn_w2"] + lp["ffn_b2"]),
                    lp["ln3_g"], lp["ln3_b"])
    return x @ params["out_w"] + params["out_b"]


# ----------------------------------- main ------------------------------------

if __name__ == "__main__":
    B, St, Ss = 2, 8, 8
    d_model, ffn_hidden, n_head, n_layers = 32, 64, 4, 2
    dec_voc_size, max_len = 50, 16

    key = jax.random.PRNGKey(0)
    kp, kt, ke = jax.random.split(key, 3)
    params = init_params(kp, dec_voc_size, d_model, ffn_hidden, n_layers, max_len)
    pparams = prepare_pallas_params(params)

    trg = jax.random.randint(kt, (B, St), 0, dec_voc_size)
    enc_src = jax.random.normal(ke, (B, Ss, d_model), jnp.float32)
    causal = jnp.tril(jnp.ones((St, St), jnp.float32))
    trg_mask = jnp.array(jnp.broadcast_to(causal, (B, 1, St, St)))
    src_mask = jnp.ones((B, 1, St, Ss), jnp.float32)

    fwd = jax.jit(functools.partial(decoder_forward, n_head=n_head, vocab=dec_voc_size))
    out = jax.block_until_ready(fwd(pparams, trg, enc_src, trg_mask, src_mask))

    ref = decoder_forward_ref(params, trg, enc_src, trg_mask, src_mask, n_head)
    assert out.shape == (B, St, dec_voc_size)
    assert bool(jnp.allclose(out, ref, atol=1e-3, rtol=1e-3))
    print("KERNEL_OK")
</pallas_src>

<mosaic_0001>
module attributes {stable_mosaic.version = 11 : i64} {
  func.func @_linear_kernel(%arg0: i32, %arg1: memref<8x32xf32, #tpu.memory_space<vmem>>, %arg2: memref<32x128xf32, #tpu.memory_space<vmem>>, %arg3: memref<1x128xf32, #tpu.memory_space<vmem>>, %arg4: memref<8x128xf32, #tpu.memory_space<vmem>>) attributes {dimension_semantics = [#tpu.dimension_semantics<parallel>], iteration_bounds = array<i64: 2>, scalar_prefetch = 0 : i64, scratch_operands = 0 : i64, tpu.core_type = #tpu.core_type<tc>, window_params = [{transform_indices = @transform_0, window_bounds = array<i64: 8, 32>}, {pipeline_mode = #tpu.pipeline_mode<synchronous>, transform_indices = @transform_1, window_bounds = array<i64: 32, 128>}, {pipeline_mode = #tpu.pipeline_mode<synchronous>, transform_indices = @transform_2, window_bounds = array<i64: 1, 128>}, {transform_indices = @transform_3, window_bounds = array<i64: 8, 128>}]} {
    %c0 = arith.constant 0 : index
    %c0_0 = arith.constant 0 : index
    %0 = vector.load %arg1[%c0, %c0_0] : memref<8x32xf32, #tpu.memory_space<vmem>>, vector<8x32xf32>
    %c0_1 = arith.constant 0 : index
    %c0_2 = arith.constant 0 : index
    %1 = vector.load %arg2[%c0_1, %c0_2] : memref<32x128xf32, #tpu.memory_space<vmem>>, vector<32x128xf32>
    %cst = arith.constant dense<0.000000e+00> : vector<8x128xf32>
    %2 = tpu.matmul %0, %1, %cst {dimension_numbers = #tpu.dot_dimension_numbers<[1], [0], [0], [1], [0, 0, 1, 1], [], []>} : vector<8x32xf32>, vector<32x128xf32>, vector<8x128xf32> -> vector<8x128xf32>
    %c0_3 = arith.constant 0 : index
    %c0_4 = arith.constant 0 : index
    %3 = vector.load %arg3[%c0_3, %c0_4] : memref<1x128xf32, #tpu.memory_space<vmem>>, vector<1x128xf32>
    %4 = vector.broadcast %3 : vector<1x128xf32> to vector<8x128xf32>
    %5 = arith.addf %2, %4 : vector<8x128xf32>
    %c0_5 = arith.constant 0 : index
    %c0_6 = arith.constant 0 : index
    %6 = vector.load %arg4[%c0_5, %c0_6] : memref<8x128xf32, #tpu.memory_space<vmem>>, vector<8x128xf32>
    tpu.vector_store %arg4[%c0_5, %c0_6], %5 {strides = array<i32>} : memref<8x128xf32, #tpu.memory_space<vmem>>, vector<8x128xf32>,
    return
  }
  func.func @transform_0(%arg0: i32) -> (i32, i32) {
    %c0_i32 = arith.constant 0 : i32
    %c0_i32_0 = arith.constant 0 : i32
    return %arg0, %c0_i32 : i32, i32
  }
  func.func @transform_1(%arg0: i32) -> (i32, i32) {
    %c0_i32 = arith.constant 0 : i32
    %c0_i32_0 = arith.constant 0 : i32
    %c0_i32_1 = arith.constant 0 : i32
    return %c0_i32, %c0_i32_0 : i32, i32
  }
  func.func @transform_2(%arg0: i32) -> (i32, i32) {
    %c0_i32 = arith.constant 0 : i32
    %c0_i32_0 = arith.constant 0 : i32
    %c0_i32_1 = arith.constant 0 : i32
    return %c0_i32, %c0_i32_0 : i32, i32
  }
  func.func @transform_3(%arg0: i32) -> (i32, i32) {
    %c0_i32 = arith.constant 0 : i32
    %c0_i32_0 = arith.constant 0 : i32
    return %arg0, %c0_i32 : i32, i32
  }
}

module attributes {stable_mosaic.version = 11 : i64} {
  func.func @_decoder_layer_kernel(%arg0: i32, %arg1: memref<1x8x32xf32, #tpu.memory_space<vmem>>, %arg2: memref<1x8x32xf32, #tpu.memory_space<vmem>>, %arg3: memref<1x8x8xf32, #tpu.memory_space<vmem>>, %arg4: memref<1x8x8xf32, #tpu.memory_space<vmem>>, %arg5: memref<32x32xf32, #tpu.memory_space<vmem>>, %arg6: memref<1x32xf32, #tpu.memory_space<vmem>>, %arg7: memref<32x64xf32, #tpu.memory_space<vmem>>, %arg8: memref<1x64xf32, #tpu.memory_space<vmem>>, %arg9: memref<32x32xf32, #tpu.memory_space<vmem>>, %arg10: memref<1x32xf32, #tpu.memory_space<vmem>>, %arg11: memref<1x32xf32, #tpu.memory_space<vmem>>, %arg12: memref<1x32xf32, #tpu.memory_space<vmem>>, %arg13: memref<32x32xf32, #tpu.memory_space<vmem>>, %arg14: memref<1x32xf32, #tpu.memory_space<vmem>>, %arg15: memref<32x64xf32, #tpu.memory_space<vmem>>, %arg16: memref<1x64xf32, #tpu.memory_space<vmem>>, %arg17: memref<32x32xf32, #tpu.memory_space<vmem>>, %arg18: memref<1x32xf32, #tpu.memory_space<vmem>>, %arg19: memref<1x32xf32, #tpu.memory_space<vmem>>, %arg20: memref<1x32xf32, #tpu.memory_space<vmem>>, %arg21: memref<32x64xf32, #tpu.memory_space<vmem>>, %arg22: memref<1x64xf32, #tpu.memory_space<vmem>>, %arg23: memref<64x32xf32, #tpu.memory_space<vmem>>, %arg24: memref<1x32xf32, #tpu.memory_space<vmem>>, %arg25: memref<1x32xf32, #tpu.memory_space<vmem>>, %arg26: memref<1x32xf32, #tpu.memory_space<vmem>>, %arg27: memref<1x8x32xf32, #tpu.memory_space<vmem>>) attributes {dimension_semantics = [#tpu.dimension_semantics<parallel>], iteration_bounds = array<i64: 2>, scalar_prefetch = 0 : i64, scratch_operands = 0 : i64, tpu.core_type = #tpu.core_type<tc>, window_params = [{transform_indices = @transform_0, window_bounds = array<i64: 1, 8, 32>}, {transform_indices = @transform_1, window_bounds = array<i64: 1, 8, 32>}, {transform_indices = @transform_2, window_bounds = array<i64: 1, 8, 8>}, {transform_indices = @transform_3, window_bounds = array<i64: 1, 8, 8>}, {pipeline_mode = #tpu.pipeline_mode<synchronous>, transform_indices = @transform_4, window_bounds = array<i64: 32, 32>}, {pipeline_mode = #tpu.pipeline_mode<synchronous>, transform_indices = @transform_5, window_bounds = array<i64: 1, 32>}, {pipeline_mode = #tpu.pipeline_mode<synchronous>, transform_indices = @transform_6, window_bounds = array<i64: 32, 64>}, {pipeline_mode = #tpu.pipeline_mode<synchronous>, transform_indices = @transform_7, window_bounds = array<i64: 1, 64>}, {pipeline_mode = #tpu.pipeline_mode<synchronous>, transform_indices = @transform_8, window_bounds = array<i64: 32, 32>}, {pipeline_mode = #tpu.pipeline_mode<synchronous>, transform_indices = @transform_9, window_bounds = array<i64: 1, 32>}, {pipeline_mode = #tpu.pipeline_mode<synchronous>, transform_indices = @transform_10, window_bounds = array<i64: 1, 32>}, {pipeline_mode = #tpu.pipeline_mode<synchronous>, transform_indices = @transform_11, window_bounds = array<i64: 1, 32>}, {pipeline_mode = #tpu.pipeline_mode<synchronous>, transform_indices = @transform_12, window_bounds = array<i64: 32, 32>}, {pipeline_mode = #tpu.pipeline_mode<synchronous>, transform_indices = @transform_13, window_bounds = array<i64: 1, 32>}, {pipeline_mode = #tpu.pipeline_mode<synchronous>, transform_indices = @transform_14, window_bounds = array<i64: 32, 64>}, {pipeline_mode = #tpu.pipeline_mode<synchronous>, transform_indices = @transform_15, window_bounds = array<i64: 1, 64>}, {pipeline_mode = #tpu.pipeline_mode<synchronous>, transform_indices = @transform_16, window_bounds = array<i64: 32, 32>}, {pipeline_mode = #tpu.pipeline_mode<synchronous>, transform_indices = @transform_17, window_bounds = array<i64: 1, 32>}, {pipeline_mode = #tpu.pipeline_mode<synchronous>, transform_indices = @transform_18, window_bounds = array<i64: 1, 32>}, {pipeline_mode = #tpu.pipeline_mode<synchronous>, transform_indices = @transform_19, window_bounds = array<i64: 1, 32>}, {pipeline_mode = #tpu.pipeline_mode<synchronous>, transform_indices = @transform_20, window_bounds = array<i64: 32, 64>}, {pipeline_mode = #tpu.pipeline_mode<synchronous>, transform_indices = @transform_21, window_bounds = array<i64: 1, 64>}, {pipeline_mode = #tpu.pipeline_mode<synchronous>, transform_indices = @transform_22, window_bounds = array<i64: 64, 32>}, {pipeline_mode = #tpu.pipeline_mode<synchronous>, transform_indices = @transform_23, window_bounds = array<i64: 1, 32>}, {pipeline_mode = #tpu.pipeline_mode<synchronous>, transform_indices = @transform_24, window_bounds = array<i64: 1, 32>}, {pipeline_mode = #tpu.pipeline_mode<synchronous>, transform_indices = @transform_25, window_bounds = array<i64: 1, 32>}, {transform_indices = @transform_26, window_bounds = array<i64: 1, 8, 32>}]} {
    %c0 = arith.constant 0 : index
    %c0_0 = arith.constant 0 : index
    %c0_1 = arith.constant 0 : index
    %0 = vector.load %arg1[%c0, %c0_0, %c0_1] : memref<1x8x32xf32, #tpu.memory_space<vmem>>, vector<1x8x32xf32>
    %1 = vector.shape_cast %0 : vector<1x8x32xf32> to vector<8x32xf32>
    %c0_2 = arith.constant 0 : index
    %c0_3 = arith.constant 0 : index
    %c0_4 = arith.constant 0 : index
    %2 = vector.load %arg2[%c0_2, %c0_3, %c0_4] : memref<1x8x32xf32, #tpu.memory_space<vmem>>, vector<1x8x32xf32>
    %3 = vector.shape_cast %2 : vector<1x8x32xf32> to vector<8x32xf32>
    %c0_5 = arith.constant 0 : index
    %c0_6 = arith.constant 0 : index
    %c0_7 = arith.constant 0 : index
    %4 = vector.load %arg3[%c0_5, %c0_6, %c0_7] : memref<1x8x8xf32, #tpu.memory_space<vmem>>, vector<1x8x8xf32>
    %5 = vector.shape_cast %4 : vector<1x8x8xf32> to vector<8x8xf32>
    %c0_8 = arith.constant 0 : index
    %c0_9 = arith.constant 0 : index
    %6 = vector.load %arg5[%c0_8, %c0_9] : memref<32x32xf32, #tpu.memory_space<vmem>>, vector<32x32xf32>
    %c0_10 = arith.constant 0 : index
    %c0_11 = arith.constant 0 : index
    %7 = vector.load %arg6[%c0_10, %c0_11] : memref<1x32xf32, #tpu.memory_space<vmem>>, vector<1x32xf32>
    %c0_12 = arith.constant 0 : index
    %c0_13 = arith.constant 0 : index
    %8 = vector.load %arg7[%c0_12, %c0_13] : memref<32x64xf32, #tpu.memory_space<vmem>>, vector<32x64xf32>
    %c0_14 = arith.constant 0 : index
    %c0_15 = arith.constant 0 : index
    %9 = vector.load %arg8[%c0_14, %c0_15] : memref<1x64xf32, #tpu.memory_space<vmem>>, vector<1x64xf32>
    %c0_16 = arith.constant 0 : index
    %c0_17 = arith.constant 0 : index
    %10 = vector.load %arg9[%c0_16, %c0_17] : memref<32x32xf32, #tpu.memory_space<vmem>>, vector<32x32xf32>
    %c0_18 = arith.constant 0 : index
    %c0_19 = arith.constant 0 : index
    %11 = vector.load %arg10[%c0_18, %c0_19] : memref<1x32xf32, #tpu.memory_space<vmem>>, vector<1x32xf32>
    %c0_20 = arith.constant 0 : index
    %c0_21 = arith.constant 0 : index
    %12 = vector.load %arg11[%c0_20, %c0_21] : memref<1x32xf32, #tpu.memory_space<vmem>>, vector<1x32xf32>
    %c0_22 = arith.constant 0 : index
    %c0_23 = arith.constant 0 : index
    %13 = vector.load %arg12[%c0_22, %c0_23] : memref<1x32xf32, #tpu.memory_space<vmem>>, vector<1x32xf32>
    %cst = arith.constant dense<0.000000e+00> : vector<8x32xf32>
    %14 = tpu.matmul %1, %6, %cst {dimension_numbers = #tpu.dot_dimension_numbers<[1], [0], [0], [1], [0, 0, 1, 1], [], []>} : vector<8x32xf32>, vector<32x32xf32>, vector<8x32xf32> -> vector<8x32xf32>
    %15 = vector.broadcast %7 : vector<1x32xf32> to vector<8x32xf32>
    %16 = arith.addf %14, %15 : vector<8x32xf32>
    %cst_24 = arith.constant 0.353553385 : f32
    %17 = vector.broadcast %cst_24 : f32 to vector<8x32xf32>
    %18 = arith.mulf %16, %17 : vector<8x32xf32>
    %cst_25 = arith.constant dense<0.000000e+00> : vector<8x64xf32>
    %19 = tpu.matmul %1, %8, %cst_25 {dimension_numbers = #tpu.dot_dimension_numbers<[1], [0], [0], [1], [0, 0, 1, 1], [], []>} : vector<8x32xf32>, vector<32x64xf32>, vector<8x64xf32> -> vector<8x64xf32>
    %20 = vector.broadcast %9 : vector<1x64xf32> to vector<8x64xf32>
    %21 = arith.addf %19, %20 : vector<8x64xf32>
    %22 = vector.extract_strided_slice %21 {offsets = [0, 0], sizes = [8, 32], strides = [1, 1]} : vector<8x64xf32> to vector<8x32xf32>
    %23 = vector.extract_strided_slice %21 {offsets = [0, 32], sizes = [8, 32], strides = [1, 1]} : vector<8x64xf32> to vector<8x32xf32>
    %24 = vector.extract_strided_slice %18 {offsets = [0, 0], sizes = [8, 8], strides = [1, 1]} : vector<8x32xf32> to vector<8x8xf32>
    %25 = vector.extract_strided_slice %22 {offsets = [0, 0], sizes = [8, 8], strides = [1, 1]} : vector<8x32xf32> to vector<8x8xf32>
    "tpu.trace_start"() <{level = 10 : i32, message = "qd,kd->qk"}> : () -> ()
    %cst_26 = arith.constant dense<0.000000e+00> : vector<8x8xf32>
    %26 = tpu.matmul %24, %25, %cst_26 {dimension_numbers = #tpu.dot_dimension_numbers<[1], [1], [0], [0], [0, 0, 1, 0], [], []>} : vector<8x8xf32>, vector<8x8xf32>, vector<8x8xf32> -> vector<8x8xf32>
    "tpu.trace_stop"() : () -> ()
    %27 = arith.addf %26, %5 : vector<8x8xf32>
    %cst_27 = arith.constant dense<0xFF800000> : vector<8xf32>
    %28 = vector.multi_reduction <maximumf>, %27, %cst_27 [1] : vector<8x8xf32> to vector<8xf32>
    %29 = vector.shape_cast %28 : vector<8xf32> to vector<8x1xf32>
    %30 = vector.broadcast %29 : vector<8x1xf32> to vector<8x8xf32>
    %31 = arith.subf %27, %30 : vector<8x8xf32>
    %32 = math.exp %31 : vector<8x8xf32>
    %cst_28 = arith.constant dense<0.000000e+00> : vector<8xf32>
    %33 = vector.multi_reduction <add>, %32, %cst_28 [1] : vector<8x8xf32> to vector<8xf32>
    %34 = vector.shape_cast %33 : vector<8xf32> to vector<8x1xf32>
    %35 = tpu.reciprocal %34 {approx = true} : vector<8x1xf32> -> vector<8x1xf32>
    %36 = vector.broadcast %35 : vector<8x1xf32> to vector<8x8xf32>
    %37 = arith.mulf %32, %36 : vector<8x8xf32>
    %38 = vector.extract_strided_slice %23 {offsets = [0, 0], sizes = [8, 8], strides = [1, 1]} : vector<8x32xf32> to vector<8x8xf32>
    %cst_29 = arith.constant dense<0.000000e+00> : vector<8x8xf32>
    %39 = tpu.matmul %37, %38, %cst_29 {dimension_numbers = #tpu.dot_dimension_numbers<[1], [0], [0], [1], [0, 0, 1, 1], [], []>} : vector<8x8xf32>, vector<8x8xf32>, vector<8x8xf32> -> vector<8x8xf32>
    %40 = vector.extract_strided_slice %18 {offsets = [0, 8], sizes = [8, 8], strides = [1, 1]} : vector<8x32xf32> to vector<8x8xf32>
    %41 = vector.extract_strided_slice %22 {offsets = [0, 8], sizes = [8, 8], strides = [1, 1]} : vector<8x32xf32> to vector<8x8xf32>
    "tpu.trace_start"() <{level = 10 : i32, message = "qd,kd->qk"}> : () -> ()
    %cst_30 = arith.constant dense<0.000000e+00> : vector<8x8xf32>
    %42 = tpu.matmul %40, %41, %cst_30 {dimension_numbers = #tpu.dot_dimension_numbers<[1], [1], [0], [0], [0, 0, 1, 0], [], []>} : vector<8x8xf32>, vector<8x8xf32>, vector<8x8xf32> -> vector<8x8xf32>
    "tpu.trace_stop"() : () -> ()
    %43 = arith.addf %42, %5 : vector<8x8xf32>
    %cst_31 = arith.constant dense<0xFF800000> : vector<8xf32>
    %44 = vector.multi_reduction <maximumf>, %43, %cst_31 [1] : vector<8x8xf32> to vector<8xf32>
    %45 = vector.shape_cast %44 : vector<8xf32> to vector<8x1xf32>
    %46 = vector.broadcast %45 : vector<8x1xf32> to vector<8x8xf32>
    %47 = arith.subf %43, %46 : vector<8x8xf32>
    %48 = math.exp %47 : vector<8x8xf32>
    %cst_32 = arith.constant dense<0.000000e+00> : vector<8xf32>
    %49 = vector.multi_reduction <add>, %48, %cst_32 [1] : vector<8x8xf32> to vector<8xf32>
    %50 = vector.shape_cast %49 : vector<8xf32> to vector<8x1xf32>
    %51 = tpu.reciprocal %50 {approx = true} : vector<8x1xf32> -> vector<8x1xf32>
    %52 = vector.broadcast %51 : vector<8x1xf32> to vector<8x8xf32>
    %53 = arith.mulf %48, %52 : vector<8x8xf32>
    %54 = vector.extract_strided_slice %23 {offsets = [0, 8], sizes = [8, 8], strides = [1, 1]} : vector<8x32xf32> to vector<8x8xf32>
    %cst_33 = arith.constant dense<0.000000e+00> : vector<8x8xf32>
    %55 = tpu.matmul %53, %54, %cst_33 {dimension_numbers = #tpu.dot_dimension_numbers<[1], [0], [0], [1], [0, 0, 1, 1], [], []>} : vector<8x8xf32>, vector<8x8xf32>, vector<8x8xf32> -> vector<8x8xf32>
    %56 = vector.extract_strided_slice %18 {offsets = [0, 16], sizes = [8, 8], strides = [1, 1]} : vector<8x32xf32> to vector<8x8xf32>
    %57 = vector.extract_strided_slice %22 {offsets = [0, 16], sizes = [8, 8], strides = [1, 1]} : vector<8x32xf32> to vector<8x8xf32>
    "tpu.trace_start"() <{level = 10 : i32, message = "qd,kd->qk"}> : () -> ()
    %cst_34 = arith.constant dense<0.000000e+00> : vector<8x8xf32>
    %58 = tpu.matmul %56, %57, %cst_34 {dimension_numbers = #tpu.dot_dimension_numbers<[1], [1], [0], [0], [0, 0, 1, 0], [], []>} : vector<8x8xf32>, vector<8x8xf32>, vector<8x8xf32> -> vector<8x8xf32>
    "tpu.trace_stop"() : () -> ()
    %59 = arith.addf %58, %5 : vector<8x8xf32>
    %cst_35 = arith.constant dense<0xFF800000> : vector<8xf32>
    %60 = vector.multi_reduction <maximumf>, %59, %cst_35 [1] : vector<8x8xf32> to vector<8xf32>
    %61 = vector.shape_cast %60 : vector<8xf32> to vector<8x1xf32>
    %62 = vector.broadcast %61 : vector<8x1xf32> to vector<8x8xf32>
    %63 = arith.subf %59, %62 : vector<8x8xf32>
    %64 = math.exp %63 : vector<8x8xf32>
    %cst_36 = arith.constant dense<0.000000e+00> : vector<8xf32>
    %65 = vector.multi_reduction <add>, %64, %cst_36 [1] : vector<8x8xf32> to vector<8xf32>
    %66 = vector.shape_cast %65 : vector<8xf32> to vector<8x1xf32>
    %67 = tpu.reciprocal %66 {approx = true} : vector<8x1xf32> -> vector<8x1xf32>
    %68 = vector.broadcast %67 : vector<8x1xf32> to vector<8x8xf32>
    %69 = arith.mulf %64, %68 : vector<8x8xf32>
    %70 = vector.extract_strided_slice %23 {offsets = [0, 16], sizes = [8, 8], strides = [1, 1]} : vector<8x32xf32> to vector<8x8xf32>
    %cst_37 = arith.constant dense<0.000000e+00> : vector<8x8xf32>
    %71 = tpu.matmul %69, %70, %cst_37 {dimension_numbers = #tpu.dot_dimension_numbers<[1], [0], [0], [1], [0, 0, 1, 1], [], []>} : vector<8x8xf32>, vector<8x8xf32>, vector<8x8xf32> -> vector<8x8xf32>
    %72 = vector.extract_strided_slice %18 {offsets = [0, 24], sizes = [8, 8], strides = [1, 1]} : vector<8x32xf32> to vector<8x8xf32>
    %73 = vector.extract_strided_slice %22 {offsets = [0, 24], sizes = [8, 8], strides = [1, 1]} : vector<8x32xf32> to vector<8x8xf32>
    "tpu.trace_start"() <{level = 10 : i32, message = "qd,kd->qk"}> : () -> ()
    %cst_38 = arith.constant dense<0.000000e+00> : vector<8x8xf32>
    %74 = tpu.matmul %72, %73, %cst_38 {dimension_numbers = #tpu.dot_dimension_numbers<[1], [1], [0], [0], [0, 0, 1, 0], [], []>} : vector<8x8xf32>, vector<8x8xf32>, vector<8x8xf32> -> vector<8x8xf32>
    "tpu.trace_stop"() : () -> ()
    %75 = arith.addf %74, %5 : vector<8x8xf32>
    %cst_39 = arith.constant dense<0xFF800000> : vector<8xf32>
    %76 = vector.multi_reduction <maximumf>, %75, %cst_39 [1] : vector<8x8xf32> to vector<8xf32>
    %77 = vector.shape_cast %76 : vector<8xf32> to vector<8x1xf32>
    %78 = vector.broadcast %77 : vector<8x1xf32> to vector<8x8xf32>
    %79 = arith.subf %75, %78 : vector<8x8xf32>
    %80 = math.exp %79 : vector<8x8xf32>
    %cst_40 = arith.constant dense<0.000000e+00> : vector<8xf32>
    %81 = vector.multi_reduction <add>, %80, %cst_40 [1] : vector<8x8xf32> to vector<8xf32>
    %82 = vector.shape_cast %81 : vector<8xf32> to vector<8x1xf32>
    %83 = tpu.reciprocal %82 {approx = true} : vector<8x1xf32> -> vector<8x1xf32>
    %84 = vector.broadcast %83 : vector<8x1xf32> to vector<8x8xf32>
    %85 = arith.mulf %80, %84 : vector<8x8xf32>
    %86 = vector.extract_strided_slice %23 {offsets = [0, 24], sizes = [8, 8], strides = [1, 1]} : vector<8x32xf32> to vector<8x8xf32>
    %cst_41 = arith.constant dense<0.000000e+00> : vector<8x8xf32>
    %87 = tpu.matmul %85, %86, %cst_41 {dimension_numbers = #tpu.dot_dimension_numbers<[1], [0], [0], [1], [0, 0, 1, 1], [], []>} : vector<8x8xf32>, vector<8x8xf32>, vector<8x8xf32> -> vector<8x8xf32>
    %88 = tpu.concatenate %39, %55, %71, %87 in 1 : vector<8x8xf32>, vector<8x8xf32>, vector<8x8xf32>, vector<8x8xf32> -> vector<8x32xf32>
    %cst_42 = arith.constant dense<0.000000e+00> : vector<8x32xf32>
    %89 = tpu.matmul %88, %10, %cst_42 {dimension_numbers = #tpu.dot_dimension_numbers<[1], [0], [0], [1], [0, 0, 1, 1], [], []>} : vector<8x32xf32>, vector<32x32xf32>, vector<8x32xf32> -> vector<8x32xf32>
    %90 = vector.broadcast %11 : vector<1x32xf32> to vector<8x32xf32>
    %91 = arith.addf %89, %90 : vector<8x32xf32>
    %92 = arith.addf %1, %91 : vector<8x32xf32>
    %cst_43 = arith.constant dense<0.000000e+00> : vector<8xf32>
    %93 = vector.multi_reduction <add>, %92, %cst_43 [1] : vector<8x32xf32> to vector<8xf32>
    %94 = vector.shape_cast %93 : vector<8xf32> to vector<8x1xf32>
    %cst_44 = arith.constant 3.200000e+01 : f32
    %95 = vector.broadcast %cst_44 : f32 to vector<8x1xf32>
    %96 = arith.divf %94, %95 : vector<8x1xf32>
    %97 = vector.broadcast %96 : vector<8x1xf32> to vector<8x32xf32>
    %98 = arith.subf %92, %97 : vector<8x32xf32>
    %99 = arith.mulf %98, %98 : vector<8x32xf32>
    %cst_45 = arith.constant dense<0.000000e+00> : vector<8xf32>
    %100 = vector.multi_reduction <add>, %99, %cst_45 [1] : vector<8x32xf32> to vector<8xf32>
    %101 = vector.shape_cast %100 : vector<8xf32> to vector<8x1xf32>
    %cst_46 = arith.constant 3.200000e+01 : f32
    %102 = vector.broadcast %cst_46 : f32 to vector<8x1xf32>
    %103 = arith.divf %101, %102 : vector<8x1xf32>
    %104 = vector.broadcast %96 : vector<8x1xf32> to vector<8x32xf32>
    %105 = arith.subf %92, %104 : vector<8x32xf32>
    %cst_47 = arith.constant 9.99999996E-13 : f32
    %106 = vector.broadcast %cst_47 : f32 to vector<8x1xf32>
    %107 = arith.addf %103, %106 : vector<8x1xf32>
    %108 = math.rsqrt %107 : vector<8x1xf32>
    %109 = vector.broadcast %108 : vector<8x1xf32> to vector<8x32xf32>
    %110 = arith.mulf %105, %109 : vector<8x32xf32>
    %111 = vector.broadcast %12 : vector<1x32xf32> to vector<8x32xf32>
    %112 = arith.mulf %110, %111 : vector<8x32xf32>
    %113 = vector.broadcast %13 : vector<1x32xf32> to vector<8x32xf32>
    %114 = arith.addf %112, %113 : vector<8x32xf32>
    %c0_48 = arith.constant 0 : index
    %c0_49 = arith.constant 0 : index
    %c0_50 = arith.constant 0 : index
    %115 = vector.load %arg4[%c0_48, %c0_49, %c0_50] : memref<1x8x8xf32, #tpu.memory_space<vmem>>, vector<1x8x8xf32>
    %116 = vector.shape_cast %115 : vector<1x8x8xf32> to vector<8x8xf32>
    %c0_51 = arith.constant 0 : index
    %c0_52 = arith.constant 0 : index
    %117 = vector.load %arg13[%c0_51, %c0_52] : memref<32x32xf32, #tpu.memory_space<vmem>>, vector<32x32xf32>
    %c0_53 = arith.constant 0 : index
    %c0_54 = arith.constant 0 : index
    %118 = vector.load %arg14[%c0_53, %c0_54] : memref<1x32xf32, #tpu.memory_space<vmem>>, vector<1x32xf32>
    %c0_55 = arith.constant 0 : index
    %c0_56 = arith.constant 0 : index
    %119 = vector.load %arg15[%c0_55, %c0_56] : memref<32x64xf32, #tpu.memory_space<vmem>>, vector<32x64xf32>
    %c0_57 = arith.constant 0 : index
    %c0_58 = arith.constant 0 : index
    %120 = vector.load %arg16[%c0_57, %c0_58] : memref<1x64xf32, #tpu.memory_space<vmem>>, vector<1x64xf32>
    %c0_59 = arith.constant 0 : index
    %c0_60 = arith.constant 0 : index
    %121 = vector.load %arg17[%c0_59, %c0_60] : memref<32x32xf32, #tpu.memory_space<vmem>>, vector<32x32xf32>
    %c0_61 = arith.constant 0 : index
    %c0_62 = arith.constant 0 : index
    %122 = vector.load %arg18[%c0_61, %c0_62] : memref<1x32xf32, #tpu.memory_space<vmem>>, vector<1x32xf32>
    %c0_63 = arith.constant 0 : index
    %c0_64 = arith.constant 0 : index
    %123 = vector.load %arg19[%c0_63, %c0_64] : memref<1x32xf32, #tpu.memory_space<vmem>>, vector<1x32xf32>
    %c0_65 = arith.constant 0 : index
    %c0_66 = arith.constant 0 : index
    %124 = vector.load %arg20[%c0_65, %c0_66] : memref<1x32xf32, #tpu.memory_space<vmem>>, vector<1x32xf32>
    %cst_67 = arith.constant dense<0.000000e+00> : vector<8x32xf32>
    %125 = tpu.matmul %114, %117, %cst_67 {dimension_numbers = #tpu.dot_dimension_numbers<[1], [0], [0], [1], [0, 0, 1, 1], [], []>} : vector<8x32xf32>, vector<32x32xf32>, vector<8x32xf32> -> vector<8x32xf32>
    %126 = vector.broadcast %118 : vector<1x32xf32> to vector<8x32xf32>
    %127 = arith.addf %125, %126 : vector<8x32xf32>
    %cst_68 = arith.constant 0.353553385 : f32
    %128 = vector.broadcast %cst_68 : f32 to vector<8x32xf32>
    %129 = arith.mulf %127, %128 : vector<8x32xf32>
    %cst_69 = arith.constant dense<0.000000e+00> : vector<8x64xf32>
    %130 = tpu.matmul %3, %119, %cst_69 {dimension_numbers = #tpu.dot_dimension_numbers<[1], [0], [0], [1], [0, 0, 1, 1], [], []>} : vector<8x32xf32>, vector<32x64xf32>, vector<8x64xf32> -> vector<8x64xf32>
    %131 = vector.broadcast %120 : vector<1x64xf32> to vector<8x64xf32>
    %132 = arith.addf %130, %131 : vector<8x64xf32>
    %133 = vector.extract_strided_slice %132 {offsets = [0, 0], sizes = [8, 32], strides = [1, 1]} : vector<8x64xf32> to vector<8x32xf32>
    %134 = vector.extract_strided_slice %132 {offsets = [0, 32], sizes = [8, 32], strides = [1, 1]} : vector<8x64xf32> to vector<8x32xf32>
    %135 = vector.extract_strided_slice %129 {offsets = [0, 0], sizes = [8, 8], strides = [1, 1]} : vector<8x32xf32> to vector<8x8xf32>
    %136 = vector.extract_strided_slice %133 {offsets = [0, 0], sizes = [8, 8], strides = [1, 1]} : vector<8x32xf32> to vector<8x8xf32>
    "tpu.trace_start"() <{level = 10 : i32, message = "qd,kd->qk"}> : () -> ()
    %cst_70 = arith.constant dense<0.000000e+00> : vector<8x8xf32>
    %137 = tpu.matmul %135, %136, %cst_70 {dimension_numbers = #tpu.dot_dimension_numbers<[1], [1], [0], [0], [0, 0, 1, 0], [], []>} : vector<8x8xf32>, vector<8x8xf32>, vector<8x8xf32> -> vector<8x8xf32>
    "tpu.trace_stop"() : () -> ()
    %138 = arith.addf %137, %116 : vector<8x8xf32>
    %cst_71 = arith.constant dense<0xFF800000> : vector<8xf32>
    %139 = vector.multi_reduction <maximumf>, %138, %cst_71 [1] : vector<8x8xf32> to vector<8xf32>
    %140 = vector.shape_cast %139 : vector<8xf32> to vector<8x1xf32>
    %141 = vector.broadcast %140 : vector<8x1xf32> to vector<8x8xf32>
    %142 = arith.subf %138, %141 : vector<8x8xf32>
    %143 = math.exp %142 : vector<8x8xf32>
    %cst_72 = arith.constant dense<0.000000e+00> : vector<8xf32>
    %144 = vector.multi_reduction <add>, %143, %cst_72 [1] : vector<8x8xf32> to vector<8xf32>
    %145 = vector.shape_cast %144 : vector<8xf32> to vector<8x1xf32>
    %146 = tpu.reciprocal %145 {approx = true} : vector<8x1xf32> -> vector<8x1xf32>
    %147 = vector.broadcast %146 : vector<8x1xf32> to vector<8x8xf32>
    %148 = arith.mulf %143, %147 : vector<8x8xf32>
    %149 = vector.extract_strided_slice %134 {offsets = [0, 0], sizes = [8, 8], strides = [1, 1]} : vector<8x32xf32> to vector<8x8xf32>
    %cst_73 = arith.constant dense<0.000000e+00> : vector<8x8xf32>
    %150 = tpu.matmul %148, %149, %cst_73 {dimension_numbers = #tpu.dot_dimension_numbers<[1], [0], [0], [1], [0, 0, 1, 1], [], []>} : vector<8x8xf32>, vector<8x8xf32>, vector<8x8xf32> -> vector<8x8xf32>
    %151 = vector.extract_strided_slice %129 {offsets = [0, 8], sizes = [8, 8], strides = [1, 1]} : vector<8x32xf32> to vector<8x8xf32>
    %152 = vector.extract_strided_slice %133 {offsets = [0, 8], sizes = [8, 8], strides = [1, 1]} : vector<8x32xf32> to vector<8x8xf32>
    "tpu.trace_start"() <{level = 10 : i32, message = "qd,kd->qk"}> : () -> ()
    %cst_74 = arith.constant dense<0.000000e+00> : vector<8x8xf32>
    %153 = tpu.matmul %151, %152, %cst_74 {dimension_numbers = #tpu.dot_dimension_numbers<[1], [1], [0], [0], [0, 0, 1, 0], [], []>} : vector<8x8xf32>, vector<8x8xf32>, vector<8x8xf32> -> vector<8x8xf32>
    "tpu.trace_stop"() : () -> ()
    %154 = arith.addf %153, %116 : vector<8x8xf32>
    %cst_75 = arith.constant dense<0xFF800000> : vector<8xf32>
    %155 = vector.multi_reduction <maximumf>, %154, %cst_75 [1] : vector<8x8xf32> to vector<8xf32>
    %156 = vector.shape_cast %155 : vector<8xf32> to vector<8x1xf32>
    %157 = vector.broadcast %156 : vector<8x1xf32> to vector<8x8xf32>
    %158 = arith.subf %154, %157 : vector<8x8xf32>
    %159 = math.exp %158 : vector<8x8xf32>
    %cst_76 = arith.constant dense<0.000000e+00> : vector<8xf32>
    %160 = vector.multi_reduction <add>, %159, %cst_76 [1] : vector<8x8xf32> to vector<8xf32>
    %161 = vector.shape_cast %160 : vector<8xf32> to vector<8x1xf32>
    %162 = tpu.reciprocal %161 {approx = true} : vector<8x1xf32> -> vector<8x1xf32>
    %163 = vector.broadcast %162 : vector<8x1xf32> to vector<8x8xf32>
    %164 = arith.mulf %159, %163 : vector<8x8xf32>
    %165 = vector.extract_strided_slice %134 {offsets = [0, 8], sizes = [8, 8], strides = [1, 1]} : vector<8x32xf32> to vector<8x8xf32>
    %cst_77 = arith.constant dense<0.000000e+00> : vector<8x8xf32>
    %166 = tpu.matmul %164, %165, %cst_77 {dimension_numbers = #tpu.dot_dimension_numbers<[1], [0], [0], [1], [0, 0, 1, 1], [], []>} : vector<8x8xf32>, vector<8x8xf32>, vector<8x8xf32> -> vector<8x8xf32>
    %167 = vector.extract_strided_slice %129 {offsets = [0, 16], sizes = [8, 8], strides = [1, 1]} : vector<8x32xf32> to vector<8x8xf32>
    %168 = vector.extract_strided_slice %133 {offsets = [0, 16], sizes = [8, 8], strides = [1, 1]} : vector<8x32xf32> to vector<8x8xf32>
    "tpu.trace_start"() <{level = 10 : i32, message = "qd,kd->qk"}> : () -> ()
    %cst_78 = arith.constant dense<0.000000e+00> : vector<8x8xf32>
    %169 = tpu.matmul %167, %168, %cst_78 {dimension_numbers = #tpu.dot_dimension_numbers<[1], [1], [0], [0], [0, 0, 1, 0], [], []>} : vector<8x8xf32>, vector<8x8xf32>, vector<8x8xf32> -> vector<8x8xf32>
    "tpu.trace_stop"() : () -> ()
    %170 = arith.addf %169, %116 : vector<8x8xf32>
    %cst_79 = arith.constant dense<0xFF800000> : vector<8xf32>
    %171 = vector.multi_reduction <maximumf>, %170, %cst_79 [1] : vector<8x8xf32> to vector<8xf32>
    %172 = vector.shape_cast %171 : vector<8xf32> to vector<8x1xf32>
    %173 = vector.broadcast %172 : vector<8x1xf32> to vector<8x8xf32>
    %174 = arith.subf %170, %173 : vector<8x8xf32>
    %175 = math.exp %174 : vector<8x8xf32>
    %cst_80 = arith.constant dense<0.000000e+00> : vector<8xf32>
    %176 = vector.multi_reduction <add>, %175, %cst_80 [1] : vector<8x8xf32> to vector<8xf32>
    %177 = vector.shape_cast %176 : vector<8xf32> to vector<8x1xf32>
    %178 = tpu.reciprocal %177 {approx = true} : vector<8x1xf32> -> vector<8x1xf32>
    %179 = vector.broadcast %178 : vector<8x1xf32> to vector<8x8xf32>
    %180 = arith.mulf %175, %179 : vector<8x8xf32>
    %181 = vector.extract_strided_slice %134 {offsets = [0, 16], sizes = [8, 8], strides = [1, 1]} : vector<8x32xf32> to vector<8x8xf32>
    %cst_81 = arith.constant dense<0.000000e+00> : vector<8x8xf32>
    %182 = tpu.matmul %180, %181, %cst_81 {dimension_numbers = #tpu.dot_dimension_numbers<[1], [0], [0], [1], [0, 0, 1, 1], [], []>} : vector<8x8xf32>, vector<8x8xf32>, vector<8x8xf32> -> vector<8x8xf32>
    %183 = vector.extract_strided_slice %129 {offsets = [0, 24], sizes = [8, 8], strides = [1, 1]} : vector<8x32xf32> to vector<8x8xf32>
    %184 = vector.extract_strided_slice %133 {offsets = [0, 24], sizes = [8, 8], strides = [1, 1]} : vector<8x32xf32> to vector<8x8xf32>
    "tpu.trace_start"() <{level = 10 : i32, message = "qd,kd->qk"}> : () -> ()
    %cst_82 = arith.constant dense<0.000000e+00> : vector<8x8xf32>
    %185 = tpu.matmul %183, %184, %cst_82 {dimension_numbers = #tpu.dot_dimension_numbers<[1], [1], [0], [0], [0, 0, 1, 0], [], []>} : vector<8x8xf32>, vector<8x8xf32>, vector<8x8xf32> -> vector<8x8xf32>
    "tpu.trace_stop"() : () -> ()
    %186 = arith.addf %185, %116 : vector<8x8xf32>
    %cst_83 = arith.constant dense<0xFF800000> : vector<8xf32>
    %187 = vector.multi_reduction <maximumf>, %186, %cst_83 [1] : vector<8x8xf32> to vector<8xf32>
    %188 = vector.shape_cast %187 : vector<8xf32> to vector<8x1xf32>
    %189 = vector.broadcast %188 : vector<8x1xf32> to vector<8x8xf32>
    %190 = arith.subf %186, %189 : vector<8x8xf32>
    %191 = math.exp %190 : vector<8x8xf32>
    %cst_84 = arith.constant dense<0.000000e+00> : vector<8xf32>
    %192 = vector.multi_reduction <add>, %191, %cst_84 [1] : vector<8x8xf32> to vector<8xf32>
    %193 = vector.shape_cast %192 : vector<8xf32> to vector<8x1xf32>
    %194 = tpu.reciprocal %193 {approx = true} : vector<8x1xf32> -> vector<8x1xf32>
    %195 = vector.broadcast %194 : vector<8x1xf32> to vector<8x8xf32>
    %196 = arith.mulf %191, %195 : vector<8x8xf32>
    %197 = vector.extract_strided_slice %134 {offsets = [0, 24], sizes = [8, 8], strides = [1, 1]} : vector<8x32xf32> to vector<8x8xf32>
    %cst_85 = arith.constant dense<0.000000e+00> : vector<8x8xf32>
    %198 = tpu.matmul %196, %197, %cst_85 {dimension_numbers = #tpu.dot_dimension_numbers<[1], [0], [0], [1], [0, 0, 1, 1], [], []>} : vector<8x8xf32>, vector<8x8xf32>, vector<8x8xf32> -> vector<8x8xf32>
    %199 = tpu.concatenate %150, %166, %182, %198 in 1 : vector<8x8xf32>, vector<8x8xf32>, vector<8x8xf32>, vector<8x8xf32> -> vector<8x32xf32>
    %cst_86 = arith.constant dense<0.000000e+00> : vector<8x32xf32>
    %200 = tpu.matmul %199, %121, %cst_86 {dimension_numbers = #tpu.dot_dimension_numbers<[1], [0], [0], [1], [0, 0, 1, 1], [], []>} : vector<8x32xf32>, vector<32x32xf32>, vector<8x32xf32> -> vector<8x32xf32>
    %201 = vector.broadcast %122 : vector<1x32xf32> to vector<8x32xf32>
    %202 = arith.addf %200, %201 : vector<8x32xf32>
    %203 = arith.addf %114, %202 : vector<8x32xf32>
    %cst_87 = arith.constant dense<0.000000e+00> : vector<8xf32>
    %204 = vector.multi_reduction <add>, %203, %cst_87 [1] : vector<8x32xf32> to vector<8xf32>
    %205 = vector.shape_cast %204 : vector<8xf32> to vector<8x1xf32>
    %cst_88 = arith.constant 3.200000e+01 : f32
    %206 = vector.broadcast %cst_88 : f32 to vector<8x1xf32>
    %207 = arith.divf %205, %206 : vector<8x1xf32>
    %208 = vector.broadcast %207 : vector<8x1xf32> to vector<8x32xf32>
    %209 = arith.subf %203, %208 : vector<8x32xf32>
    %210 = arith.mulf %209, %209 : vector<8x32xf32>
    %cst_89 = arith.constant dense<0.000000e+00> : vector<8xf32>
    %211 = vector.multi_reduction <add>, %210, %cst_89 [1] : vector<8x32xf32> to vector<8xf32>
    %212 = vector.shape_cast %211 : vector<8xf32> to vector<8x1xf32>
    %cst_90 = arith.constant 3.200000e+01 : f32
    %213 = vector.broadcast %cst_90 : f32 to vector<8x1xf32>
    %214 = arith.divf %212, %213 : vector<8x1xf32>
    %215 = vector.broadcast %207 : vector<8x1xf32> to vector<8x32xf32>
    %216 = arith.subf %203, %215 : vector<8x32xf32>
    %cst_91 = arith.constant 9.99999996E-13 : f32
    %217 = vector.broadcast %cst_91 : f32 to vector<8x1xf32>
    %218 = arith.addf %214, %217 : vector<8x1xf32>
    %219 = math.rsqrt %218 : vector<8x1xf32>
    %220 = vector.broadcast %219 : vector<8x1xf32> to vector<8x32xf32>
    %221 = arith.mulf %216, %220 : vector<8x32xf32>
    %222 = vector.broadcast %123 : vector<1x32xf32> to vector<8x32xf32>
    %223 = arith.mulf %221, %222 : vector<8x32xf32>
    %224 = vector.broadcast %124 : vector<1x32xf32> to vector<8x32xf32>
    %225 = arith.addf %223, %224 : vector<8x32xf32>
    %c0_92 = arith.constant 0 : index
    %c0_93 = arith.constant 0 : index
    %226 = vector.load %arg21[%c0_92, %c0_93] : memref<32x64xf32, #tpu.memory_space<vmem>>, vector<32x64xf32>
    %cst_94 = arith.constant dense<0.000000e+00> : vector<8x64xf32>
    %227 = tpu.matmul %225, %226, %cst_94 {dimension_numbers = #tpu.dot_dimension_numbers<[1], [0], [0], [1], [0, 0, 1, 1], [], []>} : vector<8x32xf32>, vector<32x64xf32>, vector<8x64xf32> -> vector<8x64xf32>
    %c0_95 = arith.constant 0 : index
    %c0_96 = arith.constant 0 : index
    %228 = vector.load %arg22[%c0_95, %c0_96] : memref<1x64xf32, #tpu.memory_space<vmem>>, vector<1x64xf32>
    %229 = vector.broadcast %228 : vector<1x64xf32> to vector<8x64xf32>
    %230 = arith.addf %227, %229 : vector<8x64xf32>
    %cst_97 = arith.constant 0.000000e+00 : f32
    %231 = vector.broadcast %cst_97 : f32 to vector<8x64xf32>
    %232 = arith.maximumf %230, %231 : vector<8x64xf32>
    %c0_98 = arith.constant 0 : index
    %c0_99 = arith.constant 0 : index
    %233 = vector.load %arg23[%c0_98, %c0_99] : memref<64x32xf32, #tpu.memory_space<vmem>>, vector<64x32xf32>
    %cst_100 = arith.constant dense<0.000000e+00> : vector<8x32xf32>
    %234 = tpu.matmul %232, %233, %cst_100 {dimension_numbers = #tpu.dot_dimension_numbers<[1], [0], [0], [1], [0, 0, 1, 1], [], []>} : vector<8x64xf32>, vector<64x32xf32>, vector<8x32xf32> -> vector<8x32xf32>
    %235 = arith.addf %225, %234 : vector<8x32xf32>
    %c0_101 = arith.constant 0 : index
    %c0_102 = arith.constant 0 : index
    %236 = vector.load %arg24[%c0_101, %c0_102] : memref<1x32xf32, #tpu.memory_space<vmem>>, vector<1x32xf32>
    %237 = vector.broadcast %236 : vector<1x32xf32> to vector<8x32xf32>
    %238 = arith.addf %235, %237 : vector<8x32xf32>
    %c0_103 = arith.constant 0 : index
    %c0_104 = arith.constant 0 : index
    %239 = vector.load %arg25[%c0_103, %c0_104] : memref<1x32xf32, #tpu.memory_space<vmem>>, vector<1x32xf32>
    %c0_105 = arith.constant 0 : index
    %c0_106 = arith.constant 0 : index
    %240 = vector.load %arg26[%c0_105, %c0_106] : memref<1x32xf32, #tpu.memory_space<vmem>>, vector<1x32xf32>
    %cst_107 = arith.constant dense<0.000000e+00> : vector<8xf32>
    %241 = vector.multi_reduction <add>, %238, %cst_107 [1] : vector<8x32xf32> to vector<8xf32>
    %242 = vector.shape_cast %241 : vector<8xf32> to vector<8x1xf32>
    %cst_108 = arith.constant 3.200000e+01 : f32
    %243 = vector.broadcast %cst_108 : f32 to vector<8x1xf32>
    %244 = arith.divf %242, %243 : vector<8x1xf32>
    %245 = vector.broadcast %244 : vector<8x1xf32> to vector<8x32xf32>
    %246 = arith.subf %238, %245 : vector<8x32xf32>
    %247 = arith.mulf %246, %246 : vector<8x32xf32>
    %cst_109 = arith.constant dense<0.000000e+00> : vector<8xf32>
    %248 = vector.multi_reduction <add>, %247, %cst_109 [1] : vector<8x32xf32> to vector<8xf32>
    %249 = vector.shape_cast %248 : vector<8xf32> to vector<8x1xf32>
    %cst_110 = arith.constant 3.200000e+01 : f32
    %250 = vector.broadcast %cst_110 : f32 to vector<8x1xf32>
    %251 = arith.divf %249, %250 : vector<8x1xf32>
    %252 = vector.broadcast %244 : vector<8x1xf32> to vector<8x32xf32>
    %253 = arith.subf %238, %252 : vector<8x32xf32>
    %cst_111 = arith.constant 9.99999996E-13 : f32
    %254 = vector.broadcast %cst_111 : f32 to vector<8x1xf32>
    %255 = arith.addf %251, %254 : vector<8x1xf32>
    %256 = math.rsqrt %255 : vector<8x1xf32>
    %257 = vector.broadcast %256 : vector<8x1xf32> to vector<8x32xf32>
    %258 = arith.mulf %253, %257 : vector<8x32xf32>
    %259 = vector.broadcast %239 : vector<1x32xf32> to vector<8x32xf32>
    %260 = arith.mulf %258, %259 : vector<8x32xf32>
    %261 = vector.broadcast %240 : vector<1x32xf32> to vector<8x32xf32>
    %262 = arith.addf %260, %261 : vector<8x32xf32>
    %c0_112 = arith.constant 0 : index
    %c0_113 = arith.constant 0 : index
    %c0_114 = arith.constant 0 : index
    %263 = vector.load %arg27[%c0_112, %c0_113, %c0_114] : memref<1x8x32xf32, #tpu.memory_space<vmem>>, vector<1x8x32xf32>
    %264 = vector.shape_cast %263 : vector<1x8x32xf32> to vector<8x32xf32>
    %265 = vector.shape_cast %262 : vector<8x32xf32> to vector<1x8x32xf32>
    tpu.vector_store %arg27[%c0_112, %c0_113, %c0_114], %265 {strides = array<i32>} : memref<1x8x32xf32, #tpu.memory_space<vmem>>, vector<1x8x32xf32>,
    return
  }
  func.func @transform_0(%arg0: i32) -> (i32, i32, i32) {
    %c0_i32 = arith.constant 0 : i32
    %c0_i32_0 = arith.constant 0 : i32
    %c0_i32_1 = arith.constant 0 : i32
    return %arg0, %c0_i32, %c0_i32_0 : i32, i32, i32
  }
  func.func @transform_1(%arg0: i32) -> (i32, i32, i32) {
    %c0_i32 = arith.constant 0 : i32
    %c0_i32_0 = arith.constant 0 : i32
    %c0_i32_1 = arith.constant 0 : i32
    return %arg0, %c0_i32, %c0_i32_0 : i32, i32, i32
  }
  func.func @transform_2(%arg0: i32) -> (i32, i32, i32) {
    %c0_i32 = arith.constant 0 : i32
    %c0_i32_0 = arith.constant 0 : i32
    %c0_i32_1 = arith.constant 0 : i32
    return %arg0, %c0_i32, %c0_i32_0 : i32, i32, i32
  }
  func.func @transform_3(%arg0: i32) -> (i32, i32, i32) {
    %c0_i32 = arith.constant 0 : i32
    %c0_i32_0 = arith.constant 0 : i32
    %c0_i32_1 = arith.constant 0 : i32
    return %arg0, %c0_i32, %c0_i32_0 : i32, i32, i32
  }
  func.func @transform_4(%arg0: i32) -> (i32, i32) {
    %c0_i32 = arith.constant 0 : i32
    %c0_i32_0 = arith.constant 0 : i32
    %c0_i32_1 = arith.constant 0 : i32
    return %c0_i32, %c0_i32_0 : i32, i32
  }
  func.func @transform_5(%arg0: i32) -> (i32, i32) {
    %c0_i32 = arith.constant 0 : i32
    %c0_i32_0 = arith.constant 0 : i32
    %c0_i32_1 = arith.constant 0 : i32
    return %c0_i32, %c0_i32_0 : i32, i32
  }
  func.func @transform_6(%arg0: i32) -> (i32, i32) {
    %c0_i32 = arith.constant 0 : i32
    %c0_i32_0 = arith.constant 0 : i32
    %c0_i32_1 = arith.constant 0 : i32
    return %c0_i32, %c0_i32_0 : i32, i32
  }
  func.func @transform_7(%arg0: i32) -> (i32, i32) {
    %c0_i32 = arith.constant 0 : i32
    %c0_i32_0 = arith.constant 0 : i32
    %c0_i32_1 = arith.constant 0 : i32
    return %c0_i32, %c0_i32_0 : i32, i32
  }
  func.func @transform_8(%arg0: i32) -> (i32, i32) {
    %c0_i32 = arith.constant 0 : i32
    %c0_i32_0 = arith.constant 0 : i32
    %c0_i32_1 = arith.constant 0 : i32
    return %c0_i32, %c0_i32_0 : i32, i32
  }
  func.func @transform_9(%arg0: i32) -> (i32, i32) {
    %c0_i32 = arith.constant 0 : i32
    %c0_i32_0 = arith.constant 0 : i32
    %c0_i32_1 = arith.constant 0 : i32
    return %c0_i32, %c0_i32_0 : i32, i32
  }
  func.func @transform_10(%arg0: i32) -> (i32, i32) {
    %c0_i32 = arith.constant 0 : i32
    %c0_i32_0 = arith.constant 0 : i32
    %c0_i32_1 = arith.constant 0 : i32
    return %c0_i32, %c0_i32_0 : i32, i32
  }
  func.func @transform_11(%arg0: i32) -> (i32, i32) {
    %c0_i32 = arith.constant 0 : i32
    %c0_i32_0 = arith.constant 0 : i32
    %c0_i32_1 = arith.constant 0 : i32
    return %c0_i32, %c0_i32_0 : i32, i32
  }
  func.func @transform_12(%arg0: i32) -> (i32, i32) {
    %c0_i32 = arith.constant 0 : i32
    %c0_i32_0 = arith.constant 0 : i32
    %c0_i32_1 = arith.constant 0 : i32
    return %c0_i32, %c0_i32_0 : i32, i32
  }
  func.func @transform_13(%arg0: i32) -> (i32, i32) {
    %c0_i32 = arith.constant 0 : i32
    %c0_i32_0 = arith.constant 0 : i32
    %c0_i32_1 = arith.constant 0 : i32
    return %c0_i32, %c0_i32_0 : i32, i32
  }
  func.func @transform_14(%arg0: i32) -> (i32, i32) {
    %c0_i32 = arith.constant 0 : i32
    %c0_i32_0 = arith.constant 0 : i32
    %c0_i32_1 = arith.constant 0 : i32
    return %c0_i32, %c0_i32_0 : i32, i32
  }
  func.func @transform_15(%arg0: i32) -> (i32, i32) {
    %c0_i32 = arith.constant 0 : i32
    %c0_i32_0 = arith.constant 0 : i32
    %c0_i32_1 = arith.constant 0 : i32
    return %c0_i32, %c0_i32_0 : i32, i32
  }
  func.func @transform_16(%arg0: i32) -> (i32, i32) {
    %c0_i32 = arith.constant 0 : i32
    %c0_i32_0 = arith.constant 0 : i32
    %c0_i32_1 = arith.constant 0 : i32
    return %c0_i32, %c0_i32_0 : i32, i32
  }
  func.func @transform_17(%arg0: i32) -> (i32, i32) {
    %c0_i32 = arith.constant 0 : i32
    %c0_i32_0 = arith.constant 0 : i32
    %c0_i32_1 = arith.constant 0 : i32
    return %c0_i32, %c0_i32_0 : i32, i32
  }
  func.func @transform_18(%arg0: i32) -> (i32, i32) {
    %c0_i32 = arith.constant 0 : i32
    %c0_i32_0 = arith.constant 0 : i32
    %c0_i32_1 = arith.constant 0 : i32
    return %c0_i32, %c0_i32_0 : i32, i32
  }
  func.func @transform_19(%arg0: i32) -> (i32, i32) {
    %c0_i32 = arith.constant 0 : i32
    %c0_i32_0 = arith.constant 0 : i32
    %c0_i32_1 = arith.constant 0 : i32
    return %c0_i32, %c0_i32_0 : i32, i32
  }
  func.func @transform_20(%arg0: i32) -> (i32, i32) {
    %c0_i32 = arith.constant 0 : i32
    %c0_i32_0 = arith.constant 0 : i32
    %c0_i32_1 = arith.constant 0 : i32
    return %c0_i32, %c0_i32_0 : i32, i32
  }
  func.func @transform_21(%arg0: i32) -> (i32, i32) {
    %c0_i32 = arith.constant 0 : i32
    %c0_i32_0 = arith.constant 0 : i32
    %c0_i32_1 = arith.constant 0 : i32
    return %c0_i32, %c0_i32_0 : i32, i32
  }
  func.func @transform_22(%arg0: i32) -> (i32, i32) {
    %c0_i32 = arith.constant 0 : i32
    %c0_i32_0 = arith.constant 0 : i32
    %c0_i32_1 = arith.constant 0 : i32
    return %c0_i32, %c0_i32_0 : i32, i32
  }
  func.func @transform_23(%arg0: i32) -> (i32, i32) {
    %c0_i32 = arith.constant 0 : i32
    %c0_i32_0 = arith.constant 0 : i32
    %c0_i32_1 = arith.constant 0 : i32
    return %c0_i32, %c0_i32_0 : i32, i32
  }
  func.func @transform_24(%arg0: i32) -> (i32, i32) {
    %c0_i32 = arith.constant 0 : i32
    %c0_i32_0 = arith.constant 0 : i32
    %c0_i32_1 = arith.constant 0 : i32
    return %c0_i32, %c0_i32_0 : i32, i32
  }
  func.func @transform_25(%arg0: i32) -> (i32, i32) {
    %c0_i32 = arith.constant 0 : i32
    %c0_i32_0 = arith.constant 0 : i32
    %c0_i32_1 = arith.constant 0 : i32
    return %c0_i32, %c0_i32_0 : i32, i32
  }
  func.func @transform_26(%arg0: i32) -> (i32, i32, i32) {
    %c0_i32 = arith.constant 0 : i32
    %c0_i32_0 = arith.constant 0 : i32
    %c0_i32_1 = arith.constant 0 : i32
    return %arg0, %c0_i32, %c0_i32_0 : i32, i32, i32
  }
}

module attributes {stable_mosaic.version = 11 : i64} {
  func.func @_decoder_layer_kernel(%arg0: i32, %arg1: memref<1x8x32xf32, #tpu.memory_space<vmem>>, %arg2: memref<1x8x32xf32, #tpu.memory_space<vmem>>, %arg3: memref<1x8x8xf32, #tpu.memory_space<vmem>>, %arg4: memref<1x8x8xf32, #tpu.memory_space<vmem>>, %arg5: memref<32x32xf32, #tpu.memory_space<vmem>>, %arg6: memref<1x32xf32, #tpu.memory_space<vmem>>, %arg7: memref<32x64xf32, #tpu.memory_space<vmem>>, %arg8: memref<1x64xf32, #tpu.memory_space<vmem>>, %arg9: memref<32x32xf32, #tpu.memory_space<vmem>>, %arg10: memref<1x32xf32, #tpu.memory_space<vmem>>, %arg11: memref<1x32xf32, #tpu.memory_space<vmem>>, %arg12: memref<1x32xf32, #tpu.memory_space<vmem>>, %arg13: memref<32x32xf32, #tpu.memory_space<vmem>>, %arg14: memref<1x32xf32, #tpu.memory_space<vmem>>, %arg15: memref<32x64xf32, #tpu.memory_space<vmem>>, %arg16: memref<1x64xf32, #tpu.memory_space<vmem>>, %arg17: memref<32x32xf32, #tpu.memory_space<vmem>>, %arg18: memref<1x32xf32, #tpu.memory_space<vmem>>, %arg19: memref<1x32xf32, #tpu.memory_space<vmem>>, %arg20: memref<1x32xf32, #tpu.memory_space<vmem>>, %arg21: memref<32x64xf32, #tpu.memory_space<vmem>>, %arg22: memref<1x64xf32, #tpu.memory_space<vmem>>, %arg23: memref<64x32xf32, #tpu.memory_space<vmem>>, %arg24: memref<1x32xf32, #tpu.memory_space<vmem>>, %arg25: memref<1x32xf32, #tpu.memory_space<vmem>>, %arg26: memref<1x32xf32, #tpu.memory_space<vmem>>, %arg27: memref<1x8x32xf32, #tpu.memory_space<vmem>>) attributes {dimension_semantics = [#tpu.dimension_semantics<parallel>], iteration_bounds = array<i64: 2>, scalar_prefetch = 0 : i64, scratch_operands = 0 : i64, tpu.core_type = #tpu.core_type<tc>, window_params = [{transform_indices = @transform_0, window_bounds = array<i64: 1, 8, 32>}, {transform_indices = @transform_1, window_bounds = array<i64: 1, 8, 32>}, {transform_indices = @transform_2, window_bounds = array<i64: 1, 8, 8>}, {transform_indices = @transform_3, window_bounds = array<i64: 1, 8, 8>}, {pipeline_mode = #tpu.pipeline_mode<synchronous>, transform_indices = @transform_4, window_bounds = array<i64: 32, 32>}, {pipeline_mode = #tpu.pipeline_mode<synchronous>, transform_indices = @transform_5, window_bounds = array<i64: 1, 32>}, {pipeline_mode = #tpu.pipeline_mode<synchronous>, transform_indices = @transform_6, window_bounds = array<i64: 32, 64>}, {pipeline_mode = #tpu.pipeline_mode<synchronous>, transform_indices = @transform_7, window_bounds = array<i64: 1, 64>}, {pipeline_mode = #tpu.pipeline_mode<synchronous>, transform_indices = @transform_8, window_bounds = array<i64: 32, 32>}, {pipeline_mode = #tpu.pipeline_mode<synchronous>, transform_indices = @transform_9, window_bounds = array<i64: 1, 32>}, {pipeline_mode = #tpu.pipeline_mode<synchronous>, transform_indices = @transform_10, window_bounds = array<i64: 1, 32>}, {pipeline_mode = #tpu.pipeline_mode<synchronous>, transform_indices = @transform_11, window_bounds = array<i64: 1, 32>}, {pipeline_mode = #tpu.pipeline_mode<synchronous>, transform_indices = @transform_12, window_bounds = array<i64: 32, 32>}, {pipeline_mode = #tpu.pipeline_mode<synchronous>, transform_indices = @transform_13, window_bounds = array<i64: 1, 32>}, {pipeline_mode = #tpu.pipeline_mode<synchronous>, transform_indices = @transform_14, window_bounds = array<i64: 32, 64>}, {pipeline_mode = #tpu.pipeline_mode<synchronous>, transform_indices = @transform_15, window_bounds = array<i64: 1, 64>}, {pipeline_mode = #tpu.pipeline_mode<synchronous>, transform_indices = @transform_16, window_bounds = array<i64: 32, 32>}, {pipeline_mode = #tpu.pipeline_mode<synchronous>, transform_indices = @transform_17, window_bounds = array<i64: 1, 32>}, {pipeline_mode = #tpu.pipeline_mode<synchronous>, transform_indices = @transform_18, window_bounds = array<i64: 1, 32>}, {pipeline_mode = #tpu.pipeline_mode<synchronous>, transform_indices = @transform_19, window_bounds = array<i64: 1, 32>}, {pipeline_mode = #tpu.pipeline_mode<synchronous>, transform_indices = @transform_20, window_bounds = array<i64: 32, 64>}, {pipeline_mode = #tpu.pipeline_mode<synchronous>, transform_indices = @transform_21, window_bounds = array<i64: 1, 64>}, {pipeline_mode = #tpu.pipeline_mode<synchronous>, transform_indices = @transform_22, window_bounds = array<i64: 64, 32>}, {pipeline_mode = #tpu.pipeline_mode<synchronous>, transform_indices = @transform_23, window_bounds = array<i64: 1, 32>}, {pipeline_mode = #tpu.pipeline_mode<synchronous>, transform_indices = @transform_24, window_bounds = array<i64: 1, 32>}, {pipeline_mode = #tpu.pipeline_mode<synchronous>, transform_indices = @transform_25, window_bounds = array<i64: 1, 32>}, {transform_indices = @transform_26, window_bounds = array<i64: 1, 8, 32>}]} {
    %c0 = arith.constant 0 : index
    %c0_0 = arith.constant 0 : index
    %c0_1 = arith.constant 0 : index
    %0 = vector.load %arg1[%c0, %c0_0, %c0_1] : memref<1x8x32xf32, #tpu.memory_space<vmem>>, vector<1x8x32xf32>
    %1 = vector.shape_cast %0 : vector<1x8x32xf32> to vector<8x32xf32>
    %c0_2 = arith.constant 0 : index
    %c0_3 = arith.constant 0 : index
    %c0_4 = arith.constant 0 : index
    %2 = vector.load %arg2[%c0_2, %c0_3, %c0_4] : memref<1x8x32xf32, #tpu.memory_space<vmem>>, vector<1x8x32xf32>
    %3 = vector.shape_cast %2 : vector<1x8x32xf32> to vector<8x32xf32>
    %c0_5 = arith.constant 0 : index
    %c0_6 = arith.constant 0 : index
    %c0_7 = arith.constant 0 : index
    %4 = vector.load %arg3[%c0_5, %c0_6, %c0_7] : memref<1x8x8xf32, #tpu.memory_space<vmem>>, vector<1x8x8xf32>
    %5 = vector.shape_cast %4 : vector<1x8x8xf32> to vector<8x8xf32>
    %c0_8 = arith.constant 0 : index
    %c0_9 = arith.constant 0 : index
    %6 = vector.load %arg5[%c0_8, %c0_9] : memref<32x32xf32, #tpu.memory_space<vmem>>, vector<32x32xf32>
    %c0_10 = arith.constant 0 : index
    %c0_11 = arith.constant 0 : index
    %7 = vector.load %arg6[%c0_10, %c0_11] : memref<1x32xf32, #tpu.memory_space<vmem>>, vector<1x32xf32>
    %c0_12 = arith.constant 0 : index
    %c0_13 = arith.constant 0 : index
    %8 = vector.load %arg7[%c0_12, %c0_13] : memref<32x64xf32, #tpu.memory_space<vmem>>, vector<32x64xf32>
    %c0_14 = arith.constant 0 : index
    %c0_15 = arith.constant 0 : index
    %9 = vector.load %arg8[%c0_14, %c0_15] : memref<1x64xf32, #tpu.memory_space<vmem>>, vector<1x64xf32>
    %c0_16 = arith.constant 0 : index
    %c0_17 = arith.constant 0 : index
    %10 = vector.load %arg9[%c0_16, %c0_17] : memref<32x32xf32, #tpu.memory_space<vmem>>, vector<32x32xf32>
    %c0_18 = arith.constant 0 : index
    %c0_19 = arith.constant 0 : index
    %11 = vector.load %arg10[%c0_18, %c0_19] : memref<1x32xf32, #tpu.memory_space<vmem>>, vector<1x32xf32>
    %c0_20 = arith.constant 0 : index
    %c0_21 = arith.constant 0 : index
    %12 = vector.load %arg11[%c0_20, %c0_21] : memref<1x32xf32, #tpu.memory_space<vmem>>, vector<1x32xf32>
    %c0_22 = arith.constant 0 : index
    %c0_23 = arith.constant 0 : index
    %13 = vector.load %arg12[%c0_22, %c0_23] : memref<1x32xf32, #tpu.memory_space<vmem>>, vector<1x32xf32>
    %cst = arith.constant dense<0.000000e+00> : vector<8x32xf32>
    %14 = tpu.matmul %1, %6, %cst {dimension_numbers = #tpu.dot_dimension_numbers<[1], [0], [0], [1], [0, 0, 1, 1], [], []>} : vector<8x32xf32>, vector<32x32xf32>, vector<8x32xf32> -> vector<8x32xf32>
    %15 = vector.broadcast %7 : vector<1x32xf32> to vector<8x32xf32>
    %16 = arith.addf %14, %15 : vector<8x32xf32>
    %cst_24 = arith.constant 0.353553385 : f32
    %17 = vector.broadcast %cst_24 : f32 to vector<8x32xf32>
    %18 = arith.mulf %16, %17 : vector<8x32xf32>
    %cst_25 = arith.constant dense<0.000000e+00> : vector<8x64xf32>
    %19 = tpu.matmul %1, %8, %cst_25 {dimension_numbers = #tpu.dot_dimension_numbers<[1], [0], [0], [1], [0, 0, 1, 1], [], []>} : vector<8x32xf32>, vector<32x64xf32>, vector<8x64xf32> -> vector<8x64xf32>
    %20 = vector.broadcast %9 : vector<1x64xf32> to vector<8x64xf32>
    %21 = arith.addf %19, %20 : vector<8x64xf32>
    %22 = vector.extract_strided_slice %21 {offsets = [0, 0], sizes = [8, 32], strides = [1, 1]} : vector<8x64xf32> to vector<8x32xf32>
    %23 = vector.extract_strided_slice %21 {offsets = [0, 32], sizes = [8, 32], strides = [1, 1]} : vector<8x64xf32> to vector<8x32xf32>
    %24 = vector.extract_strided_slice %18 {offsets = [0, 0], sizes = [8, 8], strides = [1, 1]} : vector<8x32xf32> to vector<8x8xf32>
    %25 = vector.extract_strided_slice %22 {offsets = [0, 0], sizes = [8, 8], strides = [1, 1]} : vector<8x32xf32> to vector<8x8xf32>
    "tpu.trace_start"() <{level = 10 : i32, message = "qd,kd->qk"}> : () -> ()
    %cst_26 = arith.constant dense<0.000000e+00> : vector<8x8xf32>
    %26 = tpu.matmul %24, %25, %cst_26 {dimension_numbers = #tpu.dot_dimension_numbers<[1], [1], [0], [0], [0, 0, 1, 0], [], []>} : vector<8x8xf32>, vector<8x8xf32>, vector<8x8xf32> -> vector<8x8xf32>
    "tpu.trace_stop"() : () -> ()
    %27 = arith.addf %26, %5 : vector<8x8xf32>
    %cst_27 = arith.constant dense<0xFF800000> : vector<8xf32>
    %28 = vector.multi_reduction <maximumf>, %27, %cst_27 [1] : vector<8x8xf32> to vector<8xf32>
    %29 = vector.shape_cast %28 : vector<8xf32> to vector<8x1xf32>
    %30 = vector.broadcast %29 : vector<8x1xf32> to vector<8x8xf32>
    %31 = arith.subf %27, %30 : vector<8x8xf32>
    %32 = math.exp %31 : vector<8x8xf32>
    %cst_28 = arith.constant dense<0.000000e+00> : vector<8xf32>
    %33 = vector.multi_reduction <add>, %32, %cst_28 [1] : vector<8x8xf32> to vector<8xf32>
    %34 = vector.shape_cast %33 : vector<8xf32> to vector<8x1xf32>
    %35 = tpu.reciprocal %34 {approx = true} : vector<8x1xf32> -> vector<8x1xf32>
    %36 = vector.broadcast %35 : vector<8x1xf32> to vector<8x8xf32>
    %37 = arith.mulf %32, %36 : vector<8x8xf32>
    %38 = vector.extract_strided_slice %23 {offsets = [0, 0], sizes = [8, 8], strides = [1, 1]} : vector<8x32xf32> to vector<8x8xf32>
    %cst_29 = arith.constant dense<0.000000e+00> : vector<8x8xf32>
    %39 = tpu.matmul %37, %38, %cst_29 {dimension_numbers = #tpu.dot_dimension_numbers<[1], [0], [0], [1], [0, 0, 1, 1], [], []>} : vector<8x8xf32>, vector<8x8xf32>, vector<8x8xf32> -> vector<8x8xf32>
    %40 = vector.extract_strided_slice %18 {offsets = [0, 8], sizes = [8, 8], strides = [1, 1]} : vector<8x32xf32> to vector<8x8xf32>
    %41 = vector.extract_strided_slice %22 {offsets = [0, 8], sizes = [8, 8], strides = [1, 1]} : vector<8x32xf32> to vector<8x8xf32>
    "tpu.trace_start"() <{level = 10 : i32, message = "qd,kd->qk"}> : () -> ()
    %cst_30 = arith.constant dense<0.000000e+00> : vector<8x8xf32>
    %42 = tpu.matmul %40, %41, %cst_30 {dimension_numbers = #tpu.dot_dimension_numbers<[1], [1], [0], [0], [0, 0, 1, 0], [], []>} : vector<8x8xf32>, vector<8x8xf32>, vector<8x8xf32> -> vector<8x8xf32>
    "tpu.trace_stop"() : () -> ()
    %43 = arith.addf %42, %5 : vector<8x8xf32>
    %cst_31 = arith.constant dense<0xFF800000> : vector<8xf32>
    %44 = vector.multi_reduction <maximumf>, %43, %cst_31 [1] : vector<8x8xf32> to vector<8xf32>
    %45 = vector.shape_cast %44 : vector<8xf32> to vector<8x1xf32>
    %46 = vector.broadcast %45 : vector<8x1xf32> to vector<8x8xf32>
    %47 = arith.subf %43, %46 : vector<8x8xf32>
    %48 = math.exp %47 : vector<8x8xf32>
    %cst_32 = arith.constant dense<0.000000e+00> : vector<8xf32>
    %49 = vector.multi_reduction <add>, %48, %cst_32 [1] : vector<8x8xf32> to vector<8xf32>
    %50 = vector.shape_cast %49 : vector<8xf32> to vector<8x1xf32>
    %51 = tpu.reciprocal %50 {approx = true} : vector<8x1xf32> -> vector<8x1xf32>
    %52 = vector.broadcast %51 : vector<8x1xf32> to vector<8x8xf32>
    %53 = arith.mulf %48, %52 : vector<8x8xf32>
    %54 = vector.extract_strided_slice %23 {offsets = [0, 8], sizes = [8, 8], strides = [1, 1]} : vector<8x32xf32> to vector<8x8xf32>
    %cst_33 = arith.constant dense<0.000000e+00> : vector<8x8xf32>
    %55 = tpu.matmul %53, %54, %cst_33 {dimension_numbers = #tpu.dot_dimension_numbers<[1], [0], [0], [1], [0, 0, 1, 1], [], []>} : vector<8x8xf32>, vector<8x8xf32>, vector<8x8xf32> -> vector<8x8xf32>
    %56 = vector.extract_strided_slice %18 {offsets = [0, 16], sizes = [8, 8], strides = [1, 1]} : vector<8x32xf32> to vector<8x8xf32>
    %57 = vector.extract_strided_slice %22 {offsets = [0, 16], sizes = [8, 8], strides = [1, 1]} : vector<8x32xf32> to vector<8x8xf32>
    "tpu.trace_start"() <{level = 10 : i32, message = "qd,kd->qk"}> : () -> ()
    %cst_34 = arith.constant dense<0.000000e+00> : vector<8x8xf32>
    %58 = tpu.matmul %56, %57, %cst_34 {dimension_numbers = #tpu.dot_dimension_numbers<[1], [1], [0], [0], [0, 0, 1, 0], [], []>} : vector<8x8xf32>, vector<8x8xf32>, vector<8x8xf32> -> vector<8x8xf32>
    "tpu.trace_stop"() : () -> ()
    %59 = arith.addf %58, %5 : vector<8x8xf32>
    %cst_35 = arith.constant dense<0xFF800000> : vector<8xf32>
    %60 = vector.multi_reduction <maximumf>, %59, %cst_35 [1] : vector<8x8xf32> to vector<8xf32>
    %61 = vector.shape_cast %60 : vector<8xf32> to vector<8x1xf32>
    %62 = vector.broadcast %61 : vector<8x1xf32> to vector<8x8xf32>
    %63 = arith.subf %59, %62 : vector<8x8xf32>
    %64 = math.exp %63 : vector<8x8xf32>
    %cst_36 = arith.constant dense<0.000000e+00> : vector<8xf32>
    %65 = vector.multi_reduction <add>, %64, %cst_36 [1] : vector<8x8xf32> to vector<8xf32>
    %66 = vector.shape_cast %65 : vector<8xf32> to vector<8x1xf32>
    %67 = tpu.reciprocal %66 {approx = true} : vector<8x1xf32> -> vector<8x1xf32>
    %68 = vector.broadcast %67 : vector<8x1xf32> to vector<8x8xf32>
    %69 = arith.mulf %64, %68 : vector<8x8xf32>
    %70 = vector.extract_strided_slice %23 {offsets = [0, 16], sizes = [8, 8], strides = [1, 1]} : vector<8x32xf32> to vector<8x8xf32>
    %cst_37 = arith.constant dense<0.000000e+00> : vector<8x8xf32>
    %71 = tpu.matmul %69, %70, %cst_37 {dimension_numbers = #tpu.dot_dimension_numbers<[1], [0], [0], [1], [0, 0, 1, 1], [], []>} : vector<8x8xf32>, vector<8x8xf32>, vector<8x8xf32> -> vector<8x8xf32>
    %72 = vector.extract_strided_slice %18 {offsets = [0, 24], sizes = [8, 8], strides = [1, 1]} : vector<8x32xf32> to vector<8x8xf32>
    %73 = vector.extract_strided_slice %22 {offsets = [0, 24], sizes = [8, 8], strides = [1, 1]} : vector<8x32xf32> to vector<8x8xf32>
    "tpu.trace_start"() <{level = 10 : i32, message = "qd,kd->qk"}> : () -> ()
    %cst_38 = arith.constant dense<0.000000e+00> : vector<8x8xf32>
    %74 = tpu.matmul %72, %73, %cst_38 {dimension_numbers = #tpu.dot_dimension_numbers<[1], [1], [0], [0], [0, 0, 1, 0], [], []>} : vector<8x8xf32>, vector<8x8xf32>, vector<8x8xf32> -> vector<8x8xf32>
    "tpu.trace_stop"() : () -> ()
    %75 = arith.addf %74, %5 : vector<8x8xf32>
    %cst_39 = arith.constant dense<0xFF800000> : vector<8xf32>
    %76 = vector.multi_reduction <maximumf>, %75, %cst_39 [1] : vector<8x8xf32> to vector<8xf32>
    %77 = vector.shape_cast %76 : vector<8xf32> to vector<8x1xf32>
    %78 = vector.broadcast %77 : vector<8x1xf32> to vector<8x8xf32>
    %79 = arith.subf %75, %78 : vector<8x8xf32>
    %80 = math.exp %79 : vector<8x8xf32>
    %cst_40 = arith.constant dense<0.000000e+00> : vector<8xf32>
    %81 = vector.multi_reduction <add>, %80, %cst_40 [1] : vector<8x8xf32> to vector<8xf32>
    %82 = vector.shape_cast %81 : vector<8xf32> to vector<8x1xf32>
    %83 = tpu.reciprocal %82 {approx = true} : vector<8x1xf32> -> vector<8x1xf32>
    %84 = vector.broadcast %83 : vector<8x1xf32> to vector<8x8xf32>
    %85 = arith.mulf %80, %84 : vector<8x8xf32>
    %86 = vector.extract_strided_slice %23 {offsets = [0, 24], sizes = [8, 8], strides = [1, 1]} : vector<8x32xf32> to vector<8x8xf32>
    %cst_41 = arith.constant dense<0.000000e+00> : vector<8x8xf32>
    %87 = tpu.matmul %85, %86, %cst_41 {dimension_numbers = #tpu.dot_dimension_numbers<[1], [0], [0], [1], [0, 0, 1, 1], [], []>} : vector<8x8xf32>, vector<8x8xf32>, vector<8x8xf32> -> vector<8x8xf32>
    %88 = tpu.concatenate %39, %55, %71, %87 in 1 : vector<8x8xf32>, vector<8x8xf32>, vector<8x8xf32>, vector<8x8xf32> -> vector<8x32xf32>
    %cst_42 = arith.constant dense<0.000000e+00> : vector<8x32xf32>
    %89 = tpu.matmul %88, %10, %cst_42 {dimension_numbers = #tpu.dot_dimension_numbers<[1], [0], [0], [1], [0, 0, 1, 1], [], []>} : vector<8x32xf32>, vector<32x32xf32>, vector<8x32xf32> -> vector<8x32xf32>
    %90 = vector.broadcast %11 : vector<1x32xf32> to vector<8x32xf32>
    %91 = arith.addf %89, %90 : vector<8x32xf32>
    %92 = arith.addf %1, %91 : vector<8x32xf32>
    %cst_43 = arith.constant dense<0.000000e+00> : vector<8xf32>
    %93 = vector.multi_reduction <add>, %92, %cst_43 [1] : vector<8x32xf32> to vector<8xf32>
    %94 = vector.shape_cast %93 : vector<8xf32> to vector<8x1xf32>
    %cst_44 = arith.constant 3.200000e+01 : f32
    %95 = vector.broadcast %cst_44 : f32 to vector<8x1xf32>
    %96 = arith.divf %94, %95 : vector<8x1xf32>
    %97 = vector.broadcast %96 : vector<8x1xf32> to vector<8x32xf32>
    %98 = arith.subf %92, %97 : vector<8x32xf32>
    %99 = arith.mulf %98, %98 : vector<8x32xf32>
    %cst_45 = arith.constant dense<0.000000e+00> : vector<8xf32>
    %100 = vector.multi_reduction <add>, %99, %cst_45 [1] : vector<8x32xf32> to vector<8xf32>
    %101 = vector.shape_cast %100 : vector<8xf32> to vector<8x1xf32>
    %cst_46 = arith.constant 3.200000e+01 : f32
    %102 = vector.broadcast %cst_46 : f32 to vector<8x1xf32>
    %103 = arith.divf %101, %102 : vector<8x1xf32>
    %104 = vector.broadcast %96 : vector<8x1xf32> to vector<8x32xf32>
    %105 = arith.subf %92, %104 : vector<8x32xf32>
    %cst_47 = arith.constant 9.99999996E-13 : f32
    %106 = vector.broadcast %cst_47 : f32 to vector<8x1xf32>
    %107 = arith.addf %103, %106 : vector<8x1xf32>
    %108 = math.rsqrt %107 : vector<8x1xf32>
    %109 = vector.broadcast %108 : vector<8x1xf32> to vector<8x32xf32>
    %110 = arith.mulf %105, %109 : vector<8x32xf32>
    %111 = vector.broadcast %12 : vector<1x32xf32> to vector<8x32xf32>
    %112 = arith.mulf %110, %111 : vector<8x32xf32>
    %113 = vector.broadcast %13 : vector<1x32xf32> to vector<8x32xf32>
    %114 = arith.addf %112, %113 : vector<8x32xf32>
    %c0_48 = arith.constant 0 : index
    %c0_49 = arith.constant 0 : index
    %c0_50 = arith.constant 0 : index
    %115 = vector.load %arg4[%c0_48, %c0_49, %c0_50] : memref<1x8x8xf32, #tpu.memory_space<vmem>>, vector<1x8x8xf32>
    %116 = vector.shape_cast %115 : vector<1x8x8xf32> to vector<8x8xf32>
    %c0_51 = arith.constant 0 : index
    %c0_52 = arith.constant 0 : index
    %117 = vector.load %arg13[%c0_51, %c0_52] : memref<32x32xf32, #tpu.memory_space<vmem>>, vector<32x32xf32>
    %c0_53 = arith.constant 0 : index
    %c0_54 = arith.constant 0 : index
    %118 = vector.load %arg14[%c0_53, %c0_54] : memref<1x32xf32, #tpu.memory_space<vmem>>, vector<1x32xf32>
    %c0_55 = arith.constant 0 : index
    %c0_56 = arith.constant 0 : index
    %119 = vector.load %arg15[%c0_55, %c0_56] : memref<32x64xf32, #tpu.memory_space<vmem>>, vector<32x64xf32>
    %c0_57 = arith.constant 0 : index
    %c0_58 = arith.constant 0 : index
    %120 = vector.load %arg16[%c0_57, %c0_58] : memref<1x64xf32, #tpu.memory_space<vmem>>, vector<1x64xf32>
    %c0_59 = arith.constant 0 : index
    %c0_60 = arith.constant 0 : index
    %121 = vector.load %arg17[%c0_59, %c0_60] : memref<32x32xf32, #tpu.memory_space<vmem>>, vector<32x32xf32>
    %c0_61 = arith.constant 0 : index
    %c0_62 = arith.constant 0 : index
    %122 = vector.load %arg18[%c0_61, %c0_62] : memref<1x32xf32, #tpu.memory_space<vmem>>, vector<1x32xf32>
    %c0_63 = arith.constant 0 : index
    %c0_64 = arith.constant 0 : index
    %123 = vector.load %arg19[%c0_63, %c0_64] : memref<1x32xf32, #tpu.memory_space<vmem>>, vector<1x32xf32>
    %c0_65 = arith.constant 0 : index
    %c0_66 = arith.constant 0 : index
    %124 = vector.load %arg20[%c0_65, %c0_66] : memref<1x32xf32, #tpu.memory_space<vmem>>, vector<1x32xf32>
    %cst_67 = arith.constant dense<0.000000e+00> : vector<8x32xf32>
    %125 = tpu.matmul %114, %117, %cst_67 {dimension_numbers = #tpu.dot_dimension_numbers<[1], [0], [0], [1], [0, 0, 1, 1], [], []>} : vector<8x32xf32>, vector<32x32xf32>, vector<8x32xf32> -> vector<8x32xf32>
    %126 = vector.broadcast %118 : vector<1x32xf32> to vector<8x32xf32>
    %127 = arith.addf %125, %126 : vector<8x32xf32>
    %cst_68 = arith.constant 0.353553385 : f32
    %128 = vector.broadcast %cst_68 : f32 to vector<8x32xf32>
    %129 = arith.mulf %127, %128 : vector<8x32xf32>
    %cst_69 = arith.constant dense<0.000000e+00> : vector<8x64xf32>
    %130 = tpu.matmul %3, %119, %cst_69 {dimension_numbers = #tpu.dot_dimension_numbers<[1], [0], [0], [1], [0, 0, 1, 1], [], []>} : vector<8x32xf32>, vector<32x64xf32>, vector<8x64xf32> -> vector<8x64xf32>
    %131 = vector.broadcast %120 : vector<1x64xf32> to vector<8x64xf32>
    %132 = arith.addf %130, %131 : vector<8x64xf32>
    %133 = vector.extract_strided_slice %132 {offsets = [0, 0], sizes = [8, 32], strides = [1, 1]} : vector<8x64xf32> to vector<8x32xf32>
    %134 = vector.extract_strided_slice %132 {offsets = [0, 32], sizes = [8, 32], strides = [1, 1]} : vector<8x64xf32> to vector<8x32xf32>
    %135 = vector.extract_strided_slice %129 {offsets = [0, 0], sizes = [8, 8], strides = [1, 1]} : vector<8x32xf32> to vector<8x8xf32>
    %136 = vector.extract_strided_slice %133 {offsets = [0, 0], sizes = [8, 8], strides = [1, 1]} : vector<8x32xf32> to vector<8x8xf32>
    "tpu.trace_start"() <{level = 10 : i32, message = "qd,kd->qk"}> : () -> ()
    %cst_70 = arith.constant dense<0.000000e+00> : vector<8x8xf32>
    %137 = tpu.matmul %135, %136, %cst_70 {dimension_numbers = #tpu.dot_dimension_numbers<[1], [1], [0], [0], [0, 0, 1, 0], [], []>} : vector<8x8xf32>, vector<8x8xf32>, vector<8x8xf32> -> vector<8x8xf32>
    "tpu.trace_stop"() : () -> ()
    %138 = arith.addf %137, %116 : vector<8x8xf32>
    %cst_71 = arith.constant dense<0xFF800000> : vector<8xf32>
    %139 = vector.multi_reduction <maximumf>, %138, %cst_71 [1] : vector<8x8xf32> to vector<8xf32>
    %140 = vector.shape_cast %139 : vector<8xf32> to vector<8x1xf32>
    %141 = vector.broadcast %140 : vector<8x1xf32> to vector<8x8xf32>
    %142 = arith.subf %138, %141 : vector<8x8xf32>
    %143 = math.exp %142 : vector<8x8xf32>
    %cst_72 = arith.constant dense<0.000000e+00> : vector<8xf32>
    %144 = vector.multi_reduction <add>, %143, %cst_72 [1] : vector<8x8xf32> to vector<8xf32>
    %145 = vector.shape_cast %144 : vector<8xf32> to vector<8x1xf32>
    %146 = tpu.reciprocal %145 {approx = true} : vector<8x1xf32> -> vector<8x1xf32>
    %147 = vector.broadcast %146 : vector<8x1xf32> to vector<8x8xf32>
    %148 = arith.mulf %143, %147 : vector<8x8xf32>
    %149 = vector.extract_strided_slice %134 {offsets = [0, 0], sizes = [8, 8], strides = [1, 1]} : vector<8x32xf32> to vector<8x8xf32>
    %cst_73 = arith.constant dense<0.000000e+00> : vector<8x8xf32>
    %150 = tpu.matmul %148, %149, %cst_73 {dimension_numbers = #tpu.dot_dimension_numbers<[1], [0], [0], [1], [0, 0, 1, 1], [], []>} : vector<8x8xf32>, vector<8x8xf32>, vector<8x8xf32> -> vector<8x8xf32>
    %151 = vector.extract_strided_slice %129 {offsets = [0, 8], sizes = [8, 8], strides = [1, 1]} : vector<8x32xf32> to vector<8x8xf32>
    %152 = vector.extract_strided_slice %133 {offsets = [0, 8], sizes = [8, 8], strides = [1, 1]} : vector<8x32xf32> to vector<8x8xf32>
    "tpu.trace_start"() <{level = 10 : i32, message = "qd,kd->qk"}> : () -> ()
    %cst_74 = arith.constant dense<0.000000e+00> : vector<8x8xf32>
    %153 = tpu.matmul %151, %152, %cst_74 {dimension_numbers = #tpu.dot_dimension_numbers<[1], [1], [0], [0], [0, 0, 1, 0], [], []>} : vector<8x8xf32>, vector<8x8xf32>, vector<8x8xf32> -> vector<8x8xf32>
    "tpu.trace_stop"() : () -> ()
    %154 = arith.addf %153, %116 : vector<8x8xf32>
    %cst_75 = arith.constant dense<0xFF800000> : vector<8xf32>
    %155 = vector.multi_reduction <maximumf>, %154, %cst_75 [1] : vector<8x8xf32> to vector<8xf32>
    %156 = vector.shape_cast %155 : vector<8xf32> to vector<8x1xf32>
    %157 = vector.broadcast %156 : vector<8x1xf32> to vector<8x8xf32>
    %158 = arith.subf %154, %157 : vector<8x8xf32>
    %159 = math.exp %158 : vector<8x8xf32>
    %cst_76 = arith.constant dense<0.000000e+00> : vector<8xf32>
    %160 = vector.multi_reduction <add>, %159, %cst_76 [1] : vector<8x8xf32> to vector<8xf32>
    %161 = vector.shape_cast %160 : vector<8xf32> to vector<8x1xf32>
    %162 = tpu.reciprocal %161 {approx = true} : vector<8x1xf32> -> vector<8x1xf32>
    %163 = vector.broadcast %162 : vector<8x1xf32> to vector<8x8xf32>
    %164 = arith.mulf %159, %163 : vector<8x8xf32>
    %165 = vector.extract_strided_slice %134 {offsets = [0, 8], sizes = [8, 8], strides = [1, 1]} : vector<8x32xf32> to vector<8x8xf32>
    %cst_77 = arith.constant dense<0.000000e+00> : vector<8x8xf32>
    %166 = tpu.matmul %164, %165, %cst_77 {dimension_numbers = #tpu.dot_dimension_numbers<[1], [0], [0], [1], [0, 0, 1, 1], [], []>} : vector<8x8xf32>, vector<8x8xf32>, vector<8x8xf32> -> vector<8x8xf32>
    %167 = vector.extract_strided_slice %129 {offsets = [0, 16], sizes = [8, 8], strides = [1, 1]} : vector<8x32xf32> to vector<8x8xf32>
    %168 = vector.extract_strided_slice %133 {offsets = [0, 16], sizes = [8, 8], strides = [1, 1]} : vector<8x32xf32> to vector<8x8xf32>
    "tpu.trace_start"() <{level = 10 : i32, message = "qd,kd->qk"}> : () -> ()
    %cst_78 = arith.constant dense<0.000000e+00> : vector<8x8xf32>
    %169 = tpu.matmul %167, %168, %cst_78 {dimension_numbers = #tpu.dot_dimension_numbers<[1], [1], [0], [0], [0, 0, 1, 0], [], []>} : vector<8x8xf32>, vector<8x8xf32>, vector<8x8xf32> -> vector<8x8xf32>
    "tpu.trace_stop"() : () -> ()
    %170 = arith.addf %169, %116 : vector<8x8xf32>
    %cst_79 = arith.constant dense<0xFF800000> : vector<8xf32>
    %171 = vector.multi_reduction <maximumf>, %170, %cst_79 [1] : vector<8x8xf32> to vector<8xf32>
    %172 = vector.shape_cast %171 : vector<8xf32> to vector<8x1xf32>
    %173 = vector.broadcast %172 : vector<8x1xf32> to vector<8x8xf32>
    %174 = arith.subf %170, %173 : vector<8x8xf32>
    %175 = math.exp %174 : vector<8x8xf32>
    %cst_80 = arith.constant dense<0.000000e+00> : vector<8xf32>
    %176 = vector.multi_reduction <add>, %175, %cst_80 [1] : vector<8x8xf32> to vector<8xf32>
    %177 = vector.shape_cast %176 : vector<8xf32> to vector<8x1xf32>
    %178 = tpu.reciprocal %177 {approx = true} : vector<8x1xf32> -> vector<8x1xf32>
    %179 = vector.broadcast %178 : vector<8x1xf32> to vector<8x8xf32>
    %180 = arith.mulf %175, %179 : vector<8x8xf32>
    %181 = vector.extract_strided_slice %134 {offsets = [0, 16], sizes = [8, 8], strides = [1, 1]} : vector<8x32xf32> to vector<8x8xf32>
    %cst_81 = arith.constant dense<0.000000e+00> : vector<8x8xf32>
    %182 = tpu.matmul %180, %181, %cst_81 {dimension_numbers = #tpu.dot_dimension_numbers<[1], [0], [0], [1], [0, 0, 1, 1], [], []>} : vector<8x8xf32>, vector<8x8xf32>, vector<8x8xf32> -> vector<8x8xf32>
    %183 = vector.extract_strided_slice %129 {offsets = [0, 24], sizes = [8, 8], strides = [1, 1]} : vector<8x32xf32> to vector<8x8xf32>
    %184 = vector.extract_strided_slice %133 {offsets = [0, 24], sizes = [8, 8], strides = [1, 1]} : vector<8x32xf32> to vector<8x8xf32>
    "tpu.trace_start"() <{level = 10 : i32, message = "qd,kd->qk"}> : () -> ()
    %cst_82 = arith.constant dense<0.000000e+00> : vector<8x8xf32>
    %185 = tpu.matmul %183, %184, %cst_82 {dimension_numbers = #tpu.dot_dimension_numbers<[1], [1], [0], [0], [0, 0, 1, 0], [], []>} : vector<8x8xf32>, vector<8x8xf32>, vector<8x8xf32> -> vector<8x8xf32>
    "tpu.trace_stop"() : () -> ()
    %186 = arith.addf %185, %116 : vector<8x8xf32>
    %cst_83 = arith.constant dense<0xFF800000> : vector<8xf32>
    %187 = vector.multi_reduction <maximumf>, %186, %cst_83 [1] : vector<8x8xf32> to vector<8xf32>
    %188 = vector.shape_cast %187 : vector<8xf32> to vector<8x1xf32>
    %189 = vector.broadcast %188 : vector<8x1xf32> to vector<8x8xf32>
    %190 = arith.subf %186, %189 : vector<8x8xf32>
    %191 = math.exp %190 : vector<8x8xf32>
    %cst_84 = arith.constant dense<0.000000e+00> : vector<8xf32>
    %192 = vector.multi_reduction <add>, %191, %cst_84 [1] : vector<8x8xf32> to vector<8xf32>
    %193 = vector.shape_cast %192 : vector<8xf32> to vector<8x1xf32>
    %194 = tpu.reciprocal %193 {approx = true} : vector<8x1xf32> -> vector<8x1xf32>
    %195 = vector.broadcast %194 : vector<8x1xf32> to vector<8x8xf32>
    %196 = arith.mulf %191, %195 : vector<8x8xf32>
    %197 = vector.extract_strided_slice %134 {offsets = [0, 24], sizes = [8, 8], strides = [1, 1]} : vector<8x32xf32> to vector<8x8xf32>
    %cst_85 = arith.constant dense<0.000000e+00> : vector<8x8xf32>
    %198 = tpu.matmul %196, %197, %cst_85 {dimension_numbers = #tpu.dot_dimension_numbers<[1], [0], [0], [1], [0, 0, 1, 1], [], []>} : vector<8x8xf32>, vector<8x8xf32>, vector<8x8xf32> -> vector<8x8xf32>
    %199 = tpu.concatenate %150, %166, %182, %198 in 1 : vector<8x8xf32>, vector<8x8xf32>, vector<8x8xf32>, vector<8x8xf32> -> vector<8x32xf32>
    %cst_86 = arith.constant dense<0.000000e+00> : vector<8x32xf32>
    %200 = tpu.matmul %199, %121, %cst_86 {dimension_numbers = #tpu.dot_dimension_numbers<[1], [0], [0], [1], [0, 0, 1, 1], [], []>} : vector<8x32xf32>, vector<32x32xf32>, vector<8x32xf32> -> vector<8x32xf32>
    %201 = vector.broadcast %122 : vector<1x32xf32> to vector<8x32xf32>
    %202 = arith.addf %200, %201 : vector<8x32xf32>
    %203 = arith.addf %114, %202 : vector<8x32xf32>
    %cst_87 = arith.constant dense<0.000000e+00> : vector<8xf32>
    %204 = vector.multi_reduction <add>, %203, %cst_87 [1] : vector<8x32xf32> to vector<8xf32>
    %205 = vector.shape_cast %204 : vector<8xf32> to vector<8x1xf32>
    %cst_88 = arith.constant 3.200000e+01 : f32
    %206 = vector.broadcast %cst_88 : f32 to vector<8x1xf32>
    %207 = arith.divf %205, %206 : vector<8x1xf32>
    %208 = vector.broadcast %207 : vector<8x1xf32> to vector<8x32xf32>
    %209 = arith.subf %203, %208 : vector<8x32xf32>
    %210 = arith.mulf %209, %209 : vector<8x32xf32>
    %cst_89 = arith.constant dense<0.000000e+00> : vector<8xf32>
    %211 = vector.multi_reduction <add>, %210, %cst_89 [1] : vector<8x32xf32> to vector<8xf32>
    %212 = vector.shape_cast %211 : vector<8xf32> to vector<8x1xf32>
    %cst_90 = arith.constant 3.200000e+01 : f32
    %213 = vector.broadcast %cst_90 : f32 to vector<8x1xf32>
    %214 = arith.divf %212, %213 : vector<8x1xf32>
    %215 = vector.broadcast %207 : vector<8x1xf32> to vector<8x32xf32>
    %216 = arith.subf %203, %215 : vector<8x32xf32>
    %cst_91 = arith.constant 9.99999996E-13 : f32
    %217 = vector.broadcast %cst_91 : f32 to vector<8x1xf32>
    %218 = arith.addf %214, %217 : vector<8x1xf32>
    %219 = math.rsqrt %218 : vector<8x1xf32>
    %220 = vector.broadcast %219 : vector<8x1xf32> to vector<8x32xf32>
    %221 = arith.mulf %216, %220 : vector<8x32xf32>
    %222 = vector.broadcast %123 : vector<1x32xf32> to vector<8x32xf32>
    %223 = arith.mulf %221, %222 : vector<8x32xf32>
    %224 = vector.broadcast %124 : vector<1x32xf32> to vector<8x32xf32>
    %225 = arith.addf %223, %224 : vector<8x32xf32>
    %c0_92 = arith.constant 0 : index
    %c0_93 = arith.constant 0 : index
    %226 = vector.load %arg21[%c0_92, %c0_93] : memref<32x64xf32, #tpu.memory_space<vmem>>, vector<32x64xf32>
    %cst_94 = arith.constant dense<0.000000e+00> : vector<8x64xf32>
    %227 = tpu.matmul %225, %226, %cst_94 {dimension_numbers = #tpu.dot_dimension_numbers<[1], [0], [0], [1], [0, 0, 1, 1], [], []>} : vector<8x32xf32>, vector<32x64xf32>, vector<8x64xf32> -> vector<8x64xf32>
    %c0_95 = arith.constant 0 : index
    %c0_96 = arith.constant 0 : index
    %228 = vector.load %arg22[%c0_95, %c0_96] : memref<1x64xf32, #tpu.memory_space<vmem>>, vector<1x64xf32>
    %229 = vector.broadcast %228 : vector<1x64xf32> to vector<8x64xf32>
    %230 = arith.addf %227, %229 : vector<8x64xf32>
    %cst_97 = arith.constant 0.000000e+00 : f32
    %231 = vector.broadcast %cst_97 : f32 to vector<8x64xf32>
    %232 = arith.maximumf %230, %231 : vector<8x64xf32>
    %c0_98 = arith.constant 0 : index
    %c0_99 = arith.constant 0 : index
    %233 = vector.load %arg23[%c0_98, %c0_99] : memref<64x32xf32, #tpu.memory_space<vmem>>, vector<64x32xf32>
    %cst_100 = arith.constant dense<0.000000e+00> : vector<8x32xf32>
    %234 = tpu.matmul %232, %233, %cst_100 {dimension_numbers = #tpu.dot_dimension_numbers<[1], [0], [0], [1], [0, 0, 1, 1], [], []>} : vector<8x64xf32>, vector<64x32xf32>, vector<8x32xf32> -> vector<8x32xf32>
    %235 = arith.addf %225, %234 : vector<8x32xf32>
    %c0_101 = arith.constant 0 : index
    %c0_102 = arith.constant 0 : index
    %236 = vector.load %arg24[%c0_101, %c0_102] : memref<1x32xf32, #tpu.memory_space<vmem>>, vector<1x32xf32>
    %237 = vector.broadcast %236 : vector<1x32xf32> to vector<8x32xf32>
    %238 = arith.addf %235, %237 : vector<8x32xf32>
    %c0_103 = arith.constant 0 : index
    %c0_104 = arith.constant 0 : index
    %239 = vector.load %arg25[%c0_103, %c0_104] : memref<1x32xf32, #tpu.memory_space<vmem>>, vector<1x32xf32>
    %c0_105 = arith.constant 0 : index
    %c0_106 = arith.constant 0 : index
    %240 = vector.load %arg26[%c0_105, %c0_106] : memref<1x32xf32, #tpu.memory_space<vmem>>, vector<1x32xf32>
    %cst_107 = arith.constant dense<0.000000e+00> : vector<8xf32>
    %241 = vector.multi_reduction <add>, %238, %cst_107 [1] : vector<8x32xf32> to vector<8xf32>
    %242 = vector.shape_cast %241 : vector<8xf32> to vector<8x1xf32>
    %cst_108 = arith.constant 3.200000e+01 : f32
    %243 = vector.broadcast %cst_108 : f32 to vector<8x1xf32>
    %244 = arith.divf %242, %243 : vector<8x1xf32>
    %245 = vector.broadcast %244 : vector<8x1xf32> to vector<8x32xf32>
    %246 = arith.subf %238, %245 : vector<8x32xf32>
    %247 = arith.mulf %246, %246 : vector<8x32xf32>
    %cst_109 = arith.constant dense<0.000000e+00> : vector<8xf32>
    %248 = vector.multi_reduction <add>, %247, %cst_109 [1] : vector<8x32xf32> to vector<8xf32>
    %249 = vector.shape_cast %248 : vector<8xf32> to vector<8x1xf32>
    %cst_110 = arith.constant 3.200000e+01 : f32
    %250 = vector.broadcast %cst_110 : f32 to vector<8x1xf32>
    %251 = arith.divf %249, %250 : vector<8x1xf32>
    %252 = vector.broadcast %244 : vector<8x1xf32> to vector<8x32xf32>
    %253 = arith.subf %238, %252 : vector<8x32xf32>
    %cst_111 = arith.constant 9.99999996E-13 : f32
    %254 = vector.broadcast %cst_111 : f32 to vector<8x1xf32>
    %255 = arith.addf %251, %254 : vector<8x1xf32>
    %256 = math.rsqrt %255 : vector<8x1xf32>
    %257 = vector.broadcast %256 : vector<8x1xf32> to vector<8x32xf32>
    %258 = arith.mulf %253, %257 : vector<8x32xf32>
    %259 = vector.broadcast %239 : vector<1x32xf32> to vector<8x32xf32>
    %260 = arith.mulf %258, %259 : vector<8x32xf32>
    %261 = vector.broadcast %240 : vector<1x32xf32> to vector<8x32xf32>
    %262 = arith.addf %260, %261 : vector<8x32xf32>
    %c0_112 = arith.constant 0 : index
    %c0_113 = arith.constant 0 : index
    %c0_114 = arith.constant 0 : index
    %263 = vector.load %arg27[%c0_112, %c0_113, %c0_114] : memref<1x8x32xf32, #tpu.memory_space<vmem>>, vector<1x8x32xf32>
    %264 = vector.shape_cast %263 : vector<1x8x32xf32> to vector<8x32xf32>
    %265 = vector.shape_cast %262 : vector<8x32xf32> to vector<1x8x32xf32>
    tpu.vector_store %arg27[%c0_112, %c0_113, %c0_114], %265 {strides = array<i32>} : memref<1x8x32xf32, #tpu.memory_space<vmem>>, vector<1x8x32xf32>,
    return
  }
  func.func @transform_0(%arg0: i32) -> (i32, i32, i32) {
    %c0_i32 = arith.constant 0 : i32
    %c0_i32_0 = arith.constant 0 : i32
    %c0_i32_1 = arith.constant 0 : i32
    return %arg0, %c0_i32, %c0_i32_0 : i32, i32, i32
  }
  func.func @transform_1(%arg0: i32) -> (i32, i32, i32) {
    %c0_i32 = arith.constant 0 : i32
    %c0_i32_0 = arith.constant 0 : i32
    %c0_i32_1 = arith.constant 0 : i32
    return %arg0, %c0_i32, %c0_i32_0 : i32, i32, i32
  }
  func.func @transform_2(%arg0: i32) -> (i32, i32, i32) {
    %c0_i32 = arith.constant 0 : i32
    %c0_i32_0 = arith.constant 0 : i32
    %c0_i32_1 = arith.constant 0 : i32
    return %arg0, %c0_i32, %c0_i32_0 : i32, i32, i32
  }
  func.func @transform_3(%arg0: i32) -> (i32, i32, i32) {
    %c0_i32 = arith.constant 0 : i32
    %c0_i32_0 = arith.constant 0 : i32
    %c0_i32_1 = arith.constant 0 : i32
    return %arg0, %c0_i32, %c0_i32_0 : i32, i32, i32
  }
  func.func @transform_4(%arg0: i32) -> (i32, i32) {
    %c0_i32 = arith.constant 0 : i32
    %c0_i32_0 = arith.constant 0 : i32
    %c0_i32_1 = arith.constant 0 : i32
    return %c0_i32, %c0_i32_0 : i32, i32
  }
  func.func @transform_5(%arg0: i32) -> (i32, i32) {
    %c0_i32 = arith.constant 0 : i32
    %c0_i32_0 = arith.constant 0 : i32
    %c0_i32_1 = arith.constant 0 : i32
    return %c0_i32, %c0_i32_0 : i32, i32
  }
  func.func @transform_6(%arg0: i32) -> (i32, i32) {
    %c0_i32 = arith.constant 0 : i32
    %c0_i32_0 = arith.constant 0 : i32
    %c0_i32_1 = arith.constant 0 : i32
    return %c0_i32, %c0_i32_0 : i32, i32
  }
  func.func @transform_7(%arg0: i32) -> (i32, i32) {
    %c0_i32 = arith.constant 0 : i32
    %c0_i32_0 = arith.constant 0 : i32
    %c0_i32_1 = arith.constant 0 : i32
    return %c0_i32, %c0_i32_0 : i32, i32
  }
  func.func @transform_8(%arg0: i32) -> (i32, i32) {
    %c0_i32 = arith.constant 0 : i32
    %c0_i32_0 = arith.constant 0 : i32
    %c0_i32_1 = arith.constant 0 : i32
    return %c0_i32, %c0_i32_0 : i32, i32
  }
  func.func @transform_9(%arg0: i32) -> (i32, i32) {
    %c0_i32 = arith.constant 0 : i32
    %c0_i32_0 = arith.constant 0 : i32
    %c0_i32_1 = arith.constant 0 : i32
    return %c0_i32, %c0_i32_0 : i32, i32
  }
  func.func @transform_10(%arg0: i32) -> (i32, i32) {
    %c0_i32 = arith.constant 0 : i32
    %c0_i32_0 = arith.constant 0 : i32
    %c0_i32_1 = arith.constant 0 : i32
    return %c0_i32, %c0_i32_0 : i32, i32
  }
  func.func @transform_11(%arg0: i32) -> (i32, i32) {
    %c0_i32 = arith.constant 0 : i32
    %c0_i32_0 = arith.constant 0 : i32
    %c0_i32_1 = arith.constant 0 : i32
    return %c0_i32, %c0_i32_0 : i32, i32
  }
  func.func @transform_12(%arg0: i32) -> (i32, i32) {
    %c0_i32 = arith.constant 0 : i32
    %c0_i32_0 = arith.constant 0 : i32
    %c0_i32_1 = arith.constant 0 : i32
    return %c0_i32, %c0_i32_0 : i32, i32
  }
  func.func @transform_13(%arg0: i32) -> (i32, i32) {
    %c0_i32 = arith.constant 0 : i32
    %c0_i32_0 = arith.constant 0 : i32
    %c0_i32_1 = arith.constant 0 : i32
    return %c0_i32, %c0_i32_0 : i32, i32
  }
  func.func @transform_14(%arg0: i32) -> (i32, i32) {
    %c0_i32 = arith.constant 0 : i32
    %c0_i32_0 = arith.constant 0 : i32
    %c0_i32_1 = arith.constant 0 : i32
    return %c0_i32, %c0_i32_0 : i32, i32
  }
  func.func @transform_15(%arg0: i32) -> (i32, i32) {
    %c0_i32 = arith.constant 0 : i32
    %c0_i32_0 = arith.constant 0 : i32
    %c0_i32_1 = arith.constant 0 : i32
    return %c0_i32, %c0_i32_0 : i32, i32
  }
  func.func @transform_16(%arg0: i32) -> (i32, i32) {
    %c0_i32 = arith.constant 0 : i32
    %c0_i32_0 = arith.constant 0 : i32
    %c0_i32_1 = arith.constant 0 : i32
    return %c0_i32, %c0_i32_0 : i32, i32
  }
  func.func @transform_17(%arg0: i32) -> (i32, i32) {
    %c0_i32 = arith.constant 0 : i32
    %c0_i32_0 = arith.constant 0 : i32
    %c0_i32_1 = arith.constant 0 : i32
    return %c0_i32, %c0_i32_0 : i32, i32
  }
  func.func @transform_18(%arg0: i32) -> (i32, i32) {
    %c0_i32 = arith.constant 0 : i32
    %c0_i32_0 = arith.constant 0 : i32
    %c0_i32_1 = arith.constant 0 : i32
    return %c0_i32, %c0_i32_0 : i32, i32
  }
  func.func @transform_19(%arg0: i32) -> (i32, i32) {
    %c0_i32 = arith.constant 0 : i32
    %c0_i32_0 = arith.constant 0 : i32
    %c0_i32_1 = arith.constant 0 : i32
    return %c0_i32, %c0_i32_0 : i32, i32
  }
  func.func @transform_20(%arg0: i32) -> (i32, i32) {
    %c0_i32 = arith.constant 0 : i32
    %c0_i32_0 = arith.constant 0 : i32
    %c0_i32_1 = arith.constant 0 : i32
    return %c0_i32, %c0_i32_0 : i32, i32
  }
  func.func @transform_21(%arg0: i32) -> (i32, i32) {
    %c0_i32 = arith.constant 0 : i32
    %c0_i32_0 = arith.constant 0 : i32
    %c0_i32_1 = arith.constant 0 : i32
    return %c0_i32, %c0_i32_0 : i32, i32
  }
  func.func @transform_22(%arg0: i32) -> (i32, i32) {
    %c0_i32 = arith.constant 0 : i32
    %c0_i32_0 = arith.constant 0 : i32
    %c0_i32_1 = arith.constant 0 : i32
    return %c0_i32, %c0_i32_0 : i32, i32
  }
  func.func @transform_23(%arg0: i32) -> (i32, i32) {
    %c0_i32 = arith.constant 0 : i32
    %c0_i32_0 = arith.constant 0 : i32
    %c0_i32_1 = arith.constant 0 : i32
    return %c0_i32, %c0_i32_0 : i32, i32
  }
  func.func @transform_24(%arg0: i32) -> (i32, i32) {
    %c0_i32 = arith.constant 0 : i32
    %c0_i32_0 = arith.constant 0 : i32
    %c0_i32_1 = arith.constant 0 : i32
    return %c0_i32, %c0_i32_0 : i32, i32
  }
  func.func @transform_25(%arg0: i32) -> (i32, i32) {
    %c0_i32 = arith.constant 0 : i32
    %c0_i32_0 = arith.constant 0 : i32
    %c0_i32_1 = arith.constant 0 : i32
    return %c0_i32, %c0_i32_0 : i32, i32
  }
  func.func @transform_26(%arg0: i32) -> (i32, i32, i32) {
    %c0_i32 = arith.constant 0 : i32
    %c0_i32_0 = arith.constant 0 : i32
    %c0_i32_1 = arith.constant 0 : i32
    return %arg0, %c0_i32, %c0_i32_0 : i32, i32, i32
  }
}

</mosaic_0001>

<llo_original>
// kernel: decoder_forward.5
$region0: #{decoder_forward.5}
  #allocation0 [shape = 'u32[]', space=smem, size = 0x4, offset = 0x4, fixed_abs, tag = 'smem constant byte address 0x4 - core index']
  #allocation1 [shape = 'u32[144,128]{1,0:T(1,128)}', space=vmem, size = 0x12000, scoped, tag = 'internal scratch']
  %s0 = inlined_call_operand.vmem [shape: f32[16,32], index: 0, kind: input, shape index: {}]
  %s1 = inlined_call_operand.vmem [shape: f32[32,128], index: 1, kind: input, shape index: {}]
  %s2 = inlined_call_operand.vmem [shape: f32[1,128], index: 2, kind: input, shape index: {}]
  %s3 = inlined_call_operand.hbm [shape: f32[16,128], index: 3, kind: output, shape index: {}]
  %s4 = sld [smem:[#allocation0]]
  $region45: #{decoder_forward.5} parent=0
    _
  %s6 = ssub.s32 1, %s4
  %s7 = scalar_select 0, %s6, %s4
  $region1: #{decoder_forward.5} parent=0
    #allocation2 [shape = 'u8[8192]{0}', space=vmem, size = 0x2000, scoped, tag = 'output window, operand 0']
    #allocation3 [shape = 's32[2]{0}', space=sflag, size = 0x8, scoped, tag = 'scoped memory for decoder_forward.5']
    %8 = vsyncpa [#allocation3], 0
    %s9 = scalar_lea.sflag [#allocation3], 1
    %10 = vsyncpa %s9, 0
    loop: start=0, step=1, limit=4
    $region2: #{decoder_forward.5} parent=1 // loop_pre_header
      _
    $region3: #{decoder_forward.5} parent=1 // loop_header
      %s12 = sphi 0, %s16
      %p13 = scmp.ge.s32.totalorder %s12, 4
      %s22 = sphi 0, %s24
      %s25 = sphi 0, %s22
      %s26 = sphi 0, %s25
      %s42 = sphi 0, %s26
      %s46 = sphi 0, %s46
      %s48 = sphi 0, %s46
      %s49 = sphi 0, %s48
      %s63 = sphi 0, %s49
      %s67 = sphi 0, %s67
      %s69 = sphi 0, %s67
      %s70 = sphi 0, %s69
      %s84 = sphi 0, %s70
      %s90 = sphi 0, %s92
      %s93 = sphi 0, %s90
      %s94 = sphi 0, %s93
      %s110 = sphi 0, %s94
    $region4: #{decoder_forward.5} parent=1 // loop_header_branch
      %15 = sbr.rel (%p13) target = $region8
    $region5: #{decoder_forward.5} parent=1 // loop_body
      %s17 = ssub.s32 %s12, 1
      %s18 = ssub.s32 %s12, 2
      %s19 = sadd.s32 %s12, 1
      %s20 = ssub.s32 %s12, %s19
      %p21 = scmp.eq.s32.totalorder %s20, 0
      %s23 = sadd.s32 %s22, 1
      %s24 = scalar_select %p21, %s22, %s23
      %p27 = pneg %p21
      %p28 = scmp.eq.s32.totalorder %s12, 1
      %p29 = por %p27, %p28
      %p30 = scmp.ne.s32.totalorder %s22, %s25
      %p31 = scmp.eq.s32.totalorder %s12, 0
      %p32 = por %p30, %p31
      %p33 = scmp.ne.s32.totalorder %s22, %s25
      %p34 = scmp.eq.s32.totalorder %s17, 1
      %p35 = por %p33, %p34
      %p36 = scmp.ne.s32.totalorder %s25, %s26
      %p37 = scmp.eq.s32.totalorder %s17, 0
      %p38 = por %p36, %p37
      %p39 = scmp.ne.s32.totalorder %s25, %s26
      %p40 = scmp.eq.s32.totalorder %s18, 1
      %p41 = por %p39, %p40
      %p43 = scmp.ne.s32.totalorder %s26, %s42
      %p44 = scmp.eq.s32.totalorder %s18, 0
      %p45 = por %p43, %p44
      %s47 = sadd.s32 %s46, 1
      %p50 = scmp.eq.s32.totalorder %s12, 1
      %p51 = scmp.ne.s32.totalorder %s46, %s48
      %p52 = scmp.eq.s32.totalorder %s12, 0
      %p53 = por %p51, %p52
      %p54 = scmp.ne.s32.totalorder %s46, %s48
      %p55 = scmp.eq.s32.totalorder %s17, 1
      %p56 = por %p54, %p55
      %p57 = scmp.ne.s32.totalorder %s48, %s49
      %p58 = scmp.eq.s32.totalorder %s17, 0
      %p59 = por %p57, %p58
      %p60 = scmp.ne.s32.totalorder %s48, %s49
      %p61 = scmp.eq.s32.totalorder %s18, 1
      %p62 = por %p60, %p61
      %p64 = scmp.ne.s32.totalorder %s49, %s63
      %p65 = scmp.eq.s32.totalorder %s18, 0
      %p66 = por %p64, %p65
      %s68 = sadd.s32 %s67, 1
      %p71 = scmp.eq.s32.totalorder %s12, 1
      %p72 = scmp.ne.s32.totalorder %s67, %s69
      %p73 = scmp.eq.s32.totalorder %s12, 0
      %p74 = por %p72, %p73
      %p75 = scmp.ne.s32.totalorder %s67, %s69
      %p76 = scmp.eq.s32.totalorder %s17, 1
      %p77 = por %p75, %p76
      %p78 = scmp.ne.s32.totalorder %s69, %s70
      %p79 = scmp.eq.s32.totalorder %s17, 0
      %p80 = por %p78, %p79
      %p81 = scmp.ne.s32.totalorder %s69, %s70
      %p82 = scmp.eq.s32.totalorder %s18, 1
      %p83 = por %p81, %p82
      %p85 = scmp.ne.s32.totalorder %s70, %s84
      %p86 = scmp.eq.s32.totalorder %s18, 0
      %p87 = por %p85, %p86
      %s88 = ssub.s32 %s12, %s19
      %p89 = scmp.eq.s32.totalorder %s88, 0
      %s91 = sadd.s32 %s90, 1
      %s92 = scalar_select %p89, %s90, %s91
      %p95 = pneg %p89
      %p96 = scmp.eq.s32.totalorder %s12, 1
      %p97 = por %p95, %p96
      %p98 = scmp.ne.s32.totalorder %s90, %s93
      %p99 = scmp.eq.s32.totalorder %s12, 0
      %p100 = por %p98, %p99
      %p101 = scmp.ne.s32.totalorder %s90, %s93
      %p102 = scmp.eq.s32.totalorder %s17, 1
      %p103 = por %p101, %p102
      %p104 = scmp.ne.s32.totalorder %s93, %s94
      %p105 = scmp.eq.s32.totalorder %s17, 0
      %p106 = por %p104, %p105
      %p107 = scmp.ne.s32.totalorder %s93, %s94
      %p108 = scmp.eq.s32.totalorder %s18, 1
      %p109 = por %p107, %p108
      %p111 = scmp.ne.s32.totalorder %s94, %s110
      %p112 = scmp.eq.s32.totalorder %s18, 0
      %p113 = por %p111, %p112
      %p114 = scmp.le.s32.totalorder 1, %s12
      %p115 = scmp.lt.s32.totalorder %s12, 3
      %p116 = pnand %p114, %p115
      %p117 = pneg %p116
      // Predicated region
      $region9: #{decoder_forward.5} parent=5 // pred_check
        _
      $region10: #{decoder_forward.5} parent=5 // pred_check_branch
        %119 = sbr.rel (%p116) target = $region12
      $region11: #{decoder_forward.5} parent=5 // pred_region
        %s120 = ssub.s32 %s12, 1
        // Predicated region
        $region13: #{decoder_forward.5} parent=11 // pred_check
          %p121 = pneg %p59
        $region14: #{decoder_forward.5} parent=11 // pred_check_branch
          %123 = sbr.rel (%p121) target = $region16
        $region15: #{decoder_forward.5} parent=11 // pred_region
          _
        $region16: #{decoder_forward.5} parent=11 // pred_fallthru
          _
        // Predicated region
        $region17: #{decoder_forward.5} parent=11 // pred_check
          %p124 = pneg %p80
        $region18: #{decoder_forward.5} parent=11 // pred_check_branch
          %126 = sbr.rel (%p124) target = $region20
        $region19: #{decoder_forward.5} parent=11 // pred_region
          _
        $region20: #{decoder_forward.5} parent=11 // pred_fallthru
          _
      $region12: #{decoder_forward.5} parent=5 // pred_fallthru
        _
      %p127 = scmp.lt.s32.totalorder %s12, 2
      // Predicated region
      $region21: #{decoder_forward.5} parent=5 // pred_check
        %p128 = pneg %p127
      $region22: #{decoder_forward.5} parent=5 // pred_check_branch
        %130 = sbr.rel (%p128) target = $region24
      $region23: #{decoder_forward.5} parent=5 // pred_region
        // Predicated region
        $region25: #{decoder_forward.5} parent=23 // pred_check
          %p131 = pneg %p32
        $region26: #{decoder_forward.5} parent=23 // pred_check_branch
          %133 = sbr.rel (%p131) target = $region28
        $region27: #{decoder_forward.5} parent=23 // pred_region
          %p134 = scmp.lt.s32.totalorder %s12, 1
          %s135 = scalar_select %p134, %s12, 1
          %s136 = smul.addr %s135, 8
          %s137 = scalar_lea.vmem %s0, %s136
        $region28: #{decoder_forward.5} parent=23 // pred_fallthru
          _
      $region24: #{decoder_forward.5} parent=5 // pred_fallthru
        _
      %p138 = scmp.le.s32.totalorder 1, %s12
      %p139 = scmp.lt.s32.totalorder %s12, 3
      %p140 = pnand %p138, %p139
      %p141 = pneg %p140
      // Predicated region
      $region29: #{decoder_forward.5} parent=5 // pred_check
        _
      $region30: #{decoder_forward.5} parent=5 // pred_check_branch
        %143 = sbr.rel (%p140) target = $region32
      $region31: #{decoder_forward.5} parent=5 // pred_region
        %s144 = ssub.s32 %s12, 1
        %p145 = scmp.lt.s32.totalorder %s17, 1
        %s146 = scalar_select %p145, %s17, 1
        %s147 = smul.addr %s146, 8
        %s148 = scalar_lea.vmem %s0, %s147
        %p149 = pneg %p38
        %p150 = pneg %p35
        %p151 = pneg %p59
        %p152 = pneg %p56
        %p153 = pneg %p80
        %p154 = pneg %p77
        %p155 = pneg %p106
        %p156 = pneg %p103
        %s157 = sand.u32 %s93, 1
        %s158 = scalar_lea.sflag [#allocation3], %s157
        %s159 = sand.u32 %s93, 1
        %s160 = smul.addr %s159, 8
        %s161 = scalar_lea.vmem [#allocation2], %s160
        %p162 = scmp.lt.s32.totalorder %s17, 1
        %s163 = scalar_select %p162, %s17, 1
        %s164 = smul.addr %s163, 8
        %s165 = scalar_lea.vmem %s0, %s164
        %v166 = vld [vmem:[%s165] sm:$0xff]
        %v167 = vld [vmem:[%s1] sm:$0xff]
        %v168 = vld [vmem:[%s1 + $0x8] sm:$0xff]
        %v169 = vld [vmem:[%s1 + $0x10] sm:$0xff]
        %v170 = vld [vmem:[%s1 + $0x18] sm:$0xff]
        %v171 = vld [vmem:[%s2] sm:$0x1]
        %v173 = vlaneseq
        %v174 = vshrl.u32 %v173, 7
        %v175 = vsub.s32 0, %v174
        %v176 = vrot.slane %v171, %v175
        %vm178 = vcmask 261120
        %v180 = vsel %vm178, %v166, 0
        %182 = vmatprep.subr.mxu0 0.0
        %183 = vmatpush1.msra.mxu0 0.0
        %184 = vmatprep.subr.mxu0 0.0
        %185 = vmatpush1.msra.mxu0 0.0
        %186 = vmatprep.subr.mxu0 0.0
        %187 = vmatpush1.msra.mxu0 0.0
        %188 = vmatprep.subr.mxu0 0.0
        %189 = vmatpush1.msra.mxu0 0.0
        %190 = vmatprep.subr.mxu0 0.0
        %191 = vmatpush1.msra.mxu0 0.0
        %192 = vmatprep.subr.mxu0 0.0
        %193 = vmatpush1.msra.mxu0 0.0
        %194 = vmatprep.subr.mxu0 0.0
        %195 = vmatpush1.msra.mxu0 0.0
        %196 = vmatprep.subr.mxu0 0.0
        %197 = vmatpush1.msra.mxu0 0.0
        %198 = vmatprep.subr.mxu0 0.0
        %199 = vmatpush1.msra.mxu0 0.0
        %200 = vmatprep.subr.mxu0 0.0
        %201 = vmatpush1.msra.mxu0 0.0
        %202 = vmatprep.subr.mxu0 0.0
        %203 = vmatpush1.msra.mxu0 0.0
        %204 = vmatprep.subr.mxu0 0.0
        %205 = vmatpush1.msra.mxu0 0.0
        %206 = vmatprep.subr.mxu0 0.0
        %207 = vmatpush1.msra.mxu0 %v170
        %208 = vmatprep.subr.mxu0 0.0
        %209 = vmatpush1.msra.mxu0 %v169
        %210 = vmatprep.subr.mxu0 0.0
        %211 = vmatpush1.msra.mxu0 %v168
        %212 = vmatprep.subr.mxu0 0.0
        %213 = vmatpush1.msra.mxu0 %v167
        %214 = vmatprep.subr.mxu0 0.0
        %215 = vmatpush2.msra.mxu0 0.0
        %216 = vmatprep.subr.mxu0 0.0
        %217 = vmatpush2.msra.mxu0 0.0
        %218 = vmatprep.subr.mxu0 0.0
        %219 = vmatpush2.msra.mxu0 0.0
        %220 = vmatprep.subr.mxu0 0.0
        %221 = vmatpush2.msra.mxu0 0.0
        %222 = vmatprep.subr.mxu0 0.0
        %223 = vmatpush2.msra.mxu0 0.0
        %224 = vmatprep.subr.mxu0 0.0
        %225 = vmatpush2.msra.mxu0 0.0
        %226 = vmatprep.subr.mxu0 0.0
        %227 = vmatpush2.msra.mxu0 0.0
        %228 = vmatprep.subr.mxu0 0.0
        %229 = vmatpush2.msra.mxu0 0.0
        %230 = vmatprep.subr.mxu0 0.0
        %231 = vmatpush2.msra.mxu0 0.0
        %232 = vmatprep.subr.mxu0 0.0
        %233 = vmatpush2.msra.mxu0 0.0
        %234 = vmatprep.subr.mxu0 0.0
        %235 = vmatpush2.msra.mxu0 0.0
        %236 = vmatprep.subr.mxu0 0.0
        %237 = vmatpush2.msra.mxu0 0.0
        %238 = vmatprep.subr.mxu0 0.0
        %239 = vmatpush2.msra.mxu0 0.0
        %240 = vmatprep.subr.mxu0 0.0
        %241 = vmatpush2.msra.mxu0 0.0
        %242 = vmatprep.subr.mxu0 0.0
        %243 = vmatpush2.msra.mxu0 0.0
        %244 = vmatprep.subr.mxu0 0.0
        %245 = vmatpush2.msra.mxu0 0.0
        %246 = vmatprep.mubr.f32.mxu0 0.0
        %247 = vmatmul.mubr.f32.gmra.mxu0 %v180
        %v248 = vpop.f32.mrf.mxu0
        %v249 = vadd.f32 %v176, %v248
        %v250 = vpop.f32.mrf.mxu0
        %251 = vdwg.mxu0
        %252 = vst [vmem:[%s161] sm:$0xff] %v249
        %s253 = sand.u32 %s93, 1
        %s254 = scalar_lea.sflag [#allocation3], %s253
        %s255 = sand.u32 %s93, 1
        %s256 = smul.addr %s255, 8
        %s257 = scalar_lea.vmem [#allocation2], %s256
        // Predicated region
        $region33: #{decoder_forward.5} parent=31 // pred_check
          %p258 = pneg %p103
        $region34: #{decoder_forward.5} parent=31 // pred_check_branch
          %260 = sbr.rel (%p258) target = $region36
        $region35: #{decoder_forward.5} parent=31 // pred_region
          %s262 = ssub.s32 128, 128
          %263 = vsyncadd %s254, %s262
          %s264 = smul.addr %s17, 128
          %s265 = scalar_lea.hbm %s3, %s264
          %s267 = sshll.u32 %s257, 4
          %s268 = int_to_ptr.vmem [resolvable:$true] %s267
          %270 = dma.vmem_to_hbm [thread:$0]  %s268, 128, %s265, %s254
        $region36: #{decoder_forward.5} parent=31 // pred_fallthru
          _
      $region32: #{decoder_forward.5} parent=5 // pred_fallthru
        _
      %p271 = scmp.le.s32.totalorder 2, %s12
      // Predicated region
      $region37: #{decoder_forward.5} parent=5 // pred_check
        %p272 = pneg %p271
      $region38: #{decoder_forward.5} parent=5 // pred_check_branch
        %274 = sbr.rel (%p272) target = $region40
      $region39: #{decoder_forward.5} parent=5 // pred_region
        %s275 = ssub.s32 %s12, 2
        // Predicated region
        $region41: #{decoder_forward.5} parent=39 // pred_check
          %p276 = pneg %p109
        $region42: #{decoder_forward.5} parent=39 // pred_check_branch
          %278 = sbr.rel (%p276) target = $region44
        $region43: #{decoder_forward.5} parent=39 // pred_region
          %s279 = sand.u32 %s94, 1
          %s280 = scalar_lea.sflag [#allocation3], %s279
          %s281 = sand.u32 %s94, 1
          %s282 = smul.addr %s281, 8
          %s283 = scalar_lea.vmem [#allocation2], %s282
          %284 = dma.done %s280, 128
        $region44: #{decoder_forward.5} parent=39 // pred_fallthru
          _
      $region40: #{decoder_forward.5} parent=5 // pred_fallthru
        _
    $region6: #{decoder_forward.5} parent=1 // loop_footer
      %s16 = sadd.s32 1, %s12
    $region7: #{decoder_forward.5} parent=1 // loop_footer_branch
      %11 = sbr.rel target = $region3
    $region8: #{decoder_forward.5} parent=1 // loop_exit
      _
    %285 = vsyncpa [#allocation3], 1
    %s286 = scalar_lea.sflag [#allocation3], 1
    %287 = vsyncpa %s286, 1

// kernel: decoder_forward.4
$region0: #{decoder_forward.4}
  #allocation0 [shape = 'u32[]', space=smem, size = 0x4, offset = 0x4, fixed_abs, tag = 'smem constant byte address 0x4 - core index']
  #allocation1 [shape = 'u32[144,128]{1,0:T(1,128)}', space=vmem, size = 0x12000, scoped, tag = 'internal scratch']
  %s0 = inlined_call_operand.vmem [shape: f32[2,8,32], index: 0, kind: input, shape index: {}]
  %s1 = inlined_call_operand.vmem [shape: f32[2,8,32], index: 1, kind: input, shape index: {}]
  %s2 = inlined_call_operand.vmem [shape: f32[2,8,8], index: 2, kind: input, shape index: {}]
  %s3 = inlined_call_operand.vmem [shape: f32[2,8,8], index: 3, kind: input, shape index: {}]
  %s4 = inlined_call_operand.vmem [shape: f32[32,32], index: 4, kind: input, shape index: {}]
  %s5 = inlined_call_operand.vmem [shape: f32[1,32], index: 5, kind: input, shape index: {}]
  %s6 = inlined_call_operand.vmem [shape: f32[32,64], index: 6, kind: input, shape index: {}]
  %s7 = inlined_call_operand.vmem [shape: f32[1,64], index: 7, kind: input, shape index: {}]
  %s8 = inlined_call_operand.vmem [shape: f32[32,32], index: 8, kind: input, shape index: {}]
  %s9 = inlined_call_operand.vmem [shape: f32[1,32], index: 9, kind: input, shape index: {}]
  %s10 = inlined_call_operand.vmem [shape: f32[1,32], index: 10, kind: input, shape index: {}]
  %s11 = inlined_call_operand.vmem [shape: f32[1,32], index: 11, kind: input, shape index: {}]
  %s12 = inlined_call_operand.vmem [shape: f32[32,32], index: 12, kind: input, shape index: {}]
  %s13 = inlined_call_operand.vmem [shape: f32[1,32], index: 13, kind: input, shape index: {}]
  %s14 = inlined_call_operand.vmem [shape: f32[32,64], index: 14, kind: input, shape index: {}]
  %s15 = inlined_call_operand.vmem [shape: f32[1,64], index: 15, kind: input, shape index: {}]
  %s16 = inlined_call_operand.vmem [shape: f32[32,32], index: 16, kind: input, shape index: {}]
  %s17 = inlined_call_operand.vmem [shape: f32[1,32], index: 17, kind: input, shape index: {}]
  %s18 = inlined_call_operand.hbm [shape: f32[1,32], index: 18, kind: input, shape index: {}]
  %s19 = inlined_call_operand.hbm [shape: f32[1,32], index: 19, kind: input, shape index: {}]
  %s20 = inlined_call_operand.vmem [shape: f32[32,64], index: 20, kind: input, shape index: {}]
  %s21 = inlined_call_operand.hbm [shape: f32[1,64], index: 21, kind: input, shape index: {}]
  %s22 = inlined_call_operand.vmem [shape: f32[64,32], index: 22, kind: input, shape index: {}]
  %s23 = inlined_call_operand.hbm [shape: f32[1,32], index: 23, kind: input, shape index: {}]
  %s24 = inlined_call_operand.hbm [shape: f32[1,32], index: 24, kind: input, shape index: {}]
  %s25 = inlined_call_operand.hbm [shape: f32[1,32], index: 25, kind: input, shape index: {}]
  %s26 = inlined_call_operand.vmem [shape: f32[2,8,32], index: 26, kind: output, shape index: {}]
  %s27 = sld [smem:[#allocation0]]
  $region161: #{decoder_forward.4} parent=0
    _
  %s29 = ssub.s32 1, %s27
  %s30 = scalar_select 0, %s29, %s27
  $region1: #{decoder_forward.4} parent=0
    #allocation2 [shape = 'u8[512]{0}', space=vmem, size = 0x400, scoped, tag = 'input window, operand 18, single buffered']
    #allocation3 [shape = 's32[2]{0}', space=sflag, size = 0x8, scoped, tag = 'scoped memory for decoder_forward.4']
    #allocation4 [shape = 'u8[512]{0}', space=vmem, size = 0x400, scoped, tag = 'input window, operand 19, single buffered']
    #allocation5 [shape = 's32[1]{0}', space=sflag, size = 0x4, scoped, tag = 'scoped memory for decoder_forward.4']
    #allocation6 [shape = 'u8[512]{0}', space=vmem, size = 0x400, scoped, tag = 'input window, operand 21, single buffered']
    #allocation7 [shape = 'u8[512]{0}', space=vmem, size = 0x400, scoped, tag = 'input window, operand 23, single buffered']
    #allocation8 [shape = 's32[1]{0}', space=sflag, size = 0x4, scoped, tag = 'scoped memory for decoder_forward.4']
    #allocation9 [shape = 'u8[512]{0}', space=vmem, size = 0x400, scoped, tag = 'input window, operand 24, single buffered']
    #allocation10 [shape = 'u8[512]{0}', space=vmem, size = 0x400, scoped, tag = 'input window, operand 25, single buffered']
    #allocation11 [shape = 's32[1]{0}', space=sflag, size = 0x4, scoped, tag = 'scoped memory for decoder_forward.4']
    %31 = vsyncpa [#allocation3], 0
    %32 = vsyncpa [#allocation5], 0
    %33 = vsyncpa [#allocation8], 0
    %34 = vsyncpa [#allocation11], 0
    loop: start=0, step=1, limit=4
    $region2: #{decoder_forward.4} parent=1 // loop_pre_header
      _
    $region3: #{decoder_forward.4} parent=1 // loop_header
      %s36 = sphi 0, %s40
      %p37 = scmp.ge.s32.totalorder %s36, 4
      %s46 = sphi 0, %s48
      %s49 = sphi 0, %s46
      %s50 = sphi 0, %s49
      %s66 = sphi 0, %s50
      %s72 = sphi 0, %s74
      %s75 = sphi 0, %s72
      %s76 = sphi 0, %s75
      %s92 = sphi 0, %s76
      %s98 = sphi 0, %s100
      %s101 = sphi 0, %s98
      %s102 = sphi 0, %s101
      %s118 = sphi 0, %s102
      %s124 = sphi 0, %s126
      %s127 = sphi 0, %s124
      %s128 = sphi 0, %s127
      %s144 = sphi 0, %s128
      %s148 = sphi 0, %s148
      %s150 = sphi 0, %s148
      %s151 = sphi 0, %s150
      %s165 = sphi 0, %s151
      %s169 = sphi 0, %s169
      %s171 = sphi 0, %s169
      %s172 = sphi 0, %s171
      %s186 = sphi 0, %s172
      %s190 = sphi 0, %s190
      %s192 = sphi 0, %s190
      %s193 = sphi 0, %s192
      %s207 = sphi 0, %s193
      %s211 = sphi 0, %s211
      %s213 = sphi 0, %s211
      %s214 = sphi 0, %s213
      %s228 = sphi 0, %s214
      %s232 = sphi 0, %s232
      %s234 = sphi 0, %s232
      %s235 = sphi 0, %s234
      %s249 = sphi 0, %s235
      %s253 = sphi 0, %s253
      %s255 = sphi 0, %s253
      %s256 = sphi 0, %s255
      %s270 = sphi 0, %s256
      %s274 = sphi 0, %s274
      %s276 = sphi 0, %s274
      %s277 = sphi 0, %s276
      %s291 = sphi 0, %s277
      %s295 = sphi 0, %s295
      %s297 = sphi 0, %s295
      %s298 = sphi 0, %s297
      %s312 = sphi 0, %s298
      %s316 = sphi 0, %s316
      %s318 = sphi 0, %s316
      %s319 = sphi 0, %s318
      %s333 = sphi 0, %s319
      %s337 = sphi 0, %s337
      %s339 = sphi 0, %s337
      %s340 = sphi 0, %s339
      %s354 = sphi 0, %s340
      %s358 = sphi 0, %s358
      %s360 = sphi 0, %s358
      %s361 = sphi 0, %s360
      %s375 = sphi 0, %s361
      %s379 = sphi 0, %s379
      %s381 = sphi 0, %s379
      %s382 = sphi 0, %s381
      %s396 = sphi 0, %s382
      %s400 = sphi 0, %s400
      %s402 = sphi 0, %s400
      %s403 = sphi 0, %s402
      %s417 = sphi 0, %s403
      %s421 = sphi 0, %s421
      %s423 = sphi 0, %s421
      %s424 = sphi 0, %s423
      %s438 = sphi 0, %s424
      %s442 = sphi 0, %s442
      %s444 = sphi 0, %s442
      %s445 = sphi 0, %s444
      %s459 = sphi 0, %s445
      %s463 = sphi 0, %s463
      %s465 = sphi 0, %s463
      %s466 = sphi 0, %s465
      %s480 = sphi 0, %s466
      %s484 = sphi 0, %s484
      %s486 = sphi 0, %s484
      %s487 = sphi 0, %s486
      %s501 = sphi 0, %s487
      %s505 = sphi 0, %s505
      %s507 = sphi 0, %s505
      %s508 = sphi 0, %s507
      %s522 = sphi 0, %s508
      %s526 = sphi 0, %s526
      %s528 = sphi 0, %s526
      %s529 = sphi 0, %s528
      %s543 = sphi 0, %s529
      %s547 = sphi 0, %s547
      %s549 = sphi 0, %s547
      %s550 = sphi 0, %s549
      %s564 = sphi 0, %s550
      %s568 = sphi 0, %s568
      %s570 = sphi 0, %s568
      %s571 = sphi 0, %s570
      %s585 = sphi 0, %s571
      %s589 = sphi 0, %s589
      %s591 = sphi 0, %s589
      %s592 = sphi 0, %s591
      %s606 = sphi 0, %s592
      %s612 = sphi 0, %s614
      %s615 = sphi 0, %s612
      %s616 = sphi 0, %s615
      %s632 = sphi 0, %s616
    $region4: #{decoder_forward.4} parent=1 // loop_header_branch
      %39 = sbr.rel (%p37) target = $region8
    $region5: #{decoder_forward.4} parent=1 // loop_body
      %s41 = ssub.s32 %s36, 1
      %s42 = ssub.s32 %s36, 2
      %s43 = sadd.s32 %s36, 1
      %s44 = ssub.s32 %s36, %s43
      %p45 = scmp.eq.s32.totalorder %s44, 0
      %s47 = sadd.s32 %s46, 1
      %s48 = scalar_select %p45, %s46, %s47
      %p51 = pneg %p45
      %p52 = scmp.eq.s32.totalorder %s36, 1
      %p53 = por %p51, %p52
      %p54 = scmp.ne.s32.totalorder %s46, %s49
      %p55 = scmp.eq.s32.totalorder %s36, 0
      %p56 = por %p54, %p55
      %p57 = scmp.ne.s32.totalorder %s46, %s49
      %p58 = scmp.eq.s32.totalorder %s41, 1
      %p59 = por %p57, %p58
      %p60 = scmp.ne.s32.totalorder %s49, %s50
      %p61 = scmp.eq.s32.totalorder %s41, 0
      %p62 = por %p60, %p61
      %p63 = scmp.ne.s32.totalorder %s49, %s50
      %p64 = scmp.eq.s32.totalorder %s42, 1
      %p65 = por %p63, %p64
      %p67 = scmp.ne.s32.totalorder %s50, %s66
      %p68 = scmp.eq.s32.totalorder %s42, 0
      %p69 = por %p67, %p68
      %s70 = ssub.s32 %s36, %s43
      %p71 = scmp.eq.s32.totalorder %s70, 0
      %s73 = sadd.s32 %s72, 1
      %s74 = scalar_select %p71, %s72, %s73
      %p77 = pneg %p71
      %p78 = scmp.eq.s32.totalorder %s36, 1
      %p79 = por %p77, %p78
      %p80 = scmp.ne.s32.totalorder %s72, %s75
      %p81 = scmp.eq.s32.totalorder %s36, 0
      %p82 = por %p80, %p81
      %p83 = scmp.ne.s32.totalorder %s72, %s75
      %p84 = scmp.eq.s32.totalorder %s41, 1
      %p85 = por %p83, %p84
      %p86 = scmp.ne.s32.totalorder %s75, %s76
      %p87 = scmp.eq.s32.totalorder %s41, 0
      %p88 = por %p86, %p87
      %p89 = scmp.ne.s32.totalorder %s75, %s76
      %p90 = scmp.eq.s32.totalorder %s42, 1
      %p91 = por %p89, %p90
      %p93 = scmp.ne.s32.totalorder %s76, %s92
      %p94 = scmp.eq.s32.totalorder %s42, 0
      %p95 = por %p93, %p94
      %s96 = ssub.s32 %s36, %s43
      %p97 = scmp.eq.s32.totalorder %s96, 0
      %s99 = sadd.s32 %s98, 1
      %s100 = scalar_select %p97, %s98, %s99
      %p103 = pneg %p97
      %p104 = scmp.eq.s32.totalorder %s36, 1
      %p105 = por %p103, %p104
      %p106 = scmp.ne.s32.totalorder %s98, %s101
      %p107 = scmp.eq.s32.totalorder %s36, 0
      %p108 = por %p106, %p107
      %p109 = scmp.ne.s32.totalorder %s98, %s101
      %p110 = scmp.eq.s32.totalorder %s41, 1
      %p111 = por %p109, %p110
      %p112 = scmp.ne.s32.totalorder %s101, %s102
      %p113 = scmp.eq.s32.totalorder %s41, 0
      %p114 = por %p112, %p113
      %p115 = scmp.ne.s32.totalorder %s101, %s102
      %p116 = scmp.eq.s32.totalorder %s42, 1
      %p117 = por %p115, %p116
      %p119 = scmp.ne.s32.totalorder %s102, %s118
      %p120 = scmp.eq.s32.totalorder %s42, 0
      %p121 = por %p119, %p120
      %s122 = ssub.s32 %s36, %s43
      %p123 = scmp.eq.s32.totalorder %s122, 0
      %s125 = sadd.s32 %s124, 1
      %s126 = scalar_select %p123, %s124, %s125
      %p129 = pneg %p123
      %p130 = scmp.eq.s32.totalorder %s36, 1
      %p131 = por %p129, %p130
      %p132 = scmp.ne.s32.totalorder %s124, %s127
      %p133 = scmp.eq.s32.totalorder %s36, 0
      %p134 = por %p132, %p133
      %p135 = scmp.ne.s32.totalorder %s124, %s127
      %p136 = scmp.eq.s32.totalorder %s41, 1
      %p137 = por %p135, %p136
      %p138 = scmp.ne.s32.totalorder %s127, %s128
      %p139 = scmp.eq.s32.totalorder %s41, 0
      %p140 = por %p138, %p139
      %p141 = scmp.ne.s32.totalorder %s127, %s128
      %p142 = scmp.eq.s32.totalorder %s42, 1
      %p143 = por %p141, %p142
      %p145 = scmp.ne.s32.totalorder %s128, %s144
      %p146 = scmp.eq.s32.totalorder %s42, 0
      %p147 = por %p145, %p146
      %s149 = sadd.s32 %s148, 1
      %p152 = scmp.eq.s32.totalorder %s36, 1
      %p153 = scmp.ne.s32.totalorder %s148, %s150
      %p154 = scmp.eq.s32.totalorder %s36, 0
      %p155 = por %p153, %p154
      %p156 = scmp.ne.s32.totalorder %s148, %s150
      %p157 = scmp.eq.s32.totalorder %s41, 1
      %p158 = por %p156, %p157
      %p159 = scmp.ne.s32.totalorder %s150, %s151
      %p160 = scmp.eq.s32.totalorder %s41, 0
      %p161 = por %p159, %p160
      %p162 = scmp.ne.s32.totalorder %s150, %s151
      %p163 = scmp.eq.s32.totalorder %s42, 1
      %p164 = por %p162, %p163
      %p166 = scmp.ne.s32.totalorder %s151, %s165
      %p167 = scmp.eq.s32.totalorder %s42, 0
      %p168 = por %p166, %p167
      %s170 = sadd.s32 %s169, 1
      %p173 = scmp.eq.s32.totalorder %s36, 1
      %p174 = scmp.ne.s32.totalorder %s169, %s171
      %p175 = scmp.eq.s32.totalorder %s36, 0
      %p176 = por %p174, %p175
      %p177 = scmp.ne.s32.totalorder %s169, %s171
      %p178 = scmp.eq.s32.totalorder %s41, 1
      %p179 = por %p177, %p178
      %p180 = scmp.ne.s32.totalorder %s171, %s172
      %p181 = scmp.eq.s32.totalorder %s41, 0
      %p182 = por %p180, %p181
      %p183 = scmp.ne.s32.totalorder %s171, %s172
      %p184 = scmp.eq.s32.totalorder %s42, 1
      %p185 = por %p183, %p184
      %p187 = scmp.ne.s32.totalorder %s172, %s186
      %p188 = scmp.eq.s32.totalorder %s42, 0
      %p189 = por %p187, %p188
      %s191 = sadd.s32 %s190, 1
      %p194 = scmp.eq.s32.totalorder %s36, 1
      %p195 = scmp.ne.s32.totalorder %s190, %s192
      %p196 = scmp.eq.s32.totalorder %s36, 0
      %p197 = por %p195, %p196
      %p198 = scmp.ne.s32.totalorder %s190, %s192
      %p199 = scmp.eq.s32.totalorder %s41, 1
      %p200 = por %p198, %p199
      %p201 = scmp.ne.s32.totalorder %s192, %s193
      %p202 = scmp.eq.s32.totalorder %s41, 0
      %p203 = por %p201, %p202
      %p204 = scmp.ne.s32.totalorder %s192, %s193
      %p205 = scmp.eq.s32.totalorder %s42, 1
      %p206 = por %p204, %p205
      %p208 = scmp.ne.s32.totalorder %s193, %s207
      %p209 = scmp.eq.s32.totalorder %s42, 0
      %p210 = por %p208, %p209
      %s212 = sadd.s32 %s211, 1
      %p215 = scmp.eq.s32.totalorder %s36, 1
      %p216 = scmp.ne.s32.totalorder %s211, %s213
      %p217 = scmp.eq.s32.totalorder %s36, 0
      %p218 = por %p216, %p217
      %p219 = scmp.ne.s32.totalorder %s211, %s213
      %p220 = scmp.eq.s32.totalorder %s41, 1
      %p221 = por %p219, %p220
      %p222 = scmp.ne.s32.totalorder %s213, %s214
      %p223 = scmp.eq.s32.totalorder %s41, 0
      %p224 = por %p222, %p223
      %p225 = scmp.ne.s32.totalorder %s213, %s214
      %p226 = scmp.eq.s32.totalorder %s42, 1
      %p227 = por %p225, %p226
      %p229 = scmp.ne.s32.totalorder %s214, %s228
      %p230 = scmp.eq.s32.totalorder %s42, 0
      %p231 = por %p229, %p230
      %s233 = sadd.s32 %s232, 1
      %p236 = scmp.eq.s32.totalorder %s36, 1
      %p237 = scmp.ne.s32.totalorder %s232, %s234
      %p238 = scmp.eq.s32.totalorder %s36, 0
      %p239 = por %p237, %p238
      %p240 = scmp.ne.s32.totalorder %s232, %s234
      %p241 = scmp.eq.s32.totalorder %s41, 1
      %p242 = por %p240, %p241
      %p243 = scmp.ne.s32.totalorder %s234, %s235
      %p244 = scmp.eq.s32.totalorder %s41, 0
      %p245 = por %p243, %p244
      %p246 = scmp.ne.s32.totalorder %s234, %s235
      %p247 = scmp.eq.s32.totalorder %s42, 1
      %p248 = por %p246, %p247
      %p250 = scmp.ne.s32.totalorder %s235, %s249
      %p251 = scmp.eq.s32.totalorder %s42, 0
      %p252 = por %p250, %p251
      %s254 = sadd.s32 %s253, 1
      %p257 = scmp.eq.s32.totalorder %s36, 1
      %p258 = scmp.ne.s32.totalorder %s253, %s255
      %p259 = scmp.eq.s32.totalorder %s36, 0
      %p260 = por %p258, %p259
      %p261 = scmp.ne.s32.totalorder %s253, %s255
      %p262 = scmp.eq.s32.totalorder %s41, 1
      %p263 = por %p261, %p262
      %p264 = scmp.ne.s32.totalorder %s255, %s256
      %p265 = scmp.eq.s32.totalorder %s41, 0
      %p266 = por %p264, %p265
      %p267 = scmp.ne.s32.totalorder %s255, %s256
      %p268 = scmp.eq.s32.totalorder %s42, 1
      %p269 = por %p267, %p268
      %p271 = scmp.ne.s32.totalorder %s256, %s270
      %p272 = scmp.eq.s32.totalorder %s42, 0
      %p273 = por %p271, %p272
      %s275 = sadd.s32 %s274, 1
      %p278 = scmp.eq.s32.totalorder %s36, 1
      %p279 = scmp.ne.s32.totalorder %s274, %s276
      %p280 = scmp.eq.s32.totalorder %s36, 0
      %p281 = por %p279, %p280
      %p282 = scmp.ne.s32.totalorder %s274, %s276
      %p283 = scmp.eq.s32.totalorder %s41, 1
      %p284 = por %p282, %p283
      %p285 = scmp.ne.s32.totalorder %s276, %s277
      %p286 = scmp.eq.s32.totalorder %s41, 0
      %p287 = por %p285, %p286
      %p288 = scmp.ne.s32.totalorder %s276, %s277
      %p289 = scmp.eq.s32.totalorder %s42, 1
      %p290 = por %p288, %p289
      %p292 = scmp.ne.s32.totalorder %s277, %s291
      %p293 = scmp.eq.s32.totalorder %s42, 0
      %p294 = por %p292, %p293
      %s296 = sadd.s32 %s295, 1
      %p299 = scmp.eq.s32.totalorder %s36, 1
      %p300 = scmp.ne.s32.totalorder %s295, %s297
      %p301 = scmp.eq.s32.totalorder %s36, 0
      %p302 = por %p300, %p301
      %p303 = scmp.ne.s32.totalorder %s295, %s297
      %p304 = scmp.eq.s32.totalorder %s41, 1
      %p305 = por %p303, %p304
      %p306 = scmp.ne.s32.totalorder %s297, %s298
      %p307 = scmp.eq.s32.totalorder %s41, 0
      %p308 = por %p306, %p307
      %p309 = scmp.ne.s32.totalorder %s297, %s298
      %p310 = scmp.eq.s32.totalorder %s42, 1
      %p311 = por %p309, %p310
      %p313 = scmp.ne.s32.totalorder %s298, %s312
      %p314 = scmp.eq.s32.totalorder %s42, 0
      %p315 = por %p313, %p314
      %s317 = sadd.s32 %s316, 1
      %p320 = scmp.eq.s32.totalorder %s36, 1
      %p321 = scmp.ne.s32.totalorder %s316, %s318
      %p322 = scmp.eq.s32.totalorder %s36, 0
      %p323 = por %p321, %p322
      %p324 = scmp.ne.s32.totalorder %s316, %s318
      %p325 = scmp.eq.s32.totalorder %s41, 1
      %p326 = por %p324, %p325
      %p327 = scmp.ne.s32.totalorder %s318, %s319
      %p328 = scmp.eq.s32.totalorder %s41, 0
      %p329 = por %p327, %p328
      %p330 = scmp.ne.s32.totalorder %s318, %s319
      %p331 = scmp.eq.s32.totalorder %s42, 1
      %p332 = por %p330, %p331
      %p334 = scmp.ne.s32.totalorder %s319, %s333
      %p335 = scmp.eq.s32.totalorder %s42, 0
      %p336 = por %p334, %p335
      %s338 = sadd.s32 %s337, 1
      %p341 = scmp.eq.s32.totalorder %s36, 1
      %p342 = scmp.ne.s32.totalorder %s337, %s339
      %p343 = scmp.eq.s32.totalorder %s36, 0
      %p344 = por %p342, %p343
      %p345 = scmp.ne.s32.totalorder %s337, %s339
      %p346 = scmp.eq.s32.totalorder %s41, 1
      %p347 = por %p345, %p346
      %p348 = scmp.ne.s32.totalorder %s339, %s340
      %p349 = scmp.eq.s32.totalorder %s41, 0
      %p350 = por %p348, %p349
      %p351 = scmp.ne.s32.totalorder %s339, %s340
      %p352 = scmp.eq.s32.totalorder %s42, 1
      %p353 = por %p351, %p352
      %p355 = scmp.ne.s32.totalorder %s340, %s354
      %p356 = scmp.eq.s32.totalorder %s42, 0
      %p357 = por %p355, %p356
      %s359 = sadd.s32 %s358, 1
      %p362 = scmp.eq.s32.totalorder %s36, 1
      %p363 = scmp.ne.s32.totalorder %s358, %s360
      %p364 = scmp.eq.s32.totalorder %s36, 0
      %p365 = por %p363, %p364
      %p366 = scmp.ne.s32.totalorder %s358, %s360
      %p367 = scmp.eq.s32.totalorder %s41, 1
      %p368 = por %p366, %p367
      %p369 = scmp.ne.s32.totalorder %s360, %s361
      %p370 = scmp.eq.s32.totalorder %s41, 0
      %p371 = por %p369, %p370
      %p372 = scmp.ne.s32.totalorder %s360, %s361
      %p373 = scmp.eq.s32.totalorder %s42, 1
      %p374 = por %p372, %p373
      %p376 = scmp.ne.s32.totalorder %s361, %s375
      %p377 = scmp.eq.s32.totalorder %s42, 0
      %p378 = por %p376, %p377
      %s380 = sadd.s32 %s379, 1
      %p383 = scmp.eq.s32.totalorder %s36, 1
      %p384 = scmp.ne.s32.totalorder %s379, %s381
      %p385 = scmp.eq.s32.totalorder %s36, 0
      %p386 = por %p384, %p385
      %p387 = scmp.ne.s32.totalorder %s379, %s381
      %p388 = scmp.eq.s32.totalorder %s41, 1
      %p389 = por %p387, %p388
      %p390 = scmp.ne.s32.totalorder %s381, %s382
      %p391 = scmp.eq.s32.totalorder %s41, 0
      %p392 = por %p390, %p391
      %p393 = scmp.ne.s32.totalorder %s381, %s382
      %p394 = scmp.eq.s32.totalorder %s42, 1
      %p395 = por %p393, %p394
      %p397 = scmp.ne.s32.totalorder %s382, %s396
      %p398 = scmp.eq.s32.totalorder %s42, 0
      %p399 = por %p397, %p398
      %s401 = sadd.s32 %s400, 1
      %p404 = scmp.eq.s32.totalorder %s36, 1
      %p405 = scmp.ne.s32.totalorder %s400, %s402
      %p406 = scmp.eq.s32.totalorder %s36, 0
      %p407 = por %p405, %p406
      %p408 = scmp.ne.s32.totalorder %s400, %s402
      %p409 = scmp.eq.s32.totalorder %s41, 1
      %p410 = por %p408, %p409
      %p411 = scmp.ne.s32.totalorder %s402, %s403
      %p412 = scmp.eq.s32.totalorder %s41, 0
      %p413 = por %p411, %p412
      %p414 = scmp.ne.s32.totalorder %s402, %s403
      %p415 = scmp.eq.s32.totalorder %s42, 1
      %p416 = por %p414, %p415
      %p418 = scmp.ne.s32.totalorder %s403, %s417
      %p419 = scmp.eq.s32.totalorder %s42, 0
      %p420 = por %p418, %p419
      %s422 = sadd.s32 %s421, 1
      %p425 = scmp.eq.s32.totalorder %s36, 1
      %p426 = scmp.ne.s32.totalorder %s421, %s423
      %p427 = scmp.eq.s32.totalorder %s36, 0
      %p428 = por %p426, %p427
      %p429 = scmp.ne.s32.totalorder %s421, %s423
      %p430 = scmp.eq.s32.totalorder %s41, 1
      %p431 = por %p429, %p430
      %p432 = scmp.ne.s32.totalorder %s423, %s424
      %p433 = scmp.eq.s32.totalorder %s41, 0
      %p434 = por %p432, %p433
      %p435 = scmp.ne.s32.totalorder %s423, %s424
      %p436 = scmp.eq.s32.totalorder %s42, 1
      %p437 = por %p435, %p436
      %p439 = scmp.ne.s32.totalorder %s424, %s438
      %p440 = scmp.eq.s32.totalorder %s42, 0
      %p441 = por %p439, %p440
      %s443 = sadd.s32 %s442, 1
      %p446 = scmp.eq.s32.totalorder %s36, 1
      %p447 = scmp.ne.s32.totalorder %s442, %s444
      %p448 = scmp.eq.s32.totalorder %s36, 0
      %p449 = por %p447, %p448
      %p450 = scmp.ne.s32.totalorder %s442, %s444
      %p451 = scmp.eq.s32.totalorder %s41, 1
      %p452 = por %p450, %p451
      %p453 = scmp.ne.s32.totalorder %s444, %s445
      %p454 = scmp.eq.s32.totalorder %s41, 0
      %p455 = por %p453, %p454
      %p456 = scmp.ne.s32.totalorder %s444, %s445
      %p457 = scmp.eq.s32.totalorder %s42, 1
      %p458 = por %p456, %p457
      %p460 = scmp.ne.s32.totalorder %s445, %s459
      %p461 = scmp.eq.s32.totalorder %s42, 0
      %p462 = por %p460, %p461
      %s464 = sadd.s32 %s463, 1
      %p467 = scmp.eq.s32.totalorder %s36, 1
      %p468 = scmp.ne.s32.totalorder %s463, %s465
      %p469 = scmp.eq.s32.totalorder %s36, 0
      %p470 = por %p468, %p469
      %p471 = scmp.ne.s32.totalorder %s463, %s465
      %p472 = scmp.eq.s32.totalorder %s41, 1
      %p473 = por %p471, %p472
      %p474 = scmp.ne.s32.totalorder %s465, %s466
      %p475 = scmp.eq.s32.totalorder %s41, 0
      %p476 = por %p474, %p475
      %p477 = scmp.ne.s32.totalorder %s465, %s466
      %p478 = scmp.eq.s32.totalorder %s42, 1
      %p479 = por %p477, %p478
      %p481 = scmp.ne.s32.totalorder %s466, %s480
      %p482 = scmp.eq.s32.totalorder %s42, 0
      %p483 = por %p481, %p482
      %s485 = sadd.s32 %s484, 1
      %p488 = scmp.eq.s32.totalorder %s36, 1
      %p489 = scmp.ne.s32.totalorder %s484, %s486
      %p490 = scmp.eq.s32.totalorder %s36, 0
      %p491 = por %p489, %p490
      %p492 = scmp.ne.s32.totalorder %s484, %s486
      %p493 = scmp.eq.s32.totalorder %s41, 1
      %p494 = por %p492, %p493
      %p495 = scmp.ne.s32.totalorder %s486, %s487
      %p496 = scmp.eq.s32.totalorder %s41, 0
      %p497 = por %p495, %p496
      %p498 = scmp.ne.s32.totalorder %s486, %s487
      %p499 = scmp.eq.s32.totalorder %s42, 1
      %p500 = por %p498, %p499
      %p502 = scmp.ne.s32.totalorder %s487, %s501
      %p503 = scmp.eq.s32.totalorder %s42, 0
      %p504 = por %p502, %p503
      %s506 = sadd.s32 %s505, 1
      %p509 = scmp.eq.s32.totalorder %s36, 1
      %p510 = scmp.ne.s32.totalorder %s505, %s507
      %p511 = scmp.eq.s32.totalorder %s36, 0
      %p512 = por %p510, %p511
      %p513 = scmp.ne.s32.totalorder %s505, %s507
      %p514 = scmp.eq.s32.totalorder %s41, 1
      %p515 = por %p513, %p514
      %p516 = scmp.ne.s32.totalorder %s507, %s508
      %p517 = scmp.eq.s32.totalorder %s41, 0
      %p518 = por %p516, %p517
      %p519 = scmp.ne.s32.totalorder %s507, %s508
      %p520 = scmp.eq.s32.totalorder %s42, 1
      %p521 = por %p519, %p520
      %p523 = scmp.ne.s32.totalorder %s508, %s522
      %p524 = scmp.eq.s32.totalorder %s42, 0
      %p525 = por %p523, %p524
      %s527 = sadd.s32 %s526, 1
      %p530 = scmp.eq.s32.totalorder %s36, 1
      %p531 = scmp.ne.s32.totalorder %s526, %s528
      %p532 = scmp.eq.s32.totalorder %s36, 0
      %p533 = por %p531, %p532
      %p534 = scmp.ne.s32.totalorder %s526, %s528
      %p535 = scmp.eq.s32.totalorder %s41, 1
      %p536 = por %p534, %p535
      %p537 = scmp.ne.s32.totalorder %s528, %s529
      %p538 = scmp.eq.s32.totalorder %s41, 0
      %p539 = por %p537, %p538
      %p540 = scmp.ne.s32.totalorder %s528, %s529
      %p541 = scmp.eq.s32.totalorder %s42, 1
      %p542 = por %p540, %p541
      %p544 = scmp.ne.s32.totalorder %s529, %s543
      %p545 = scmp.eq.s32.totalorder %s42, 0
      %p546 = por %p544, %p545
      %s548 = sadd.s32 %s547, 1
      %p551 = scmp.eq.s32.totalorder %s36, 1
      %p552 = scmp.ne.s32.totalorder %s547, %s549
      %p553 = scmp.eq.s32.totalorder %s36, 0
      %p554 = por %p552, %p553
      %p555 = scmp.ne.s32.totalorder %s547, %s549
      %p556 = scmp.eq.s32.totalorder %s41, 1
      %p557 = por %p555, %p556
      %p558 = scmp.ne.s32.totalorder %s549, %s550
      %p559 = scmp.eq.s32.totalorder %s41, 0
      %p560 = por %p558, %p559
      %p561 = scmp.ne.s32.totalorder %s549, %s550
      %p562 = scmp.eq.s32.totalorder %s42, 1
      %p563 = por %p561, %p562
      %p565 = scmp.ne.s32.totalorder %s550, %s564
      %p566 = scmp.eq.s32.totalorder %s42, 0
      %p567 = por %p565, %p566
      %s569 = sadd.s32 %s568, 1
      %p572 = scmp.eq.s32.totalorder %s36, 1
      %p573 = scmp.ne.s32.totalorder %s568, %s570
      %p574 = scmp.eq.s32.totalorder %s36, 0
      %p575 = por %p573, %p574
      %p576 = scmp.ne.s32.totalorder %s568, %s570
      %p577 = scmp.eq.s32.totalorder %s41, 1
      %p578 = por %p576, %p577
      %p579 = scmp.ne.s32.totalorder %s570, %s571
      %p580 = scmp.eq.s32.totalorder %s41, 0
      %p581 = por %p579, %p580
      %p582 = scmp.ne.s32.totalorder %s570, %s571
      %p583 = scmp.eq.s32.totalorder %s42, 1
      %p584 = por %p582, %p583
      %p586 = scmp.ne.s32.totalorder %s571, %s585
      %p587 = scmp.eq.s32.totalorder %s42, 0
      %p588 = por %p586, %p587
      %s590 = sadd.s32 %s589, 1
      %p593 = scmp.eq.s32.totalorder %s36, 1
      %p594 = scmp.ne.s32.totalorder %s589, %s591
      %p595 = scmp.eq.s32.totalorder %s36, 0
      %p596 = por %p594, %p595
      %p597 = scmp.ne.s32.totalorder %s589, %s591
      %p598 = scmp.eq.s32.totalorder %s41, 1
      %p599 = por %p597, %p598
      %p600 = scmp.ne.s32.totalorder %s591, %s592
      %p601 = scmp.eq.s32.totalorder %s41, 0
      %p602 = por %p600, %p601
      %p603 = scmp.ne.s32.totalorder %s591, %s592
      %p604 = scmp.eq.s32.totalorder %s42, 1
      %p605 = por %p603, %p604
      %p607 = scmp.ne.s32.totalorder %s592, %s606
      %p608 = scmp.eq.s32.totalorder %s42, 0
      %p609 = por %p607, %p608
      %s610 = ssub.s32 %s36, %s43
      %p611 = scmp.eq.s32.totalorder %s610, 0
      %s613 = sadd.s32 %s612, 1
      %s614 = scalar_select %p611, %s612, %s613
      %p617 = pneg %p611
      %p618 = scmp.eq.s32.totalorder %s36, 1
      %p619 = por %p617, %p618
      %p620 = scmp.ne.s32.totalorder %s612, %s615
      %p621 = scmp.eq.s32.totalorder %s36, 0
      %p622 = por %p620, %p621
      %p623 = scmp.ne.s32.totalorder %s612, %s615
      %p624 = scmp.eq.s32.totalorder %s41, 1
      %p625 = por %p623, %p624
      %p626 = scmp.ne.s32.totalorder %s615, %s616
      %p627 = scmp.eq.s32.totalorder %s41, 0
      %p628 = por %p626, %p627
      %p629 = scmp.ne.s32.totalorder %s615, %s616
      %p630 = scmp.eq.s32.totalorder %s42, 1
      %p631 = por %p629, %p630
      %p633 = scmp.ne.s32.totalorder %s616, %s632
      %p634 = scmp.eq.s32.totalorder %s42, 0
      %p635 = por %p633, %p634
      %p636 = scmp.le.s32.totalorder 1, %s36
      %p637 = scmp.lt.s32.totalorder %s36, 3
      %p638 = pnand %p636, %p637
      %p639 = pneg %p638
      // Predicated region
      $region9: #{decoder_forward.4} parent=5 // pred_check
        _
      $region10: #{decoder_forward.4} parent=5 // pred_check_branch
        %641 = sbr.rel (%p638) target = $region12
      $region11: #{decoder_forward.4} parent=5 // pred_region
        %s642 = ssub.s32 %s36, 1
        // Predicated region
        $region13: #{decoder_forward.4} parent=11 // pred_check
          %p643 = pneg %p161
        $region14: #{decoder_forward.4} parent=11 // pred_check_branch
          %645 = sbr.rel (%p643) target = $region16
        $region15: #{decoder_forward.4} parent=11 // pred_region
          _
        $region16: #{decoder_forward.4} parent=11 // pred_fallthru
          _
        // Predicated region
        $region17: #{decoder_forward.4} parent=11 // pred_check
          %p646 = pneg %p182
        $region18: #{decoder_forward.4} parent=11 // pred_check_branch
          %648 = sbr.rel (%p646) target = $region20
        $region19: #{decoder_forward.4} parent=11 // pred_region
          _
        $region20: #{decoder_forward.4} parent=11 // pred_fallthru
          _
        // Predicated region
        $region21: #{decoder_forward.4} parent=11 // pred_check
          %p649 = pneg %p203
        $region22: #{decoder_forward.4} parent=11 // pred_check_branch
          %651 = sbr.rel (%p649) target = $region24
        $region23: #{decoder_forward.4} parent=11 // pred_region
          _
        $region24: #{decoder_forward.4} parent=11 // pred_fallthru
          _
        // Predicated region
        $region25: #{decoder_forward.4} parent=11 // pred_check
          %p652 = pneg %p224
        $region26: #{decoder_forward.4} parent=11 // pred_check_branch
          %654 = sbr.rel (%p652) target = $region28
        $region27: #{decoder_forward.4} parent=11 // pred_region
          _
        $region28: #{decoder_forward.4} parent=11 // pred_fallthru
          _
        // Predicated region
        $region29: #{decoder_forward.4} parent=11 // pred_check
          %p655 = pneg %p245
        $region30: #{decoder_forward.4} parent=11 // pred_check_branch
          %657 = sbr.rel (%p655) target = $region32
        $region31: #{decoder_forward.4} parent=11 // pred_region
          _
        $region32: #{decoder_forward.4} parent=11 // pred_fallthru
          _
        // Predicated region
        $region33: #{decoder_forward.4} parent=11 // pred_check
          %p658 = pneg %p266
        $region34: #{decoder_forward.4} parent=11 // pred_check_branch
          %660 = sbr.rel (%p658) target = $region36
        $region35: #{decoder_forward.4} parent=11 // pred_region
          _
        $region36: #{decoder_forward.4} parent=11 // pred_fallthru
          _
        // Predicated region
        $region37: #{decoder_forward.4} parent=11 // pred_check
          %p661 = pneg %p287
        $region38: #{decoder_forward.4} parent=11 // pred_check_branch
          %663 = sbr.rel (%p661) target = $region40
        $region39: #{decoder_forward.4} parent=11 // pred_region
          _
        $region40: #{decoder_forward.4} parent=11 // pred_fallthru
          _
        // Predicated region
        $region41: #{decoder_forward.4} parent=11 // pred_check
          %p664 = pneg %p308
        $region42: #{decoder_forward.4} parent=11 // pred_check_branch
          %666 = sbr.rel (%p664) target = $region44
        $region43: #{decoder_forward.4} parent=11 // pred_region
          _
        $region44: #{decoder_forward.4} parent=11 // pred_fallthru
          _
        // Predicated region
        $region45: #{decoder_forward.4} parent=11 // pred_check
          %p667 = pneg %p329
        $region46: #{decoder_forward.4} parent=11 // pred_check_branch
          %669 = sbr.rel (%p667) target = $region48
        $region47: #{decoder_forward.4} parent=11 // pred_region
          _
        $region48: #{decoder_forward.4} parent=11 // pred_fallthru
          _
        // Predicated region
        $region49: #{decoder_forward.4} parent=11 // pred_check
          %p670 = pneg %p350
        $region50: #{decoder_forward.4} parent=11 // pred_check_branch
          %672 = sbr.rel (%p670) target = $region52
        $region51: #{decoder_forward.4} parent=11 // pred_region
          _
        $region52: #{decoder_forward.4} parent=11 // pred_fallthru
          _
        // Predicated region
        $region53: #{decoder_forward.4} parent=11 // pred_check
          %p673 = pneg %p371
        $region54: #{decoder_forward.4} parent=11 // pred_check_branch
          %675 = sbr.rel (%p673) target = $region56
        $region55: #{decoder_forward.4} parent=11 // pred_region
          _
        $region56: #{decoder_forward.4} parent=11 // pred_fallthru
          _
        // Predicated region
        $region57: #{decoder_forward.4} parent=11 // pred_check
          %p676 = pneg %p392
        $region58: #{decoder_forward.4} parent=11 // pred_check_branch
          %678 = sbr.rel (%p676) target = $region60
        $region59: #{decoder_forward.4} parent=11 // pred_region
          _
        $region60: #{decoder_forward.4} parent=11 // pred_fallthru
          _
        // Predicated region
        $region61: #{decoder_forward.4} parent=11 // pred_check
          %p679 = pneg %p413
        $region62: #{decoder_forward.4} parent=11 // pred_check_branch
          %681 = sbr.rel (%p679) target = $region64
        $region63: #{decoder_forward.4} parent=11 // pred_region
          _
        $region64: #{decoder_forward.4} parent=11 // pred_fallthru
          _
        // Predicated region
        $region65: #{decoder_forward.4} parent=11 // pred_check
          %p682 = pneg %p434
        $region66: #{decoder_forward.4} parent=11 // pred_check_branch
          %684 = sbr.rel (%p682) target = $region68
        $region67: #{decoder_forward.4} parent=11 // pred_region
          _
        $region68: #{decoder_forward.4} parent=11 // pred_fallthru
          _
        // Predicated region
        $region69: #{decoder_forward.4} parent=11 // pred_check
          %p685 = pneg %p455
        $region70: #{decoder_forward.4} parent=11 // pred_check_branch
          %687 = sbr.rel (%p685) target = $region72
        $region71: #{decoder_forward.4} parent=11 // pred_region
          %s689 = ssub.s32 16, 16
          %690 = vsyncadd [#allocation3], %s689
          %s692 = sshll.u32 [#allocation2], 4
          %s693 = int_to_ptr.vmem [resolvable:$true] %s692
          %695 = dma.hbm_to_vmem [thread:$0]  %s18, 16, %s693, [#allocation3]
        $region72: #{decoder_forward.4} parent=11 // pred_fallthru
          _
        // Predicated region
        $region73: #{decoder_forward.4} parent=11 // pred_check
          %p696 = pneg %p476
        $region74: #{decoder_forward.4} parent=11 // pred_check_branch
          %698 = sbr.rel (%p696) target = $region76
        $region75: #{decoder_forward.4} parent=11 // pred_region
          %s700 = ssub.s32 16, 16
          %701 = vsyncadd [#allocation5], %s700
          %s703 = sshll.u32 [#allocation4], 4
          %s704 = int_to_ptr.vmem [resolvable:$true] %s703
          %706 = dma.hbm_to_vmem [thread:$0]  %s19, 16, %s704, [#allocation5]
        $region76: #{decoder_forward.4} parent=11 // pred_fallthru
          _
        // Predicated region
        $region77: #{decoder_forward.4} parent=11 // pred_check
          %p707 = pneg %p497
        $region78: #{decoder_forward.4} parent=11 // pred_check_branch
          %709 = sbr.rel (%p707) target = $region80
        $region79: #{decoder_forward.4} parent=11 // pred_region
          _
        $region80: #{decoder_forward.4} parent=11 // pred_fallthru
          _
        // Predicated region
        $region81: #{decoder_forward.4} parent=11 // pred_check
          %p710 = pneg %p518
        $region82: #{decoder_forward.4} parent=11 // pred_check_branch
          %712 = sbr.rel (%p710) target = $region84
        $region83: #{decoder_forward.4} parent=11 // pred_region
          %s714 = ssub.s32 16, 16
          %715 = vsyncadd [#allocation5], %s714
          %s717 = sshll.u32 [#allocation6], 4
          %s718 = int_to_ptr.vmem [resolvable:$true] %s717
          %720 = dma.hbm_to_vmem [thread:$0]  %s21, 16, %s718, [#allocation5]
        $region84: #{decoder_forward.4} parent=11 // pred_fallthru
          _
        // Predicated region
        $region85: #{decoder_forward.4} parent=11 // pred_check
          %p721 = pneg %p539
        $region86: #{decoder_forward.4} parent=11 // pred_check_branch
          %723 = sbr.rel (%p721) target = $region88
        $region87: #{decoder_forward.4} parent=11 // pred_region
          _
        $region88: #{decoder_forward.4} parent=11 // pred_fallthru
          _
        // Predicated region
        $region89: #{decoder_forward.4} parent=11 // pred_check
          %p724 = pneg %p560
        $region90: #{decoder_forward.4} parent=11 // pred_check_branch
          %726 = sbr.rel (%p724) target = $region92
        $region91: #{decoder_forward.4} parent=11 // pred_region
          %s728 = ssub.s32 16, 16
          %729 = vsyncadd [#allocation8], %s728
          %s731 = sshll.u32 [#allocation7], 4
          %s732 = int_to_ptr.vmem [resolvable:$true] %s731
          %734 = dma.hbm_to_vmem [thread:$0]  %s23, 16, %s732, [#allocation8]
        $region92: #{decoder_forward.4} parent=11 // pred_fallthru
          _
        // Predicated region
        $region93: #{decoder_forward.4} parent=11 // pred_check
          %p735 = pneg %p581
        $region94: #{decoder_forward.4} parent=11 // pred_check_branch
          %737 = sbr.rel (%p735) target = $region96
        $region95: #{decoder_forward.4} parent=11 // pred_region
          %s739 = ssub.s32 16, 16
          %740 = vsyncadd [#allocation8], %s739
          %s742 = sshll.u32 [#allocation9], 4
          %s743 = int_to_ptr.vmem [resolvable:$true] %s742
          %745 = dma.hbm_to_vmem [thread:$0]  %s24, 16, %s743, [#allocation8]
        $region96: #{decoder_forward.4} parent=11 // pred_fallthru
          _
        // Predicated region
        $region97: #{decoder_forward.4} parent=11 // pred_check
          %p746 = pneg %p602
        $region98: #{decoder_forward.4} parent=11 // pred_check_branch
          %748 = sbr.rel (%p746) target = $region100
        $region99: #{decoder_forward.4} parent=11 // pred_region
          %s750 = ssub.s32 16, 16
          %751 = vsyncadd [#allocation11], %s750
          %s753 = sshll.u32 [#allocation10], 4
          %s754 = int_to_ptr.vmem [resolvable:$true] %s753
          %756 = dma.hbm_to_vmem [thread:$0]  %s25, 16, %s754, [#allocation11]
        $region100: #{decoder_forward.4} parent=11 // pred_fallthru
          _
      $region12: #{decoder_forward.4} parent=5 // pred_fallthru
        _
      %p757 = scmp.lt.s32.totalorder %s36, 2
      // Predicated region
      $region101: #{decoder_forward.4} parent=5 // pred_check
        %p758 = pneg %p757
      $region102: #{decoder_forward.4} parent=5 // pred_check_branch
        %760 = sbr.rel (%p758) target = $region104
      $region103: #{decoder_forward.4} parent=5 // pred_region
        // Predicated region
        $region105: #{decoder_forward.4} parent=103 // pred_check
          %p761 = pneg %p56
        $region106: #{decoder_forward.4} parent=103 // pred_check_branch
          %763 = sbr.rel (%p761) target = $region108
        $region107: #{decoder_forward.4} parent=103 // pred_region
          %p764 = scmp.lt.s32.totalorder %s36, 1
          %s765 = scalar_select %p764, %s36, 1
          %s766 = smul.addr %s765, 8
          %s767 = scalar_lea.vmem %s0, %s766
        $region108: #{decoder_forward.4} parent=103 // pred_fallthru
          _
        // Predicated region
        $region109: #{decoder_forward.4} parent=103 // pred_check
          %p768 = pneg %p82
        $region110: #{decoder_forward.4} parent=103 // pred_check_branch
          %770 = sbr.rel (%p768) target = $region112
        $region111: #{decoder_forward.4} parent=103 // pred_region
          %p771 = scmp.lt.s32.totalorder %s36, 1
          %s772 = scalar_select %p771, %s36, 1
          %s773 = smul.addr %s772, 8
          %s774 = scalar_lea.vmem %s1, %s773
        $region112: #{decoder_forward.4} parent=103 // pred_fallthru
          _
        // Predicated region
        $region113: #{decoder_forward.4} parent=103 // pred_check
          %p775 = pneg %p108
        $region114: #{decoder_forward.4} parent=103 // pred_check_branch
          %777 = sbr.rel (%p775) target = $region116
        $region115: #{decoder_forward.4} parent=103 // pred_region
          %p778 = scmp.lt.s32.totalorder %s36, 1
          %s779 = scalar_select %p778, %s36, 1
          %s780 = smul.addr %s779, 8
          %s781 = scalar_lea.vmem %s2, %s780
        $region116: #{decoder_forward.4} parent=103 // pred_fallthru
          _
        // Predicated region
        $region117: #{decoder_forward.4} parent=103 // pred_check
          %p782 = pneg %p134
        $region118: #{decoder_forward.4} parent=103 // pred_check_branch
          %784 = sbr.rel (%p782) target = $region120
        $region119: #{decoder_forward.4} parent=103 // pred_region
          %p785 = scmp.lt.s32.totalorder %s36, 1
          %s786 = scalar_select %p785, %s36, 1
          %s787 = smul.addr %s786, 8
          %s788 = scalar_lea.vmem %s3, %s787
        $region120: #{decoder_forward.4} parent=103 // pred_fallthru
          _
      $region104: #{decoder_forward.4} parent=5 // pred_fallthru
        _
      %p789 = scmp.le.s32.totalorder 1, %s36
      %p790 = scmp.lt.s32.totalorder %s36, 3
      %p791 = pnand %p789, %p790
      %p792 = pneg %p791
      // Predicated region
      $region121: #{decoder_forward.4} parent=5 // pred_check
        _
      $region122: #{decoder_forward.4} parent=5 // pred_check_branch
        %794 = sbr.rel (%p791) target = $region124
      $region123: #{decoder_forward.4} parent=5 // pred_region
        %s795 = ssub.s32 %s36, 1
        // Predicated region
        $region125: #{decoder_forward.4} parent=123 // pred_check
          %p796 = pneg %p455
        $region126: #{decoder_forward.4} parent=123 // pred_check_branch
          %798 = sbr.rel (%p796) target = $region128
        $region127: #{decoder_forward.4} parent=123 // pred_region
          %799 = dma.done [#allocation3], 16
        $region128: #{decoder_forward.4} parent=123 // pred_fallthru
          _
        // Predicated region
        $region129: #{decoder_forward.4} parent=123 // pred_check
          %p800 = pneg %p476
        $region130: #{decoder_forward.4} parent=123 // pred_check_branch
          %802 = sbr.rel (%p800) target = $region132
        $region131: #{decoder_forward.4} parent=123 // pred_region
          %803 = dma.done [#allocation5], 16
        $region132: #{decoder_forward.4} parent=123 // pred_fallthru
          _
        // Predicated region
        $region133: #{decoder_forward.4} parent=123 // pred_check
          %p804 = pneg %p518
        $region134: #{decoder_forward.4} parent=123 // pred_check_branch
          %806 = sbr.rel (%p804) target = $region136
        $region135: #{decoder_forward.4} parent=123 // pred_region
          %807 = dma.done [#allocation5], 16
        $region136: #{decoder_forward.4} parent=123 // pred_fallthru
          _
        // Predicated region
        $region137: #{decoder_forward.4} parent=123 // pred_check
          %p808 = pneg %p560
        $region138: #{decoder_forward.4} parent=123 // pred_check_branch
          %810 = sbr.rel (%p808) target = $region140
        $region139: #{decoder_forward.4} parent=123 // pred_region
          %811 = dma.done [#allocation8], 16
        $region140: #{decoder_forward.4} parent=123 // pred_fallthru
          _
        // Predicated region
        $region141: #{decoder_forward.4} parent=123 // pred_check
          %p812 = pneg %p581
        $region142: #{decoder_forward.4} parent=123 // pred_check_branch
          %814 = sbr.rel (%p812) target = $region144
        $region143: #{decoder_forward.4} parent=123 // pred_region
          %815 = dma.done [#allocation8], 16
        $region144: #{decoder_forward.4} parent=123 // pred_fallthru
          _
        // Predicated region
        $region145: #{decoder_forward.4} parent=123 // pred_check
          %p816 = pneg %p602
        $region146: #{decoder_forward.4} parent=123 // pred_check_branch
          %818 = sbr.rel (%p816) target = $region148
        $region147: #{decoder_forward.4} parent=123 // pred_region
          %819 = dma.done [#allocation11], 16
        $region148: #{decoder_forward.4} parent=123 // pred_fallthru
          _
        %p820 = scmp.lt.s32.totalorder %s41, 1
        %s821 = scalar_select %p820, %s41, 1
        %s822 = smul.addr %s821, 8
        %s823 = scalar_lea.vmem %s0, %s822
        %p824 = pneg %p62
        %p825 = pneg %p59
        %p826 = scmp.lt.s32.totalorder %s41, 1
        %s827 = scalar_select %p826, %s41, 1
        %s828 = smul.addr %s827, 8
        %s829 = scalar_lea.vmem %s1, %s828
        %p830 = pneg %p88
        %p831 = pneg %p85
        %p832 = scmp.lt.s32.totalorder %s41, 1
        %s833 = scalar_select %p832, %s41, 1
        %s834 = smul.addr %s833, 8
        %s835 = scalar_lea.vmem %s2, %s834
        %p836 = pneg %p114
        %p837 = pneg %p111
        %p838 = scmp.lt.s32.totalorder %s41, 1
        %s839 = scalar_select %p838, %s41, 1
        %s840 = smul.addr %s839, 8
        %s841 = scalar_lea.vmem %s3, %s840
        %p842 = pneg %p140
        %p843 = pneg %p137
        %p844 = pneg %p161
        %p845 = pneg %p158
        %p846 = pneg %p182
        %p847 = pneg %p179
        %p848 = pneg %p203
        %p849 = pneg %p200
        %p850 = pneg %p224
        %p851 = pneg %p221
        %p852 = pneg %p245
        %p853 = pneg %p242
        %p854 = pneg %p266
        %p855 = pneg %p263
        %p856 = pneg %p287
        %p857 = pneg %p284
        %p858 = pneg %p308
        %p859 = pneg %p305
        %p860 = pneg %p329
        %p861 = pneg %p326
        %p862 = pneg %p350
        %p863 = pneg %p347
        %p864 = pneg %p371
        %p865 = pneg %p368
        %p866 = pneg %p392
        %p867 = pneg %p389
        %p868 = pneg %p413
        %p869 = pneg %p410
        %p870 = pneg %p434
        %p871 = pneg %p431
        %p872 = pneg %p455
        %p873 = pneg %p452
        %p874 = pneg %p476
        %p875 = pneg %p473
        %p876 = pneg %p497
        %p877 = pneg %p494
        %p878 = pneg %p518
        %p879 = pneg %p515
        %p880 = pneg %p539
        %p881 = pneg %p536
        %p882 = pneg %p560
        %p883 = pneg %p557
        %p884 = pneg %p581
        %p885 = pneg %p578
        %p886 = pneg %p602
        %p887 = pneg %p599
        %p888 = pneg %p628
        %p889 = pneg %p625
        %p890 = scmp.lt.s32.totalorder %s41, 1
        %s891 = scalar_select %p890, %s41, 1
        %s892 = smul.addr %s891, 8
        %s893 = scalar_lea.vmem %s26, %s892
        %p894 = scmp.lt.s32.totalorder %s41, 1
        %s895 = scalar_select %p894, %s41, 1
        %s896 = smul.addr %s895, 8
        %s897 = scalar_lea.vmem %s0, %s896
        %p898 = scmp.lt.s32.totalorder %s41, 1
        %s899 = scalar_select %p898, %s41, 1
        %s900 = smul.addr %s899, 8
        %s901 = scalar_lea.vmem %s1, %s900
        %p902 = scmp.lt.s32.totalorder %s41, 1
        %s903 = scalar_select %p902, %s41, 1
        %s904 = smul.addr %s903, 8
        %s905 = scalar_lea.vmem %s2, %s904
        %p906 = scmp.lt.s32.totalorder %s41, 1
        %s907 = scalar_select %p906, %s41, 1
        %s908 = smul.addr %s907, 8
        %s909 = scalar_lea.vmem %s3, %s908
        %p910 = scmp.lt.s32.totalorder %s41, 1
        %s911 = scalar_select %p910, %s41, 1
        %s912 = smul.addr %s911, 8
        %s913 = scalar_lea.vmem %s26, %s912
        %v914 = vld [vmem:[%s897] sm:$0xff]
        %v915 = vld [vmem:[%s901] sm:$0xff]
        %v916 = vld [vmem:[%s905] sm:$0xff]
        %v917 = vld [vmem:[%s4] sm:$0xff]
        %v918 = vld [vmem:[%s4 + $0x8] sm:$0xff]
        %v919 = vld [vmem:[%s4 + $0x10] sm:$0xff]
        %v920 = vld [vmem:[%s4 + $0x18] sm:$0xff]
        %v921 = vld [vmem:[%s5] sm:$0x1]
        %v922 = vld [vmem:[%s6] sm:$0xff]
        %v923 = vld [vmem:[%s6 + $0x8] sm:$0xff]
        %v924 = vld [vmem:[%s6 + $0x10] sm:$0xff]
        %v925 = vld [vmem:[%s6 + $0x18] sm:$0xff]
        %v926 = vld [vmem:[%s7] sm:$0x1]
        %v927 = vld [vmem:[%s8] sm:$0xff]
        %v928 = vld [vmem:[%s8 + $0x8] sm:$0xff]
        %v929 = vld [vmem:[%s8 + $0x10] sm:$0xff]
        %v930 = vld [vmem:[%s8 + $0x18] sm:$0xff]
        %v931 = vld [vmem:[%s9] sm:$0x1]
        %v932 = vld [vmem:[%s10] sm:$0x1]
        %v933 = vld [vmem:[%s11] sm:$0x1]
        %v935 = vlaneseq
        %v936 = vshrl.u32 %v935, 7
        %v937 = vsub.s32 0, %v936
        %v938 = vrot.slane %v921, %v937
        %vm940 = vcmask 261120
        %v942 = vsel %vm940, %v914, 0
        %944 = vmatprep.subr.mxu0 0.0
        %945 = vmatpush1.msra.mxu0 0.0
        %946 = vmatprep.subr.mxu0 0.0
        %947 = vmatpush1.msra.mxu0 0.0
        %948 = vmatprep.subr.mxu0 0.0
        %949 = vmatpush1.msra.mxu0 0.0
        %950 = vmatprep.subr.mxu0 0.0
        %951 = vmatpush1.msra.mxu0 0.0
        %952 = vmatprep.subr.mxu0 0.0
        %953 = vmatpush1.msra.mxu0 0.0
        %954 = vmatprep.subr.mxu0 0.0
        %955 = vmatpush1.msra.mxu0 0.0
        %956 = vmatprep.subr.mxu0 0.0
        %957 = vmatpush1.msra.mxu0 0.0
        %958 = vmatprep.subr.mxu0 0.0
        %959 = vmatpush1.msra.mxu0 0.0
        %960 = vmatprep.subr.mxu0 0.0
        %961 = vmatpush1.msra.mxu0 0.0
        %962 = vmatprep.subr.mxu0 0.0
        %963 = vmatpush1.msra.mxu0 0.0
        %964 = vmatprep.subr.mxu0 0.0
        %965 = vmatpush1.msra.mxu0 0.0
        %966 = vmatprep.subr.mxu0 0.0
        %967 = vmatpush1.msra.mxu0 0.0
        %968 = vmatprep.subr.mxu0 0.0
        %969 = vmatpush1.msra.mxu0 %v920
        %970 = vmatprep.subr.mxu0 0.0
        %971 = vmatpush1.msra.mxu0 %v919
        %972 = vmatprep.subr.mxu0 0.0
        %973 = vmatpush1.msra.mxu0 %v918
        %974 = vmatprep.subr.mxu0 0.0
        %975 = vmatpush1.msra.mxu0 %v917
        %976 = vmatprep.subr.mxu0 0.0
        %977 = vmatpush2.msra.mxu0 0.0
        %978 = vmatprep.subr.mxu0 0.0
        %979 = vmatpush2.msra.mxu0 0.0
        %980 = vmatprep.subr.mxu0 0.0
        %981 = vmatpush2.msra.mxu0 0.0
        %982 = vmatprep.subr.mxu0 0.0
        %983 = vmatpush2.msra.mxu0 0.0
        %984 = vmatprep.subr.mxu0 0.0
        %985 = vmatpush2.msra.mxu0 0.0
        %986 = vmatprep.subr.mxu0 0.0
        %987 = vmatpush2.msra.mxu0 0.0
        %988 = vmatprep.subr.mxu0 0.0
        %989 = vmatpush2.msra.mxu0 0.0
        %990 = vmatprep.subr.mxu0 0.0
        %991 = vmatpush2.msra.mxu0 0.0
        %992 = vmatprep.subr.mxu0 0.0
        %993 = vmatpush2.msra.mxu0 0.0
        %994 = vmatprep.subr.mxu0 0.0
        %995 = vmatpush2.msra.mxu0 0.0
        %996 = vmatprep.subr.mxu0 0.0
        %997 = vmatpush2.msra.mxu0 0.0
        %998 = vmatprep.subr.mxu0 0.0
        %999 = vmatpush2.msra.mxu0 0.0
        %1000 = vmatprep.subr.mxu0 0.0
        %1001 = vmatpush2.msra.mxu0 0.0
        %1002 = vmatprep.subr.mxu0 0.0
        %1003 = vmatpush2.msra.mxu0 0.0
        %1004 = vmatprep.subr.mxu0 0.0
        %1005 = vmatpush2.msra.mxu0 0.0
        %1006 = vmatprep.subr.mxu0 0.0
        %1007 = vmatpush2.msra.mxu0 0.0
        %1008 = vmatprep.mubr.f32.mxu0 0.0
        %1009 = vmatmul.mubr.f32.gmra.mxu0 %v942
        %v1010 = vpop.f32.mrf.mxu0
        %v1011 = vadd.f32 %v938, %v1010
        %v1012 = vpop.f32.mrf.mxu0
        %1013 = vdwg.mxu0
        %v1014 = vmul.f32 %v1011, 0.35355338
        %v1016 = vlaneseq
        %v1017 = vshrl.u32 %v1016, 7
        %v1018 = vsub.s32 0, %v1017
        %v1019 = vrot.slane %v926, %v1018
        %1021 = vmatprep.subr.mxu0 0.0
        %1022 = vmatpush1.msra.mxu0 0.0
        %1023 = vmatprep.subr.mxu0 0.0
        %1024 = vmatpush1.msra.mxu0 0.0
        %1025 = vmatprep.subr.mxu0 0.0
        %1026 = vmatpush1.msra.mxu0 0.0
        %1027 = vmatprep.subr.mxu0 0.0
        %1028 = vmatpush1.msra.mxu0 0.0
        %1029 = vmatprep.subr.mxu0 0.0
        %1030 = vmatpush1.msra.mxu0 0.0
        %1031 = vmatprep.subr.mxu0 0.0
        %1032 = vmatpush1.msra.mxu0 0.0
        %1033 = vmatprep.subr.mxu0 0.0
        %1034 = vmatpush1.msra.mxu0 0.0
        %1035 = vmatprep.subr.mxu0 0.0
        %1036 = vmatpush1.msra.mxu0 0.0
        %1037 = vmatprep.subr.mxu0 0.0
        %1038 = vmatpush1.msra.mxu0 0.0
        %1039 = vmatprep.subr.mxu0 0.0
        %1040 = vmatpush1.msra.mxu0 0.0
        %1041 = vmatprep.subr.mxu0 0.0
        %1042 = vmatpush1.msra.mxu0 0.0
        %1043 = vmatprep.subr.mxu0 0.0
        %1044 = vmatpush1.msra.mxu0 0.0
        %1045 = vmatprep.subr.mxu0 0.0
        %1046 = vmatpush1.msra.mxu0 %v925
        %1047 = vmatprep.subr.mxu0 0.0
        %1048 = vmatpush1.msra.mxu0 %v924
        %1049 = vmatprep.subr.mxu0 0.0
        %1050 = vmatpush1.msra.mxu0 %v923
        %1051 = vmatprep.subr.mxu0 0.0
        %1052 = vmatpush1.msra.mxu0 %v922
        %1053 = vmatprep.subr.mxu0 0.0
        %1054 = vmatpush2.msra.mxu0 0.0
        %1055 = vmatprep.subr.mxu0 0.0
        %1056 = vmatpush2.msra.mxu0 0.0
        %1057 = vmatprep.subr.mxu0 0.0
        %1058 = vmatpush2.msra.mxu0 0.0
        %1059 = vmatprep.subr.mxu0 0.0
        %1060 = vmatpush2.msra.mxu0 0.0
        %1061 = vmatprep.subr.mxu0 0.0
        %1062 = vmatpush2.msra.mxu0 0.0
        %1063 = vmatprep.subr.mxu0 0.0
        %1064 = vmatpush2.msra.mxu0 0.0
        %1065 = vmatprep.subr.mxu0 0.0
        %1066 = vmatpush2.msra.mxu0 0.0
        %1067 = vmatprep.subr.mxu0 0.0
        %1068 = vmatpush2.msra.mxu0 0.0
        %1069 = vmatprep.subr.mxu0 0.0
        %1070 = vmatpush2.msra.mxu0 0.0
        %1071 = vmatprep.subr.mxu0 0.0
        %1072 = vmatpush2.msra.mxu0 0.0
        %1073 = vmatprep.subr.mxu0 0.0
        %1074 = vmatpush2.msra.mxu0 0.0
        %1075 = vmatprep.subr.mxu0 0.0
        %1076 = vmatpush2.msra.mxu0 0.0
        %1077 = vmatprep.subr.mxu0 0.0
        %1078 = vmatpush2.msra.mxu0 0.0
        %1079 = vmatprep.subr.mxu0 0.0
        %1080 = vmatpush2.msra.mxu0 0.0
        %1081 = vmatprep.subr.mxu0 0.0
        %1082 = vmatpush2.msra.mxu0 0.0
        %1083 = vmatprep.subr.mxu0 0.0
        %1084 = vmatpush2.msra.mxu0 0.0
        %1085 = vmatprep.mubr.f32.mxu0 0.0
        %1086 = vmatmul.mubr.f32.gmra.mxu0 %v942
        %v1087 = vpop.f32.mrf.mxu0
        %v1088 = vadd.f32 %v1019, %v1087
        %v1089 = vpop.f32.mrf.mxu0
        %1090 = vdwg.mxu0
        %vm1091 = vcmask 64512
        %v1093 = vsel %vm1091, %v1014, 0
        %v1096 = vsel %vm1091, %v1088, 0
        %1098 = vmatprep.subr.mxu0 0.0
        %1099 = vmatpush1.xpose.msra.mxu0 0.0
        %1100 = vmatprep.subr.mxu0 0.0
        %1101 = vmatpush1.xpose.msra.mxu0 0.0
        %1102 = vmatprep.subr.mxu0 0.0
        %1103 = vmatpush1.xpose.msra.mxu0 0.0
        %1104 = vmatprep.subr.mxu0 0.0
        %1105 = vmatpush1.xpose.msra.mxu0 0.0
        %1106 = vmatprep.subr.mxu0 0.0
        %1107 = vmatpush1.xpose.msra.mxu0 0.0
        %1108 = vmatprep.subr.mxu0 0.0
        %1109 = vmatpush1.xpose.msra.mxu0 0.0
        %1110 = vmatprep.subr.mxu0 0.0
        %1111 = vmatpush1.xpose.msra.mxu0 0.0
        %1112 = vmatprep.subr.mxu0 0.0
        %1113 = vmatpush1.xpose.msra.mxu0 0.0
        %1114 = vmatprep.subr.mxu0 0.0
        %1115 = vmatpush1.xpose.msra.mxu0 0.0
        %1116 = vmatprep.subr.mxu0 0.0
        %1117 = vmatpush1.xpose.msra.mxu0 0.0
        %1118 = vmatprep.subr.mxu0 0.0
        %1119 = vmatpush1.xpose.msra.mxu0 0.0
        %1120 = vmatprep.subr.mxu0 0.0
        %1121 = vmatpush1.xpose.msra.mxu0 0.0
        %1122 = vmatprep.subr.mxu0 0.0
        %1123 = vmatpush1.xpose.msra.mxu0 0.0
        %1124 = vmatprep.subr.mxu0 0.0
        %1125 = vmatpush1.xpose.msra.mxu0 0.0
        %1126 = vmatprep.subr.mxu0 0.0
        %1127 = vmatpush1.xpose.msra.mxu0 0.0
        %1128 = vmatprep.subr.mxu0 0.0
        %1129 = vmatpush1.xpose.msra.mxu0 %v1096
        %1130 = vmatprep.subr.mxu0 0.0
        %1131 = vmatpush2.xpose.msra.mxu0 0.0
        %1132 = vmatprep.subr.mxu0 0.0
        %1133 = vmatpush2.xpose.msra.mxu0 0.0
        %1134 = vmatprep.subr.mxu0 0.0
        %1135 = vmatpush2.xpose.msra.mxu0 0.0
        %1136 = vmatprep.subr.mxu0 0.0
        %1137 = vmatpush2.xpose.msra.mxu0 0.0
        %1138 = vmatprep.subr.mxu0 0.0
        %1139 = vmatpush2.xpose.msra.mxu0 0.0
        %1140 = vmatprep.subr.mxu0 0.0
        %1141 = vmatpush2.xpose.msra.mxu0 0.0
        %1142 = vmatprep.subr.mxu0 0.0
        %1143 = vmatpush2.xpose.msra.mxu0 0.0
        %1144 = vmatprep.subr.mxu0 0.0
        %1145 = vmatpush2.xpose.msra.mxu0 0.0
        %1146 = vmatprep.subr.mxu0 0.0
        %1147 = vmatpush2.xpose.msra.mxu0 0.0
        %1148 = vmatprep.subr.mxu0 0.0
        %1149 = vmatpush2.xpose.msra.mxu0 0.0
        %1150 = vmatprep.subr.mxu0 0.0
        %1151 = vmatpush2.xpose.msra.mxu0 0.0
        %1152 = vmatprep.subr.mxu0 0.0
        %1153 = vmatpush2.xpose.msra.mxu0 0.0
        %1154 = vmatprep.subr.mxu0 0.0
        %1155 = vmatpush2.xpose.msra.mxu0 0.0
        %1156 = vmatprep.subr.mxu0 0.0
        %1157 = vmatpush2.xpose.msra.mxu0 0.0
        %1158 = vmatprep.subr.mxu0 0.0
        %1159 = vmatpush2.xpose.msra.mxu0 0.0
        %1160 = vmatprep.subr.mxu0 0.0
        %1161 = vmatpush2.xpose.msra.mxu0 0.0
        %1162 = vmatprep.mubr.f32.mxu0 0.0
        %1163 = vmatmul.mubr.f32.gmra.mxu0 %v1093
        %v1164 = vpop.f32.mrf.mxu0
        %v1165 = vadd.f32 %v916, %v1164
        %v1166 = vpop.f32.mrf.mxu0
        %1167 = vdwg.mxu0
        %v1168 = vsel %vm1091, %v1165, -inf
        %1169 = vmax.xlane.f32.xlu0 %v1168
        %v1170 = vpop.xlane.xlu0 %1169
        %v1171 = vsub.f32 %v1165, %v1170
        %v1172 = vmul.f32 %v1171, 1.442695
        %v1173 = vpow.pop %v1172
        %v1174 = vsel %vm1091, %v1173, 0.0
        %1175 = vadd.xlane.f32.xlu0 %v1174
        %v1176 = vpop.xlane.xlu0 %1175
        %v1177 = vrcp.pop %v1176
        %v1178 = vmul.f32 %v1173, %v1177
        %1179 = vrot.lane.b32.xlu0 %v1088, 96
        %v1180 = vpop.permute.xlu0 %1179
        %v1183 = vsel %vm1091, %v1178, 0
        %1185 = vmatprep.subr.mxu0 0.0
        %1186 = vmatpush1.msra.mxu0 0.0
        %1187 = vmatprep.subr.mxu0 0.0
        %1188 = vmatpush1.msra.mxu0 0.0
        %1189 = vmatprep.subr.mxu0 0.0
        %1190 = vmatpush1.msra.mxu0 0.0
        %1191 = vmatprep.subr.mxu0 0.0
        %1192 = vmatpush1.msra.mxu0 0.0
        %1193 = vmatprep.subr.mxu0 0.0
        %1194 = vmatpush1.msra.mxu0 0.0
        %1195 = vmatprep.subr.mxu0 0.0
        %1196 = vmatpush1.msra.mxu0 0.0
        %1197 = vmatprep.subr.mxu0 0.0
        %1198 = vmatpush1.msra.mxu0 0.0
        %1199 = vmatprep.subr.mxu0 0.0
        %1200 = vmatpush1.msra.mxu0 0.0
        %1201 = vmatprep.subr.mxu0 0.0
        %1202 = vmatpush1.msra.mxu0 0.0
        %1203 = vmatprep.subr.mxu0 0.0
        %1204 = vmatpush1.msra.mxu0 0.0
        %1205 = vmatprep.subr.mxu0 0.0
        %1206 = vmatpush1.msra.mxu0 0.0
        %1207 = vmatprep.subr.mxu0 0.0
        %1208 = vmatpush1.msra.mxu0 0.0
        %1209 = vmatprep.subr.mxu0 0.0
        %1210 = vmatpush1.msra.mxu0 0.0
        %1211 = vmatprep.subr.mxu0 0.0
        %1212 = vmatpush1.msra.mxu0 0.0
        %1213 = vmatprep.subr.mxu0 0.0
        %1214 = vmatpush1.msra.mxu0 0.0
        %1215 = vmatprep.subr.mxu0 0.0
        %1216 = vmatpush1.msra.mxu0 %v1180
        %1217 = vmatprep.subr.mxu0 0.0
        %1218 = vmatpush2.msra.mxu0 0.0
        %1219 = vmatprep.subr.mxu0 0.0
        %1220 = vmatpush2.msra.mxu0 0.0
        %1221 = vmatprep.subr.mxu0 0.0
        %1222 = vmatpush2.msra.mxu0 0.0
        %1223 = vmatprep.subr.mxu0 0.0
        %1224 = vmatpush2.msra.mxu0 0.0
        %1225 = vmatprep.subr.mxu0 0.0
        %1226 = vmatpush2.msra.mxu0 0.0
        %1227 = vmatprep.subr.mxu0 0.0
        %1228 = vmatpush2.msra.mxu0 0.0
        %1229 = vmatprep.subr.mxu0 0.0
        %1230 = vmatpush2.msra.mxu0 0.0
        %1231 = vmatprep.subr.mxu0 0.0
        %1232 = vmatpush2.msra.mxu0 0.0
        %1233 = vmatprep.subr.mxu0 0.0
        %1234 = vmatpush2.msra.mxu0 0.0
        %1235 = vmatprep.subr.mxu0 0.0
        %1236 = vmatpush2.msra.mxu0 0.0
        %1237 = vmatprep.subr.mxu0 0.0
        %1238 = vmatpush2.msra.mxu0 0.0
        %1239 = vmatprep.subr.mxu0 0.0
        %1240 = vmatpush2.msra.mxu0 0.0
        %1241 = vmatprep.subr.mxu0 0.0
        %1242 = vmatpush2.msra.mxu0 0.0
        %1243 = vmatprep.subr.mxu0 0.0
        %1244 = vmatpush2.msra.mxu0 0.0
        %1245 = vmatprep.subr.mxu0 0.0
        %1246 = vmatpush2.msra.mxu0 0.0
        %1247 = vmatprep.subr.mxu0 0.0
        %1248 = vmatpush2.msra.mxu0 0.0
        %1249 = vmatprep.mubr.f32.mxu0 0.0
        %1250 = vmatmul.mubr.f32.gmra.mxu0 %v1183
        %v1251 = vpop.f32.mrf.mxu0
        %v1252 = vadd.f32 0.0, %v1251
        %v1253 = vpop.f32.mrf.mxu0
        %1254 = vdwg.mxu0
        %1255 = vrot.lane.b32.xlu0 %v1014, 120
        %v1256 = vpop.permute.xlu0 %1255
        %1257 = vrot.lane.b32.xlu0 %v1088, 120
        %v1258 = vpop.permute.xlu0 %1257
        %v1259 = vsel %vm1091, %v1256, 0
        %v1261 = vsel %vm1091, %v1258, 0
        %1263 = vmatprep.subr.mxu0 0.0
        %1264 = vmatpush1.xpose.msra.mxu0 0.0
        %1265 = vmatprep.subr.mxu0 0.0
        %1266 = vmatpush1.xpose.msra.mxu0 0.0
        %1267 = vmatprep.subr.mxu0 0.0
        %1268 = vmatpush1.xpose.msra.mxu0 0.0
        %1269 = vmatprep.subr.mxu0 0.0
        %1270 = vmatpush1.xpose.msra.mxu0 0.0
        %1271 = vmatprep.subr.mxu0 0.0
        %1272 = vmatpush1.xpose.msra.mxu0 0.0
        %1273 = vmatprep.subr.mxu0 0.0
        %1274 = vmatpush1.xpose.msra.mxu0 0.0
        %1275 = vmatprep.subr.mxu0 0.0
        %1276 = vmatpush1.xpose.msra.mxu0 0.0
        %1277 = vmatprep.subr.mxu0 0.0
        %1278 = vmatpush1.xpose.msra.mxu0 0.0
        %1279 = vmatprep.subr.mxu0 0.0
        %1280 = vmatpush1.xpose.msra.mxu0 0.0
        %1281 = vmatprep.subr.mxu0 0.0
        %1282 = vmatpush1.xpose.msra.mxu0 0.0
        %1283 = vmatprep.subr.mxu0 0.0
        %1284 = vmatpush1.xpose.msra.mxu0 0.0
        %1285 = vmatprep.subr.mxu0 0.0
        %1286 = vmatpush1.xpose.msra.mxu0 0.0
        %1287 = vmatprep.subr.mxu0 0.0
        %1288 = vmatpush1.xpose.msra.mxu0 0.0
        %1289 = vmatprep.subr.mxu0 0.0
        %1290 = vmatpush1.xpose.msra.mxu0 0.0
        %1291 = vmatprep.subr.mxu0 0.0
        %1292 = vmatpush1.xpose.msra.mxu0 0.0
        %1293 = vmatprep.subr.mxu0 0.0
        %1294 = vmatpush1.xpose.msra.mxu0 %v1261
        %1295 = vmatprep.subr.mxu0 0.0
        %1296 = vmatpush2.xpose.msra.mxu0 0.0
        %1297 = vmatprep.subr.mxu0 0.0
        %1298 = vmatpush2.xpose.msra.mxu0 0.0
        %1299 = vmatprep.subr.mxu0 0.0
        %1300 = vmatpush2.xpose.msra.mxu0 0.0
        %1301 = vmatprep.subr.mxu0 0.0
        %1302 = vmatpush2.xpose.msra.mxu0 0.0
        %1303 = vmatprep.subr.mxu0 0.0
        %1304 = vmatpush2.xpose.msra.mxu0 0.0
        %1305 = vmatprep.subr.mxu0 0.0
        %1306 = vmatpush2.xpose.msra.mxu0 0.0
        %1307 = vmatprep.subr.mxu0 0.0
        %1308 = vmatpush2.xpose.msra.mxu0 0.0
        %1309 = vmatprep.subr.mxu0 0.0
        %1310 = vmatpush2.xpose.msra.mxu0 0.0
        %1311 = vmatprep.subr.mxu0 0.0
        %1312 = vmatpush2.xpose.msra.mxu0 0.0
        %1313 = vmatprep.subr.mxu0 0.0
        %1314 = vmatpush2.xpose.msra.mxu0 0.0
        %1315 = vmatprep.subr.mxu0 0.0
        %1316 = vmatpush2.xpose.msra.mxu0 0.0
        %1317 = vmatprep.subr.mxu0 0.0
        %1318 = vmatpush2.xpose.msra.mxu0 0.0
        %1319 = vmatprep.subr.mxu0 0.0
        %1320 = vmatpush2.xpose.msra.mxu0 0.0
        %1321 = vmatprep.subr.mxu0 0.0
        %1322 = vmatpush2.xpose.msra.mxu0 0.0
        %1323 = vmatprep.subr.mxu0 0.0
        %1324 = vmatpush2.xpose.msra.mxu0 0.0
        %1325 = vmatprep.subr.mxu0 0.0
        %1326 = vmatpush2.xpose.msra.mxu0 0.0
        %1327 = vmatprep.mubr.f32.mxu0 0.0
        %1328 = vmatmul.mubr.f32.gmra.mxu0 %v1259
        %v1329 = vpop.f32.mrf.mxu0
        %v1330 = vadd.f32 %v916, %v1329
        %v1331 = vpop.f32.mrf.mxu0
        %1332 = vdwg.mxu0
        %v1333 = vsel %vm1091, %v1330, -inf
        %1334 = vmax.xlane.f32.xlu0 %v1333
        %v1335 = vpop.xlane.xlu0 %1334
        %v1336 = vsub.f32 %v1330, %v1335
        %v1337 = vmul.f32 %v1336, 1.442695
        %v1338 = vpow.pop %v1337
        %v1339 = vsel %vm1091, %v1338, 0.0
        %1340 = vadd.xlane.f32.xlu0 %v1339
        %v1341 = vpop.xlane.xlu0 %1340
        %v1342 = vrcp.pop %v1341
        %v1343 = vmul.f32 %v1338, %v1342
        %1344 = vrot.lane.b32.xlu0 %v1088, 88
        %v1345 = vpop.permute.xlu0 %1344
        %v1348 = vsel %vm1091, %v1343, 0
        %1350 = vmatprep.subr.mxu0 0.0
        %1351 = vmatpush1.msra.mxu0 0.0
        %1352 = vmatprep.subr.mxu0 0.0
        %1353 = vmatpush1.msra.mxu0 0.0
        %1354 = vmatprep.subr.mxu0 0.0
        %1355 = vmatpush1.msra.mxu0 0.0
        %1356 = vmatprep.subr.mxu0 0.0
        %1357 = vmatpush1.msra.mxu0 0.0
        %1358 = vmatprep.subr.mxu0 0.0
        %1359 = vmatpush1.msra.mxu0 0.0
        %1360 = vmatprep.subr.mxu0 0.0
        %1361 = vmatpush1.msra.mxu0 0.0
        %1362 = vmatprep.subr.mxu0 0.0
        %1363 = vmatpush1.msra.mxu0 0.0
        %1364 = vmatprep.subr.mxu0 0.0
        %1365 = vmatpush1.msra.mxu0 0.0
        %1366 = vmatprep.subr.mxu0 0.0
        %1367 = vmatpush1.msra.mxu0 0.0
        %1368 = vmatprep.subr.mxu0 0.0
        %1369 = vmatpush1.msra.mxu0 0.0
        %1370 = vmatprep.subr.mxu0 0.0
        %1371 = vmatpush1.msra.mxu0 0.0
        %1372 = vmatprep.subr.mxu0 0.0
        %1373 = vmatpush1.msra.mxu0 0.0
        %1374 = vmatprep.subr.mxu0 0.0
        %1375 = vmatpush1.msra.mxu0 0.0
        %1376 = vmatprep.subr.mxu0 0.0
        %1377 = vmatpush1.msra.mxu0 0.0
        %1378 = vmatprep.subr.mxu0 0.0
        %1379 = vmatpush1.msra.mxu0 0.0
        %1380 = vmatprep.subr.mxu0 0.0
        %1381 = vmatpush1.msra.mxu0 %v1345
        %1382 = vmatprep.subr.mxu0 0.0
        %1383 = vmatpush2.msra.mxu0 0.0
        %1384 = vmatprep.subr.mxu0 0.0
        %1385 = vmatpush2.msra.mxu0 0.0
        %1386 = vmatprep.subr.mxu0 0.0
        %1387 = vmatpush2.msra.mxu0 0.0
        %1388 = vmatprep.subr.mxu0 0.0
        %1389 = vmatpush2.msra.mxu0 0.0
        %1390 = vmatprep.subr.mxu0 0.0
        %1391 = vmatpush2.msra.mxu0 0.0
        %1392 = vmatprep.subr.mxu0 0.0
        %1393 = vmatpush2.msra.mxu0 0.0
        %1394 = vmatprep.subr.mxu0 0.0
        %1395 = vmatpush2.msra.mxu0 0.0
        %1396 = vmatprep.subr.mxu0 0.0
        %1397 = vmatpush2.msra.mxu0 0.0
        %1398 = vmatprep.subr.mxu0 0.0
        %1399 = vmatpush2.msra.mxu0 0.0
        %1400 = vmatprep.subr.mxu0 0.0
        %1401 = vmatpush2.msra.mxu0 0.0
        %1402 = vmatprep.subr.mxu0 0.0
        %1403 = vmatpush2.msra.mxu0 0.0
        %1404 = vmatprep.subr.mxu0 0.0
        %1405 = vmatpush2.msra.mxu0 0.0
        %1406 = vmatprep.subr.mxu0 0.0
        %1407 = vmatpush2.msra.mxu0 0.0
        %1408 = vmatprep.subr.mxu0 0.0
        %1409 = vmatpush2.msra.mxu0 0.0
        %1410 = vmatprep.subr.mxu0 0.0
        %1411 = vmatpush2.msra.mxu0 0.0
        %1412 = vmatprep.subr.mxu0 0.0
        %1413 = vmatpush2.msra.mxu0 0.0
        %1414 = vmatprep.mubr.f32.mxu0 0.0
        %1415 = vmatmul.mubr.f32.gmra.mxu0 %v1348
        %v1416 = vpop.f32.mrf.mxu0
        %v1417 = vadd.f32 0.0, %v1416
        %v1418 = vpop.f32.mrf.mxu0
        %1419 = vdwg.mxu0
        %1420 = vrot.lane.b32.xlu0 %v1014, 112
        %v1421 = vpop.permute.xlu0 %1420
        %1422 = vrot.lane.b32.xlu0 %v1088, 112
        %v1423 = vpop.permute.xlu0 %1422
        %v1424 = vsel %vm1091, %v1421, 0
        %v1426 = vsel %vm1091, %v1423, 0
        %1428 = vmatprep.subr.mxu0 0.0
        %1429 = vmatpush1.xpose.msra.mxu0 0.0
        %1430 = vmatprep.subr.mxu0 0.0
        %1431 = vmatpush1.xpose.msra.mxu0 0.0
        %1432 = vmatprep.subr.mxu0 0.0
        %1433 = vmatpush1.xpose.msra.mxu0 0.0
        %1434 = vmatprep.subr.mxu0 0.0
        %1435 = vmatpush1.xpose.msra.mxu0 0.0
        %1436 = vmatprep.subr.mxu0 0.0
        %1437 = vmatpush1.xpose.msra.mxu0 0.0
        %1438 = vmatprep.subr.mxu0 0.0
        %1439 = vmatpush1.xpose.msra.mxu0 0.0
        %1440 = vmatprep.subr.mxu0 0.0
        %1441 = vmatpush1.xpose.msra.mxu0 0.0
        %1442 = vmatprep.subr.mxu0 0.0
        %1443 = vmatpush1.xpose.msra.mxu0 0.0
        %1444 = vmatprep.subr.mxu0 0.0
        %1445 = vmatpush1.xpose.msra.mxu0 0.0
        %1446 = vmatprep.subr.mxu0 0.0
        %1447 = vmatpush1.xpose.msra.mxu0 0.0
        %1448 = vmatprep.subr.mxu0 0.0
        %1449 = vmatpush1.xpose.msra.mxu0 0.0
        %1450 = vmatprep.subr.mxu0 0.0
        %1451 = vmatpush1.xpose.msra.mxu0 0.0
        %1452 = vmatprep.subr.mxu0 0.0
        %1453 = vmatpush1.xpose.msra.mxu0 0.0
        %1454 = vmatprep.subr.mxu0 0.0
        %1455 = vmatpush1.xpose.msra.mxu0 0.0
        %1456 = vmatprep.subr.mxu0 0.0
        %1457 = vmatpush1.xpose.msra.mxu0 0.0
        %1458 = vmatprep.subr.mxu0 0.0
        %1459 = vmatpush1.xpose.msra.mxu0 %v1426
        %1460 = vmatprep.subr.mxu0 0.0
        %1461 = vmatpush2.xpose.msra.mxu0 0.0
        %1462 = vmatprep.subr.mxu0 0.0
        %1463 = vmatpush2.xpose.msra.mxu0 0.0
        %1464 = vmatprep.subr.mxu0 0.0
        %1465 = vmatpush2.xpose.msra.mxu0 0.0
        %1466 = vmatprep.subr.mxu0 0.0
        %1467 = vmatpush2.xpose.msra.mxu0 0.0
        %1468 = vmatprep.subr.mxu0 0.0
        %1469 = vmatpush2.xpose.msra.mxu0 0.0
        %1470 = vmatprep.subr.mxu0 0.0
        %1471 = vmatpush2.xpose.msra.mxu0 0.0
        %1472 = vmatprep.subr.mxu0 0.0
        %1473 = vmatpush2.xpose.msra.mxu0 0.0
        %1474 = vmatprep.subr.mxu0 0.0
        %1475 = vmatpush2.xpose.msra.mxu0 0.0
        %1476 = vmatprep.subr.mxu0 0.0
        %1477 = vmatpush2.xpose.msra.mxu0 0.0
        %1478 = vmatprep.subr.mxu0 0.0
        %1479 = vmatpush2.xpose.msra.mxu0 0.0
        %1480 = vmatprep.subr.mxu0 0.0
        %1481 = vmatpush2.xpose.msra.mxu0 0.0
        %1482 = vmatprep.subr.mxu0 0.0
        %1483 = vmatpush2.xpose.msra.mxu0 0.0
        %1484 = vmatprep.subr.mxu0 0.0
        %1485 = vmatpush2.xpose.msra.mxu0 0.0
        %1486 = vmatprep.subr.mxu0 0.0
        %1487 = vmatpush2.xpose.msra.mxu0 0.0
        %1488 = vmatprep.subr.mxu0 0.0
        %1489 = vmatpush2.xpose.msra.mxu0 0.0
        %1490 = vmatprep.subr.mxu0 0.0
        %1491 = vmatpush2.xpose.msra.mxu0 0.0
        %1492 = vmatprep.mubr.f32.mxu0 0.0
        %1493 = vmatmul.mubr.f32.gmra.mxu0 %v1424
        %v1494 = vpop.f32.mrf.mxu0
        %v1495 = vadd.f32 %v916, %v1494
        %v1496 = vpop.f32.mrf.mxu0
        %1497 = vdwg.mxu0
        %v1498 = vsel %vm1091, %v1495, -inf
        %1499 = vmax.xlane.f32.xlu0 %v1498
        %v1500 = vpop.xlane.xlu0 %1499
        %v1501 = vsub.f32 %v1495, %v1500
        %v1502 = vmul.f32 %v1501, 1.442695
        %v1503 = vpow.pop %v1502
        %v1504 = vsel %vm1091, %v1503, 0.0
        %1505 = vadd.xlane.f32.xlu0 %v1504
        %v1506 = vpop.xlane.xlu0 %1505
        %v1507 = vrcp.pop %v1506
        %v1508 = vmul.f32 %v1503, %v1507
        %1509 = vrot.lane.b32.xlu0 %v1088, 80
        %v1510 = vpop.permute.xlu0 %1509
        %v1513 = vsel %vm1091, %v1508, 0
        %1515 = vmatprep.subr.mxu0 0.0
        %1516 = vmatpush1.msra.mxu0 0.0
        %1517 = vmatprep.subr.mxu0 0.0
        %1518 = vmatpush1.msra.mxu0 0.0
        %1519 = vmatprep.subr.mxu0 0.0
        %1520 = vmatpush1.msra.mxu0 0.0
        %1521 = vmatprep.subr.mxu0 0.0
        %1522 = vmatpush1.msra.mxu0 0.0
        %1523 = vmatprep.subr.mxu0 0.0
        %1524 = vmatpush1.msra.mxu0 0.0
        %1525 = vmatprep.subr.mxu0 0.0
        %1526 = vmatpush1.msra.mxu0 0.0
        %1527 = vmatprep.subr.mxu0 0.0
        %1528 = vmatpush1.msra.mxu0 0.0
        %1529 = vmatprep.subr.mxu0 0.0
        %1530 = vmatpush1.msra.mxu0 0.0
        %1531 = vmatprep.subr.mxu0 0.0
        %1532 = vmatpush1.msra.mxu0 0.0
        %1533 = vmatprep.subr.mxu0 0.0
        %1534 = vmatpush1.msra.mxu0 0.0
        %1535 = vmatprep.subr.mxu0 0.0
        %1536 = vmatpush1.msra.mxu0 0.0
        %1537 = vmatprep.subr.mxu0 0.0
        %1538 = vmatpush1.msra.mxu0 0.0
        %1539 = vmatprep.subr.mxu0 0.0
        %1540 = vmatpush1.msra.mxu0 0.0
        %1541 = vmatprep.subr.mxu0 0.0
        %1542 = vmatpush1.msra.mxu0 0.0
        %1543 = vmatprep.subr.mxu0 0.0
        %1544 = vmatpush1.msra.mxu0 0.0
        %1545 = vmatprep.subr.mxu0 0.0
        %1546 = vmatpush1.msra.mxu0 %v1510
        %1547 = vmatprep.subr.mxu0 0.0
        %1548 = vmatpush2.msra.mxu0 0.0
        %1549 = vmatprep.subr.mxu0 0.0
        %1550 = vmatpush2.msra.mxu0 0.0
        %1551 = vmatprep.subr.mxu0 0.0
        %1552 = vmatpush2.msra.mxu0 0.0
        %1553 = vmatprep.subr.mxu0 0.0
        %1554 = vmatpush2.msra.mxu0 0.0
        %1555 = vmatprep.subr.mxu0 0.0
        %1556 = vmatpush2.msra.mxu0 0.0
        %1557 = vmatprep.subr.mxu0 0.0
        %1558 = vmatpush2.msra.mxu0 0.0
        %1559 = vmatprep.subr.mxu0 0.0
        %1560 = vmatpush2.msra.mxu0 0.0
        %1561 = vmatprep.subr.mxu0 0.0
        %1562 = vmatpush2.msra.mxu0 0.0
        %1563 = vmatprep.subr.mxu0 0.0
        %1564 = vmatpush2.msra.mxu0 0.0
        %1565 = vmatprep.subr.mxu0 0.0
        %1566 = vmatpush2.msra.mxu0 0.0
        %1567 = vmatprep.subr.mxu0 0.0
        %1568 = vmatpush2.msra.mxu0 0.0
        %1569 = vmatprep.subr.mxu0 0.0
        %1570 = vmatpush2.msra.mxu0 0.0
        %1571 = vmatprep.subr.mxu0 0.0
        %1572 = vmatpush2.msra.mxu0 0.0
        %1573 = vmatprep.subr.mxu0 0.0
        %1574 = vmatpush2.msra.mxu0 0.0
        %1575 = vmatprep.subr.mxu0 0.0
        %1576 = vmatpush2.msra.mxu0 0.0
        %1577 = vmatprep.subr.mxu0 0.0
        %1578 = vmatpush2.msra.mxu0 0.0
        %1579 = vmatprep.mubr.f32.mxu0 0.0
        %1580 = vmatmul.mubr.f32.gmra.mxu0 %v1513
        %v1581 = vpop.f32.mrf.mxu0
        %v1582 = vadd.f32 0.0, %v1581
        %v1583 = vpop.f32.mrf.mxu0
        %1584 = vdwg.mxu0
        %1585 = vrot.lane.b32.xlu0 %v1014, 104
        %v1586 = vpop.permute.xlu0 %1585
        %1587 = vrot.lane.b32.xlu0 %v1088, 104
        %v1588 = vpop.permute.xlu0 %1587
        %v1589 = vsel %vm1091, %v1586, 0
        %v1591 = vsel %vm1091, %v1588, 0
        %1593 = vmatprep.subr.mxu0 0.0
        %1594 = vmatpush1.xpose.msra.mxu0 0.0
        %1595 = vmatprep.subr.mxu0 0.0
        %1596 = vmatpush1.xpose.msra.mxu0 0.0
        %1597 = vmatprep.subr.mxu0 0.0
        %1598 = vmatpush1.xpose.msra.mxu0 0.0
        %1599 = vmatprep.subr.mxu0 0.0
        %1600 = vmatpush1.xpose.msra.mxu0 0.0
        %1601 = vmatprep.subr.mxu0 0.0
        %1602 = vmatpush1.xpose.msra.mxu0 0.0
        %1603 = vmatprep.subr.mxu0 0.0
        %1604 = vmatpush1.xpose.msra.mxu0 0.0
        %1605 = vmatprep.subr.mxu0 0.0
        %1606 = vmatpush1.xpose.msra.mxu0 0.0
        %1607 = vmatprep.subr.mxu0 0.0
        %1608 = vmatpush1.xpose.msra.mxu0 0.0
        %1609 = vmatprep.subr.mxu0 0.0
        %1610 = vmatpush1.xpose.msra.mxu0 0.0
        %1611 = vmatprep.subr.mxu0 0.0
        %1612 = vmatpush1.xpose.msra.mxu0 0.0
        %1613 = vmatprep.subr.mxu0 0.0
        %1614 = vmatpush1.xpose.msra.mxu0 0.0
        %1615 = vmatprep.subr.mxu0 0.0
        %1616 = vmatpush1.xpose.msra.mxu0 0.0
        %1617 = vmatprep.subr.mxu0 0.0
        %1618 = vmatpush1.xpose.msra.mxu0 0.0
        %1619 = vmatprep.subr.mxu0 0.0
        %1620 = vmatpush1.xpose.msra.mxu0 0.0
        %1621 = vmatprep.subr.mxu0 0.0
        %1622 = vmatpush1.xpose.msra.mxu0 0.0
        %1623 = vmatprep.subr.mxu0 0.0
        %1624 = vmatpush1.xpose.msra.mxu0 %v1591
        %1625 = vmatprep.subr.mxu0 0.0
        %1626 = vmatpush2.xpose.msra.mxu0 0.0
        %1627 = vmatprep.subr.mxu0 0.0
        %1628 = vmatpush2.xpose.msra.mxu0 0.0
        %1629 = vmatprep.subr.mxu0 0.0
        %1630 = vmatpush2.xpose.msra.mxu0 0.0
        %1631 = vmatprep.subr.mxu0 0.0
        %1632 = vmatpush2.xpose.msra.mxu0 0.0
        %1633 = vmatprep.subr.mxu0 0.0
        %1634 = vmatpush2.xpose.msra.mxu0 0.0
        %1635 = vmatprep.subr.mxu0 0.0
        %1636 = vmatpush2.xpose.msra.mxu0 0.0
        %1637 = vmatprep.subr.mxu0 0.0
        %1638 = vmatpush2.xpose.msra.mxu0 0.0
        %1639 = vmatprep.subr.mxu0 0.0
        %1640 = vmatpush2.xpose.msra.mxu0 0.0
        %1641 = vmatprep.subr.mxu0 0.0
        %1642 = vmatpush2.xpose.msra.mxu0 0.0
        %1643 = vmatprep.subr.mxu0 0.0
        %1644 = vmatpush2.xpose.msra.mxu0 0.0
        %1645 = vmatprep.subr.mxu0 0.0
        %1646 = vmatpush2.xpose.msra.mxu0 0.0
        %1647 = vmatprep.subr.mxu0 0.0
        %1648 = vmatpush2.xpose.msra.mxu0 0.0
        %1649 = vmatprep.subr.mxu0 0.0
        %1650 = vmatpush2.xpose.msra.mxu0 0.0
        %1651 = vmatprep.subr.mxu0 0.0
        %1652 = vmatpush2.xpose.msra.mxu0 0.0
        %1653 = vmatprep.subr.mxu0 0.0
        %1654 = vmatpush2.xpose.msra.mxu0 0.0
        %1655 = vmatprep.subr.mxu0 0.0
        %1656 = vmatpush2.xpose.msra.mxu0 0.0
        %1657 = vmatprep.mubr.f32.mxu0 0.0
        %1658 = vmatmul.mubr.f32.gmra.mxu0 %v1589
        %v1659 = vpop.f32.mrf.mxu0
        %v1660 = vadd.f32 %v916, %v1659
        %v1661 = vpop.f32.mrf.mxu0
        %1662 = vdwg.mxu0
        %v1663 = vsel %vm1091, %v1660, -inf
        %1664 = vmax.xlane.f32.xlu0 %v1663
        %v1665 = vpop.xlane.xlu0 %1664
        %v1666 = vsub.f32 %v1660, %v1665
        %v1667 = vmul.f32 %v1666, 1.442695
        %v1668 = vpow.pop %v1667
        %v1669 = vsel %vm1091, %v1668, 0.0
        %1670 = vadd.xlane.f32.xlu0 %v1669
        %v1671 = vpop.xlane.xlu0 %1670
        %v1672 = vrcp.pop %v1671
        %v1673 = vmul.f32 %v1668, %v1672
        %1674 = vrot.lane.b32.xlu0 %v1088, 72
        %v1675 = vpop.permute.xlu0 %1674
        %v1678 = vsel %vm1091, %v1673, 0
        %1680 = vmatprep.subr.mxu0 0.0
        %1681 = vmatpush1.msra.mxu0 0.0
        %1682 = vmatprep.subr.mxu0 0.0
        %1683 = vmatpush1.msra.mxu0 0.0
        %1684 = vmatprep.subr.mxu0 0.0
        %1685 = vmatpush1.msra.mxu0 0.0
        %1686 = vmatprep.subr.mxu0 0.0
        %1687 = vmatpush1.msra.mxu0 0.0
        %1688 = vmatprep.subr.mxu0 0.0
        %1689 = vmatpush1.msra.mxu0 0.0
        %1690 = vmatprep.subr.mxu0 0.0
        %1691 = vmatpush1.msra.mxu0 0.0
        %1692 = vmatprep.subr.mxu0 0.0
        %1693 = vmatpush1.msra.mxu0 0.0
        %1694 = vmatprep.subr.mxu0 0.0
        %1695 = vmatpush1.msra.mxu0 0.0
        %1696 = vmatprep.subr.mxu0 0.0
        %1697 = vmatpush1.msra.mxu0 0.0
        %1698 = vmatprep.subr.mxu0 0.0
        %1699 = vmatpush1.msra.mxu0 0.0
        %1700 = vmatprep.subr.mxu0 0.0
        %1701 = vmatpush1.msra.mxu0 0.0
        %1702 = vmatprep.subr.mxu0 0.0
        %1703 = vmatpush1.msra.mxu0 0.0
        %1704 = vmatprep.subr.mxu0 0.0
        %1705 = vmatpush1.msra.mxu0 0.0
        %1706 = vmatprep.subr.mxu0 0.0
        %1707 = vmatpush1.msra.mxu0 0.0
        %1708 = vmatprep.subr.mxu0 0.0
        %1709 = vmatpush1.msra.mxu0 0.0
        %1710 = vmatprep.subr.mxu0 0.0
        %1711 = vmatpush1.msra.mxu0 %v1675
        %1712 = vmatprep.subr.mxu0 0.0
        %1713 = vmatpush2.msra.mxu0 0.0
        %1714 = vmatprep.subr.mxu0 0.0
        %1715 = vmatpush2.msra.mxu0 0.0
        %1716 = vmatprep.subr.mxu0 0.0
        %1717 = vmatpush2.msra.mxu0 0.0
        %1718 = vmatprep.subr.mxu0 0.0
        %1719 = vmatpush2.msra.mxu0 0.0
        %1720 = vmatprep.subr.mxu0 0.0
        %1721 = vmatpush2.msra.mxu0 0.0
        %1722 = vmatprep.subr.mxu0 0.0
        %1723 = vmatpush2.msra.mxu0 0.0
        %1724 = vmatprep.subr.mxu0 0.0
        %1725 = vmatpush2.msra.mxu0 0.0
        %1726 = vmatprep.subr.mxu0 0.0
        %1727 = vmatpush2.msra.mxu0 0.0
        %1728 = vmatprep.subr.mxu0 0.0
        %1729 = vmatpush2.msra.mxu0 0.0
        %1730 = vmatprep.subr.mxu0 0.0
        %1731 = vmatpush2.msra.mxu0 0.0
        %1732 = vmatprep.subr.mxu0 0.0
        %1733 = vmatpush2.msra.mxu0 0.0
        %1734 = vmatprep.subr.mxu0 0.0
        %1735 = vmatpush2.msra.mxu0 0.0
        %1736 = vmatprep.subr.mxu0 0.0
        %1737 = vmatpush2.msra.mxu0 0.0
        %1738 = vmatprep.subr.mxu0 0.0
        %1739 = vmatpush2.msra.mxu0 0.0
        %1740 = vmatprep.subr.mxu0 0.0
        %1741 = vmatpush2.msra.mxu0 0.0
        %1742 = vmatprep.subr.mxu0 0.0
        %1743 = vmatpush2.msra.mxu0 0.0
        %1744 = vmatprep.mubr.f32.mxu0 0.0
        %1745 = vmatmul.mubr.f32.gmra.mxu0 %v1678
        %v1746 = vpop.f32.mrf.mxu0
        %v1747 = vadd.f32 0.0, %v1746
        %v1748 = vpop.f32.mrf.mxu0
        %1749 = vdwg.mxu0
        %1751 = vrot.lane.b32.xlu0 %v1417, 8
        %v1752 = vpop.permute.xlu0 %1751
        %1755 = vrot.lane.b32.xlu0 %v1582, 16
        %v1756 = vpop.permute.xlu0 %1755
        %1759 = vrot.lane.b32.xlu0 %v1747, 24
        %v1760 = vpop.permute.xlu0 %1759
        %v1762 = vsel %vm1091, %v1252, %v1752
        %vm1763 = vcmask 130048
        %v1764 = vsel %vm1763, %v1762, %v1756
        %vm1765 = vcmask 195584
        %v1766 = vsel %vm1765, %v1764, %v1760
        %v1768 = vlaneseq
        %v1769 = vshrl.u32 %v1768, 7
        %v1770 = vsub.s32 0, %v1769
        %v1771 = vrot.slane %v931, %v1770
        %v1774 = vsel %vm940, %v1766, 0
        %1776 = vmatprep.subr.mxu0 0.0
        %1777 = vmatpush1.msra.mxu0 0.0
        %1778 = vmatprep.subr.mxu0 0.0
        %1779 = vmatpush1.msra.mxu0 0.0
        %1780 = vmatprep.subr.mxu0 0.0
        %1781 = vmatpush1.msra.mxu0 0.0
        %1782 = vmatprep.subr.mxu0 0.0
        %1783 = vmatpush1.msra.mxu0 0.0
        %1784 = vmatprep.subr.mxu0 0.0
        %1785 = vmatpush1.msra.mxu0 0.0
        %1786 = vmatprep.subr.mxu0 0.0
        %1787 = vmatpush1.msra.mxu0 0.0
        %1788 = vmatprep.subr.mxu0 0.0
        %1789 = vmatpush1.msra.mxu0 0.0
        %1790 = vmatprep.subr.mxu0 0.0
        %1791 = vmatpush1.msra.mxu0 0.0
        %1792 = vmatprep.subr.mxu0 0.0
        %1793 = vmatpush1.msra.mxu0 0.0
        %1794 = vmatprep.subr.mxu0 0.0
        %1795 = vmatpush1.msra.mxu0 0.0
        %1796 = vmatprep.subr.mxu0 0.0
        %1797 = vmatpush1.msra.mxu0 0.0
        %1798 = vmatprep.subr.mxu0 0.0
        %1799 = vmatpush1.msra.mxu0 0.0
        %1800 = vmatprep.subr.mxu0 0.0
        %1801 = vmatpush1.msra.mxu0 %v930
        %1802 = vmatprep.subr.mxu0 0.0
        %1803 = vmatpush1.msra.mxu0 %v929
        %1804 = vmatprep.subr.mxu0 0.0
        %1805 = vmatpush1.msra.mxu0 %v928
        %1806 = vmatprep.subr.mxu0 0.0
        %1807 = vmatpush1.msra.mxu0 %v927
        %1808 = vmatprep.subr.mxu0 0.0
        %1809 = vmatpush2.msra.mxu0 0.0
        %1810 = vmatprep.subr.mxu0 0.0
        %1811 = vmatpush2.msra.mxu0 0.0
        %1812 = vmatprep.subr.mxu0 0.0
        %1813 = vmatpush2.msra.mxu0 0.0
        %1814 = vmatprep.subr.mxu0 0.0
        %1815 = vmatpush2.msra.mxu0 0.0
        %1816 = vmatprep.subr.mxu0 0.0
        %1817 = vmatpush2.msra.mxu0 0.0
        %1818 = vmatprep.subr.mxu0 0.0
        %1819 = vmatpush2.msra.mxu0 0.0
        %1820 = vmatprep.subr.mxu0 0.0
        %1821 = vmatpush2.msra.mxu0 0.0
        %1822 = vmatprep.subr.mxu0 0.0
        %1823 = vmatpush2.msra.mxu0 0.0
        %1824 = vmatprep.subr.mxu0 0.0
        %1825 = vmatpush2.msra.mxu0 0.0
        %1826 = vmatprep.subr.mxu0 0.0
        %1827 = vmatpush2.msra.mxu0 0.0
        %1828 = vmatprep.subr.mxu0 0.0
        %1829 = vmatpush2.msra.mxu0 0.0
        %1830 = vmatprep.subr.mxu0 0.0
        %1831 = vmatpush2.msra.mxu0 0.0
        %1832 = vmatprep.subr.mxu0 0.0
        %1833 = vmatpush2.msra.mxu0 0.0
        %1834 = vmatprep.subr.mxu0 0.0
        %1835 = vmatpush2.msra.mxu0 0.0
        %1836 = vmatprep.subr.mxu0 0.0
        %1837 = vmatpush2.msra.mxu0 0.0
        %1838 = vmatprep.subr.mxu0 0.0
        %1839 = vmatpush2.msra.mxu0 0.0
        %1840 = vmatprep.mubr.f32.mxu0 0.0
        %1841 = vmatmul.mubr.f32.gmra.mxu0 %v1774
        %v1842 = vpop.f32.mrf.mxu0
        %v1843 = vadd.f32 %v1771, %v1842
        %v1844 = vpop.f32.mrf.mxu0
        %1845 = vdwg.mxu0
        %v1846 = vadd.f32 %v914, %v1843
        %v1847 = vsel %vm940, %v1846, 0.0
        %1848 = vadd.xlane.f32.xlu0 %v1847
        %v1849 = vpop.xlane.xlu0 %1848
        %v1850 = vrcp.pop 32.0
        %v1851 = vmul.f32 %v1849, %v1850
        %v1852 = vsub.f32 %v1846, %v1851
        %v1853 = vmul.f32 %v1852, %v1852
        %v1854 = vsel %vm940, %v1853, 0.0
        %1855 = vadd.xlane.f32.xlu0 %v1854
        %v1856 = vpop.xlane.xlu0 %1855
        %v1857 = vmul.f32 %v1856, %v1850
        %v1858 = vadd.f32 %v1857, 1e-12
        %v1859 = vrsqrt.pop %v1858
        %v1860 = vmul.f32 %v1852, %v1859
        %v1862 = vlaneseq
        %v1863 = vshrl.u32 %v1862, 7
        %v1864 = vsub.s32 0, %v1863
        %v1865 = vrot.slane %v932, %v1864
        %v1867 = vmul.f32 %v1860, %v1865
        %v1869 = vlaneseq
        %v1870 = vshrl.u32 %v1869, 7
        %v1871 = vsub.s32 0, %v1870
        %v1872 = vrot.slane %v933, %v1871
        %v1874 = vadd.f32 %v1867, %v1872
        %v1875 = vld [vmem:[%s909] sm:$0xff]
        %v1876 = vld [vmem:[%s12] sm:$0xff]
        %v1877 = vld [vmem:[%s12 + $0x8] sm:$0xff]
        %v1878 = vld [vmem:[%s12 + $0x10] sm:$0xff]
        %v1879 = vld [vmem:[%s12 + $0x18] sm:$0xff]
        %v1880 = vld [vmem:[%s13] sm:$0x1]
        %v1881 = vld [vmem:[%s14] sm:$0xff]
        %v1882 = vld [vmem:[%s14 + $0x8] sm:$0xff]
        %v1883 = vld [vmem:[%s14 + $0x10] sm:$0xff]
        %v1884 = vld [vmem:[%s14 + $0x18] sm:$0xff]
        %v1885 = vld [vmem:[%s15] sm:$0x1]
        %v1886 = vld [vmem:[%s16] sm:$0xff]
        %v1887 = vld [vmem:[%s16 + $0x8] sm:$0xff]
        %v1888 = vld [vmem:[%s16 + $0x10] sm:$0xff]
        %v1889 = vld [vmem:[%s16 + $0x18] sm:$0xff]
        %v1890 = vld [vmem:[%s17] sm:$0x1]
        %v1891 = vld [vmem:[#allocation2] sm:$0x1]
        %v1892 = vld [vmem:[#allocation4] sm:$0x1]
        %v1894 = vlaneseq
        %v1895 = vshrl.u32 %v1894, 7
        %v1896 = vsub.s32 0, %v1895
        %v1897 = vrot.slane %v1880, %v1896
        %v1900 = vsel %vm940, %v1874, 0
        %1902 = vmatprep.subr.mxu0 0.0
        %1903 = vmatpush1.msra.mxu0 0.0
        %1904 = vmatprep.subr.mxu0 0.0
        %1905 = vmatpush1.msra.mxu0 0.0
        %1906 = vmatprep.subr.mxu0 0.0
        %1907 = vmatpush1.msra.mxu0 0.0
        %1908 = vmatprep.subr.mxu0 0.0
        %1909 = vmatpush1.msra.mxu0 0.0
        %1910 = vmatprep.subr.mxu0 0.0
        %1911 = vmatpush1.msra.mxu0 0.0
        %1912 = vmatprep.subr.mxu0 0.0
        %1913 = vmatpush1.msra.mxu0 0.0
        %1914 = vmatprep.subr.mxu0 0.0
        %1915 = vmatpush1.msra.mxu0 0.0
        %1916 = vmatprep.subr.mxu0 0.0
        %1917 = vmatpush1.msra.mxu0 0.0
        %1918 = vmatprep.subr.mxu0 0.0
        %1919 = vmatpush1.msra.mxu0 0.0
        %1920 = vmatprep.subr.mxu0 0.0
        %1921 = vmatpush1.msra.mxu0 0.0
        %1922 = vmatprep.subr.mxu0 0.0
        %1923 = vmatpush1.msra.mxu0 0.0
        %1924 = vmatprep.subr.mxu0 0.0
        %1925 = vmatpush1.msra.mxu0 0.0
        %1926 = vmatprep.subr.mxu0 0.0
        %1927 = vmatpush1.msra.mxu0 %v1879
        %1928 = vmatprep.subr.mxu0 0.0
        %1929 = vmatpush1.msra.mxu0 %v1878
        %1930 = vmatprep.subr.mxu0 0.0
        %1931 = vmatpush1.msra.mxu0 %v1877
        %1932 = vmatprep.subr.mxu0 0.0
        %1933 = vmatpush1.msra.mxu0 %v1876
        %1934 = vmatprep.subr.mxu0 0.0
        %1935 = vmatpush2.msra.mxu0 0.0
        %1936 = vmatprep.subr.mxu0 0.0
        %1937 = vmatpush2.msra.mxu0 0.0
        %1938 = vmatprep.subr.mxu0 0.0
        %1939 = vmatpush2.msra.mxu0 0.0
        %1940 = vmatprep.subr.mxu0 0.0
        %1941 = vmatpush2.msra.mxu0 0.0
        %1942 = vmatprep.subr.mxu0 0.0
        %1943 = vmatpush2.msra.mxu0 0.0
        %1944 = vmatprep.subr.mxu0 0.0
        %1945 = vmatpush2.msra.mxu0 0.0
        %1946 = vmatprep.subr.mxu0 0.0
        %1947 = vmatpush2.msra.mxu0 0.0
        %1948 = vmatprep.subr.mxu0 0.0
        %1949 = vmatpush2.msra.mxu0 0.0
        %1950 = vmatprep.subr.mxu0 0.0
        %1951 = vmatpush2.msra.mxu0 0.0
        %1952 = vmatprep.subr.mxu0 0.0
        %1953 = vmatpush2.msra.mxu0 0.0
        %1954 = vmatprep.subr.mxu0 0.0
        %1955 = vmatpush2.msra.mxu0 0.0
        %1956 = vmatprep.subr.mxu0 0.0
        %1957 = vmatpush2.msra.mxu0 0.0
        %1958 = vmatprep.subr.mxu0 0.0
        %1959 = vmatpush2.msra.mxu0 0.0
        %1960 = vmatprep.subr.mxu0 0.0
        %1961 = vmatpush2.msra.mxu0 0.0
        %1962 = vmatprep.subr.mxu0 0.0
        %1963 = vmatpush2.msra.mxu0 0.0
        %1964 = vmatprep.subr.mxu0 0.0
        %1965 = vmatpush2.msra.mxu0 0.0
        %1966 = vmatprep.mubr.f32.mxu0 0.0
        %1967 = vmatmul.mubr.f32.gmra.mxu0 %v1900
        %v1968 = vpop.f32.mrf.mxu0
        %v1969 = vadd.f32 %v1897, %v1968
        %v1970 = vpop.f32.mrf.mxu0
        %1971 = vdwg.mxu0
        %v1972 = vmul.f32 %v1969, 0.35355338
        %v1974 = vlaneseq
        %v1975 = vshrl.u32 %v1974, 7
        %v1976 = vsub.s32 0, %v1975
        %v1977 = vrot.slane %v1885, %v1976
        %v1980 = vsel %vm940, %v915, 0
        %1982 = vmatprep.subr.mxu0 0.0
        %1983 = vmatpush1.msra.mxu0 0.0
        %1984 = vmatprep.subr.mxu0 0.0
        %1985 = vmatpush1.msra.mxu0 0.0
        %1986 = vmatprep.subr.mxu0 0.0
        %1987 = vmatpush1.msra.mxu0 0.0
        %1988 = vmatprep.subr.mxu0 0.0
        %1989 = vmatpush1.msra.mxu0 0.0
        %1990 = vmatprep.subr.mxu0 0.0
        %1991 = vmatpush1.msra.mxu0 0.0
        %1992 = vmatprep.subr.mxu0 0.0
        %1993 = vmatpush1.msra.mxu0 0.0
        %1994 = vmatprep.subr.mxu0 0.0
        %1995 = vmatpush1.msra.mxu0 0.0
        %1996 = vmatprep.subr.mxu0 0.0
        %1997 = vmatpush1.msra.mxu0 0.0
        %1998 = vmatprep.subr.mxu0 0.0
        %1999 = vmatpush1.msra.mxu0 0.0
        %2000 = vmatprep.subr.mxu0 0.0
        %2001 = vmatpush1.msra.mxu0 0.0
        %2002 = vmatprep.subr.mxu0 0.0
        %2003 = vmatpush1.msra.mxu0 0.0
        %2004 = vmatprep.subr.mxu0 0.0
        %2005 = vmatpush1.msra.mxu0 0.0
        %2006 = vmatprep.subr.mxu0 0.0
        %2007 = vmatpush1.msra.mxu0 %v1884
        %2008 = vmatprep.subr.mxu0 0.0
        %2009 = vmatpush1.msra.mxu0 %v1883
        %2010 = vmatprep.subr.mxu0 0.0
        %2011 = vmatpush1.msra.mxu0 %v1882
        %2012 = vmatprep.subr.mxu0 0.0
        %2013 = vmatpush1.msra.mxu0 %v1881
        %2014 = vmatprep.subr.mxu0 0.0
        %2015 = vmatpush2.msra.mxu0 0.0
        %2016 = vmatprep.subr.mxu0 0.0
        %2017 = vmatpush2.msra.mxu0 0.0
        %2018 = vmatprep.subr.mxu0 0.0
        %2019 = vmatpush2.msra.mxu0 0.0
        %2020 = vmatprep.subr.mxu0 0.0
        %2021 = vmatpush2.msra.mxu0 0.0
        %2022 = vmatprep.subr.mxu0 0.0
        %2023 = vmatpush2.msra.mxu0 0.0
        %2024 = vmatprep.subr.mxu0 0.0
        %2025 = vmatpush2.msra.mxu0 0.0
        %2026 = vmatprep.subr.mxu0 0.0
        %2027 = vmatpush2.msra.mxu0 0.0
        %2028 = vmatprep.subr.mxu0 0.0
        %2029 = vmatpush2.msra.mxu0 0.0
        %2030 = vmatprep.subr.mxu0 0.0
        %2031 = vmatpush2.msra.mxu0 0.0
        %2032 = vmatprep.subr.mxu0 0.0
        %2033 = vmatpush2.msra.mxu0 0.0
        %2034 = vmatprep.subr.mxu0 0.0
        %2035 = vmatpush2.msra.mxu0 0.0
        %2036 = vmatprep.subr.mxu0 0.0
        %2037 = vmatpush2.msra.mxu0 0.0
        %2038 = vmatprep.subr.mxu0 0.0
        %2039 = vmatpush2.msra.mxu0 0.0
        %2040 = vmatprep.subr.mxu0 0.0
        %2041 = vmatpush2.msra.mxu0 0.0
        %2042 = vmatprep.subr.mxu0 0.0
        %2043 = vmatpush2.msra.mxu0 0.0
        %2044 = vmatprep.subr.mxu0 0.0
        %2045 = vmatpush2.msra.mxu0 0.0
        %2046 = vmatprep.mubr.f32.mxu0 0.0
        %2047 = vmatmul.mubr.f32.gmra.mxu0 %v1980
        %v2048 = vpop.f32.mrf.mxu0
        %v2049 = vadd.f32 %v1977, %v2048
        %v2050 = vpop.f32.mrf.mxu0
        %2051 = vdwg.mxu0
        %v2053 = vsel %vm1091, %v1972, 0
        %v2056 = vsel %vm1091, %v2049, 0
        %2058 = vmatprep.subr.mxu0 0.0
        %2059 = vmatpush1.xpose.msra.mxu0 0.0
        %2060 = vmatprep.subr.mxu0 0.0
        %2061 = vmatpush1.xpose.msra.mxu0 0.0
        %2062 = vmatprep.subr.mxu0 0.0
        %2063 = vmatpush1.xpose.msra.mxu0 0.0
        %2064 = vmatprep.subr.mxu0 0.0
        %2065 = vmatpush1.xpose.msra.mxu0 0.0
        %2066 = vmatprep.subr.mxu0 0.0
        %2067 = vmatpush1.xpose.msra.mxu0 0.0
        %2068 = vmatprep.subr.mxu0 0.0
        %2069 = vmatpush1.xpose.msra.mxu0 0.0
        %2070 = vmatprep.subr.mxu0 0.0
        %2071 = vmatpush1.xpose.msra.mxu0 0.0
        %2072 = vmatprep.subr.mxu0 0.0
        %2073 = vmatpush1.xpose.msra.mxu0 0.0
        %2074 = vmatprep.subr.mxu0 0.0
        %2075 = vmatpush1.xpose.msra.mxu0 0.0
        %2076 = vmatprep.subr.mxu0 0.0
        %2077 = vmatpush1.xpose.msra.mxu0 0.0
        %2078 = vmatprep.subr.mxu0 0.0
        %2079 = vmatpush1.xpose.msra.mxu0 0.0
        %2080 = vmatprep.subr.mxu0 0.0
        %2081 = vmatpush1.xpose.msra.mxu0 0.0
        %2082 = vmatprep.subr.mxu0 0.0
        %2083 = vmatpush1.xpose.msra.mxu0 0.0
        %2084 = vmatprep.subr.mxu0 0.0
        %2085 = vmatpush1.xpose.msra.mxu0 0.0
        %2086 = vmatprep.subr.mxu0 0.0
        %2087 = vmatpush1.xpose.msra.mxu0 0.0
        %2088 = vmatprep.subr.mxu0 0.0
        %2089 = vmatpush1.xpose.msra.mxu0 %v2056
        %2090 = vmatprep.subr.mxu0 0.0
        %2091 = vmatpush2.xpose.msra.mxu0 0.0
        %2092 = vmatprep.subr.mxu0 0.0
        %2093 = vmatpush2.xpose.msra.mxu0 0.0
        %2094 = vmatprep.subr.mxu0 0.0
        %2095 = vmatpush2.xpose.msra.mxu0 0.0
        %2096 = vmatprep.subr.mxu0 0.0
        %2097 = vmatpush2.xpose.msra.mxu0 0.0
        %2098 = vmatprep.subr.mxu0 0.0
        %2099 = vmatpush2.xpose.msra.mxu0 0.0
        %2100 = vmatprep.subr.mxu0 0.0
        %2101 = vmatpush2.xpose.msra.mxu0 0.0
        %2102 = vmatprep.subr.mxu0 0.0
        %2103 = vmatpush2.xpose.msra.mxu0 0.0
        %2104 = vmatprep.subr.mxu0 0.0
        %2105 = vmatpush2.xpose.msra.mxu0 0.0
        %2106 = vmatprep.subr.mxu0 0.0
        %2107 = vmatpush2.xpose.msra.mxu0 0.0
        %2108 = vmatprep.subr.mxu0 0.0
        %2109 = vmatpush2.xpose.msra.mxu0 0.0
        %2110 = vmatprep.subr.mxu0 0.0
        %2111 = vmatpush2.xpose.msra.mxu0 0.0
        %2112 = vmatprep.subr.mxu0 0.0
        %2113 = vmatpush2.xpose.msra.mxu0 0.0
        %2114 = vmatprep.subr.mxu0 0.0
        %2115 = vmatpush2.xpose.msra.mxu0 0.0
        %2116 = vmatprep.subr.mxu0 0.0
        %2117 = vmatpush2.xpose.msra.mxu0 0.0
        %2118 = vmatprep.subr.mxu0 0.0
        %2119 = vmatpush2.xpose.msra.mxu0 0.0
        %2120 = vmatprep.subr.mxu0 0.0
        %2121 = vmatpush2.xpose.msra.mxu0 0.0
        %2122 = vmatprep.mubr.f32.mxu0 0.0
        %2123 = vmatmul.mubr.f32.gmra.mxu0 %v2053
        %v2124 = vpop.f32.mrf.mxu0
        %v2125 = vadd.f32 %v1875, %v2124
        %v2126 = vpop.f32.mrf.mxu0
        %2127 = vdwg.mxu0
        %v2128 = vsel %vm1091, %v2125, -inf
        %2129 = vmax.xlane.f32.xlu0 %v2128
        %v2130 = vpop.xlane.xlu0 %2129
        %v2131 = vsub.f32 %v2125, %v2130
        %v2132 = vmul.f32 %v2131, 1.442695
        %v2133 = vpow.pop %v2132
        %v2134 = vsel %vm1091, %v2133, 0.0
        %2135 = vadd.xlane.f32.xlu0 %v2134
        %v2136 = vpop.xlane.xlu0 %2135
        %v2137 = vrcp.pop %v2136
        %v2138 = vmul.f32 %v2133, %v2137
        %2139 = vrot.lane.b32.xlu0 %v2049, 96
        %v2140 = vpop.permute.xlu0 %2139
        %v2143 = vsel %vm1091, %v2138, 0
        %2145 = vmatprep.subr.mxu0 0.0
        %2146 = vmatpush1.msra.mxu0 0.0
        %2147 = vmatprep.subr.mxu0 0.0
        %2148 = vmatpush1.msra.mxu0 0.0
        %2149 = vmatprep.subr.mxu0 0.0
        %2150 = vmatpush1.msra.mxu0 0.0
        %2151 = vmatprep.subr.mxu0 0.0
        %2152 = vmatpush1.msra.mxu0 0.0
        %2153 = vmatprep.subr.mxu0 0.0
        %2154 = vmatpush1.msra.mxu0 0.0
        %2155 = vmatprep.subr.mxu0 0.0
        %2156 = vmatpush1.msra.mxu0 0.0
        %2157 = vmatprep.subr.mxu0 0.0
        %2158 = vmatpush1.msra.mxu0 0.0
        %2159 = vmatprep.subr.mxu0 0.0
        %2160 = vmatpush1.msra.mxu0 0.0
        %2161 = vmatprep.subr.mxu0 0.0
        %2162 = vmatpush1.msra.mxu0 0.0
        %2163 = vmatprep.subr.mxu0 0.0
        %2164 = vmatpush1.msra.mxu0 0.0
        %2165 = vmatprep.subr.mxu0 0.0
        %2166 = vmatpush1.msra.mxu0 0.0
        %2167 = vmatprep.subr.mxu0 0.0
        %2168 = vmatpush1.msra.mxu0 0.0
        %2169 = vmatprep.subr.mxu0 0.0
        %2170 = vmatpush1.msra.mxu0 0.0
        %2171 = vmatprep.subr.mxu0 0.0
        %2172 = vmatpush1.msra.mxu0 0.0
        %2173 = vmatprep.subr.mxu0 0.0
        %2174 = vmatpush1.msra.mxu0 0.0
        %2175 = vmatprep.subr.mxu0 0.0
        %2176 = vmatpush1.msra.mxu0 %v2140
        %2177 = vmatprep.subr.mxu0 0.0
        %2178 = vmatpush2.msra.mxu0 0.0
        %2179 = vmatprep.subr.mxu0 0.0
        %2180 = vmatpush2.msra.mxu0 0.0
        %2181 = vmatprep.subr.mxu0 0.0
        %2182 = vmatpush2.msra.mxu0 0.0
        %2183 = vmatprep.subr.mxu0 0.0
        %2184 = vmatpush2.msra.mxu0 0.0
        %2185 = vmatprep.subr.mxu0 0.0
        %2186 = vmatpush2.msra.mxu0 0.0
        %2187 = vmatprep.subr.mxu0 0.0
        %2188 = vmatpush2.msra.mxu0 0.0
        %2189 = vmatprep.subr.mxu0 0.0
        %2190 = vmatpush2.msra.mxu0 0.0
        %2191 = vmatprep.subr.mxu0 0.0
        %2192 = vmatpush2.msra.mxu0 0.0
        %2193 = vmatprep.subr.mxu0 0.0
        %2194 = vmatpush2.msra.mxu0 0.0
        %2195 = vmatprep.subr.mxu0 0.0
        %2196 = vmatpush2.msra.mxu0 0.0
        %2197 = vmatprep.subr.mxu0 0.0
        %2198 = vmatpush2.msra.mxu0 0.0
        %2199 = vmatprep.subr.mxu0 0.0
        %2200 = vmatpush2.msra.mxu0 0.0
        %2201 = vmatprep.subr.mxu0 0.0
        %2202 = vmatpush2.msra.mxu0 0.0
        %2203 = vmatprep.subr.mxu0 0.0
        %2204 = vmatpush2.msra.mxu0 0.0
        %2205 = vmatprep.subr.mxu0 0.0
        %2206 = vmatpush2.msra.mxu0 0.0
        %2207 = vmatprep.subr.mxu0 0.0
        %2208 = vmatpush2.msra.mxu0 0.0
        %2209 = vmatprep.mubr.f32.mxu0 0.0
        %2210 = vmatmul.mubr.f32.gmra.mxu0 %v2143
        %v2211 = vpop.f32.mrf.mxu0
        %v2212 = vadd.f32 0.0, %v2211
        %v2213 = vpop.f32.mrf.mxu0
        %2214 = vdwg.mxu0
        %2215 = vrot.lane.b32.xlu0 %v1972, 120
        %v2216 = vpop.permute.xlu0 %2215
        %2217 = vrot.lane.b32.xlu0 %v2049, 120
        %v2218 = vpop.permute.xlu0 %2217
        %v2219 = vsel %vm1091, %v2216, 0
        %v2221 = vsel %vm1091, %v2218, 0
        %2223 = vmatprep.subr.mxu0 0.0
        %2224 = vmatpush1.xpose.msra.mxu0 0.0
        %2225 = vmatprep.subr.mxu0 0.0
        %2226 = vmatpush1.xpose.msra.mxu0 0.0
        %2227 = vmatprep.subr.mxu0 0.0
        %2228 = vmatpush1.xpose.msra.mxu0 0.0
        %2229 = vmatprep.subr.mxu0 0.0
        %2230 = vmatpush1.xpose.msra.mxu0 0.0
        %2231 = vmatprep.subr.mxu0 0.0
        %2232 = vmatpush1.xpose.msra.mxu0 0.0
        %2233 = vmatprep.subr.mxu0 0.0
        %2234 = vmatpush1.xpose.msra.mxu0 0.0
        %2235 = vmatprep.subr.mxu0 0.0
        %2236 = vmatpush1.xpose.msra.mxu0 0.0
        %2237 = vmatprep.subr.mxu0 0.0
        %2238 = vmatpush1.xpose.msra.mxu0 0.0
        %2239 = vmatprep.subr.mxu0 0.0
        %2240 = vmatpush1.xpose.msra.mxu0 0.0
        %2241 = vmatprep.subr.mxu0 0.0
        %2242 = vmatpush1.xpose.msra.mxu0 0.0
        %2243 = vmatprep.subr.mxu0 0.0
        %2244 = vmatpush1.xpose.msra.mxu0 0.0
        %2245 = vmatprep.subr.mxu0 0.0
        %2246 = vmatpush1.xpose.msra.mxu0 0.0
        %2247 = vmatprep.subr.mxu0 0.0
        %2248 = vmatpush1.xpose.msra.mxu0 0.0
        %2249 = vmatprep.subr.mxu0 0.0
        %2250 = vmatpush1.xpose.msra.mxu0 0.0
        %2251 = vmatprep.subr.mxu0 0.0
        %2252 = vmatpush1.xpose.msra.mxu0 0.0
        %2253 = vmatprep.subr.mxu0 0.0
        %2254 = vmatpush1.xpose.msra.mxu0 %v2221
        %2255 = vmatprep.subr.mxu0 0.0
        %2256 = vmatpush2.xpose.msra.mxu0 0.0
        %2257 = vmatprep.subr.mxu0 0.0
        %2258 = vmatpush2.xpose.msra.mxu0 0.0
        %2259 = vmatprep.subr.mxu0 0.0
        %2260 = vmatpush2.xpose.msra.mxu0 0.0
        %2261 = vmatprep.subr.mxu0 0.0
        %2262 = vmatpush2.xpose.msra.mxu0 0.0
        %2263 = vmatprep.subr.mxu0 0.0
        %2264 = vmatpush2.xpose.msra.mxu0 0.0
        %2265 = vmatprep.subr.mxu0 0.0
        %2266 = vmatpush2.xpose.msra.mxu0 0.0
        %2267 = vmatprep.subr.mxu0 0.0
        %2268 = vmatpush2.xpose.msra.mxu0 0.0
        %2269 = vmatprep.subr.mxu0 0.0
        %2270 = vmatpush2.xpose.msra.mxu0 0.0
        %2271 = vmatprep.subr.mxu0 0.0
        %2272 = vmatpush2.xpose.msra.mxu0 0.0
        %2273 = vmatprep.subr.mxu0 0.0
        %2274 = vmatpush2.xpose.msra.mxu0 0.0
        %2275 = vmatprep.subr.mxu0 0.0
        %2276 = vmatpush2.xpose.msra.mxu0 0.0
        %2277 = vmatprep.subr.mxu0 0.0
        %2278 = vmatpush2.xpose.msra.mxu0 0.0
        %2279 = vmatprep.subr.mxu0 0.0
        %2280 = vmatpush2.xpose.msra.mxu0 0.0
        %2281 = vmatprep.subr.mxu0 0.0
        %2282 = vmatpush2.xpose.msra.mxu0 0.0
        %2283 = vmatprep.subr.mxu0 0.0
        %2284 = vmatpush2.xpose.msra.mxu0 0.0
        %2285 = vmatprep.subr.mxu0 0.0
        %2286 = vmatpush2.xpose.msra.mxu0 0.0
        %2287 = vmatprep.mubr.f32.mxu0 0.0
        %2288 = vmatmul.mubr.f32.gmra.mxu0 %v2219
        %v2289 = vpop.f32.mrf.mxu0
        %v2290 = vadd.f32 %v1875, %v2289
        %v2291 = vpop.f32.mrf.mxu0
        %2292 = vdwg.mxu0
        %v2293 = vsel %vm1091, %v2290, -inf
        %2294 = vmax.xlane.f32.xlu0 %v2293
        %v2295 = vpop.xlane.xlu0 %2294
        %v2296 = vsub.f32 %v2290, %v2295
        %v2297 = vmul.f32 %v2296, 1.442695
        %v2298 = vpow.pop %v2297
        %v2299 = vsel %vm1091, %v2298, 0.0
        %2300 = vadd.xlane.f32.xlu0 %v2299
        %v2301 = vpop.xlane.xlu0 %2300
        %v2302 = vrcp.pop %v2301
        %v2303 = vmul.f32 %v2298, %v2302
        %2304 = vrot.lane.b32.xlu0 %v2049, 88
        %v2305 = vpop.permute.xlu0 %2304
        %v2308 = vsel %vm1091, %v2303, 0
        %2310 = vmatprep.subr.mxu0 0.0
        %2311 = vmatpush1.msra.mxu0 0.0
        %2312 = vmatprep.subr.mxu0 0.0
        %2313 = vmatpush1.msra.mxu0 0.0
        %2314 = vmatprep.subr.mxu0 0.0
        %2315 = vmatpush1.msra.mxu0 0.0
        %2316 = vmatprep.subr.mxu0 0.0
        %2317 = vmatpush1.msra.mxu0 0.0
        %2318 = vmatprep.subr.mxu0 0.0
        %2319 = vmatpush1.msra.mxu0 0.0
        %2320 = vmatprep.subr.mxu0 0.0
        %2321 = vmatpush1.msra.mxu0 0.0
        %2322 = vmatprep.subr.mxu0 0.0
        %2323 = vmatpush1.msra.mxu0 0.0
        %2324 = vmatprep.subr.mxu0 0.0
        %2325 = vmatpush1.msra.mxu0 0.0
        %2326 = vmatprep.subr.mxu0 0.0
        %2327 = vmatpush1.msra.mxu0 0.0
        %2328 = vmatprep.subr.mxu0 0.0
        %2329 = vmatpush1.msra.mxu0 0.0
        %2330 = vmatprep.subr.mxu0 0.0
        %2331 = vmatpush1.msra.mxu0 0.0
        %2332 = vmatprep.subr.mxu0 0.0
        %2333 = vmatpush1.msra.mxu0 0.0
        %2334 = vmatprep.subr.mxu0 0.0
        %2335 = vmatpush1.msra.mxu0 0.0
        %2336 = vmatprep.subr.mxu0 0.0
        %2337 = vmatpush1.msra.mxu0 0.0
        %2338 = vmatprep.subr.mxu0 0.0
        %2339 = vmatpush1.msra.mxu0 0.0
        %2340 = vmatprep.subr.mxu0 0.0
        %2341 = vmatpush1.msra.mxu0 %v2305
        %2342 = vmatprep.subr.mxu0 0.0
        %2343 = vmatpush2.msra.mxu0 0.0
        %2344 = vmatprep.subr.mxu0 0.0
        %2345 = vmatpush2.msra.mxu0 0.0
        %2346 = vmatprep.subr.mxu0 0.0
        %2347 = vmatpush2.msra.mxu0 0.0
        %2348 = vmatprep.subr.mxu0 0.0
        %2349 = vmatpush2.msra.mxu0 0.0
        %2350 = vmatprep.subr.mxu0 0.0
        %2351 = vmatpush2.msra.mxu0 0.0
        %2352 = vmatprep.subr.mxu0 0.0
        %2353 = vmatpush2.msra.mxu0 0.0
        %2354 = vmatprep.subr.mxu0 0.0
        %2355 = vmatpush2.msra.mxu0 0.0
        %2356 = vmatprep.subr.mxu0 0.0
        %2357 = vmatpush2.msra.mxu0 0.0
        %2358 = vmatprep.subr.mxu0 0.0
        %2359 = vmatpush2.msra.mxu0 0.0
        %2360 = vmatprep.subr.mxu0 0.0
        %2361 = vmatpush2.msra.mxu0 0.0
        %2362 = vmatprep.subr.mxu0 0.0
        %2363 = vmatpush2.msra.mxu0 0.0
        %2364 = vmatprep.subr.mxu0 0.0
        %2365 = vmatpush2.msra.mxu0 0.0
        %2366 = vmatprep.subr.mxu0 0.0
        %2367 = vmatpush2.msra.mxu0 0.0
        %2368 = vmatprep.subr.mxu0 0.0
        %2369 = vmatpush2.msra.mxu0 0.0
        %2370 = vmatprep.subr.mxu0 0.0
        %2371 = vmatpush2.msra.mxu0 0.0
        %2372 = vmatprep.subr.mxu0 0.0
        %2373 = vmatpush2.msra.mxu0 0.0
        %2374 = vmatprep.mubr.f32.mxu0 0.0
        %2375 = vmatmul.mubr.f32.gmra.mxu0 %v2308
        %v2376 = vpop.f32.mrf.mxu0
        %v2377 = vadd.f32 0.0, %v2376
        %v2378 = vpop.f32.mrf.mxu0
        %2379 = vdwg.mxu0
        %2380 = vrot.lane.b32.xlu0 %v1972, 112
        %v2381 = vpop.permute.xlu0 %2380
        %2382 = vrot.lane.b32.xlu0 %v2049, 112
        %v2383 = vpop.permute.xlu0 %2382
        %v2384 = vsel %vm1091, %v2381, 0
        %v2386 = vsel %vm1091, %v2383, 0
        %2388 = vmatprep.subr.mxu0 0.0
        %2389 = vmatpush1.xpose.msra.mxu0 0.0
        %2390 = vmatprep.subr.mxu0 0.0
        %2391 = vmatpush1.xpose.msra.mxu0 0.0
        %2392 = vmatprep.subr.mxu0 0.0
        %2393 = vmatpush1.xpose.msra.mxu0 0.0
        %2394 = vmatprep.subr.mxu0 0.0
        %2395 = vmatpush1.xpose.msra.mxu0 0.0
        %2396 = vmatprep.subr.mxu0 0.0
        %2397 = vmatpush1.xpose.msra.mxu0 0.0
        %2398 = vmatprep.subr.mxu0 0.0
        %2399 = vmatpush1.xpose.msra.mxu0 0.0
        %2400 = vmatprep.subr.mxu0 0.0
        %2401 = vmatpush1.xpose.msra.mxu0 0.0
        %2402 = vmatprep.subr.mxu0 0.0
        %2403 = vmatpush1.xpose.msra.mxu0 0.0
        %2404 = vmatprep.subr.mxu0 0.0
        %2405 = vmatpush1.xpose.msra.mxu0 0.0
        %2406 = vmatprep.subr.mxu0 0.0
        %2407 = vmatpush1.xpose.msra.mxu0 0.0
        %2408 = vmatprep.subr.mxu0 0.0
        %2409 = vmatpush1.xpose.msra.mxu0 0.0
        %2410 = vmatprep.subr.mxu0 0.0
        %2411 = vmatpush1.xpose.msra.mxu0 0.0
        %2412 = vmatprep.subr.mxu0 0.0
        %2413 = vmatpush1.xpose.msra.mxu0 0.0
        %2414 = vmatprep.subr.mxu0 0.0
        %2415 = vmatpush1.xpose.msra.mxu0 0.0
        %2416 = vmatprep.subr.mxu0 0.0
        %2417 = vmatpush1.xpose.msra.mxu0 0.0
        %2418 = vmatprep.subr.mxu0 0.0
        %2419 = vmatpush1.xpose.msra.mxu0 %v2386
        %2420 = vmatprep.subr.mxu0 0.0
        %2421 = vmatpush2.xpose.msra.mxu0 0.0
        %2422 = vmatprep.subr.mxu0 0.0
        %2423 = vmatpush2.xpose.msra.mxu0 0.0
        %2424 = vmatprep.subr.mxu0 0.0
        %2425 = vmatpush2.xpose.msra.mxu0 0.0
        %2426 = vmatprep.subr.mxu0 0.0
        %2427 = vmatpush2.xpose.msra.mxu0 0.0
        %2428 = vmatprep.subr.mxu0 0.0
        %2429 = vmatpush2.xpose.msra.mxu0 0.0
        %2430 = vmatprep.subr.mxu0 0.0
        %2431 = vmatpush2.xpose.msra.mxu0 0.0
        %2432 = vmatprep.subr.mxu0 0.0
        %2433 = vmatpush2.xpose.msra.mxu0 0.0
        %2434 = vmatprep.subr.mxu0 0.0
        %2435 = vmatpush2.xpose.msra.mxu0 0.0
        %2436 = vmatprep.subr.mxu0 0.0
        %2437 = vmatpush2.xpose.msra.mxu0 0.0
        %2438 = vmatprep.subr.mxu0 0.0
        %2439 = vmatpush2.xpose.msra.mxu0 0.0
        %2440 = vmatprep.subr.mxu0 0.0
        %2441 = vmatpush2.xpose.msra.mxu0 0.0
        %2442 = vmatprep.subr.mxu0 0.0
        %2443 = vmatpush2.xpose.msra.mxu0 0.0
        %2444 = vmatprep.subr.mxu0 0.0
        %2445 = vmatpush2.xpose.msra.mxu0 0.0
        %2446 = vmatprep.subr.mxu0 0.0
        %2447 = vmatpush2.xpose.msra.mxu0 0.0
        %2448 = vmatprep.subr.mxu0 0.0
        %2449 = vmatpush2.xpose.msra.mxu0 0.0
        %2450 = vmatprep.subr.mxu0 0.0
        %2451 = vmatpush2.xpose.msra.mxu0 0.0
        %2452 = vmatprep.mubr.f32.mxu0 0.0
        %2453 = vmatmul.mubr.f32.gmra.mxu0 %v2384
        %v2454 = vpop.f32.mrf.mxu0
        %v2455 = vadd.f32 %v1875, %v2454
        %v2456 = vpop.f32.mrf.mxu0
        %2457 = vdwg.mxu0
        %v2458 = vsel %vm1091, %v2455, -inf
        %2459 = vmax.xlane.f32.xlu0 %v2458
        %v2460 = vpop.xlane.xlu0 %2459
        %v2461 = vsub.f32 %v2455, %v2460
        %v2462 = vmul.f32 %v2461, 1.442695
        %v2463 = vpow.pop %v2462
        %v2464 = vsel %vm1091, %v2463, 0.0
        %2465 = vadd.xlane.f32.xlu0 %v2464
        %v2466 = vpop.xlane.xlu0 %2465
        %v2467 = vrcp.pop %v2466
        %v2468 = vmul.f32 %v2463, %v2467
        %2469 = vrot.lane.b32.xlu0 %v2049, 80
        %v2470 = vpop.permute.xlu0 %2469
        %v2473 = vsel %vm1091, %v2468, 0
        %2475 = vmatprep.subr.mxu0 0.0
        %2476 = vmatpush1.msra.mxu0 0.0
        %2477 = vmatprep.subr.mxu0 0.0
        %2478 = vmatpush1.msra.mxu0 0.0
        %2479 = vmatprep.subr.mxu0 0.0
        %2480 = vmatpush1.msra.mxu0 0.0
        %2481 = vmatprep.subr.mxu0 0.0
        %2482 = vmatpush1.msra.mxu0 0.0
        %2483 = vmatprep.subr.mxu0 0.0
        %2484 = vmatpush1.msra.mxu0 0.0
        %2485 = vmatprep.subr.mxu0 0.0
        %2486 = vmatpush1.msra.mxu0 0.0
        %2487 = vmatprep.subr.mxu0 0.0
        %2488 = vmatpush1.msra.mxu0 0.0
        %2489 = vmatprep.subr.mxu0 0.0
        %2490 = vmatpush1.msra.mxu0 0.0
        %2491 = vmatprep.subr.mxu0 0.0
        %2492 = vmatpush1.msra.mxu0 0.0
        %2493 = vmatprep.subr.mxu0 0.0
        %2494 = vmatpush1.msra.mxu0 0.0
        %2495 = vmatprep.subr.mxu0 0.0
        %2496 = vmatpush1.msra.mxu0 0.0
        %2497 = vmatprep.subr.mxu0 0.0
        %2498 = vmatpush1.msra.mxu0 0.0
        %2499 = vmatprep.subr.mxu0 0.0
        %2500 = vmatpush1.msra.mxu0 0.0
        %2501 = vmatprep.subr.mxu0 0.0
        %2502 = vmatpush1.msra.mxu0 0.0
        %2503 = vmatprep.subr.mxu0 0.0
        %2504 = vmatpush1.msra.mxu0 0.0
        %2505 = vmatprep.subr.mxu0 0.0
        %2506 = vmatpush1.msra.mxu0 %v2470
        %2507 = vmatprep.subr.mxu0 0.0
        %2508 = vmatpush2.msra.mxu0 0.0
        %2509 = vmatprep.subr.mxu0 0.0
        %2510 = vmatpush2.msra.mxu0 0.0
        %2511 = vmatprep.subr.mxu0 0.0
        %2512 = vmatpush2.msra.mxu0 0.0
        %2513 = vmatprep.subr.mxu0 0.0
        %2514 = vmatpush2.msra.mxu0 0.0
        %2515 = vmatprep.subr.mxu0 0.0
        %2516 = vmatpush2.msra.mxu0 0.0
        %2517 = vmatprep.subr.mxu0 0.0
        %2518 = vmatpush2.msra.mxu0 0.0
        %2519 = vmatprep.subr.mxu0 0.0
        %2520 = vmatpush2.msra.mxu0 0.0
        %2521 = vmatprep.subr.mxu0 0.0
        %2522 = vmatpush2.msra.mxu0 0.0
        %2523 = vmatprep.subr.mxu0 0.0
        %2524 = vmatpush2.msra.mxu0 0.0
        %2525 = vmatprep.subr.mxu0 0.0
        %2526 = vmatpush2.msra.mxu0 0.0
        %2527 = vmatprep.subr.mxu0 0.0
        %2528 = vmatpush2.msra.mxu0 0.0
        %2529 = vmatprep.subr.mxu0 0.0
        %2530 = vmatpush2.msra.mxu0 0.0
        %2531 = vmatprep.subr.mxu0 0.0
        %2532 = vmatpush2.msra.mxu0 0.0
        %2533 = vmatprep.subr.mxu0 0.0
        %2534 = vmatpush2.msra.mxu0 0.0
        %2535 = vmatprep.subr.mxu0 0.0
        %2536 = vmatpush2.msra.mxu0 0.0
        %2537 = vmatprep.subr.mxu0 0.0
        %2538 = vmatpush2.msra.mxu0 0.0
        %2539 = vmatprep.mubr.f32.mxu0 0.0
        %2540 = vmatmul.mubr.f32.gmra.mxu0 %v2473
        %v2541 = vpop.f32.mrf.mxu0
        %v2542 = vadd.f32 0.0, %v2541
        %v2543 = vpop.f32.mrf.mxu0
        %2544 = vdwg.mxu0
        %2545 = vrot.lane.b32.xlu0 %v1972, 104
        %v2546 = vpop.permute.xlu0 %2545
        %2547 = vrot.lane.b32.xlu0 %v2049, 104
        %v2548 = vpop.permute.xlu0 %2547
        %v2549 = vsel %vm1091, %v2546, 0
        %v2551 = vsel %vm1091, %v2548, 0
        %2553 = vmatprep.subr.mxu0 0.0
        %2554 = vmatpush1.xpose.msra.mxu0 0.0
        %2555 = vmatprep.subr.mxu0 0.0
        %2556 = vmatpush1.xpose.msra.mxu0 0.0
        %2557 = vmatprep.subr.mxu0 0.0
        %2558 = vmatpush1.xpose.msra.mxu0 0.0
        %2559 = vmatprep.subr.mxu0 0.0
        %2560 = vmatpush1.xpose.msra.mxu0 0.0
        %2561 = vmatprep.subr.mxu0 0.0
        %2562 = vmatpush1.xpose.msra.mxu0 0.0
        %2563 = vmatprep.subr.mxu0 0.0
        %2564 = vmatpush1.xpose.msra.mxu0 0.0
        %2565 = vmatprep.subr.mxu0 0.0
        %2566 = vmatpush1.xpose.msra.mxu0 0.0
        %2567 = vmatprep.subr.mxu0 0.0
        %2568 = vmatpush1.xpose.msra.mxu0 0.0
        %2569 = vmatprep.subr.mxu0 0.0
        %2570 = vmatpush1.xpose.msra.mxu0 0.0
        %2571 = vmatprep.subr.mxu0 0.0
        %2572 = vmatpush1.xpose.msra.mxu0 0.0
        %2573 = vmatprep.subr.mxu0 0.0
        %2574 = vmatpush1.xpose.msra.mxu0 0.0
        %2575 = vmatprep.subr.mxu0 0.0
        %2576 = vmatpush1.xpose.msra.mxu0 0.0
        %2577 = vmatprep.subr.mxu0 0.0
        %2578 = vmatpush1.xpose.msra.mxu0 0.0
        %2579 = vmatprep.subr.mxu0 0.0
        %2580 = vmatpush1.xpose.msra.mxu0 0.0
        %2581 = vmatprep.subr.mxu0 0.0
        %2582 = vmatpush1.xpose.msra.mxu0 0.0
        %2583 = vmatprep.subr.mxu0 0.0
        %2584 = vmatpush1.xpose.msra.mxu0 %v2551
        %2585 = vmatprep.subr.mxu0 0.0
        %2586 = vmatpush2.xpose.msra.mxu0 0.0
        %2587 = vmatprep.subr.mxu0 0.0
        %2588 = vmatpush2.xpose.msra.mxu0 0.0
        %2589 = vmatprep.subr.mxu0 0.0
        %2590 = vmatpush2.xpose.msra.mxu0 0.0
        %2591 = vmatprep.subr.mxu0 0.0
        %2592 = vmatpush2.xpose.msra.mxu0 0.0
        %2593 = vmatprep.subr.mxu0 0.0
        %2594 = vmatpush2.xpose.msra.mxu0 0.0
        %2595 = vmatprep.subr.mxu0 0.0
        %2596 = vmatpush2.xpose.msra.mxu0 0.0
        %2597 = vmatprep.subr.mxu0 0.0
        %2598 = vmatpush2.xpose.msra.mxu0 0.0
        %2599 = vmatprep.subr.mxu0 0.0
        %2600 = vmatpush2.xpose.msra.mxu0 0.0
        %2601 = vmatprep.subr.mxu0 0.0
        %2602 = vmatpush2.xpose.msra.mxu0 0.0
        %2603 = vmatprep.subr.mxu0 0.0
        %2604 = vmatpush2.xpose.msra.mxu0 0.0
        %2605 = vmatprep.subr.mxu0 0.0
        %2606 = vmatpush2.xpose.msra.mxu0 0.0
        %2607 = vmatprep.subr.mxu0 0.0
        %2608 = vmatpush2.xpose.msra.mxu0 0.0
        %2609 = vmatprep.subr.mxu0 0.0
        %2610 = vmatpush2.xpose.msra.mxu0 0.0
        %2611 = vmatprep.subr.mxu0 0.0
        %2612 = vmatpush2.xpose.msra.mxu0 0.0
        %2613 = vmatprep.subr.mxu0 0.0
        %2614 = vmatpush2.xpose.msra.mxu0 0.0
        %2615 = vmatprep.subr.mxu0 0.0
        %2616 = vmatpush2.xpose.msra.mxu0 0.0
        %2617 = vmatprep.mubr.f32.mxu0 0.0
        %2618 = vmatmul.mubr.f32.gmra.mxu0 %v2549
        %v2619 = vpop.f32.mrf.mxu0
        %v2620 = vadd.f32 %v1875, %v2619
        %v2621 = vpop.f32.mrf.mxu0
        %2622 = vdwg.mxu0
        %v2623 = vsel %vm1091, %v2620, -inf
        %2624 = vmax.xlane.f32.xlu0 %v2623
        %v2625 = vpop.xlane.xlu0 %2624
        %v2626 = vsub.f32 %v2620, %v2625
        %v2627 = vmul.f32 %v2626, 1.442695
        %v2628 = vpow.pop %v2627
        %v2629 = vsel %vm1091, %v2628, 0.0
        %2630 = vadd.xlane.f32.xlu0 %v2629
        %v2631 = vpop.xlane.xlu0 %2630
        %v2632 = vrcp.pop %v2631
        %v2633 = vmul.f32 %v2628, %v2632
        %2634 = vrot.lane.b32.xlu0 %v2049, 72
        %v2635 = vpop.permute.xlu0 %2634
        %v2638 = vsel %vm1091, %v2633, 0
        %2640 = vmatprep.subr.mxu0 0.0
        %2641 = vmatpush1.msra.mxu0 0.0
        %2642 = vmatprep.subr.mxu0 0.0
        %2643 = vmatpush1.msra.mxu0 0.0
        %2644 = vmatprep.subr.mxu0 0.0
        %2645 = vmatpush1.msra.mxu0 0.0
        %2646 = vmatprep.subr.mxu0 0.0
        %2647 = vmatpush1.msra.mxu0 0.0
        %2648 = vmatprep.subr.mxu0 0.0
        %2649 = vmatpush1.msra.mxu0 0.0
        %2650 = vmatprep.subr.mxu0 0.0
        %2651 = vmatpush1.msra.mxu0 0.0
        %2652 = vmatprep.subr.mxu0 0.0
        %2653 = vmatpush1.msra.mxu0 0.0
        %2654 = vmatprep.subr.mxu0 0.0
        %2655 = vmatpush1.msra.mxu0 0.0
        %2656 = vmatprep.subr.mxu0 0.0
        %2657 = vmatpush1.msra.mxu0 0.0
        %2658 = vmatprep.subr.mxu0 0.0
        %2659 = vmatpush1.msra.mxu0 0.0
        %2660 = vmatprep.subr.mxu0 0.0
        %2661 = vmatpush1.msra.mxu0 0.0
        %2662 = vmatprep.subr.mxu0 0.0
        %2663 = vmatpush1.msra.mxu0 0.0
        %2664 = vmatprep.subr.mxu0 0.0
        %2665 = vmatpush1.msra.mxu0 0.0
        %2666 = vmatprep.subr.mxu0 0.0
        %2667 = vmatpush1.msra.mxu0 0.0
        %2668 = vmatprep.subr.mxu0 0.0
        %2669 = vmatpush1.msra.mxu0 0.0
        %2670 = vmatprep.subr.mxu0 0.0
        %2671 = vmatpush1.msra.mxu0 %v2635
        %2672 = vmatprep.subr.mxu0 0.0
        %2673 = vmatpush2.msra.mxu0 0.0
        %2674 = vmatprep.subr.mxu0 0.0
        %2675 = vmatpush2.msra.mxu0 0.0
        %2676 = vmatprep.subr.mxu0 0.0
        %2677 = vmatpush2.msra.mxu0 0.0
        %2678 = vmatprep.subr.mxu0 0.0
        %2679 = vmatpush2.msra.mxu0 0.0
        %2680 = vmatprep.subr.mxu0 0.0
        %2681 = vmatpush2.msra.mxu0 0.0
        %2682 = vmatprep.subr.mxu0 0.0
        %2683 = vmatpush2.msra.mxu0 0.0
        %2684 = vmatprep.subr.mxu0 0.0
        %2685 = vmatpush2.msra.mxu0 0.0
        %2686 = vmatprep.subr.mxu0 0.0
        %2687 = vmatpush2.msra.mxu0 0.0
        %2688 = vmatprep.subr.mxu0 0.0
        %2689 = vmatpush2.msra.mxu0 0.0
        %2690 = vmatprep.subr.mxu0 0.0
        %2691 = vmatpush2.msra.mxu0 0.0
        %2692 = vmatprep.subr.mxu0 0.0
        %2693 = vmatpush2.msra.mxu0 0.0
        %2694 = vmatprep.subr.mxu0 0.0
        %2695 = vmatpush2.msra.mxu0 0.0
        %2696 = vmatprep.subr.mxu0 0.0
        %2697 = vmatpush2.msra.mxu0 0.0
        %2698 = vmatprep.subr.mxu0 0.0
        %2699 = vmatpush2.msra.mxu0 0.0
        %2700 = vmatprep.subr.mxu0 0.0
        %2701 = vmatpush2.msra.mxu0 0.0
        %2702 = vmatprep.subr.mxu0 0.0
        %2703 = vmatpush2.msra.mxu0 0.0
        %2704 = vmatprep.mubr.f32.mxu0 0.0
        %2705 = vmatmul.mubr.f32.gmra.mxu0 %v2638
        %v2706 = vpop.f32.mrf.mxu0
        %v2707 = vadd.f32 0.0, %v2706
        %v2708 = vpop.f32.mrf.mxu0
        %2709 = vdwg.mxu0
        %2711 = vrot.lane.b32.xlu0 %v2377, 8
        %v2712 = vpop.permute.xlu0 %2711
        %2715 = vrot.lane.b32.xlu0 %v2542, 16
        %v2716 = vpop.permute.xlu0 %2715
        %2719 = vrot.lane.b32.xlu0 %v2707, 24
        %v2720 = vpop.permute.xlu0 %2719
        %v2722 = vsel %vm1091, %v2212, %v2712
        %v2723 = vsel %vm1763, %v2722, %v2716
        %v2724 = vsel %vm1765, %v2723, %v2720
        %v2726 = vlaneseq
        %v2727 = vshrl.u32 %v2726, 7
        %v2728 = vsub.s32 0, %v2727
        %v2729 = vrot.slane %v1890, %v2728
        %v2732 = vsel %vm940, %v2724, 0
        %2734 = vmatprep.subr.mxu0 0.0
        %2735 = vmatpush1.msra.mxu0 0.0
        %2736 = vmatprep.subr.mxu0 0.0
        %2737 = vmatpush1.msra.mxu0 0.0
        %2738 = vmatprep.subr.mxu0 0.0
        %2739 = vmatpush1.msra.mxu0 0.0
        %2740 = vmatprep.subr.mxu0 0.0
        %2741 = vmatpush1.msra.mxu0 0.0
        %2742 = vmatprep.subr.mxu0 0.0
        %2743 = vmatpush1.msra.mxu0 0.0
        %2744 = vmatprep.subr.mxu0 0.0
        %2745 = vmatpush1.msra.mxu0 0.0
        %2746 = vmatprep.subr.mxu0 0.0
        %2747 = vmatpush1.msra.mxu0 0.0
        %2748 = vmatprep.subr.mxu0 0.0
        %2749 = vmatpush1.msra.mxu0 0.0
        %2750 = vmatprep.subr.mxu0 0.0
        %2751 = vmatpush1.msra.mxu0 0.0
        %2752 = vmatprep.subr.mxu0 0.0
        %2753 = vmatpush1.msra.mxu0 0.0
        %2754 = vmatprep.subr.mxu0 0.0
        %2755 = vmatpush1.msra.mxu0 0.0
        %2756 = vmatprep.subr.mxu0 0.0
        %2757 = vmatpush1.msra.mxu0 0.0
        %2758 = vmatprep.subr.mxu0 0.0
        %2759 = vmatpush1.msra.mxu0 %v1889
        %2760 = vmatprep.subr.mxu0 0.0
        %2761 = vmatpush1.msra.mxu0 %v1888
        %2762 = vmatprep.subr.mxu0 0.0
        %2763 = vmatpush1.msra.mxu0 %v1887
        %2764 = vmatprep.subr.mxu0 0.0
        %2765 = vmatpush1.msra.mxu0 %v1886
        %2766 = vmatprep.subr.mxu0 0.0
        %2767 = vmatpush2.msra.mxu0 0.0
        %2768 = vmatprep.subr.mxu0 0.0
        %2769 = vmatpush2.msra.mxu0 0.0
        %2770 = vmatprep.subr.mxu0 0.0
        %2771 = vmatpush2.msra.mxu0 0.0
        %2772 = vmatprep.subr.mxu0 0.0
        %2773 = vmatpush2.msra.mxu0 0.0
        %2774 = vmatprep.subr.mxu0 0.0
        %2775 = vmatpush2.msra.mxu0 0.0
        %2776 = vmatprep.subr.mxu0 0.0
        %2777 = vmatpush2.msra.mxu0 0.0
        %2778 = vmatprep.subr.mxu0 0.0
        %2779 = vmatpush2.msra.mxu0 0.0
        %2780 = vmatprep.subr.mxu0 0.0
        %2781 = vmatpush2.msra.mxu0 0.0
        %2782 = vmatprep.subr.mxu0 0.0
        %2783 = vmatpush2.msra.mxu0 0.0
        %2784 = vmatprep.subr.mxu0 0.0
        %2785 = vmatpush2.msra.mxu0 0.0
        %2786 = vmatprep.subr.mxu0 0.0
        %2787 = vmatpush2.msra.mxu0 0.0
        %2788 = vmatprep.subr.mxu0 0.0
        %2789 = vmatpush2.msra.mxu0 0.0
        %2790 = vmatprep.subr.mxu0 0.0
        %2791 = vmatpush2.msra.mxu0 0.0
        %2792 = vmatprep.subr.mxu0 0.0
        %2793 = vmatpush2.msra.mxu0 0.0
        %2794 = vmatprep.subr.mxu0 0.0
        %2795 = vmatpush2.msra.mxu0 0.0
        %2796 = vmatprep.subr.mxu0 0.0
        %2797 = vmatpush2.msra.mxu0 0.0
        %2798 = vmatprep.mubr.f32.mxu0 0.0
        %2799 = vmatmul.mubr.f32.gmra.mxu0 %v2732
        %v2800 = vpop.f32.mrf.mxu0
        %v2801 = vadd.f32 %v2729, %v2800
        %v2802 = vpop.f32.mrf.mxu0
        %2803 = vdwg.mxu0
        %v2804 = vadd.f32 %v1874, %v2801
        %v2805 = vsel %vm940, %v2804, 0.0
        %2806 = vadd.xlane.f32.xlu0 %v2805
        %v2807 = vpop.xlane.xlu0 %2806
        %v2808 = vmul.f32 %v2807, %v1850
        %v2809 = vsub.f32 %v2804, %v2808
        %v2810 = vmul.f32 %v2809, %v2809
        %v2811 = vsel %vm940, %v2810, 0.0
        %2812 = vadd.xlane.f32.xlu0 %v2811
        %v2813 = vpop.xlane.xlu0 %2812
        %v2814 = vmul.f32 %v2813, %v1850
        %v2815 = vadd.f32 %v2814, 1e-12
        %v2816 = vrsqrt.pop %v2815
        %v2817 = vmul.f32 %v2809, %v2816
        %v2819 = vlaneseq
        %v2820 = vshrl.u32 %v2819, 7
        %v2821 = vsub.s32 0, %v2820
        %v2822 = vrot.slane %v1891, %v2821
        %v2824 = vmul.f32 %v2817, %v2822
        %v2826 = vlaneseq
        %v2827 = vshrl.u32 %v2826, 7
        %v2828 = vsub.s32 0, %v2827
        %v2829 = vrot.slane %v1892, %v2828
        %v2831 = vadd.f32 %v2824, %v2829
        %v2832 = vld [vmem:[%s20] sm:$0xff]
        %v2833 = vld [vmem:[%s20 + $0x8] sm:$0xff]
        %v2834 = vld [vmem:[%s20 + $0x10] sm:$0xff]
        %v2835 = vld [vmem:[%s20 + $0x18] sm:$0xff]
        %v2836 = vld [vmem:[#allocation6] sm:$0x1]
        %v2838 = vlaneseq
        %v2839 = vshrl.u32 %v2838, 7
        %v2840 = vsub.s32 0, %v2839
        %v2841 = vrot.slane %v2836, %v2840
        %v2844 = vsel %vm940, %v2831, 0
        %2846 = vmatprep.subr.mxu0 0.0
        %2847 = vmatpush1.msra.mxu0 0.0
        %2848 = vmatprep.subr.mxu0 0.0
        %2849 = vmatpush1.msra.mxu0 0.0
        %2850 = vmatprep.subr.mxu0 0.0
        %2851 = vmatpush1.msra.mxu0 0.0
        %2852 = vmatprep.subr.mxu0 0.0
        %2853 = vmatpush1.msra.mxu0 0.0
        %2854 = vmatprep.subr.mxu0 0.0
        %2855 = vmatpush1.msra.mxu0 0.0
        %2856 = vmatprep.subr.mxu0 0.0
        %2857 = vmatpush1.msra.mxu0 0.0
        %2858 = vmatprep.subr.mxu0 0.0
        %2859 = vmatpush1.msra.mxu0 0.0
        %2860 = vmatprep.subr.mxu0 0.0
        %2861 = vmatpush1.msra.mxu0 0.0
        %2862 = vmatprep.subr.mxu0 0.0
        %2863 = vmatpush1.msra.mxu0 0.0
        %2864 = vmatprep.subr.mxu0 0.0
        %2865 = vmatpush1.msra.mxu0 0.0
        %2866 = vmatprep.subr.mxu0 0.0
        %2867 = vmatpush1.msra.mxu0 0.0
        %2868 = vmatprep.subr.mxu0 0.0
        %2869 = vmatpush1.msra.mxu0 0.0
        %2870 = vmatprep.subr.mxu0 0.0
        %2871 = vmatpush1.msra.mxu0 %v2835
        %2872 = vmatprep.subr.mxu0 0.0
        %2873 = vmatpush1.msra.mxu0 %v2834
        %2874 = vmatprep.subr.mxu0 0.0
        %2875 = vmatpush1.msra.mxu0 %v2833
        %2876 = vmatprep.subr.mxu0 0.0
        %2877 = vmatpush1.msra.mxu0 %v2832
        %2878 = vmatprep.subr.mxu0 0.0
        %2879 = vmatpush2.msra.mxu0 0.0
        %2880 = vmatprep.subr.mxu0 0.0
        %2881 = vmatpush2.msra.mxu0 0.0
        %2882 = vmatprep.subr.mxu0 0.0
        %2883 = vmatpush2.msra.mxu0 0.0
        %2884 = vmatprep.subr.mxu0 0.0
        %2885 = vmatpush2.msra.mxu0 0.0
        %2886 = vmatprep.subr.mxu0 0.0
        %2887 = vmatpush2.msra.mxu0 0.0
        %2888 = vmatprep.subr.mxu0 0.0
        %2889 = vmatpush2.msra.mxu0 0.0
        %2890 = vmatprep.subr.mxu0 0.0
        %2891 = vmatpush2.msra.mxu0 0.0
        %2892 = vmatprep.subr.mxu0 0.0
        %2893 = vmatpush2.msra.mxu0 0.0
        %2894 = vmatprep.subr.mxu0 0.0
        %2895 = vmatpush2.msra.mxu0 0.0
        %2896 = vmatprep.subr.mxu0 0.0
        %2897 = vmatpush2.msra.mxu0 0.0
        %2898 = vmatprep.subr.mxu0 0.0
        %2899 = vmatpush2.msra.mxu0 0.0
        %2900 = vmatprep.subr.mxu0 0.0
        %2901 = vmatpush2.msra.mxu0 0.0
        %2902 = vmatprep.subr.mxu0 0.0
        %2903 = vmatpush2.msra.mxu0 0.0
        %2904 = vmatprep.subr.mxu0 0.0
        %2905 = vmatpush2.msra.mxu0 0.0
        %2906 = vmatprep.subr.mxu0 0.0
        %2907 = vmatpush2.msra.mxu0 0.0
        %2908 = vmatprep.subr.mxu0 0.0
        %2909 = vmatpush2.msra.mxu0 0.0
        %2910 = vmatprep.mubr.f32.mxu0 0.0
        %2911 = vmatmul.mubr.f32.gmra.mxu0 %v2844
        %v2912 = vpop.f32.mrf.mxu0
        %v2913 = vadd.f32 %v2841, %v2912
        %v2914 = vpop.f32.mrf.mxu0
        %2915 = vdwg.mxu0
        %v2916 = vmax.f32 %v2913, 0.0
        %v2917 = vld [vmem:[%s22] sm:$0xff]
        %v2918 = vld [vmem:[%s22 + $0x8] sm:$0xff]
        %v2919 = vld [vmem:[%s22 + $0x10] sm:$0xff]
        %v2920 = vld [vmem:[%s22 + $0x18] sm:$0xff]
        %v2921 = vld [vmem:[%s22 + $0x20] sm:$0xff]
        %v2922 = vld [vmem:[%s22 + $0x28] sm:$0xff]
        %v2923 = vld [vmem:[%s22 + $0x30] sm:$0xff]
        %v2924 = vld [vmem:[%s22 + $0x38] sm:$0xff]
        %vm2925 = vcmask 523264
        %v2927 = vsel %vm2925, %v2916, 0
        %2929 = vmatprep.subr.mxu0 0.0
        %2930 = vmatpush1.msra.mxu0 0.0
        %2931 = vmatprep.subr.mxu0 0.0
        %2932 = vmatpush1.msra.mxu0 0.0
        %2933 = vmatprep.subr.mxu0 0.0
        %2934 = vmatpush1.msra.mxu0 0.0
        %2935 = vmatprep.subr.mxu0 0.0
        %2936 = vmatpush1.msra.mxu0 0.0
        %2937 = vmatprep.subr.mxu0 0.0
        %2938 = vmatpush1.msra.mxu0 0.0
        %2939 = vmatprep.subr.mxu0 0.0
        %2940 = vmatpush1.msra.mxu0 0.0
        %2941 = vmatprep.subr.mxu0 0.0
        %2942 = vmatpush1.msra.mxu0 0.0
        %2943 = vmatprep.subr.mxu0 0.0
        %2944 = vmatpush1.msra.mxu0 0.0
        %2945 = vmatprep.subr.mxu0 0.0
        %2946 = vmatpush1.msra.mxu0 %v2924
        %2947 = vmatprep.subr.mxu0 0.0
        %2948 = vmatpush1.msra.mxu0 %v2923
        %2949 = vmatprep.subr.mxu0 0.0
        %2950 = vmatpush1.msra.mxu0 %v2922
        %2951 = vmatprep.subr.mxu0 0.0
        %2952 = vmatpush1.msra.mxu0 %v2921
        %2953 = vmatprep.subr.mxu0 0.0
        %2954 = vmatpush1.msra.mxu0 %v2920
        %2955 = vmatprep.subr.mxu0 0.0
        %2956 = vmatpush1.msra.mxu0 %v2919
        %2957 = vmatprep.subr.mxu0 0.0
        %2958 = vmatpush1.msra.mxu0 %v2918
        %2959 = vmatprep.subr.mxu0 0.0
        %2960 = vmatpush1.msra.mxu0 %v2917
        %2961 = vmatprep.subr.mxu0 0.0
        %2962 = vmatpush2.msra.mxu0 0.0
        %2963 = vmatprep.subr.mxu0 0.0
        %2964 = vmatpush2.msra.mxu0 0.0
        %2965 = vmatprep.subr.mxu0 0.0
        %2966 = vmatpush2.msra.mxu0 0.0
        %2967 = vmatprep.subr.mxu0 0.0
        %2968 = vmatpush2.msra.mxu0 0.0
        %2969 = vmatprep.subr.mxu0 0.0
        %2970 = vmatpush2.msra.mxu0 0.0
        %2971 = vmatprep.subr.mxu0 0.0
        %2972 = vmatpush2.msra.mxu0 0.0
        %2973 = vmatprep.subr.mxu0 0.0
        %2974 = vmatpush2.msra.mxu0 0.0
        %2975 = vmatprep.subr.mxu0 0.0
        %2976 = vmatpush2.msra.mxu0 0.0
        %2977 = vmatprep.subr.mxu0 0.0
        %2978 = vmatpush2.msra.mxu0 0.0
        %2979 = vmatprep.subr.mxu0 0.0
        %2980 = vmatpush2.msra.mxu0 0.0
        %2981 = vmatprep.subr.mxu0 0.0
        %2982 = vmatpush2.msra.mxu0 0.0
        %2983 = vmatprep.subr.mxu0 0.0
        %2984 = vmatpush2.msra.mxu0 0.0
        %2985 = vmatprep.subr.mxu0 0.0
        %2986 = vmatpush2.msra.mxu0 0.0
        %2987 = vmatprep.subr.mxu0 0.0
        %2988 = vmatpush2.msra.mxu0 0.0
        %2989 = vmatprep.subr.mxu0 0.0
        %2990 = vmatpush2.msra.mxu0 0.0
        %2991 = vmatprep.subr.mxu0 0.0
        %2992 = vmatpush2.msra.mxu0 0.0
        %2993 = vmatprep.mubr.f32.mxu0 0.0
        %2994 = vmatmul.mubr.f32.gmra.mxu0 %v2927
        %v2995 = vpop.f32.mrf.mxu0
        %v2996 = vadd.f32 0.0, %v2995
        %v2997 = vpop.f32.mrf.mxu0
        %2998 = vdwg.mxu0
        %v2999 = vadd.f32 %v2831, %v2996
        %v3000 = vld [vmem:[#allocation7] sm:$0x1]
        %v3002 = vlaneseq
        %v3003 = vshrl.u32 %v3002, 7
        %v3004 = vsub.s32 0, %v3003
        %v3005 = vrot.slane %v3000, %v3004
        %v3007 = vadd.f32 %v2999, %v3005
        %v3008 = vld [vmem:[#allocation9] sm:$0x1]
        %v3009 = vld [vmem:[#allocation10] sm:$0x1]
        %v3010 = vsel %vm940, %v3007, 0.0
        %3011 = vadd.xlane.f32.xlu0 %v3010
        %v3012 = vpop.xlane.xlu0 %3011
        %v3013 = vmul.f32 %v3012, %v1850
        %v3014 = vsub.f32 %v3007, %v3013
        %v3015 = vmul.f32 %v3014, %v3014
        %v3016 = vsel %vm940, %v3015, 0.0
        %3017 = vadd.xlane.f32.xlu0 %v3016
        %v3018 = vpop.xlane.xlu0 %3017
        %v3019 = vmul.f32 %v3018, %v1850
        %v3020 = vadd.f32 %v3019, 1e-12
        %v3021 = vrsqrt.pop %v3020
        %v3022 = vmul.f32 %v3014, %v3021
        %v3024 = vlaneseq
        %v3025 = vshrl.u32 %v3024, 7
        %v3026 = vsub.s32 0, %v3025
        %v3027 = vrot.slane %v3008, %v3026
        %v3029 = vmul.f32 %v3022, %v3027
        %v3031 = vlaneseq
        %v3032 = vshrl.u32 %v3031, 7
        %v3033 = vsub.s32 0, %v3032
        %v3034 = vrot.slane %v3009, %v3033
        %v3036 = vadd.f32 %v3029, %v3034
        %3037 = vst.msk [vmem:[%s913] sm:$0xff] %vm940, %v3036
        %p3038 = scmp.lt.s32.totalorder %s41, 1
        %s3039 = scalar_select %p3038, %s41, 1
        %s3040 = smul.addr %s3039, 8
        %s3041 = scalar_lea.vmem %s26, %s3040
        // Predicated region
        $region149: #{decoder_forward.4} parent=123 // pred_check
          %p3042 = pneg %p625
        $region150: #{decoder_forward.4} parent=123 // pred_check_branch
          %3044 = sbr.rel (%p3042) target = $region152
        $region151: #{decoder_forward.4} parent=123 // pred_region
          _
        $region152: #{decoder_forward.4} parent=123 // pred_fallthru
          _
      $region124: #{decoder_forward.4} parent=5 // pred_fallthru
        _
      %p3045 = scmp.le.s32.totalorder 2, %s36
      // Predicated region
      $region153: #{decoder_forward.4} parent=5 // pred_check
        %p3046 = pneg %p3045
      $region154: #{decoder_forward.4} parent=5 // pred_check_branch
        %3048 = sbr.rel (%p3046) target = $region156
      $region155: #{decoder_forward.4} parent=5 // pred_region
        %s3049 = ssub.s32 %s36, 2
        // Predicated region
        $region157: #{decoder_forward.4} parent=155 // pred_check
          %p3050 = pneg %p631
        $region158: #{decoder_forward.4} parent=155 // pred_check_branch
          %3052 = sbr.rel (%p3050) target = $region160
        $region159: #{decoder_forward.4} parent=155 // pred_region
          %p3053 = scmp.lt.s32.totalorder %s42, 1
          %s3054 = scalar_select %p3053, %s42, 1
          %s3055 = smul.addr %s3054, 8
          %s3056 = scalar_lea.vmem %s26, %s3055
        $region160: #{decoder_forward.4} parent=155 // pred_fallthru
          _
      $region156: #{decoder_forward.4} parent=5 // pred_fallthru
        _
    $region6: #{decoder_forward.4} parent=1 // loop_footer
      %s40 = sadd.s32 1, %s36
    $region7: #{decoder_forward.4} parent=1 // loop_footer_branch
      %35 = sbr.rel target = $region3
    $region8: #{decoder_forward.4} parent=1 // loop_exit
      _
    %3057 = vsyncpa [#allocation3], 1
    %s3058 = scalar_lea.sflag [#allocation3], 1
    %3059 = vsyncpa %s3058, 1
    %3060 = vsyncpa [#allocation5], 1
    %3061 = vsyncpa [#allocation8], 1
    %3062 = vsyncpa [#allocation11], 1

// kernel: decoder_forward.3
$region0: #{decoder_forward.3}
  #allocation0 [shape = 'u32[]', space=smem, size = 0x4, offset = 0x4, fixed_abs, tag = 'smem constant byte address 0x4 - core index']
  #allocation1 [shape = 'u32[144,128]{1,0:T(1,128)}', space=vmem, size = 0x12000, scoped, tag = 'internal scratch']
  %s0 = inlined_call_operand.vmem [shape: f32[2,8,32], index: 0, kind: input, shape index: {}]
  %s1 = inlined_call_operand.vmem [shape: f32[2,8,32], index: 1, kind: input, shape index: {}]
  %s2 = inlined_call_operand.vmem [shape: f32[2,8,8], index: 2, kind: input, shape index: {}]
  %s3 = inlined_call_operand.vmem [shape: f32[2,8,8], index: 3, kind: input, shape index: {}]
  %s4 = inlined_call_operand.vmem [shape: f32[32,32], index: 4, kind: input, shape index: {}]
  %s5 = inlined_call_operand.vmem [shape: f32[1,32], index: 5, kind: input, shape index: {}]
  %s6 = inlined_call_operand.vmem [shape: f32[32,64], index: 6, kind: input, shape index: {}]
  %s7 = inlined_call_operand.vmem [shape: f32[1,64], index: 7, kind: input, shape index: {}]
  %s8 = inlined_call_operand.vmem [shape: f32[32,32], index: 8, kind: input, shape index: {}]
  %s9 = inlined_call_operand.vmem [shape: f32[1,32], index: 9, kind: input, shape index: {}]
  %s10 = inlined_call_operand.vmem [shape: f32[1,32], index: 10, kind: input, shape index: {}]
  %s11 = inlined_call_operand.vmem [shape: f32[1,32], index: 11, kind: input, shape index: {}]
  %s12 = inlined_call_operand.vmem [shape: f32[32,32], index: 12, kind: input, shape index: {}]
  %s13 = inlined_call_operand.vmem [shape: f32[1,32], index: 13, kind: input, shape index: {}]
  %s14 = inlined_call_operand.vmem [shape: f32[32,64], index: 14, kind: input, shape index: {}]
  %s15 = inlined_call_operand.vmem [shape: f32[1,64], index: 15, kind: input, shape index: {}]
  %s16 = inlined_call_operand.vmem [shape: f32[32,32], index: 16, kind: input, shape index: {}]
  %s17 = inlined_call_operand.vmem [shape: f32[1,32], index: 17, kind: input, shape index: {}]
  %s18 = inlined_call_operand.vmem [shape: f32[1,32], index: 18, kind: input, shape index: {}]
  %s19 = inlined_call_operand.vmem [shape: f32[1,32], index: 19, kind: input, shape index: {}]
  %s20 = inlined_call_operand.vmem [shape: f32[32,64], index: 20, kind: input, shape index: {}]
  %s21 = inlined_call_operand.vmem [shape: f32[1,64], index: 21, kind: input, shape index: {}]
  %s22 = inlined_call_operand.vmem [shape: f32[64,32], index: 22, kind: input, shape index: {}]
  %s23 = inlined_call_operand.vmem [shape: f32[1,32], index: 23, kind: input, shape index: {}]
  %s24 = inlined_call_operand.vmem [shape: f32[1,32], index: 24, kind: input, shape index: {}]
  %s25 = inlined_call_operand.vmem [shape: f32[1,32], index: 25, kind: input, shape index: {}]
  %s26 = inlined_call_operand.vmem [shape: f32[2,8,32], index: 26, kind: output, shape index: {}]
  %s27 = sld [smem:[#allocation0]]
  $region137: #{decoder_forward.3} parent=0
    _
  %s29 = ssub.s32 1, %s27
  %s30 = scalar_select 0, %s29, %s27
  loop: start=0, step=1, limit=4
  $region2: #{decoder_forward.3} parent=0 // loop_pre_header
    _
  $region3: #{decoder_forward.3} parent=0 // loop_header
    %s32 = sphi 0, %s36
    %p33 = scmp.ge.s32.totalorder %s32, 4
    %s42 = sphi 0, %s44
    %s45 = sphi 0, %s42
    %s46 = sphi 0, %s45
    %s62 = sphi 0, %s46
    %s68 = sphi 0, %s70
    %s71 = sphi 0, %s68
    %s72 = sphi 0, %s71
    %s88 = sphi 0, %s72
    %s94 = sphi 0, %s96
    %s97 = sphi 0, %s94
    %s98 = sphi 0, %s97
    %s114 = sphi 0, %s98
    %s120 = sphi 0, %s122
    %s123 = sphi 0, %s120
    %s124 = sphi 0, %s123
    %s140 = sphi 0, %s124
    %s144 = sphi 0, %s144
    %s146 = sphi 0, %s144
    %s147 = sphi 0, %s146
    %s161 = sphi 0, %s147
    %s165 = sphi 0, %s165
    %s167 = sphi 0, %s165
    %s168 = sphi 0, %s167
    %s182 = sphi 0, %s168
    %s186 = sphi 0, %s186
    %s188 = sphi 0, %s186
    %s189 = sphi 0, %s188
    %s203 = sphi 0, %s189
    %s207 = sphi 0, %s207
    %s209 = sphi 0, %s207
    %s210 = sphi 0, %s209
    %s224 = sphi 0, %s210
    %s228 = sphi 0, %s228
    %s230 = sphi 0, %s228
    %s231 = sphi 0, %s230
    %s245 = sphi 0, %s231
    %s249 = sphi 0, %s249
    %s251 = sphi 0, %s249
    %s252 = sphi 0, %s251
    %s266 = sphi 0, %s252
    %s270 = sphi 0, %s270
    %s272 = sphi 0, %s270
    %s273 = sphi 0, %s272
    %s287 = sphi 0, %s273
    %s291 = sphi 0, %s291
    %s293 = sphi 0, %s291
    %s294 = sphi 0, %s293
    %s308 = sphi 0, %s294
    %s312 = sphi 0, %s312
    %s314 = sphi 0, %s312
    %s315 = sphi 0, %s314
    %s329 = sphi 0, %s315
    %s333 = sphi 0, %s333
    %s335 = sphi 0, %s333
    %s336 = sphi 0, %s335
    %s350 = sphi 0, %s336
    %s354 = sphi 0, %s354
    %s356 = sphi 0, %s354
    %s357 = sphi 0, %s356
    %s371 = sphi 0, %s357
    %s375 = sphi 0, %s375
    %s377 = sphi 0, %s375
    %s378 = sphi 0, %s377
    %s392 = sphi 0, %s378
    %s396 = sphi 0, %s396
    %s398 = sphi 0, %s396
    %s399 = sphi 0, %s398
    %s413 = sphi 0, %s399
    %s417 = sphi 0, %s417
    %s419 = sphi 0, %s417
    %s420 = sphi 0, %s419
    %s434 = sphi 0, %s420
    %s438 = sphi 0, %s438
    %s440 = sphi 0, %s438
    %s441 = sphi 0, %s440
    %s455 = sphi 0, %s441
    %s459 = sphi 0, %s459
    %s461 = sphi 0, %s459
    %s462 = sphi 0, %s461
    %s476 = sphi 0, %s462
    %s480 = sphi 0, %s480
    %s482 = sphi 0, %s480
    %s483 = sphi 0, %s482
    %s497 = sphi 0, %s483
    %s501 = sphi 0, %s501
    %s503 = sphi 0, %s501
    %s504 = sphi 0, %s503
    %s518 = sphi 0, %s504
    %s522 = sphi 0, %s522
    %s524 = sphi 0, %s522
    %s525 = sphi 0, %s524
    %s539 = sphi 0, %s525
    %s543 = sphi 0, %s543
    %s545 = sphi 0, %s543
    %s546 = sphi 0, %s545
    %s560 = sphi 0, %s546
    %s564 = sphi 0, %s564
    %s566 = sphi 0, %s564
    %s567 = sphi 0, %s566
    %s581 = sphi 0, %s567
    %s585 = sphi 0, %s585
    %s587 = sphi 0, %s585
    %s588 = sphi 0, %s587
    %s602 = sphi 0, %s588
    %s608 = sphi 0, %s610
    %s611 = sphi 0, %s608
    %s612 = sphi 0, %s611
    %s628 = sphi 0, %s612
  $region4: #{decoder_forward.3} parent=0 // loop_header_branch
    %35 = sbr.rel (%p33) target = $region8
  $region5: #{decoder_forward.3} parent=0 // loop_body
    %s37 = ssub.s32 %s32, 1
    %s38 = ssub.s32 %s32, 2
    %s39 = sadd.s32 %s32, 1
    %s40 = ssub.s32 %s32, %s39
    %p41 = scmp.eq.s32.totalorder %s40, 0
    %s43 = sadd.s32 %s42, 1
    %s44 = scalar_select %p41, %s42, %s43
    %p47 = pneg %p41
    %p48 = scmp.eq.s32.totalorder %s32, 1
    %p49 = por %p47, %p48
    %p50 = scmp.ne.s32.totalorder %s42, %s45
    %p51 = scmp.eq.s32.totalorder %s32, 0
    %p52 = por %p50, %p51
    %p53 = scmp.ne.s32.totalorder %s42, %s45
    %p54 = scmp.eq.s32.totalorder %s37, 1
    %p55 = por %p53, %p54
    %p56 = scmp.ne.s32.totalorder %s45, %s46
    %p57 = scmp.eq.s32.totalorder %s37, 0
    %p58 = por %p56, %p57
    %p59 = scmp.ne.s32.totalorder %s45, %s46
    %p60 = scmp.eq.s32.totalorder %s38, 1
    %p61 = por %p59, %p60
    %p63 = scmp.ne.s32.totalorder %s46, %s62
    %p64 = scmp.eq.s32.totalorder %s38, 0
    %p65 = por %p63, %p64
    %s66 = ssub.s32 %s32, %s39
    %p67 = scmp.eq.s32.totalorder %s66, 0
    %s69 = sadd.s32 %s68, 1
    %s70 = scalar_select %p67, %s68, %s69
    %p73 = pneg %p67
    %p74 = scmp.eq.s32.totalorder %s32, 1
    %p75 = por %p73, %p74
    %p76 = scmp.ne.s32.totalorder %s68, %s71
    %p77 = scmp.eq.s32.totalorder %s32, 0
    %p78 = por %p76, %p77
    %p79 = scmp.ne.s32.totalorder %s68, %s71
    %p80 = scmp.eq.s32.totalorder %s37, 1
    %p81 = por %p79, %p80
    %p82 = scmp.ne.s32.totalorder %s71, %s72
    %p83 = scmp.eq.s32.totalorder %s37, 0
    %p84 = por %p82, %p83
    %p85 = scmp.ne.s32.totalorder %s71, %s72
    %p86 = scmp.eq.s32.totalorder %s38, 1
    %p87 = por %p85, %p86
    %p89 = scmp.ne.s32.totalorder %s72, %s88
    %p90 = scmp.eq.s32.totalorder %s38, 0
    %p91 = por %p89, %p90
    %s92 = ssub.s32 %s32, %s39
    %p93 = scmp.eq.s32.totalorder %s92, 0
    %s95 = sadd.s32 %s94, 1
    %s96 = scalar_select %p93, %s94, %s95
    %p99 = pneg %p93
    %p100 = scmp.eq.s32.totalorder %s32, 1
    %p101 = por %p99, %p100
    %p102 = scmp.ne.s32.totalorder %s94, %s97
    %p103 = scmp.eq.s32.totalorder %s32, 0
    %p104 = por %p102, %p103
    %p105 = scmp.ne.s32.totalorder %s94, %s97
    %p106 = scmp.eq.s32.totalorder %s37, 1
    %p107 = por %p105, %p106
    %p108 = scmp.ne.s32.totalorder %s97, %s98
    %p109 = scmp.eq.s32.totalorder %s37, 0
    %p110 = por %p108, %p109
    %p111 = scmp.ne.s32.totalorder %s97, %s98
    %p112 = scmp.eq.s32.totalorder %s38, 1
    %p113 = por %p111, %p112
    %p115 = scmp.ne.s32.totalorder %s98, %s114
    %p116 = scmp.eq.s32.totalorder %s38, 0
    %p117 = por %p115, %p116
    %s118 = ssub.s32 %s32, %s39
    %p119 = scmp.eq.s32.totalorder %s118, 0
    %s121 = sadd.s32 %s120, 1
    %s122 = scalar_select %p119, %s120, %s121
    %p125 = pneg %p119
    %p126 = scmp.eq.s32.totalorder %s32, 1
    %p127 = por %p125, %p126
    %p128 = scmp.ne.s32.totalorder %s120, %s123
    %p129 = scmp.eq.s32.totalorder %s32, 0
    %p130 = por %p128, %p129
    %p131 = scmp.ne.s32.totalorder %s120, %s123
    %p132 = scmp.eq.s32.totalorder %s37, 1
    %p133 = por %p131, %p132
    %p134 = scmp.ne.s32.totalorder %s123, %s124
    %p135 = scmp.eq.s32.totalorder %s37, 0
    %p136 = por %p134, %p135
    %p137 = scmp.ne.s32.totalorder %s123, %s124
    %p138 = scmp.eq.s32.totalorder %s38, 1
    %p139 = por %p137, %p138
    %p141 = scmp.ne.s32.totalorder %s124, %s140
    %p142 = scmp.eq.s32.totalorder %s38, 0
    %p143 = por %p141, %p142
    %s145 = sadd.s32 %s144, 1
    %p148 = scmp.eq.s32.totalorder %s32, 1
    %p149 = scmp.ne.s32.totalorder %s144, %s146
    %p150 = scmp.eq.s32.totalorder %s32, 0
    %p151 = por %p149, %p150
    %p152 = scmp.ne.s32.totalorder %s144, %s146
    %p153 = scmp.eq.s32.totalorder %s37, 1
    %p154 = por %p152, %p153
    %p155 = scmp.ne.s32.totalorder %s146, %s147
    %p156 = scmp.eq.s32.totalorder %s37, 0
    %p157 = por %p155, %p156
    %p158 = scmp.ne.s32.totalorder %s146, %s147
    %p159 = scmp.eq.s32.totalorder %s38, 1
    %p160 = por %p158, %p159
    %p162 = scmp.ne.s32.totalorder %s147, %s161
    %p163 = scmp.eq.s32.totalorder %s38, 0
    %p164 = por %p162, %p163
    %s166 = sadd.s32 %s165, 1
    %p169 = scmp.eq.s32.totalorder %s32, 1
    %p170 = scmp.ne.s32.totalorder %s165, %s167
    %p171 = scmp.eq.s32.totalorder %s32, 0
    %p172 = por %p170, %p171
    %p173 = scmp.ne.s32.totalorder %s165, %s167
    %p174 = scmp.eq.s32.totalorder %s37, 1
    %p175 = por %p173, %p174
    %p176 = scmp.ne.s32.totalorder %s167, %s168
    %p177 = scmp.eq.s32.totalorder %s37, 0
    %p178 = por %p176, %p177
    %p179 = scmp.ne.s32.totalorder %s167, %s168
    %p180 = scmp.eq.s32.totalorder %s38, 1
    %p181 = por %p179, %p180
    %p183 = scmp.ne.s32.totalorder %s168, %s182
    %p184 = scmp.eq.s32.totalorder %s38, 0
    %p185 = por %p183, %p184
    %s187 = sadd.s32 %s186, 1
    %p190 = scmp.eq.s32.totalorder %s32, 1
    %p191 = scmp.ne.s32.totalorder %s186, %s188
    %p192 = scmp.eq.s32.totalorder %s32, 0
    %p193 = por %p191, %p192
    %p194 = scmp.ne.s32.totalorder %s186, %s188
    %p195 = scmp.eq.s32.totalorder %s37, 1
    %p196 = por %p194, %p195
    %p197 = scmp.ne.s32.totalorder %s188, %s189
    %p198 = scmp.eq.s32.totalorder %s37, 0
    %p199 = por %p197, %p198
    %p200 = scmp.ne.s32.totalorder %s188, %s189
    %p201 = scmp.eq.s32.totalorder %s38, 1
    %p202 = por %p200, %p201
    %p204 = scmp.ne.s32.totalorder %s189, %s203
    %p205 = scmp.eq.s32.totalorder %s38, 0
    %p206 = por %p204, %p205
    %s208 = sadd.s32 %s207, 1
    %p211 = scmp.eq.s32.totalorder %s32, 1
    %p212 = scmp.ne.s32.totalorder %s207, %s209
    %p213 = scmp.eq.s32.totalorder %s32, 0
    %p214 = por %p212, %p213
    %p215 = scmp.ne.s32.totalorder %s207, %s209
    %p216 = scmp.eq.s32.totalorder %s37, 1
    %p217 = por %p215, %p216
    %p218 = scmp.ne.s32.totalorder %s209, %s210
    %p219 = scmp.eq.s32.totalorder %s37, 0
    %p220 = por %p218, %p219
    %p221 = scmp.ne.s32.totalorder %s209, %s210
    %p222 = scmp.eq.s32.totalorder %s38, 1
    %p223 = por %p221, %p222
    %p225 = scmp.ne.s32.totalorder %s210, %s224
    %p226 = scmp.eq.s32.totalorder %s38, 0
    %p227 = por %p225, %p226
    %s229 = sadd.s32 %s228, 1
    %p232 = scmp.eq.s32.totalorder %s32, 1
    %p233 = scmp.ne.s32.totalorder %s228, %s230
    %p234 = scmp.eq.s32.totalorder %s32, 0
    %p235 = por %p233, %p234
    %p236 = scmp.ne.s32.totalorder %s228, %s230
    %p237 = scmp.eq.s32.totalorder %s37, 1
    %p238 = por %p236, %p237
    %p239 = scmp.ne.s32.totalorder %s230, %s231
    %p240 = scmp.eq.s32.totalorder %s37, 0
    %p241 = por %p239, %p240
    %p242 = scmp.ne.s32.totalorder %s230, %s231
    %p243 = scmp.eq.s32.totalorder %s38, 1
    %p244 = por %p242, %p243
    %p246 = scmp.ne.s32.totalorder %s231, %s245
    %p247 = scmp.eq.s32.totalorder %s38, 0
    %p248 = por %p246, %p247
    %s250 = sadd.s32 %s249, 1
    %p253 = scmp.eq.s32.totalorder %s32, 1
    %p254 = scmp.ne.s32.totalorder %s249, %s251
    %p255 = scmp.eq.s32.totalorder %s32, 0
    %p256 = por %p254, %p255
    %p257 = scmp.ne.s32.totalorder %s249, %s251
    %p258 = scmp.eq.s32.totalorder %s37, 1
    %p259 = por %p257, %p258
    %p260 = scmp.ne.s32.totalorder %s251, %s252
    %p261 = scmp.eq.s32.totalorder %s37, 0
    %p262 = por %p260, %p261
    %p263 = scmp.ne.s32.totalorder %s251, %s252
    %p264 = scmp.eq.s32.totalorder %s38, 1
    %p265 = por %p263, %p264
    %p267 = scmp.ne.s32.totalorder %s252, %s266
    %p268 = scmp.eq.s32.totalorder %s38, 0
    %p269 = por %p267, %p268
    %s271 = sadd.s32 %s270, 1
    %p274 = scmp.eq.s32.totalorder %s32, 1
    %p275 = scmp.ne.s32.totalorder %s270, %s272
    %p276 = scmp.eq.s32.totalorder %s32, 0
    %p277 = por %p275, %p276
    %p278 = scmp.ne.s32.totalorder %s270, %s272
    %p279 = scmp.eq.s32.totalorder %s37, 1
    %p280 = por %p278, %p279
    %p281 = scmp.ne.s32.totalorder %s272, %s273
    %p282 = scmp.eq.s32.totalorder %s37, 0
    %p283 = por %p281, %p282
    %p284 = scmp.ne.s32.totalorder %s272, %s273
    %p285 = scmp.eq.s32.totalorder %s38, 1
    %p286 = por %p284, %p285
    %p288 = scmp.ne.s32.totalorder %s273, %s287
    %p289 = scmp.eq.s32.totalorder %s38, 0
    %p290 = por %p288, %p289
    %s292 = sadd.s32 %s291, 1
    %p295 = scmp.eq.s32.totalorder %s32, 1
    %p296 = scmp.ne.s32.totalorder %s291, %s293
    %p297 = scmp.eq.s32.totalorder %s32, 0
    %p298 = por %p296, %p297
    %p299 = scmp.ne.s32.totalorder %s291, %s293
    %p300 = scmp.eq.s32.totalorder %s37, 1
    %p301 = por %p299, %p300
    %p302 = scmp.ne.s32.totalorder %s293, %s294
    %p303 = scmp.eq.s32.totalorder %s37, 0
    %p304 = por %p302, %p303
    %p305 = scmp.ne.s32.totalorder %s293, %s294
    %p306 = scmp.eq.s32.totalorder %s38, 1
    %p307 = por %p305, %p306
    %p309 = scmp.ne.s32.totalorder %s294, %s308
    %p310 = scmp.eq.s32.totalorder %s38, 0
    %p311 = por %p309, %p310
    %s313 = sadd.s32 %s312, 1
    %p316 = scmp.eq.s32.totalorder %s32, 1
    %p317 = scmp.ne.s32.totalorder %s312, %s314
    %p318 = scmp.eq.s32.totalorder %s32, 0
    %p319 = por %p317, %p318
    %p320 = scmp.ne.s32.totalorder %s312, %s314
    %p321 = scmp.eq.s32.totalorder %s37, 1
    %p322 = por %p320, %p321
    %p323 = scmp.ne.s32.totalorder %s314, %s315
    %p324 = scmp.eq.s32.totalorder %s37, 0
    %p325 = por %p323, %p324
    %p326 = scmp.ne.s32.totalorder %s314, %s315
    %p327 = scmp.eq.s32.totalorder %s38, 1
    %p328 = por %p326, %p327
    %p330 = scmp.ne.s32.totalorder %s315, %s329
    %p331 = scmp.eq.s32.totalorder %s38, 0
    %p332 = por %p330, %p331
    %s334 = sadd.s32 %s333, 1
    %p337 = scmp.eq.s32.totalorder %s32, 1
    %p338 = scmp.ne.s32.totalorder %s333, %s335
    %p339 = scmp.eq.s32.totalorder %s32, 0
    %p340 = por %p338, %p339
    %p341 = scmp.ne.s32.totalorder %s333, %s335
    %p342 = scmp.eq.s32.totalorder %s37, 1
    %p343 = por %p341, %p342
    %p344 = scmp.ne.s32.totalorder %s335, %s336
    %p345 = scmp.eq.s32.totalorder %s37, 0
    %p346 = por %p344, %p345
    %p347 = scmp.ne.s32.totalorder %s335, %s336
    %p348 = scmp.eq.s32.totalorder %s38, 1
    %p349 = por %p347, %p348
    %p351 = scmp.ne.s32.totalorder %s336, %s350
    %p352 = scmp.eq.s32.totalorder %s38, 0
    %p353 = por %p351, %p352
    %s355 = sadd.s32 %s354, 1
    %p358 = scmp.eq.s32.totalorder %s32, 1
    %p359 = scmp.ne.s32.totalorder %s354, %s356
    %p360 = scmp.eq.s32.totalorder %s32, 0
    %p361 = por %p359, %p360
    %p362 = scmp.ne.s32.totalorder %s354, %s356
    %p363 = scmp.eq.s32.totalorder %s37, 1
    %p364 = por %p362, %p363
    %p365 = scmp.ne.s32.totalorder %s356, %s357
    %p366 = scmp.eq.s32.totalorder %s37, 0
    %p367 = por %p365, %p366
    %p368 = scmp.ne.s32.totalorder %s356, %s357
    %p369 = scmp.eq.s32.totalorder %s38, 1
    %p370 = por %p368, %p369
    %p372 = scmp.ne.s32.totalorder %s357, %s371
    %p373 = scmp.eq.s32.totalorder %s38, 0
    %p374 = por %p372, %p373
    %s376 = sadd.s32 %s375, 1
    %p379 = scmp.eq.s32.totalorder %s32, 1
    %p380 = scmp.ne.s32.totalorder %s375, %s377
    %p381 = scmp.eq.s32.totalorder %s32, 0
    %p382 = por %p380, %p381
    %p383 = scmp.ne.s32.totalorder %s375, %s377
    %p384 = scmp.eq.s32.totalorder %s37, 1
    %p385 = por %p383, %p384
    %p386 = scmp.ne.s32.totalorder %s377, %s378
    %p387 = scmp.eq.s32.totalorder %s37, 0
    %p388 = por %p386, %p387
    %p389 = scmp.ne.s32.totalorder %s377, %s378
    %p390 = scmp.eq.s32.totalorder %s38, 1
    %p391 = por %p389, %p390
    %p393 = scmp.ne.s32.totalorder %s378, %s392
    %p394 = scmp.eq.s32.totalorder %s38, 0
    %p395 = por %p393, %p394
    %s397 = sadd.s32 %s396, 1
    %p400 = scmp.eq.s32.totalorder %s32, 1
    %p401 = scmp.ne.s32.totalorder %s396, %s398
    %p402 = scmp.eq.s32.totalorder %s32, 0
    %p403 = por %p401, %p402
    %p404 = scmp.ne.s32.totalorder %s396, %s398
    %p405 = scmp.eq.s32.totalorder %s37, 1
    %p406 = por %p404, %p405
    %p407 = scmp.ne.s32.totalorder %s398, %s399
    %p408 = scmp.eq.s32.totalorder %s37, 0
    %p409 = por %p407, %p408
    %p410 = scmp.ne.s32.totalorder %s398, %s399
    %p411 = scmp.eq.s32.totalorder %s38, 1
    %p412 = por %p410, %p411
    %p414 = scmp.ne.s32.totalorder %s399, %s413
    %p415 = scmp.eq.s32.totalorder %s38, 0
    %p416 = por %p414, %p415
    %s418 = sadd.s32 %s417, 1
    %p421 = scmp.eq.s32.totalorder %s32, 1
    %p422 = scmp.ne.s32.totalorder %s417, %s419
    %p423 = scmp.eq.s32.totalorder %s32, 0
    %p424 = por %p422, %p423
    %p425 = scmp.ne.s32.totalorder %s417, %s419
    %p426 = scmp.eq.s32.totalorder %s37, 1
    %p427 = por %p425, %p426
    %p428 = scmp.ne.s32.totalorder %s419, %s420
    %p429 = scmp.eq.s32.totalorder %s37, 0
    %p430 = por %p428, %p429
    %p431 = scmp.ne.s32.totalorder %s419, %s420
    %p432 = scmp.eq.s32.totalorder %s38, 1
    %p433 = por %p431, %p432
    %p435 = scmp.ne.s32.totalorder %s420, %s434
    %p436 = scmp.eq.s32.totalorder %s38, 0
    %p437 = por %p435, %p436
    %s439 = sadd.s32 %s438, 1
    %p442 = scmp.eq.s32.totalorder %s32, 1
    %p443 = scmp.ne.s32.totalorder %s438, %s440
    %p444 = scmp.eq.s32.totalorder %s32, 0
    %p445 = por %p443, %p444
    %p446 = scmp.ne.s32.totalorder %s438, %s440
    %p447 = scmp.eq.s32.totalorder %s37, 1
    %p448 = por %p446, %p447
    %p449 = scmp.ne.s32.totalorder %s440, %s441
    %p450 = scmp.eq.s32.totalorder %s37, 0
    %p451 = por %p449, %p450
    %p452 = scmp.ne.s32.totalorder %s440, %s441
    %p453 = scmp.eq.s32.totalorder %s38, 1
    %p454 = por %p452, %p453
    %p456 = scmp.ne.s32.totalorder %s441, %s455
    %p457 = scmp.eq.s32.totalorder %s38, 0
    %p458 = por %p456, %p457
    %s460 = sadd.s32 %s459, 1
    %p463 = scmp.eq.s32.totalorder %s32, 1
    %p464 = scmp.ne.s32.totalorder %s459, %s461
    %p465 = scmp.eq.s32.totalorder %s32, 0
    %p466 = por %p464, %p465
    %p467 = scmp.ne.s32.totalorder %s459, %s461
    %p468 = scmp.eq.s32.totalorder %s37, 1
    %p469 = por %p467, %p468
    %p470 = scmp.ne.s32.totalorder %s461, %s462
    %p471 = scmp.eq.s32.totalorder %s37, 0
    %p472 = por %p470, %p471
    %p473 = scmp.ne.s32.totalorder %s461, %s462
    %p474 = scmp.eq.s32.totalorder %s38, 1
    %p475 = por %p473, %p474
    %p477 = scmp.ne.s32.totalorder %s462, %s476
    %p478 = scmp.eq.s32.totalorder %s38, 0
    %p479 = por %p477, %p478
    %s481 = sadd.s32 %s480, 1
    %p484 = scmp.eq.s32.totalorder %s32, 1
    %p485 = scmp.ne.s32.totalorder %s480, %s482
    %p486 = scmp.eq.s32.totalorder %s32, 0
    %p487 = por %p485, %p486
    %p488 = scmp.ne.s32.totalorder %s480, %s482
    %p489 = scmp.eq.s32.totalorder %s37, 1
    %p490 = por %p488, %p489
    %p491 = scmp.ne.s32.totalorder %s482, %s483
    %p492 = scmp.eq.s32.totalorder %s37, 0
    %p493 = por %p491, %p492
    %p494 = scmp.ne.s32.totalorder %s482, %s483
    %p495 = scmp.eq.s32.totalorder %s38, 1
    %p496 = por %p494, %p495
    %p498 = scmp.ne.s32.totalorder %s483, %s497
    %p499 = scmp.eq.s32.totalorder %s38, 0
    %p500 = por %p498, %p499
    %s502 = sadd.s32 %s501, 1
    %p505 = scmp.eq.s32.totalorder %s32, 1
    %p506 = scmp.ne.s32.totalorder %s501, %s503
    %p507 = scmp.eq.s32.totalorder %s32, 0
    %p508 = por %p506, %p507
    %p509 = scmp.ne.s32.totalorder %s501, %s503
    %p510 = scmp.eq.s32.totalorder %s37, 1
    %p511 = por %p509, %p510
    %p512 = scmp.ne.s32.totalorder %s503, %s504
    %p513 = scmp.eq.s32.totalorder %s37, 0
    %p514 = por %p512, %p513
    %p515 = scmp.ne.s32.totalorder %s503, %s504
    %p516 = scmp.eq.s32.totalorder %s38, 1
    %p517 = por %p515, %p516
    %p519 = scmp.ne.s32.totalorder %s504, %s518
    %p520 = scmp.eq.s32.totalorder %s38, 0
    %p521 = por %p519, %p520
    %s523 = sadd.s32 %s522, 1
    %p526 = scmp.eq.s32.totalorder %s32, 1
    %p527 = scmp.ne.s32.totalorder %s522, %s524
    %p528 = scmp.eq.s32.totalorder %s32, 0
    %p529 = por %p527, %p528
    %p530 = scmp.ne.s32.totalorder %s522, %s524
    %p531 = scmp.eq.s32.totalorder %s37, 1
    %p532 = por %p530, %p531
    %p533 = scmp.ne.s32.totalorder %s524, %s525
    %p534 = scmp.eq.s32.totalorder %s37, 0
    %p535 = por %p533, %p534
    %p536 = scmp.ne.s32.totalorder %s524, %s525
    %p537 = scmp.eq.s32.totalorder %s38, 1
    %p538 = por %p536, %p537
    %p540 = scmp.ne.s32.totalorder %s525, %s539
    %p541 = scmp.eq.s32.totalorder %s38, 0
    %p542 = por %p540, %p541
    %s544 = sadd.s32 %s543, 1
    %p547 = scmp.eq.s32.totalorder %s32, 1
    %p548 = scmp.ne.s32.totalorder %s543, %s545
    %p549 = scmp.eq.s32.totalorder %s32, 0
    %p550 = por %p548, %p549
    %p551 = scmp.ne.s32.totalorder %s543, %s545
    %p552 = scmp.eq.s32.totalorder %s37, 1
    %p553 = por %p551, %p552
    %p554 = scmp.ne.s32.totalorder %s545, %s546
    %p555 = scmp.eq.s32.totalorder %s37, 0
    %p556 = por %p554, %p555
    %p557 = scmp.ne.s32.totalorder %s545, %s546
    %p558 = scmp.eq.s32.totalorder %s38, 1
    %p559 = por %p557, %p558
    %p561 = scmp.ne.s32.totalorder %s546, %s560
    %p562 = scmp.eq.s32.totalorder %s38, 0
    %p563 = por %p561, %p562
    %s565 = sadd.s32 %s564, 1
    %p568 = scmp.eq.s32.totalorder %s32, 1
    %p569 = scmp.ne.s32.totalorder %s564, %s566
    %p570 = scmp.eq.s32.totalorder %s32, 0
    %p571 = por %p569, %p570
    %p572 = scmp.ne.s32.totalorder %s564, %s566
    %p573 = scmp.eq.s32.totalorder %s37, 1
    %p574 = por %p572, %p573
    %p575 = scmp.ne.s32.totalorder %s566, %s567
    %p576 = scmp.eq.s32.totalorder %s37, 0
    %p577 = por %p575, %p576
    %p578 = scmp.ne.s32.totalorder %s566, %s567
    %p579 = scmp.eq.s32.totalorder %s38, 1
    %p580 = por %p578, %p579
    %p582 = scmp.ne.s32.totalorder %s567, %s581
    %p583 = scmp.eq.s32.totalorder %s38, 0
    %p584 = por %p582, %p583
    %s586 = sadd.s32 %s585, 1
    %p589 = scmp.eq.s32.totalorder %s32, 1
    %p590 = scmp.ne.s32.totalorder %s585, %s587
    %p591 = scmp.eq.s32.totalorder %s32, 0
    %p592 = por %p590, %p591
    %p593 = scmp.ne.s32.totalorder %s585, %s587
    %p594 = scmp.eq.s32.totalorder %s37, 1
    %p595 = por %p593, %p594
    %p596 = scmp.ne.s32.totalorder %s587, %s588
    %p597 = scmp.eq.s32.totalorder %s37, 0
    %p598 = por %p596, %p597
    %p599 = scmp.ne.s32.totalorder %s587, %s588
    %p600 = scmp.eq.s32.totalorder %s38, 1
    %p601 = por %p599, %p600
    %p603 = scmp.ne.s32.totalorder %s588, %s602
    %p604 = scmp.eq.s32.totalorder %s38, 0
    %p605 = por %p603, %p604
    %s606 = ssub.s32 %s32, %s39
    %p607 = scmp.eq.s32.totalorder %s606, 0
    %s609 = sadd.s32 %s608, 1
    %s610 = scalar_select %p607, %s608, %s609
    %p613 = pneg %p607
    %p614 = scmp.eq.s32.totalorder %s32, 1
    %p615 = por %p613, %p614
    %p616 = scmp.ne.s32.totalorder %s608, %s611
    %p617 = scmp.eq.s32.totalorder %s32, 0
    %p618 = por %p616, %p617
    %p619 = scmp.ne.s32.totalorder %s608, %s611
    %p620 = scmp.eq.s32.totalorder %s37, 1
    %p621 = por %p619, %p620
    %p622 = scmp.ne.s32.totalorder %s611, %s612
    %p623 = scmp.eq.s32.totalorder %s37, 0
    %p624 = por %p622, %p623
    %p625 = scmp.ne.s32.totalorder %s611, %s612
    %p626 = scmp.eq.s32.totalorder %s38, 1
    %p627 = por %p625, %p626
    %p629 = scmp.ne.s32.totalorder %s612, %s628
    %p630 = scmp.eq.s32.totalorder %s38, 0
    %p631 = por %p629, %p630
    %p632 = scmp.le.s32.totalorder 1, %s32
    %p633 = scmp.lt.s32.totalorder %s32, 3
    %p634 = pnand %p632, %p633
    %p635 = pneg %p634
    // Predicated region
    $region9: #{decoder_forward.3} parent=5 // pred_check
      _
    $region10: #{decoder_forward.3} parent=5 // pred_check_branch
      %637 = sbr.rel (%p634) target = $region12
    $region11: #{decoder_forward.3} parent=5 // pred_region
      %s638 = ssub.s32 %s32, 1
      // Predicated region
      $region13: #{decoder_forward.3} parent=11 // pred_check
        %p639 = pneg %p157
      $region14: #{decoder_forward.3} parent=11 // pred_check_branch
        %641 = sbr.rel (%p639) target = $region16
      $region15: #{decoder_forward.3} parent=11 // pred_region
        _
      $region16: #{decoder_forward.3} parent=11 // pred_fallthru
        _
      // Predicated region
      $region17: #{decoder_forward.3} parent=11 // pred_check
        %p642 = pneg %p178
      $region18: #{decoder_forward.3} parent=11 // pred_check_branch
        %644 = sbr.rel (%p642) target = $region20
      $region19: #{decoder_forward.3} parent=11 // pred_region
        _
      $region20: #{decoder_forward.3} parent=11 // pred_fallthru
        _
      // Predicated region
      $region21: #{decoder_forward.3} parent=11 // pred_check
        %p645 = pneg %p199
      $region22: #{decoder_forward.3} parent=11 // pred_check_branch
        %647 = sbr.rel (%p645) target = $region24
      $region23: #{decoder_forward.3} parent=11 // pred_region
        _
      $region24: #{decoder_forward.3} parent=11 // pred_fallthru
        _
      // Predicated region
      $region25: #{decoder_forward.3} parent=11 // pred_check
        %p648 = pneg %p220
      $region26: #{decoder_forward.3} parent=11 // pred_check_branch
        %650 = sbr.rel (%p648) target = $region28
      $region27: #{decoder_forward.3} parent=11 // pred_region
        _
      $region28: #{decoder_forward.3} parent=11 // pred_fallthru
        _
      // Predicated region
      $region29: #{decoder_forward.3} parent=11 // pred_check
        %p651 = pneg %p241
      $region30: #{decoder_forward.3} parent=11 // pred_check_branch
        %653 = sbr.rel (%p651) target = $region32
      $region31: #{decoder_forward.3} parent=11 // pred_region
        _
      $region32: #{decoder_forward.3} parent=11 // pred_fallthru
        _
      // Predicated region
      $region33: #{decoder_forward.3} parent=11 // pred_check
        %p654 = pneg %p262
      $region34: #{decoder_forward.3} parent=11 // pred_check_branch
        %656 = sbr.rel (%p654) target = $region36
      $region35: #{decoder_forward.3} parent=11 // pred_region
        _
      $region36: #{decoder_forward.3} parent=11 // pred_fallthru
        _
      // Predicated region
      $region37: #{decoder_forward.3} parent=11 // pred_check
        %p657 = pneg %p283
      $region38: #{decoder_forward.3} parent=11 // pred_check_branch
        %659 = sbr.rel (%p657) target = $region40
      $region39: #{decoder_forward.3} parent=11 // pred_region
        _
      $region40: #{decoder_forward.3} parent=11 // pred_fallthru
        _
      // Predicated region
      $region41: #{decoder_forward.3} parent=11 // pred_check
        %p660 = pneg %p304
      $region42: #{decoder_forward.3} parent=11 // pred_check_branch
        %662 = sbr.rel (%p660) target = $region44
      $region43: #{decoder_forward.3} parent=11 // pred_region
        _
      $region44: #{decoder_forward.3} parent=11 // pred_fallthru
        _
      // Predicated region
      $region45: #{decoder_forward.3} parent=11 // pred_check
        %p663 = pneg %p325
      $region46: #{decoder_forward.3} parent=11 // pred_check_branch
        %665 = sbr.rel (%p663) target = $region48
      $region47: #{decoder_forward.3} parent=11 // pred_region
        _
      $region48: #{decoder_forward.3} parent=11 // pred_fallthru
        _
      // Predicated region
      $region49: #{decoder_forward.3} parent=11 // pred_check
        %p666 = pneg %p346
      $region50: #{decoder_forward.3} parent=11 // pred_check_branch
        %668 = sbr.rel (%p666) target = $region52
      $region51: #{decoder_forward.3} parent=11 // pred_region
        _
      $region52: #{decoder_forward.3} parent=11 // pred_fallthru
        _
      // Predicated region
      $region53: #{decoder_forward.3} parent=11 // pred_check
        %p669 = pneg %p367
      $region54: #{decoder_forward.3} parent=11 // pred_check_branch
        %671 = sbr.rel (%p669) target = $region56
      $region55: #{decoder_forward.3} parent=11 // pred_region
        _
      $region56: #{decoder_forward.3} parent=11 // pred_fallthru
        _
      // Predicated region
      $region57: #{decoder_forward.3} parent=11 // pred_check
        %p672 = pneg %p388
      $region58: #{decoder_forward.3} parent=11 // pred_check_branch
        %674 = sbr.rel (%p672) target = $region60
      $region59: #{decoder_forward.3} parent=11 // pred_region
        _
      $region60: #{decoder_forward.3} parent=11 // pred_fallthru
        _
      // Predicated region
      $region61: #{decoder_forward.3} parent=11 // pred_check
        %p675 = pneg %p409
      $region62: #{decoder_forward.3} parent=11 // pred_check_branch
        %677 = sbr.rel (%p675) target = $region64
      $region63: #{decoder_forward.3} parent=11 // pred_region
        _
      $region64: #{decoder_forward.3} parent=11 // pred_fallthru
        _
      // Predicated region
      $region65: #{decoder_forward.3} parent=11 // pred_check
        %p678 = pneg %p430
      $region66: #{decoder_forward.3} parent=11 // pred_check_branch
        %680 = sbr.rel (%p678) target = $region68
      $region67: #{decoder_forward.3} parent=11 // pred_region
        _
      $region68: #{decoder_forward.3} parent=11 // pred_fallthru
        _
      // Predicated region
      $region69: #{decoder_forward.3} parent=11 // pred_check
        %p681 = pneg %p451
      $region70: #{decoder_forward.3} parent=11 // pred_check_branch
        %683 = sbr.rel (%p681) target = $region72
      $region71: #{decoder_forward.3} parent=11 // pred_region
        _
      $region72: #{decoder_forward.3} parent=11 // pred_fallthru
        _
      // Predicated region
      $region73: #{decoder_forward.3} parent=11 // pred_check
        %p684 = pneg %p472
      $region74: #{decoder_forward.3} parent=11 // pred_check_branch
        %686 = sbr.rel (%p684) target = $region76
      $region75: #{decoder_forward.3} parent=11 // pred_region
        _
      $region76: #{decoder_forward.3} parent=11 // pred_fallthru
        _
      // Predicated region
      $region77: #{decoder_forward.3} parent=11 // pred_check
        %p687 = pneg %p493
      $region78: #{decoder_forward.3} parent=11 // pred_check_branch
        %689 = sbr.rel (%p687) target = $region80
      $region79: #{decoder_forward.3} parent=11 // pred_region
        _
      $region80: #{decoder_forward.3} parent=11 // pred_fallthru
        _
      // Predicated region
      $region81: #{decoder_forward.3} parent=11 // pred_check
        %p690 = pneg %p514
      $region82: #{decoder_forward.3} parent=11 // pred_check_branch
        %692 = sbr.rel (%p690) target = $region84
      $region83: #{decoder_forward.3} parent=11 // pred_region
        _
      $region84: #{decoder_forward.3} parent=11 // pred_fallthru
        _
      // Predicated region
      $region85: #{decoder_forward.3} parent=11 // pred_check
        %p693 = pneg %p535
      $region86: #{decoder_forward.3} parent=11 // pred_check_branch
        %695 = sbr.rel (%p693) target = $region88
      $region87: #{decoder_forward.3} parent=11 // pred_region
        _
      $region88: #{decoder_forward.3} parent=11 // pred_fallthru
        _
      // Predicated region
      $region89: #{decoder_forward.3} parent=11 // pred_check
        %p696 = pneg %p556
      $region90: #{decoder_forward.3} parent=11 // pred_check_branch
        %698 = sbr.rel (%p696) target = $region92
      $region91: #{decoder_forward.3} parent=11 // pred_region
        _
      $region92: #{decoder_forward.3} parent=11 // pred_fallthru
        _
      // Predicated region
      $region93: #{decoder_forward.3} parent=11 // pred_check
        %p699 = pneg %p577
      $region94: #{decoder_forward.3} parent=11 // pred_check_branch
        %701 = sbr.rel (%p699) target = $region96
      $region95: #{decoder_forward.3} parent=11 // pred_region
        _
      $region96: #{decoder_forward.3} parent=11 // pred_fallthru
        _
      // Predicated region
      $region97: #{decoder_forward.3} parent=11 // pred_check
        %p702 = pneg %p598
      $region98: #{decoder_forward.3} parent=11 // pred_check_branch
        %704 = sbr.rel (%p702) target = $region100
      $region99: #{decoder_forward.3} parent=11 // pred_region
        _
      $region100: #{decoder_forward.3} parent=11 // pred_fallthru
        _
    $region12: #{decoder_forward.3} parent=5 // pred_fallthru
      _
    %p705 = scmp.lt.s32.totalorder %s32, 2
    // Predicated region
    $region101: #{decoder_forward.3} parent=5 // pred_check
      %p706 = pneg %p705
    $region102: #{decoder_forward.3} parent=5 // pred_check_branch
      %708 = sbr.rel (%p706) target = $region104
    $region103: #{decoder_forward.3} parent=5 // pred_region
      // Predicated region
      $region105: #{decoder_forward.3} parent=103 // pred_check
        %p709 = pneg %p52
      $region106: #{decoder_forward.3} parent=103 // pred_check_branch
        %711 = sbr.rel (%p709) target = $region108
      $region107: #{decoder_forward.3} parent=103 // pred_region
        %p712 = scmp.lt.s32.totalorder %s32, 1
        %s713 = scalar_select %p712, %s32, 1
        %s714 = smul.addr %s713, 8
        %s715 = scalar_lea.vmem %s0, %s714
      $region108: #{decoder_forward.3} parent=103 // pred_fallthru
        _
      // Predicated region
      $region109: #{decoder_forward.3} parent=103 // pred_check
        %p716 = pneg %p78
      $region110: #{decoder_forward.3} parent=103 // pred_check_branch
        %718 = sbr.rel (%p716) target = $region112
      $region111: #{decoder_forward.3} parent=103 // pred_region
        %p719 = scmp.lt.s32.totalorder %s32, 1
        %s720 = scalar_select %p719, %s32, 1
        %s721 = smul.addr %s720, 8
        %s722 = scalar_lea.vmem %s1, %s721
      $region112: #{decoder_forward.3} parent=103 // pred_fallthru
        _
      // Predicated region
      $region113: #{decoder_forward.3} parent=103 // pred_check
        %p723 = pneg %p104
      $region114: #{decoder_forward.3} parent=103 // pred_check_branch
        %725 = sbr.rel (%p723) target = $region116
      $region115: #{decoder_forward.3} parent=103 // pred_region
        %p726 = scmp.lt.s32.totalorder %s32, 1
        %s727 = scalar_select %p726, %s32, 1
        %s728 = smul.addr %s727, 8
        %s729 = scalar_lea.vmem %s2, %s728
      $region116: #{decoder_forward.3} parent=103 // pred_fallthru
        _
      // Predicated region
      $region117: #{decoder_forward.3} parent=103 // pred_check
        %p730 = pneg %p130
      $region118: #{decoder_forward.3} parent=103 // pred_check_branch
        %732 = sbr.rel (%p730) target = $region120
      $region119: #{decoder_forward.3} parent=103 // pred_region
        %p733 = scmp.lt.s32.totalorder %s32, 1
        %s734 = scalar_select %p733, %s32, 1
        %s735 = smul.addr %s734, 8
        %s736 = scalar_lea.vmem %s3, %s735
      $region120: #{decoder_forward.3} parent=103 // pred_fallthru
        _
    $region104: #{decoder_forward.3} parent=5 // pred_fallthru
      _
    %p737 = scmp.le.s32.totalorder 1, %s32
    %p738 = scmp.lt.s32.totalorder %s32, 3
    %p739 = pnand %p737, %p738
    %p740 = pneg %p739
    // Predicated region
    $region121: #{decoder_forward.3} parent=5 // pred_check
      _
    $region122: #{decoder_forward.3} parent=5 // pred_check_branch
      %742 = sbr.rel (%p739) target = $region124
    $region123: #{decoder_forward.3} parent=5 // pred_region
      %s743 = ssub.s32 %s32, 1
      %p744 = scmp.lt.s32.totalorder %s37, 1
      %s745 = scalar_select %p744, %s37, 1
      %s746 = smul.addr %s745, 8
      %s747 = scalar_lea.vmem %s0, %s746
      %p748 = pneg %p58
      %p749 = pneg %p55
      %p750 = scmp.lt.s32.totalorder %s37, 1
      %s751 = scalar_select %p750, %s37, 1
      %s752 = smul.addr %s751, 8
      %s753 = scalar_lea.vmem %s1, %s752
      %p754 = pneg %p84
      %p755 = pneg %p81
      %p756 = scmp.lt.s32.totalorder %s37, 1
      %s757 = scalar_select %p756, %s37, 1
      %s758 = smul.addr %s757, 8
      %s759 = scalar_lea.vmem %s2, %s758
      %p760 = pneg %p110
      %p761 = pneg %p107
      %p762 = scmp.lt.s32.totalorder %s37, 1
      %s763 = scalar_select %p762, %s37, 1
      %s764 = smul.addr %s763, 8
      %s765 = scalar_lea.vmem %s3, %s764
      %p766 = pneg %p136
      %p767 = pneg %p133
      %p768 = pneg %p157
      %p769 = pneg %p154
      %p770 = pneg %p178
      %p771 = pneg %p175
      %p772 = pneg %p199
      %p773 = pneg %p196
      %p774 = pneg %p220
      %p775 = pneg %p217
      %p776 = pneg %p241
      %p777 = pneg %p238
      %p778 = pneg %p262
      %p779 = pneg %p259
      %p780 = pneg %p283
      %p781 = pneg %p280
      %p782 = pneg %p304
      %p783 = pneg %p301
      %p784 = pneg %p325
      %p785 = pneg %p322
      %p786 = pneg %p346
      %p787 = pneg %p343
      %p788 = pneg %p367
      %p789 = pneg %p364
      %p790 = pneg %p388
      %p791 = pneg %p385
      %p792 = pneg %p409
      %p793 = pneg %p406
      %p794 = pneg %p430
      %p795 = pneg %p427
      %p796 = pneg %p451
      %p797 = pneg %p448
      %p798 = pneg %p472
      %p799 = pneg %p469
      %p800 = pneg %p493
      %p801 = pneg %p490
      %p802 = pneg %p514
      %p803 = pneg %p511
      %p804 = pneg %p535
      %p805 = pneg %p532
      %p806 = pneg %p556
      %p807 = pneg %p553
      %p808 = pneg %p577
      %p809 = pneg %p574
      %p810 = pneg %p598
      %p811 = pneg %p595
      %p812 = pneg %p624
      %p813 = pneg %p621
      %p814 = scmp.lt.s32.totalorder %s37, 1
      %s815 = scalar_select %p814, %s37, 1
      %s816 = smul.addr %s815, 8
      %s817 = scalar_lea.vmem %s26, %s816
      %p818 = scmp.lt.s32.totalorder %s37, 1
      %s819 = scalar_select %p818, %s37, 1
      %s820 = smul.addr %s819, 8
      %s821 = scalar_lea.vmem %s0, %s820
      %p822 = scmp.lt.s32.totalorder %s37, 1
      %s823 = scalar_select %p822, %s37, 1
      %s824 = smul.addr %s823, 8
      %s825 = scalar_lea.vmem %s1, %s824
      %p826 = scmp.lt.s32.totalorder %s37, 1
      %s827 = scalar_select %p826, %s37, 1
      %s828 = smul.addr %s827, 8
      %s829 = scalar_lea.vmem %s2, %s828
      %p830 = scmp.lt.s32.totalorder %s37, 1
      %s831 = scalar_select %p830, %s37, 1
      %s832 = smul.addr %s831, 8
      %s833 = scalar_lea.vmem %s3, %s832
      %p834 = scmp.lt.s32.totalorder %s37, 1
      %s835 = scalar_select %p834, %s37, 1
      %s836 = smul.addr %s835, 8
      %s837 = scalar_lea.vmem %s26, %s836
      %v838 = vld [vmem:[%s821] sm:$0xff]
      %v839 = vld [vmem:[%s825] sm:$0xff]
      %v840 = vld [vmem:[%s829] sm:$0xff]
      %v841 = vld [vmem:[%s4] sm:$0xff]
      %v842 = vld [vmem:[%s4 + $0x8] sm:$0xff]
      %v843 = vld [vmem:[%s4 + $0x10] sm:$0xff]
      %v844 = vld [vmem:[%s4 + $0x18] sm:$0xff]
      %v845 = vld [vmem:[%s5] sm:$0x1]
      %v846 = vld [vmem:[%s6] sm:$0xff]
      %v847 = vld [vmem:[%s6 + $0x8] sm:$0xff]
      %v848 = vld [vmem:[%s6 + $0x10] sm:$0xff]
      %v849 = vld [vmem:[%s6 + $0x18] sm:$0xff]
      %v850 = vld [vmem:[%s7] sm:$0x1]
      %v851 = vld [vmem:[%s8] sm:$0xff]
      %v852 = vld [vmem:[%s8 + $0x8] sm:$0xff]
      %v853 = vld [vmem:[%s8 + $0x10] sm:$0xff]
      %v854 = vld [vmem:[%s8 + $0x18] sm:$0xff]
      %v855 = vld [vmem:[%s9] sm:$0x1]
      %v856 = vld [vmem:[%s10] sm:$0x1]
      %v857 = vld [vmem:[%s11] sm:$0x1]
      %v859 = vlaneseq
      %v860 = vshrl.u32 %v859, 7
      %v861 = vsub.s32 0, %v860
      %v862 = vrot.slane %v845, %v861
      %vm864 = vcmask 261120
      %v866 = vsel %vm864, %v838, 0
      %868 = vmatprep.subr.mxu0 0.0
      %869 = vmatpush1.msra.mxu0 0.0
      %870 = vmatprep.subr.mxu0 0.0
      %871 = vmatpush1.msra.mxu0 0.0
      %872 = vmatprep.subr.mxu0 0.0
      %873 = vmatpush1.msra.mxu0 0.0
      %874 = vmatprep.subr.mxu0 0.0
      %875 = vmatpush1.msra.mxu0 0.0
      %876 = vmatprep.subr.mxu0 0.0
      %877 = vmatpush1.msra.mxu0 0.0
      %878 = vmatprep.subr.mxu0 0.0
      %879 = vmatpush1.msra.mxu0 0.0
      %880 = vmatprep.subr.mxu0 0.0
      %881 = vmatpush1.msra.mxu0 0.0
      %882 = vmatprep.subr.mxu0 0.0
      %883 = vmatpush1.msra.mxu0 0.0
      %884 = vmatprep.subr.mxu0 0.0
      %885 = vmatpush1.msra.mxu0 0.0
      %886 = vmatprep.subr.mxu0 0.0
      %887 = vmatpush1.msra.mxu0 0.0
      %888 = vmatprep.subr.mxu0 0.0
      %889 = vmatpush1.msra.mxu0 0.0
      %890 = vmatprep.subr.mxu0 0.0
      %891 = vmatpush1.msra.mxu0 0.0
      %892 = vmatprep.subr.mxu0 0.0
      %893 = vmatpush1.msra.mxu0 %v844
      %894 = vmatprep.subr.mxu0 0.0
      %895 = vmatpush1.msra.mxu0 %v843
      %896 = vmatprep.subr.mxu0 0.0
      %897 = vmatpush1.msra.mxu0 %v842
      %898 = vmatprep.subr.mxu0 0.0
      %899 = vmatpush1.msra.mxu0 %v841
      %900 = vmatprep.subr.mxu0 0.0
      %901 = vmatpush2.msra.mxu0 0.0
      %902 = vmatprep.subr.mxu0 0.0
      %903 = vmatpush2.msra.mxu0 0.0
      %904 = vmatprep.subr.mxu0 0.0
      %905 = vmatpush2.msra.mxu0 0.0
      %906 = vmatprep.subr.mxu0 0.0
      %907 = vmatpush2.msra.mxu0 0.0
      %908 = vmatprep.subr.mxu0 0.0
      %909 = vmatpush2.msra.mxu0 0.0
      %910 = vmatprep.subr.mxu0 0.0
      %911 = vmatpush2.msra.mxu0 0.0
      %912 = vmatprep.subr.mxu0 0.0
      %913 = vmatpush2.msra.mxu0 0.0
      %914 = vmatprep.subr.mxu0 0.0
      %915 = vmatpush2.msra.mxu0 0.0
      %916 = vmatprep.subr.mxu0 0.0
      %917 = vmatpush2.msra.mxu0 0.0
      %918 = vmatprep.subr.mxu0 0.0
      %919 = vmatpush2.msra.mxu0 0.0
      %920 = vmatprep.subr.mxu0 0.0
      %921 = vmatpush2.msra.mxu0 0.0
      %922 = vmatprep.subr.mxu0 0.0
      %923 = vmatpush2.msra.mxu0 0.0
      %924 = vmatprep.subr.mxu0 0.0
      %925 = vmatpush2.msra.mxu0 0.0
      %926 = vmatprep.subr.mxu0 0.0
      %927 = vmatpush2.msra.mxu0 0.0
      %928 = vmatprep.subr.mxu0 0.0
      %929 = vmatpush2.msra.mxu0 0.0
      %930 = vmatprep.subr.mxu0 0.0
      %931 = vmatpush2.msra.mxu0 0.0
      %932 = vmatprep.mubr.f32.mxu0 0.0
      %933 = vmatmul.mubr.f32.gmra.mxu0 %v866
      %v934 = vpop.f32.mrf.mxu0
      %v935 = vadd.f32 %v862, %v934
      %v936 = vpop.f32.mrf.mxu0
      %937 = vdwg.mxu0
      %v938 = vmul.f32 %v935, 0.35355338
      %v940 = vlaneseq
      %v941 = vshrl.u32 %v940, 7
      %v942 = vsub.s32 0, %v941
      %v943 = vrot.slane %v850, %v942
      %945 = vmatprep.subr.mxu0 0.0
      %946 = vmatpush1.msra.mxu0 0.0
      %947 = vmatprep.subr.mxu0 0.0
      %948 = vmatpush1.msra.mxu0 0.0
      %949 = vmatprep.subr.mxu0 0.0
      %950 = vmatpush1.msra.mxu0 0.0
      %951 = vmatprep.subr.mxu0 0.0
      %952 = vmatpush1.msra.mxu0 0.0
      %953 = vmatprep.subr.mxu0 0.0
      %954 = vmatpush1.msra.mxu0 0.0
      %955 = vmatprep.subr.mxu0 0.0
      %956 = vmatpush1.msra.mxu0 0.0
      %957 = vmatprep.subr.mxu0 0.0
      %958 = vmatpush1.msra.mxu0 0.0
      %959 = vmatprep.subr.mxu0 0.0
      %960 = vmatpush1.msra.mxu0 0.0
      %961 = vmatprep.subr.mxu0 0.0
      %962 = vmatpush1.msra.mxu0 0.0
      %963 = vmatprep.subr.mxu0 0.0
      %964 = vmatpush1.msra.mxu0 0.0
      %965 = vmatprep.subr.mxu0 0.0
      %966 = vmatpush1.msra.mxu0 0.0
      %967 = vmatprep.subr.mxu0 0.0
      %968 = vmatpush1.msra.mxu0 0.0
      %969 = vmatprep.subr.mxu0 0.0
      %970 = vmatpush1.msra.mxu0 %v849
      %971 = vmatprep.subr.mxu0 0.0
      %972 = vmatpush1.msra.mxu0 %v848
      %973 = vmatprep.subr.mxu0 0.0
      %974 = vmatpush1.msra.mxu0 %v847
      %975 = vmatprep.subr.mxu0 0.0
      %976 = vmatpush1.msra.mxu0 %v846
      %977 = vmatprep.subr.mxu0 0.0
      %978 = vmatpush2.msra.mxu0 0.0
      %979 = vmatprep.subr.mxu0 0.0
      %980 = vmatpush2.msra.mxu0 0.0
      %981 = vmatprep.subr.mxu0 0.0
      %982 = vmatpush2.msra.mxu0 0.0
      %983 = vmatprep.subr.mxu0 0.0
      %984 = vmatpush2.msra.mxu0 0.0
      %985 = vmatprep.subr.mxu0 0.0
      %986 = vmatpush2.msra.mxu0 0.0
      %987 = vmatprep.subr.mxu0 0.0
      %988 = vmatpush2.msra.mxu0 0.0
      %989 = vmatprep.subr.mxu0 0.0
      %990 = vmatpush2.msra.mxu0 0.0
      %991 = vmatprep.subr.mxu0 0.0
      %992 = vmatpush2.msra.mxu0 0.0
      %993 = vmatprep.subr.mxu0 0.0
      %994 = vmatpush2.msra.mxu0 0.0
      %995 = vmatprep.subr.mxu0 0.0
      %996 = vmatpush2.msra.mxu0 0.0
      %997 = vmatprep.subr.mxu0 0.0
      %998 = vmatpush2.msra.mxu0 0.0
      %999 = vmatprep.subr.mxu0 0.0
      %1000 = vmatpush2.msra.mxu0 0.0
      %1001 = vmatprep.subr.mxu0 0.0
      %1002 = vmatpush2.msra.mxu0 0.0
      %1003 = vmatprep.subr.mxu0 0.0
      %1004 = vmatpush2.msra.mxu0 0.0
      %1005 = vmatprep.subr.mxu0 0.0
      %1006 = vmatpush2.msra.mxu0 0.0
      %1007 = vmatprep.subr.mxu0 0.0
      %1008 = vmatpush2.msra.mxu0 0.0
      %1009 = vmatprep.mubr.f32.mxu0 0.0
      %1010 = vmatmul.mubr.f32.gmra.mxu0 %v866
      %v1011 = vpop.f32.mrf.mxu0
      %v1012 = vadd.f32 %v943, %v1011
      %v1013 = vpop.f32.mrf.mxu0
      %1014 = vdwg.mxu0
      %vm1015 = vcmask 64512
      %v1017 = vsel %vm1015, %v938, 0
      %v1020 = vsel %vm1015, %v1012, 0
      %1022 = vmatprep.subr.mxu0 0.0
      %1023 = vmatpush1.xpose.msra.mxu0 0.0
      %1024 = vmatprep.subr.mxu0 0.0
      %1025 = vmatpush1.xpose.msra.mxu0 0.0
      %1026 = vmatprep.subr.mxu0 0.0
      %1027 = vmatpush1.xpose.msra.mxu0 0.0
      %1028 = vmatprep.subr.mxu0 0.0
      %1029 = vmatpush1.xpose.msra.mxu0 0.0
      %1030 = vmatprep.subr.mxu0 0.0
      %1031 = vmatpush1.xpose.msra.mxu0 0.0
      %1032 = vmatprep.subr.mxu0 0.0
      %1033 = vmatpush1.xpose.msra.mxu0 0.0
      %1034 = vmatprep.subr.mxu0 0.0
      %1035 = vmatpush1.xpose.msra.mxu0 0.0
      %1036 = vmatprep.subr.mxu0 0.0
      %1037 = vmatpush1.xpose.msra.mxu0 0.0
      %1038 = vmatprep.subr.mxu0 0.0
      %1039 = vmatpush1.xpose.msra.mxu0 0.0
      %1040 = vmatprep.subr.mxu0 0.0
      %1041 = vmatpush1.xpose.msra.mxu0 0.0
      %1042 = vmatprep.subr.mxu0 0.0
      %1043 = vmatpush1.xpose.msra.mxu0 0.0
      %1044 = vmatprep.subr.mxu0 0.0
      %1045 = vmatpush1.xpose.msra.mxu0 0.0
      %1046 = vmatprep.subr.mxu0 0.0
      %1047 = vmatpush1.xpose.msra.mxu0 0.0
      %1048 = vmatprep.subr.mxu0 0.0
      %1049 = vmatpush1.xpose.msra.mxu0 0.0
      %1050 = vmatprep.subr.mxu0 0.0
      %1051 = vmatpush1.xpose.msra.mxu0 0.0
      %1052 = vmatprep.subr.mxu0 0.0
      %1053 = vmatpush1.xpose.msra.mxu0 %v1020
      %1054 = vmatprep.subr.mxu0 0.0
      %1055 = vmatpush2.xpose.msra.mxu0 0.0
      %1056 = vmatprep.subr.mxu0 0.0
      %1057 = vmatpush2.xpose.msra.mxu0 0.0
      %1058 = vmatprep.subr.mxu0 0.0
      %1059 = vmatpush2.xpose.msra.mxu0 0.0
      %1060 = vmatprep.subr.mxu0 0.0
      %1061 = vmatpush2.xpose.msra.mxu0 0.0
      %1062 = vmatprep.subr.mxu0 0.0
      %1063 = vmatpush2.xpose.msra.mxu0 0.0
      %1064 = vmatprep.subr.mxu0 0.0
      %1065 = vmatpush2.xpose.msra.mxu0 0.0
      %1066 = vmatprep.subr.mxu0 0.0
      %1067 = vmatpush2.xpose.msra.mxu0 0.0
      %1068 = vmatprep.subr.mxu0 0.0
      %1069 = vmatpush2.xpose.msra.mxu0 0.0
      %1070 = vmatprep.subr.mxu0 0.0
      %1071 = vmatpush2.xpose.msra.mxu0 0.0
      %1072 = vmatprep.subr.mxu0 0.0
      %1073 = vmatpush2.xpose.msra.mxu0 0.0
      %1074 = vmatprep.subr.mxu0 0.0
      %1075 = vmatpush2.xpose.msra.mxu0 0.0
      %1076 = vmatprep.subr.mxu0 0.0
      %1077 = vmatpush2.xpose.msra.mxu0 0.0
      %1078 = vmatprep.subr.mxu0 0.0
      %1079 = vmatpush2.xpose.msra.mxu0 0.0
      %1080 = vmatprep.subr.mxu0 0.0
      %1081 = vmatpush2.xpose.msra.mxu0 0.0
      %1082 = vmatprep.subr.mxu0 0.0
      %1083 = vmatpush2.xpose.msra.mxu0 0.0
      %1084 = vmatprep.subr.mxu0 0.0
      %1085 = vmatpush2.xpose.msra.mxu0 0.0
      %1086 = vmatprep.mubr.f32.mxu0 0.0
      %1087 = vmatmul.mubr.f32.gmra.mxu0 %v1017
      %v1088 = vpop.f32.mrf.mxu0
      %v1089 = vadd.f32 %v840, %v1088
      %v1090 = vpop.f32.mrf.mxu0
      %1091 = vdwg.mxu0
      %v1092 = vsel %vm1015, %v1089, -inf
      %1093 = vmax.xlane.f32.xlu0 %v1092
      %v1094 = vpop.xlane.xlu0 %1093
      %v1095 = vsub.f32 %v1089, %v1094
      %v1096 = vmul.f32 %v1095, 1.442695
      %v1097 = vpow.pop %v1096
      %v1098 = vsel %vm1015, %v1097, 0.0
      %1099 = vadd.xlane.f32.xlu0 %v1098
      %v1100 = vpop.xlane.xlu0 %1099
      %v1101 = vrcp.pop %v1100
      %v1102 = vmul.f32 %v1097, %v1101
      %1103 = vrot.lane.b32.xlu0 %v1012, 96
      %v1104 = vpop.permute.xlu0 %1103
      %v1107 = vsel %vm1015, %v1102, 0
      %1109 = vmatprep.subr.mxu0 0.0
      %1110 = vmatpush1.msra.mxu0 0.0
      %1111 = vmatprep.subr.mxu0 0.0
      %1112 = vmatpush1.msra.mxu0 0.0
      %1113 = vmatprep.subr.mxu0 0.0
      %1114 = vmatpush1.msra.mxu0 0.0
      %1115 = vmatprep.subr.mxu0 0.0
      %1116 = vmatpush1.msra.mxu0 0.0
      %1117 = vmatprep.subr.mxu0 0.0
      %1118 = vmatpush1.msra.mxu0 0.0
      %1119 = vmatprep.subr.mxu0 0.0
      %1120 = vmatpush1.msra.mxu0 0.0
      %1121 = vmatprep.subr.mxu0 0.0
      %1122 = vmatpush1.msra.mxu0 0.0
      %1123 = vmatprep.subr.mxu0 0.0
      %1124 = vmatpush1.msra.mxu0 0.0
      %1125 = vmatprep.subr.mxu0 0.0
      %1126 = vmatpush1.msra.mxu0 0.0
      %1127 = vmatprep.subr.mxu0 0.0
      %1128 = vmatpush1.msra.mxu0 0.0
      %1129 = vmatprep.subr.mxu0 0.0
      %1130 = vmatpush1.msra.mxu0 0.0
      %1131 = vmatprep.subr.mxu0 0.0
      %1132 = vmatpush1.msra.mxu0 0.0
      %1133 = vmatprep.subr.mxu0 0.0
      %1134 = vmatpush1.msra.mxu0 0.0
      %1135 = vmatprep.subr.mxu0 0.0
      %1136 = vmatpush1.msra.mxu0 0.0
      %1137 = vmatprep.subr.mxu0 0.0
      %1138 = vmatpush1.msra.mxu0 0.0
      %1139 = vmatprep.subr.mxu0 0.0
      %1140 = vmatpush1.msra.mxu0 %v1104
      %1141 = vmatprep.subr.mxu0 0.0
      %1142 = vmatpush2.msra.mxu0 0.0
      %1143 = vmatprep.subr.mxu0 0.0
      %1144 = vmatpush2.msra.mxu0 0.0
      %1145 = vmatprep.subr.mxu0 0.0
      %1146 = vmatpush2.msra.mxu0 0.0
      %1147 = vmatprep.subr.mxu0 0.0
      %1148 = vmatpush2.msra.mxu0 0.0
      %1149 = vmatprep.subr.mxu0 0.0
      %1150 = vmatpush2.msra.mxu0 0.0
      %1151 = vmatprep.subr.mxu0 0.0
      %1152 = vmatpush2.msra.mxu0 0.0
      %1153 = vmatprep.subr.mxu0 0.0
      %1154 = vmatpush2.msra.mxu0 0.0
      %1155 = vmatprep.subr.mxu0 0.0
      %1156 = vmatpush2.msra.mxu0 0.0
      %1157 = vmatprep.subr.mxu0 0.0
      %1158 = vmatpush2.msra.mxu0 0.0
      %1159 = vmatprep.subr.mxu0 0.0
      %1160 = vmatpush2.msra.mxu0 0.0
      %1161 = vmatprep.subr.mxu0 0.0
      %1162 = vmatpush2.msra.mxu0 0.0
      %1163 = vmatprep.subr.mxu0 0.0
      %1164 = vmatpush2.msra.mxu0 0.0
      %1165 = vmatprep.subr.mxu0 0.0
      %1166 = vmatpush2.msra.mxu0 0.0
      %1167 = vmatprep.subr.mxu0 0.0
      %1168 = vmatpush2.msra.mxu0 0.0
      %1169 = vmatprep.subr.mxu0 0.0
      %1170 = vmatpush2.msra.mxu0 0.0
      %1171 = vmatprep.subr.mxu0 0.0
      %1172 = vmatpush2.msra.mxu0 0.0
      %1173 = vmatprep.mubr.f32.mxu0 0.0
      %1174 = vmatmul.mubr.f32.gmra.mxu0 %v1107
      %v1175 = vpop.f32.mrf.mxu0
      %v1176 = vadd.f32 0.0, %v1175
      %v1177 = vpop.f32.mrf.mxu0
      %1178 = vdwg.mxu0
      %1179 = vrot.lane.b32.xlu0 %v938, 120
      %v1180 = vpop.permute.xlu0 %1179
      %1181 = vrot.lane.b32.xlu0 %v1012, 120
      %v1182 = vpop.permute.xlu0 %1181
      %v1183 = vsel %vm1015, %v1180, 0
      %v1185 = vsel %vm1015, %v1182, 0
      %1187 = vmatprep.subr.mxu0 0.0
      %1188 = vmatpush1.xpose.msra.mxu0 0.0
      %1189 = vmatprep.subr.mxu0 0.0
      %1190 = vmatpush1.xpose.msra.mxu0 0.0
      %1191 = vmatprep.subr.mxu0 0.0
      %1192 = vmatpush1.xpose.msra.mxu0 0.0
      %1193 = vmatprep.subr.mxu0 0.0
      %1194 = vmatpush1.xpose.msra.mxu0 0.0
      %1195 = vmatprep.subr.mxu0 0.0
      %1196 = vmatpush1.xpose.msra.mxu0 0.0
      %1197 = vmatprep.subr.mxu0 0.0
      %1198 = vmatpush1.xpose.msra.mxu0 0.0
      %1199 = vmatprep.subr.mxu0 0.0
      %1200 = vmatpush1.xpose.msra.mxu0 0.0
      %1201 = vmatprep.subr.mxu0 0.0
      %1202 = vmatpush1.xpose.msra.mxu0 0.0
      %1203 = vmatprep.subr.mxu0 0.0
      %1204 = vmatpush1.xpose.msra.mxu0 0.0
      %1205 = vmatprep.subr.mxu0 0.0
      %1206 = vmatpush1.xpose.msra.mxu0 0.0
      %1207 = vmatprep.subr.mxu0 0.0
      %1208 = vmatpush1.xpose.msra.mxu0 0.0
      %1209 = vmatprep.subr.mxu0 0.0
      %1210 = vmatpush1.xpose.msra.mxu0 0.0
      %1211 = vmatprep.subr.mxu0 0.0
      %1212 = vmatpush1.xpose.msra.mxu0 0.0
      %1213 = vmatprep.subr.mxu0 0.0
      %1214 = vmatpush1.xpose.msra.mxu0 0.0
      %1215 = vmatprep.subr.mxu0 0.0
      %1216 = vmatpush1.xpose.msra.mxu0 0.0
      %1217 = vmatprep.subr.mxu0 0.0
      %1218 = vmatpush1.xpose.msra.mxu0 %v1185
      %1219 = vmatprep.subr.mxu0 0.0
      %1220 = vmatpush2.xpose.msra.mxu0 0.0
      %1221 = vmatprep.subr.mxu0 0.0
      %1222 = vmatpush2.xpose.msra.mxu0 0.0
      %1223 = vmatprep.subr.mxu0 0.0
      %1224 = vmatpush2.xpose.msra.mxu0 0.0
      %1225 = vmatprep.subr.mxu0 0.0
      %1226 = vmatpush2.xpose.msra.mxu0 0.0
      %1227 = vmatprep.subr.mxu0 0.0
      %1228 = vmatpush2.xpose.msra.mxu0 0.0
      %1229 = vmatprep.subr.mxu0 0.0
      %1230 = vmatpush2.xpose.msra.mxu0 0.0
      %1231 = vmatprep.subr.mxu0 0.0
      %1232 = vmatpush2.xpose.msra.mxu0 0.0
      %1233 = vmatprep.subr.mxu0 0.0
      %1234 = vmatpush2.xpose.msra.mxu0 0.0
      %1235 = vmatprep.subr.mxu0 0.0
      %1236 = vmatpush2.xpose.msra.mxu0 0.0
      %1237 = vmatprep.subr.mxu0 0.0
      %1238 = vmatpush2.xpose.msra.mxu0 0.0
      %1239 = vmatprep.subr.mxu0 0.0
      %1240 = vmatpush2.xpose.msra.mxu0 0.0
      %1241 = vmatprep.subr.mxu0 0.0
      %1242 = vmatpush2.xpose.msra.mxu0 0.0
      %1243 = vmatprep.subr.mxu0 0.0
      %1244 = vmatpush2.xpose.msra.mxu0 0.0
      %1245 = vmatprep.subr.mxu0 0.0
      %1246 = vmatpush2.xpose.msra.mxu0 0.0
      %1247 = vmatprep.subr.mxu0 0.0
      %1248 = vmatpush2.xpose.msra.mxu0 0.0
      %1249 = vmatprep.subr.mxu0 0.0
      %1250 = vmatpush2.xpose.msra.mxu0 0.0
      %1251 = vmatprep.mubr.f32.mxu0 0.0
      %1252 = vmatmul.mubr.f32.gmra.mxu0 %v1183
      %v1253 = vpop.f32.mrf.mxu0
      %v1254 = vadd.f32 %v840, %v1253
      %v1255 = vpop.f32.mrf.mxu0
      %1256 = vdwg.mxu0
      %v1257 = vsel %vm1015, %v1254, -inf
      %1258 = vmax.xlane.f32.xlu0 %v1257
      %v1259 = vpop.xlane.xlu0 %1258
      %v1260 = vsub.f32 %v1254, %v1259
      %v1261 = vmul.f32 %v1260, 1.442695
      %v1262 = vpow.pop %v1261
      %v1263 = vsel %vm1015, %v1262, 0.0
      %1264 = vadd.xlane.f32.xlu0 %v1263
      %v1265 = vpop.xlane.xlu0 %1264
      %v1266 = vrcp.pop %v1265
      %v1267 = vmul.f32 %v1262, %v1266
      %1268 = vrot.lane.b32.xlu0 %v1012, 88
      %v1269 = vpop.permute.xlu0 %1268
      %v1272 = vsel %vm1015, %v1267, 0
      %1274 = vmatprep.subr.mxu0 0.0
      %1275 = vmatpush1.msra.mxu0 0.0
      %1276 = vmatprep.subr.mxu0 0.0
      %1277 = vmatpush1.msra.mxu0 0.0
      %1278 = vmatprep.subr.mxu0 0.0
      %1279 = vmatpush1.msra.mxu0 0.0
      %1280 = vmatprep.subr.mxu0 0.0
      %1281 = vmatpush1.msra.mxu0 0.0
      %1282 = vmatprep.subr.mxu0 0.0
      %1283 = vmatpush1.msra.mxu0 0.0
      %1284 = vmatprep.subr.mxu0 0.0
      %1285 = vmatpush1.msra.mxu0 0.0
      %1286 = vmatprep.subr.mxu0 0.0
      %1287 = vmatpush1.msra.mxu0 0.0
      %1288 = vmatprep.subr.mxu0 0.0
      %1289 = vmatpush1.msra.mxu0 0.0
      %1290 = vmatprep.subr.mxu0 0.0
      %1291 = vmatpush1.msra.mxu0 0.0
      %1292 = vmatprep.subr.mxu0 0.0
      %1293 = vmatpush1.msra.mxu0 0.0
      %1294 = vmatprep.subr.mxu0 0.0
      %1295 = vmatpush1.msra.mxu0 0.0
      %1296 = vmatprep.subr.mxu0 0.0
      %1297 = vmatpush1.msra.mxu0 0.0
      %1298 = vmatprep.subr.mxu0 0.0
      %1299 = vmatpush1.msra.mxu0 0.0
      %1300 = vmatprep.subr.mxu0 0.0
      %1301 = vmatpush1.msra.mxu0 0.0
      %1302 = vmatprep.subr.mxu0 0.0
      %1303 = vmatpush1.msra.mxu0 0.0
      %1304 = vmatprep.subr.mxu0 0.0
      %1305 = vmatpush1.msra.mxu0 %v1269
      %1306 = vmatprep.subr.mxu0 0.0
      %1307 = vmatpush2.msra.mxu0 0.0
      %1308 = vmatprep.subr.mxu0 0.0
      %1309 = vmatpush2.msra.mxu0 0.0
      %1310 = vmatprep.subr.mxu0 0.0
      %1311 = vmatpush2.msra.mxu0 0.0
      %1312 = vmatprep.subr.mxu0 0.0
      %1313 = vmatpush2.msra.mxu0 0.0
      %1314 = vmatprep.subr.mxu0 0.0
      %1315 = vmatpush2.msra.mxu0 0.0
      %1316 = vmatprep.subr.mxu0 0.0
      %1317 = vmatpush2.msra.mxu0 0.0
      %1318 = vmatprep.subr.mxu0 0.0
      %1319 = vmatpush2.msra.mxu0 0.0
      %1320 = vmatprep.subr.mxu0 0.0
      %1321 = vmatpush2.msra.mxu0 0.0
      %1322 = vmatprep.subr.mxu0 0.0
      %1323 = vmatpush2.msra.mxu0 0.0
      %1324 = vmatprep.subr.mxu0 0.0
      %1325 = vmatpush2.msra.mxu0 0.0
      %1326 = vmatprep.subr.mxu0 0.0
      %1327 = vmatpush2.msra.mxu0 0.0
      %1328 = vmatprep.subr.mxu0 0.0
      %1329 = vmatpush2.msra.mxu0 0.0
      %1330 = vmatprep.subr.mxu0 0.0
      %1331 = vmatpush2.msra.mxu0 0.0
      %1332 = vmatprep.subr.mxu0 0.0
      %1333 = vmatpush2.msra.mxu0 0.0
      %1334 = vmatprep.subr.mxu0 0.0
      %1335 = vmatpush2.msra.mxu0 0.0
      %1336 = vmatprep.subr.mxu0 0.0
      %1337 = vmatpush2.msra.mxu0 0.0
      %1338 = vmatprep.mubr.f32.mxu0 0.0
      %1339 = vmatmul.mubr.f32.gmra.mxu0 %v1272
      %v1340 = vpop.f32.mrf.mxu0
      %v1341 = vadd.f32 0.0, %v1340
      %v1342 = vpop.f32.mrf.mxu0
      %1343 = vdwg.mxu0
      %1344 = vrot.lane.b32.xlu0 %v938, 112
      %v1345 = vpop.permute.xlu0 %1344
      %1346 = vrot.lane.b32.xlu0 %v1012, 112
      %v1347 = vpop.permute.xlu0 %1346
      %v1348 = vsel %vm1015, %v1345, 0
      %v1350 = vsel %vm1015, %v1347, 0
      %1352 = vmatprep.subr.mxu0 0.0
      %1353 = vmatpush1.xpose.msra.mxu0 0.0
      %1354 = vmatprep.subr.mxu0 0.0
      %1355 = vmatpush1.xpose.msra.mxu0 0.0
      %1356 = vmatprep.subr.mxu0 0.0
      %1357 = vmatpush1.xpose.msra.mxu0 0.0
      %1358 = vmatprep.subr.mxu0 0.0
      %1359 = vmatpush1.xpose.msra.mxu0 0.0
      %1360 = vmatprep.subr.mxu0 0.0
      %1361 = vmatpush1.xpose.msra.mxu0 0.0
      %1362 = vmatprep.subr.mxu0 0.0
      %1363 = vmatpush1.xpose.msra.mxu0 0.0
      %1364 = vmatprep.subr.mxu0 0.0
      %1365 = vmatpush1.xpose.msra.mxu0 0.0
      %1366 = vmatprep.subr.mxu0 0.0
      %1367 = vmatpush1.xpose.msra.mxu0 0.0
      %1368 = vmatprep.subr.mxu0 0.0
      %1369 = vmatpush1.xpose.msra.mxu0 0.0
      %1370 = vmatprep.subr.mxu0 0.0
      %1371 = vmatpush1.xpose.msra.mxu0 0.0
      %1372 = vmatprep.subr.mxu0 0.0
      %1373 = vmatpush1.xpose.msra.mxu0 0.0
      %1374 = vmatprep.subr.mxu0 0.0
      %1375 = vmatpush1.xpose.msra.mxu0 0.0
      %1376 = vmatprep.subr.mxu0 0.0
      %1377 = vmatpush1.xpose.msra.mxu0 0.0
      %1378 = vmatprep.subr.mxu0 0.0
      %1379 = vmatpush1.xpose.msra.mxu0 0.0
      %1380 = vmatprep.subr.mxu0 0.0
      %1381 = vmatpush1.xpose.msra.mxu0 0.0
      %1382 = vmatprep.subr.mxu0 0.0
      %1383 = vmatpush1.xpose.msra.mxu0 %v1350
      %1384 = vmatprep.subr.mxu0 0.0
      %1385 = vmatpush2.xpose.msra.mxu0 0.0
      %1386 = vmatprep.subr.mxu0 0.0
      %1387 = vmatpush2.xpose.msra.mxu0 0.0
      %1388 = vmatprep.subr.mxu0 0.0
      %1389 = vmatpush2.xpose.msra.mxu0 0.0
      %1390 = vmatprep.subr.mxu0 0.0
      %1391 = vmatpush2.xpose.msra.mxu0 0.0
      %1392 = vmatprep.subr.mxu0 0.0
      %1393 = vmatpush2.xpose.msra.mxu0 0.0
      %1394 = vmatprep.subr.mxu0 0.0
      %1395 = vmatpush2.xpose.msra.mxu0 0.0
      %1396 = vmatprep.subr.mxu0 0.0
      %1397 = vmatpush2.xpose.msra.mxu0 0.0
      %1398 = vmatprep.subr.mxu0 0.0
      %1399 = vmatpush2.xpose.msra.mxu0 0.0
      %1400 = vmatprep.subr.mxu0 0.0
      %1401 = vmatpush2.xpose.msra.mxu0 0.0
      %1402 = vmatprep.subr.mxu0 0.0
      %1403 = vmatpush2.xpose.msra.mxu0 0.0
      %1404 = vmatprep.subr.mxu0 0.0
      %1405 = vmatpush2.xpose.msra.mxu0 0.0
      %1406 = vmatprep.subr.mxu0 0.0
      %1407 = vmatpush2.xpose.msra.mxu0 0.0
      %1408 = vmatprep.subr.mxu0 0.0
      %1409 = vmatpush2.xpose.msra.mxu0 0.0
      %1410 = vmatprep.subr.mxu0 0.0
      %1411 = vmatpush2.xpose.msra.mxu0 0.0
      %1412 = vmatprep.subr.mxu0 0.0
      %1413 = vmatpush2.xpose.msra.mxu0 0.0
      %1414 = vmatprep.subr.mxu0 0.0
      %1415 = vmatpush2.xpose.msra.mxu0 0.0
      %1416 = vmatprep.mubr.f32.mxu0 0.0
      %1417 = vmatmul.mubr.f32.gmra.mxu0 %v1348
      %v1418 = vpop.f32.mrf.mxu0
      %v1419 = vadd.f32 %v840, %v1418
      %v1420 = vpop.f32.mrf.mxu0
      %1421 = vdwg.mxu0
      %v1422 = vsel %vm1015, %v1419, -inf
      %1423 = vmax.xlane.f32.xlu0 %v1422
      %v1424 = vpop.xlane.xlu0 %1423
      %v1425 = vsub.f32 %v1419, %v1424
      %v1426 = vmul.f32 %v1425, 1.442695
      %v1427 = vpow.pop %v1426
      %v1428 = vsel %vm1015, %v1427, 0.0
      %1429 = vadd.xlane.f32.xlu0 %v1428
      %v1430 = vpop.xlane.xlu0 %1429
      %v1431 = vrcp.pop %v1430
      %v1432 = vmul.f32 %v1427, %v1431
      %1433 = vrot.lane.b32.xlu0 %v1012, 80
      %v1434 = vpop.permute.xlu0 %1433
      %v1437 = vsel %vm1015, %v1432, 0
      %1439 = vmatprep.subr.mxu0 0.0
      %1440 = vmatpush1.msra.mxu0 0.0
      %1441 = vmatprep.subr.mxu0 0.0
      %1442 = vmatpush1.msra.mxu0 0.0
      %1443 = vmatprep.subr.mxu0 0.0
      %1444 = vmatpush1.msra.mxu0 0.0
      %1445 = vmatprep.subr.mxu0 0.0
      %1446 = vmatpush1.msra.mxu0 0.0
      %1447 = vmatprep.subr.mxu0 0.0
      %1448 = vmatpush1.msra.mxu0 0.0
      %1449 = vmatprep.subr.mxu0 0.0
      %1450 = vmatpush1.msra.mxu0 0.0
      %1451 = vmatprep.subr.mxu0 0.0
      %1452 = vmatpush1.msra.mxu0 0.0
      %1453 = vmatprep.subr.mxu0 0.0
      %1454 = vmatpush1.msra.mxu0 0.0
      %1455 = vmatprep.subr.mxu0 0.0
      %1456 = vmatpush1.msra.mxu0 0.0
      %1457 = vmatprep.subr.mxu0 0.0
      %1458 = vmatpush1.msra.mxu0 0.0
      %1459 = vmatprep.subr.mxu0 0.0
      %1460 = vmatpush1.msra.mxu0 0.0
      %1461 = vmatprep.subr.mxu0 0.0
      %1462 = vmatpush1.msra.mxu0 0.0
      %1463 = vmatprep.subr.mxu0 0.0
      %1464 = vmatpush1.msra.mxu0 0.0
      %1465 = vmatprep.subr.mxu0 0.0
      %1466 = vmatpush1.msra.mxu0 0.0
      %1467 = vmatprep.subr.mxu0 0.0
      %1468 = vmatpush1.msra.mxu0 0.0
      %1469 = vmatprep.subr.mxu0 0.0
      %1470 = vmatpush1.msra.mxu0 %v1434
      %1471 = vmatprep.subr.mxu0 0.0
      %1472 = vmatpush2.msra.mxu0 0.0
      %1473 = vmatprep.subr.mxu0 0.0
      %1474 = vmatpush2.msra.mxu0 0.0
      %1475 = vmatprep.subr.mxu0 0.0
      %1476 = vmatpush2.msra.mxu0 0.0
      %1477 = vmatprep.subr.mxu0 0.0
      %1478 = vmatpush2.msra.mxu0 0.0
      %1479 = vmatprep.subr.mxu0 0.0
      %1480 = vmatpush2.msra.mxu0 0.0
      %1481 = vmatprep.subr.mxu0 0.0
      %1482 = vmatpush2.msra.mxu0 0.0
      %1483 = vmatprep.subr.mxu0 0.0
      %1484 = vmatpush2.msra.mxu0 0.0
      %1485 = vmatprep.subr.mxu0 0.0
      %1486 = vmatpush2.msra.mxu0 0.0
      %1487 = vmatprep.subr.mxu0 0.0
      %1488 = vmatpush2.msra.mxu0 0.0
      %1489 = vmatprep.subr.mxu0 0.0
      %1490 = vmatpush2.msra.mxu0 0.0
      %1491 = vmatprep.subr.mxu0 0.0
      %1492 = vmatpush2.msra.mxu0 0.0
      %1493 = vmatprep.subr.mxu0 0.0
      %1494 = vmatpush2.msra.mxu0 0.0
      %1495 = vmatprep.subr.mxu0 0.0
      %1496 = vmatpush2.msra.mxu0 0.0
      %1497 = vmatprep.subr.mxu0 0.0
      %1498 = vmatpush2.msra.mxu0 0.0
      %1499 = vmatprep.subr.mxu0 0.0
      %1500 = vmatpush2.msra.mxu0 0.0
      %1501 = vmatprep.subr.mxu0 0.0
      %1502 = vmatpush2.msra.mxu0 0.0
      %1503 = vmatprep.mubr.f32.mxu0 0.0
      %1504 = vmatmul.mubr.f32.gmra.mxu0 %v1437
      %v1505 = vpop.f32.mrf.mxu0
      %v1506 = vadd.f32 0.0, %v1505
      %v1507 = vpop.f32.mrf.mxu0
      %1508 = vdwg.mxu0
      %1509 = vrot.lane.b32.xlu0 %v938, 104
      %v1510 = vpop.permute.xlu0 %1509
      %1511 = vrot.lane.b32.xlu0 %v1012, 104
      %v1512 = vpop.permute.xlu0 %1511
      %v1513 = vsel %vm1015, %v1510, 0
      %v1515 = vsel %vm1015, %v1512, 0
      %1517 = vmatprep.subr.mxu0 0.0
      %1518 = vmatpush1.xpose.msra.mxu0 0.0
      %1519 = vmatprep.subr.mxu0 0.0
      %1520 = vmatpush1.xpose.msra.mxu0 0.0
      %1521 = vmatprep.subr.mxu0 0.0
      %1522 = vmatpush1.xpose.msra.mxu0 0.0
      %1523 = vmatprep.subr.mxu0 0.0
      %1524 = vmatpush1.xpose.msra.mxu0 0.0
      %1525 = vmatprep.subr.mxu0 0.0
      %1526 = vmatpush1.xpose.msra.mxu0 0.0
      %1527 = vmatprep.subr.mxu0 0.0
      %1528 = vmatpush1.xpose.msra.mxu0 0.0
      %1529 = vmatprep.subr.mxu0 0.0
      %1530 = vmatpush1.xpose.msra.mxu0 0.0
      %1531 = vmatprep.subr.mxu0 0.0
      %1532 = vmatpush1.xpose.msra.mxu0 0.0
      %1533 = vmatprep.subr.mxu0 0.0
      %1534 = vmatpush1.xpose.msra.mxu0 0.0
      %1535 = vmatprep.subr.mxu0 0.0
      %1536 = vmatpush1.xpose.msra.mxu0 0.0
      %1537 = vmatprep.subr.mxu0 0.0
      %1538 = vmatpush1.xpose.msra.mxu0 0.0
      %1539 = vmatprep.subr.mxu0 0.0
      %1540 = vmatpush1.xpose.msra.mxu0 0.0
      %1541 = vmatprep.subr.mxu0 0.0
      %1542 = vmatpush1.xpose.msra.mxu0 0.0
      %1543 = vmatprep.subr.mxu0 0.0
      %1544 = vmatpush1.xpose.msra.mxu0 0.0
      %1545 = vmatprep.subr.mxu0 0.0
      %1546 = vmatpush1.xpose.msra.mxu0 0.0
      %1547 = vmatprep.subr.mxu0 0.0
      %1548 = vmatpush1.xpose.msra.mxu0 %v1515
      %1549 = vmatprep.subr.mxu0 0.0
      %1550 = vmatpush2.xpose.msra.mxu0 0.0
      %1551 = vmatprep.subr.mxu0 0.0
      %1552 = vmatpush2.xpose.msra.mxu0 0.0
      %1553 = vmatprep.subr.mxu0 0.0
      %1554 = vmatpush2.xpose.msra.mxu0 0.0
      %1555 = vmatprep.subr.mxu0 0.0
      %1556 = vmatpush2.xpose.msra.mxu0 0.0
      %1557 = vmatprep.subr.mxu0 0.0
      %1558 = vmatpush2.xpose.msra.mxu0 0.0
      %1559 = vmatprep.subr.mxu0 0.0
      %1560 = vmatpush2.xpose.msra.mxu0 0.0
      %1561 = vmatprep.subr.mxu0 0.0
      %1562 = vmatpush2.xpose.msra.mxu0 0.0
      %1563 = vmatprep.subr.mxu0 0.0
      %1564 = vmatpush2.xpose.msra.mxu0 0.0
      %1565 = vmatprep.subr.mxu0 0.0
      %1566 = vmatpush2.xpose.msra.mxu0 0.0
      %1567 = vmatprep.subr.mxu0 0.0
      %1568 = vmatpush2.xpose.msra.mxu0 0.0
      %1569 = vmatprep.subr.mxu0 0.0
      %1570 = vmatpush2.xpose.msra.mxu0 0.0
      %1571 = vmatprep.subr.mxu0 0.0
      %1572 = vmatpush2.xpose.msra.mxu0 0.0
      %1573 = vmatprep.subr.mxu0 0.0
      %1574 = vmatpush2.xpose.msra.mxu0 0.0
      %1575 = vmatprep.subr.mxu0 0.0
      %1576 = vmatpush2.xpose.msra.mxu0 0.0
      %1577 = vmatprep.subr.mxu0 0.0
      %1578 = vmatpush2.xpose.msra.mxu0 0.0
      %1579 = vmatprep.subr.mxu0 0.0
      %1580 = vmatpush2.xpose.msra.mxu0 0.0
      %1581 = vmatprep.mubr.f32.mxu0 0.0
      %1582 = vmatmul.mubr.f32.gmra.mxu0 %v1513
      %v1583 = vpop.f32.mrf.mxu0
      %v1584 = vadd.f32 %v840, %v1583
      %v1585 = vpop.f32.mrf.mxu0
      %1586 = vdwg.mxu0
      %v1587 = vsel %vm1015, %v1584, -inf
      %1588 = vmax.xlane.f32.xlu0 %v1587
      %v1589 = vpop.xlane.xlu0 %1588
      %v1590 = vsub.f32 %v1584, %v1589
      %v1591 = vmul.f32 %v1590, 1.442695
      %v1592 = vpow.pop %v1591
      %v1593 = vsel %vm1015, %v1592, 0.0
      %1594 = vadd.xlane.f32.xlu0 %v1593
      %v1595 = vpop.xlane.xlu0 %1594
      %v1596 = vrcp.pop %v1595
      %v1597 = vmul.f32 %v1592, %v1596
      %1598 = vrot.lane.b32.xlu0 %v1012, 72
      %v1599 = vpop.permute.xlu0 %1598
      %v1602 = vsel %vm1015, %v1597, 0
      %1604 = vmatprep.subr.mxu0 0.0
      %1605 = vmatpush1.msra.mxu0 0.0
      %1606 = vmatprep.subr.mxu0 0.0
      %1607 = vmatpush1.msra.mxu0 0.0
      %1608 = vmatprep.subr.mxu0 0.0
      %1609 = vmatpush1.msra.mxu0 0.0
      %1610 = vmatprep.subr.mxu0 0.0
      %1611 = vmatpush1.msra.mxu0 0.0
      %1612 = vmatprep.subr.mxu0 0.0
      %1613 = vmatpush1.msra.mxu0 0.0
      %1614 = vmatprep.subr.mxu0 0.0
      %1615 = vmatpush1.msra.mxu0 0.0
      %1616 = vmatprep.subr.mxu0 0.0
      %1617 = vmatpush1.msra.mxu0 0.0
      %1618 = vmatprep.subr.mxu0 0.0
      %1619 = vmatpush1.msra.mxu0 0.0
      %1620 = vmatprep.subr.mxu0 0.0
      %1621 = vmatpush1.msra.mxu0 0.0
      %1622 = vmatprep.subr.mxu0 0.0
      %1623 = vmatpush1.msra.mxu0 0.0
      %1624 = vmatprep.subr.mxu0 0.0
      %1625 = vmatpush1.msra.mxu0 0.0
      %1626 = vmatprep.subr.mxu0 0.0
      %1627 = vmatpush1.msra.mxu0 0.0
      %1628 = vmatprep.subr.mxu0 0.0
      %1629 = vmatpush1.msra.mxu0 0.0
      %1630 = vmatprep.subr.mxu0 0.0
      %1631 = vmatpush1.msra.mxu0 0.0
      %1632 = vmatprep.subr.mxu0 0.0
      %1633 = vmatpush1.msra.mxu0 0.0
      %1634 = vmatprep.subr.mxu0 0.0
      %1635 = vmatpush1.msra.mxu0 %v1599
      %1636 = vmatprep.subr.mxu0 0.0
      %1637 = vmatpush2.msra.mxu0 0.0
      %1638 = vmatprep.subr.mxu0 0.0
      %1639 = vmatpush2.msra.mxu0 0.0
      %1640 = vmatprep.subr.mxu0 0.0
      %1641 = vmatpush2.msra.mxu0 0.0
      %1642 = vmatprep.subr.mxu0 0.0
      %1643 = vmatpush2.msra.mxu0 0.0
      %1644 = vmatprep.subr.mxu0 0.0
      %1645 = vmatpush2.msra.mxu0 0.0
      %1646 = vmatprep.subr.mxu0 0.0
      %1647 = vmatpush2.msra.mxu0 0.0
      %1648 = vmatprep.subr.mxu0 0.0
      %1649 = vmatpush2.msra.mxu0 0.0
      %1650 = vmatprep.subr.mxu0 0.0
      %1651 = vmatpush2.msra.mxu0 0.0
      %1652 = vmatprep.subr.mxu0 0.0
      %1653 = vmatpush2.msra.mxu0 0.0
      %1654 = vmatprep.subr.mxu0 0.0
      %1655 = vmatpush2.msra.mxu0 0.0
      %1656 = vmatprep.subr.mxu0 0.0
      %1657 = vmatpush2.msra.mxu0 0.0
      %1658 = vmatprep.subr.mxu0 0.0
      %1659 = vmatpush2.msra.mxu0 0.0
      %1660 = vmatprep.subr.mxu0 0.0
      %1661 = vmatpush2.msra.mxu0 0.0
      %1662 = vmatprep.subr.mxu0 0.0
      %1663 = vmatpush2.msra.mxu0 0.0
      %1664 = vmatprep.subr.mxu0 0.0
      %1665 = vmatpush2.msra.mxu0 0.0
      %1666 = vmatprep.subr.mxu0 0.0
      %1667 = vmatpush2.msra.mxu0 0.0
      %1668 = vmatprep.mubr.f32.mxu0 0.0
      %1669 = vmatmul.mubr.f32.gmra.mxu0 %v1602
      %v1670 = vpop.f32.mrf.mxu0
      %v1671 = vadd.f32 0.0, %v1670
      %v1672 = vpop.f32.mrf.mxu0
      %1673 = vdwg.mxu0
      %1675 = vrot.lane.b32.xlu0 %v1341, 8
      %v1676 = vpop.permute.xlu0 %1675
      %1679 = vrot.lane.b32.xlu0 %v1506, 16
      %v1680 = vpop.permute.xlu0 %1679
      %1683 = vrot.lane.b32.xlu0 %v1671, 24
      %v1684 = vpop.permute.xlu0 %1683
      %v1686 = vsel %vm1015, %v1176, %v1676
      %vm1687 = vcmask 130048
      %v1688 = vsel %vm1687, %v1686, %v1680
      %vm1689 = vcmask 195584
      %v1690 = vsel %vm1689, %v1688, %v1684
      %v1692 = vlaneseq
      %v1693 = vshrl.u32 %v1692, 7
      %v1694 = vsub.s32 0, %v1693
      %v1695 = vrot.slane %v855, %v1694
      %v1698 = vsel %vm864, %v1690, 0
      %1700 = vmatprep.subr.mxu0 0.0
      %1701 = vmatpush1.msra.mxu0 0.0
      %1702 = vmatprep.subr.mxu0 0.0
      %1703 = vmatpush1.msra.mxu0 0.0
      %1704 = vmatprep.subr.mxu0 0.0
      %1705 = vmatpush1.msra.mxu0 0.0
      %1706 = vmatprep.subr.mxu0 0.0
      %1707 = vmatpush1.msra.mxu0 0.0
      %1708 = vmatprep.subr.mxu0 0.0
      %1709 = vmatpush1.msra.mxu0 0.0
      %1710 = vmatprep.subr.mxu0 0.0
      %1711 = vmatpush1.msra.mxu0 0.0
      %1712 = vmatprep.subr.mxu0 0.0
      %1713 = vmatpush1.msra.mxu0 0.0
      %1714 = vmatprep.subr.mxu0 0.0
      %1715 = vmatpush1.msra.mxu0 0.0
      %1716 = vmatprep.subr.mxu0 0.0
      %1717 = vmatpush1.msra.mxu0 0.0
      %1718 = vmatprep.subr.mxu0 0.0
      %1719 = vmatpush1.msra.mxu0 0.0
      %1720 = vmatprep.subr.mxu0 0.0
      %1721 = vmatpush1.msra.mxu0 0.0
      %1722 = vmatprep.subr.mxu0 0.0
      %1723 = vmatpush1.msra.mxu0 0.0
      %1724 = vmatprep.subr.mxu0 0.0
      %1725 = vmatpush1.msra.mxu0 %v854
      %1726 = vmatprep.subr.mxu0 0.0
      %1727 = vmatpush1.msra.mxu0 %v853
      %1728 = vmatprep.subr.mxu0 0.0
      %1729 = vmatpush1.msra.mxu0 %v852
      %1730 = vmatprep.subr.mxu0 0.0
      %1731 = vmatpush1.msra.mxu0 %v851
      %1732 = vmatprep.subr.mxu0 0.0
      %1733 = vmatpush2.msra.mxu0 0.0
      %1734 = vmatprep.subr.mxu0 0.0
      %1735 = vmatpush2.msra.mxu0 0.0
      %1736 = vmatprep.subr.mxu0 0.0
      %1737 = vmatpush2.msra.mxu0 0.0
      %1738 = vmatprep.subr.mxu0 0.0
      %1739 = vmatpush2.msra.mxu0 0.0
      %1740 = vmatprep.subr.mxu0 0.0
      %1741 = vmatpush2.msra.mxu0 0.0
      %1742 = vmatprep.subr.mxu0 0.0
      %1743 = vmatpush2.msra.mxu0 0.0
      %1744 = vmatprep.subr.mxu0 0.0
      %1745 = vmatpush2.msra.mxu0 0.0
      %1746 = vmatprep.subr.mxu0 0.0
      %1747 = vmatpush2.msra.mxu0 0.0
      %1748 = vmatprep.subr.mxu0 0.0
      %1749 = vmatpush2.msra.mxu0 0.0
      %1750 = vmatprep.subr.mxu0 0.0
      %1751 = vmatpush2.msra.mxu0 0.0
      %1752 = vmatprep.subr.mxu0 0.0
      %1753 = vmatpush2.msra.mxu0 0.0
      %1754 = vmatprep.subr.mxu0 0.0
      %1755 = vmatpush2.msra.mxu0 0.0
      %1756 = vmatprep.subr.mxu0 0.0
      %1757 = vmatpush2.msra.mxu0 0.0
      %1758 = vmatprep.subr.mxu0 0.0
      %1759 = vmatpush2.msra.mxu0 0.0
      %1760 = vmatprep.subr.mxu0 0.0
      %1761 = vmatpush2.msra.mxu0 0.0
      %1762 = vmatprep.subr.mxu0 0.0
      %1763 = vmatpush2.msra.mxu0 0.0
      %1764 = vmatprep.mubr.f32.mxu0 0.0
      %1765 = vmatmul.mubr.f32.gmra.mxu0 %v1698
      %v1766 = vpop.f32.mrf.mxu0
      %v1767 = vadd.f32 %v1695, %v1766
      %v1768 = vpop.f32.mrf.mxu0
      %1769 = vdwg.mxu0
      %v1770 = vadd.f32 %v838, %v1767
      %v1771 = vsel %vm864, %v1770, 0.0
      %1772 = vadd.xlane.f32.xlu0 %v1771
      %v1773 = vpop.xlane.xlu0 %1772
      %v1774 = vrcp.pop 32.0
      %v1775 = vmul.f32 %v1773, %v1774
      %v1776 = vsub.f32 %v1770, %v1775
      %v1777 = vmul.f32 %v1776, %v1776
      %v1778 = vsel %vm864, %v1777, 0.0
      %1779 = vadd.xlane.f32.xlu0 %v1778
      %v1780 = vpop.xlane.xlu0 %1779
      %v1781 = vmul.f32 %v1780, %v1774
      %v1782 = vadd.f32 %v1781, 1e-12
      %v1783 = vrsqrt.pop %v1782
      %v1784 = vmul.f32 %v1776, %v1783
      %v1786 = vlaneseq
      %v1787 = vshrl.u32 %v1786, 7
      %v1788 = vsub.s32 0, %v1787
      %v1789 = vrot.slane %v856, %v1788
      %v1791 = vmul.f32 %v1784, %v1789
      %v1793 = vlaneseq
      %v1794 = vshrl.u32 %v1793, 7
      %v1795 = vsub.s32 0, %v1794
      %v1796 = vrot.slane %v857, %v1795
      %v1798 = vadd.f32 %v1791, %v1796
      %v1799 = vld [vmem:[%s833] sm:$0xff]
      %v1800 = vld [vmem:[%s12] sm:$0xff]
      %v1801 = vld [vmem:[%s12 + $0x8] sm:$0xff]
      %v1802 = vld [vmem:[%s12 + $0x10] sm:$0xff]
      %v1803 = vld [vmem:[%s12 + $0x18] sm:$0xff]
      %v1804 = vld [vmem:[%s13] sm:$0x1]
      %v1805 = vld [vmem:[%s14] sm:$0xff]
      %v1806 = vld [vmem:[%s14 + $0x8] sm:$0xff]
      %v1807 = vld [vmem:[%s14 + $0x10] sm:$0xff]
      %v1808 = vld [vmem:[%s14 + $0x18] sm:$0xff]
      %v1809 = vld [vmem:[%s15] sm:$0x1]
      %v1810 = vld [vmem:[%s16] sm:$0xff]
      %v1811 = vld [vmem:[%s16 + $0x8] sm:$0xff]
      %v1812 = vld [vmem:[%s16 + $0x10] sm:$0xff]
      %v1813 = vld [vmem:[%s16 + $0x18] sm:$0xff]
      %v1814 = vld [vmem:[%s17] sm:$0x1]
      %v1815 = vld [vmem:[%s18] sm:$0x1]
      %v1816 = vld [vmem:[%s19] sm:$0x1]
      %v1818 = vlaneseq
      %v1819 = vshrl.u32 %v1818, 7
      %v1820 = vsub.s32 0, %v1819
      %v1821 = vrot.slane %v1804, %v1820
      %v1824 = vsel %vm864, %v1798, 0
      %1826 = vmatprep.subr.mxu0 0.0
      %1827 = vmatpush1.msra.mxu0 0.0
      %1828 = vmatprep.subr.mxu0 0.0
      %1829 = vmatpush1.msra.mxu0 0.0
      %1830 = vmatprep.subr.mxu0 0.0
      %1831 = vmatpush1.msra.mxu0 0.0
      %1832 = vmatprep.subr.mxu0 0.0
      %1833 = vmatpush1.msra.mxu0 0.0
      %1834 = vmatprep.subr.mxu0 0.0
      %1835 = vmatpush1.msra.mxu0 0.0
      %1836 = vmatprep.subr.mxu0 0.0
      %1837 = vmatpush1.msra.mxu0 0.0
      %1838 = vmatprep.subr.mxu0 0.0
      %1839 = vmatpush1.msra.mxu0 0.0
      %1840 = vmatprep.subr.mxu0 0.0
      %1841 = vmatpush1.msra.mxu0 0.0
      %1842 = vmatprep.subr.mxu0 0.0
      %1843 = vmatpush1.msra.mxu0 0.0
      %1844 = vmatprep.subr.mxu0 0.0
      %1845 = vmatpush1.msra.mxu0 0.0
      %1846 = vmatprep.subr.mxu0 0.0
      %1847 = vmatpush1.msra.mxu0 0.0
      %1848 = vmatprep.subr.mxu0 0.0
      %1849 = vmatpush1.msra.mxu0 0.0
      %1850 = vmatprep.subr.mxu0 0.0
      %1851 = vmatpush1.msra.mxu0 %v1803
      %1852 = vmatprep.subr.mxu0 0.0
      %1853 = vmatpush1.msra.mxu0 %v1802
      %1854 = vmatprep.subr.mxu0 0.0
      %1855 = vmatpush1.msra.mxu0 %v1801
      %1856 = vmatprep.subr.mxu0 0.0
      %1857 = vmatpush1.msra.mxu0 %v1800
      %1858 = vmatprep.subr.mxu0 0.0
      %1859 = vmatpush2.msra.mxu0 0.0
      %1860 = vmatprep.subr.mxu0 0.0
      %1861 = vmatpush2.msra.mxu0 0.0
      %1862 = vmatprep.subr.mxu0 0.0
      %1863 = vmatpush2.msra.mxu0 0.0
      %1864 = vmatprep.subr.mxu0 0.0
      %1865 = vmatpush2.msra.mxu0 0.0
      %1866 = vmatprep.subr.mxu0 0.0
      %1867 = vmatpush2.msra.mxu0 0.0
      %1868 = vmatprep.subr.mxu0 0.0
      %1869 = vmatpush2.msra.mxu0 0.0
      %1870 = vmatprep.subr.mxu0 0.0
      %1871 = vmatpush2.msra.mxu0 0.0
      %1872 = vmatprep.subr.mxu0 0.0
      %1873 = vmatpush2.msra.mxu0 0.0
      %1874 = vmatprep.subr.mxu0 0.0
      %1875 = vmatpush2.msra.mxu0 0.0
      %1876 = vmatprep.subr.mxu0 0.0
      %1877 = vmatpush2.msra.mxu0 0.0
      %1878 = vmatprep.subr.mxu0 0.0
      %1879 = vmatpush2.msra.mxu0 0.0
      %1880 = vmatprep.subr.mxu0 0.0
      %1881 = vmatpush2.msra.mxu0 0.0
      %1882 = vmatprep.subr.mxu0 0.0
      %1883 = vmatpush2.msra.mxu0 0.0
      %1884 = vmatprep.subr.mxu0 0.0
      %1885 = vmatpush2.msra.mxu0 0.0
      %1886 = vmatprep.subr.mxu0 0.0
      %1887 = vmatpush2.msra.mxu0 0.0
      %1888 = vmatprep.subr.mxu0 0.0
      %1889 = vmatpush2.msra.mxu0 0.0
      %1890 = vmatprep.mubr.f32.mxu0 0.0
      %1891 = vmatmul.mubr.f32.gmra.mxu0 %v1824
      %v1892 = vpop.f32.mrf.mxu0
      %v1893 = vadd.f32 %v1821, %v1892
      %v1894 = vpop.f32.mrf.mxu0
      %1895 = vdwg.mxu0
      %v1896 = vmul.f32 %v1893, 0.35355338
      %v1898 = vlaneseq
      %v1899 = vshrl.u32 %v1898, 7
      %v1900 = vsub.s32 0, %v1899
      %v1901 = vrot.slane %v1809, %v1900
      %v1904 = vsel %vm864, %v839, 0
      %1906 = vmatprep.subr.mxu0 0.0
      %1907 = vmatpush1.msra.mxu0 0.0
      %1908 = vmatprep.subr.mxu0 0.0
      %1909 = vmatpush1.msra.mxu0 0.0
      %1910 = vmatprep.subr.mxu0 0.0
      %1911 = vmatpush1.msra.mxu0 0.0
      %1912 = vmatprep.subr.mxu0 0.0
      %1913 = vmatpush1.msra.mxu0 0.0
      %1914 = vmatprep.subr.mxu0 0.0
      %1915 = vmatpush1.msra.mxu0 0.0
      %1916 = vmatprep.subr.mxu0 0.0
      %1917 = vmatpush1.msra.mxu0 0.0
      %1918 = vmatprep.subr.mxu0 0.0
      %1919 = vmatpush1.msra.mxu0 0.0
      %1920 = vmatprep.subr.mxu0 0.0
      %1921 = vmatpush1.msra.mxu0 0.0
      %1922 = vmatprep.subr.mxu0 0.0
      %1923 = vmatpush1.msra.mxu0 0.0
      %1924 = vmatprep.subr.mxu0 0.0
      %1925 = vmatpush1.msra.mxu0 0.0
      %1926 = vmatprep.subr.mxu0 0.0
      %1927 = vmatpush1.msra.mxu0 0.0
      %1928 = vmatprep.subr.mxu0 0.0
      %1929 = vmatpush1.msra.mxu0 0.0
      %1930 = vmatprep.subr.mxu0 0.0
      %1931 = vmatpush1.msra.mxu0 %v1808
      %1932 = vmatprep.subr.mxu0 0.0
      %1933 = vmatpush1.msra.mxu0 %v1807
      %1934 = vmatprep.subr.mxu0 0.0
      %1935 = vmatpush1.msra.mxu0 %v1806
      %1936 = vmatprep.subr.mxu0 0.0
      %1937 = vmatpush1.msra.mxu0 %v1805
      %1938 = vmatprep.subr.mxu0 0.0
      %1939 = vmatpush2.msra.mxu0 0.0
      %1940 = vmatprep.subr.mxu0 0.0
      %1941 = vmatpush2.msra.mxu0 0.0
      %1942 = vmatprep.subr.mxu0 0.0
      %1943 = vmatpush2.msra.mxu0 0.0
      %1944 = vmatprep.subr.mxu0 0.0
      %1945 = vmatpush2.msra.mxu0 0.0
      %1946 = vmatprep.subr.mxu0 0.0
      %1947 = vmatpush2.msra.mxu0 0.0
      %1948 = vmatprep.subr.mxu0 0.0
      %1949 = vmatpush2.msra.mxu0 0.0
      %1950 = vmatprep.subr.mxu0 0.0
      %1951 = vmatpush2.msra.mxu0 0.0
      %1952 = vmatprep.subr.mxu0 0.0
      %1953 = vmatpush2.msra.mxu0 0.0
      %1954 = vmatprep.subr.mxu0 0.0
      %1955 = vmatpush2.msra.mxu0 0.0
      %1956 = vmatprep.subr.mxu0 0.0
      %1957 = vmatpush2.msra.mxu0 0.0
      %1958 = vmatprep.subr.mxu0 0.0
      %1959 = vmatpush2.msra.mxu0 0.0
      %1960 = vmatprep.subr.mxu0 0.0
      %1961 = vmatpush2.msra.mxu0 0.0
      %1962 = vmatprep.subr.mxu0 0.0
      %1963 = vmatpush2.msra.mxu0 0.0
      %1964 = vmatprep.subr.mxu0 0.0
      %1965 = vmatpush2.msra.mxu0 0.0
      %1966 = vmatprep.subr.mxu0 0.0
      %1967 = vmatpush2.msra.mxu0 0.0
      %1968 = vmatprep.subr.mxu0 0.0
      %1969 = vmatpush2.msra.mxu0 0.0
      %1970 = vmatprep.mubr.f32.mxu0 0.0
      %1971 = vmatmul.mubr.f32.gmra.mxu0 %v1904
      %v1972 = vpop.f32.mrf.mxu0
      %v1973 = vadd.f32 %v1901, %v1972
      %v1974 = vpop.f32.mrf.mxu0
      %1975 = vdwg.mxu0
      %v1977 = vsel %vm1015, %v1896, 0
      %v1980 = vsel %vm1015, %v1973, 0
      %1982 = vmatprep.subr.mxu0 0.0
      %1983 = vmatpush1.xpose.msra.mxu0 0.0
      %1984 = vmatprep.subr.mxu0 0.0
      %1985 = vmatpush1.xpose.msra.mxu0 0.0
      %1986 = vmatprep.subr.mxu0 0.0
      %1987 = vmatpush1.xpose.msra.mxu0 0.0
      %1988 = vmatprep.subr.mxu0 0.0
      %1989 = vmatpush1.xpose.msra.mxu0 0.0
      %1990 = vmatprep.subr.mxu0 0.0
      %1991 = vmatpush1.xpose.msra.mxu0 0.0
      %1992 = vmatprep.subr.mxu0 0.0
      %1993 = vmatpush1.xpose.msra.mxu0 0.0
      %1994 = vmatprep.subr.mxu0 0.0
      %1995 = vmatpush1.xpose.msra.mxu0 0.0
      %1996 = vmatprep.subr.mxu0 0.0
      %1997 = vmatpush1.xpose.msra.mxu0 0.0
      %1998 = vmatprep.subr.mxu0 0.0
      %1999 = vmatpush1.xpose.msra.mxu0 0.0
      %2000 = vmatprep.subr.mxu0 0.0
      %2001 = vmatpush1.xpose.msra.mxu0 0.0
      %2002 = vmatprep.subr.mxu0 0.0
      %2003 = vmatpush1.xpose.msra.mxu0 0.0
      %2004 = vmatprep.subr.mxu0 0.0
      %2005 = vmatpush1.xpose.msra.mxu0 0.0
      %2006 = vmatprep.subr.mxu0 0.0
      %2007 = vmatpush1.xpose.msra.mxu0 0.0
      %2008 = vmatprep.subr.mxu0 0.0
      %2009 = vmatpush1.xpose.msra.mxu0 0.0
      %2010 = vmatprep.subr.mxu0 0.0
      %2011 = vmatpush1.xpose.msra.mxu0 0.0
      %2012 = vmatprep.subr.mxu0 0.0
      %2013 = vmatpush1.xpose.msra.mxu0 %v1980
      %2014 = vmatprep.subr.mxu0 0.0
      %2015 = vmatpush2.xpose.msra.mxu0 0.0
      %2016 = vmatprep.subr.mxu0 0.0
      %2017 = vmatpush2.xpose.msra.mxu0 0.0
      %2018 = vmatprep.subr.mxu0 0.0
      %2019 = vmatpush2.xpose.msra.mxu0 0.0
      %2020 = vmatprep.subr.mxu0 0.0
      %2021 = vmatpush2.xpose.msra.mxu0 0.0
      %2022 = vmatprep.subr.mxu0 0.0
      %2023 = vmatpush2.xpose.msra.mxu0 0.0
      %2024 = vmatprep.subr.mxu0 0.0
      %2025 = vmatpush2.xpose.msra.mxu0 0.0
      %2026 = vmatprep.subr.mxu0 0.0
      %2027 = vmatpush2.xpose.msra.mxu0 0.0
      %2028 = vmatprep.subr.mxu0 0.0
      %2029 = vmatpush2.xpose.msra.mxu0 0.0
      %2030 = vmatprep.subr.mxu0 0.0
      %2031 = vmatpush2.xpose.msra.mxu0 0.0
      %2032 = vmatprep.subr.mxu0 0.0
      %2033 = vmatpush2.xpose.msra.mxu0 0.0
      %2034 = vmatprep.subr.mxu0 0.0
      %2035 = vmatpush2.xpose.msra.mxu0 0.0
      %2036 = vmatprep.subr.mxu0 0.0
      %2037 = vmatpush2.xpose.msra.mxu0 0.0
      %2038 = vmatprep.subr.mxu0 0.0
      %2039 = vmatpush2.xpose.msra.mxu0 0.0
      %2040 = vmatprep.subr.mxu0 0.0
      %2041 = vmatpush2.xpose.msra.mxu0 0.0
      %2042 = vmatprep.subr.mxu0 0.0
      %2043 = vmatpush2.xpose.msra.mxu0 0.0
      %2044 = vmatprep.subr.mxu0 0.0
      %2045 = vmatpush2.xpose.msra.mxu0 0.0
      %2046 = vmatprep.mubr.f32.mxu0 0.0
      %2047 = vmatmul.mubr.f32.gmra.mxu0 %v1977
      %v2048 = vpop.f32.mrf.mxu0
      %v2049 = vadd.f32 %v1799, %v2048
      %v2050 = vpop.f32.mrf.mxu0
      %2051 = vdwg.mxu0
      %v2052 = vsel %vm1015, %v2049, -inf
      %2053 = vmax.xlane.f32.xlu0 %v2052
      %v2054 = vpop.xlane.xlu0 %2053
      %v2055 = vsub.f32 %v2049, %v2054
      %v2056 = vmul.f32 %v2055, 1.442695
      %v2057 = vpow.pop %v2056
      %v2058 = vsel %vm1015, %v2057, 0.0
      %2059 = vadd.xlane.f32.xlu0 %v2058
      %v2060 = vpop.xlane.xlu0 %2059
      %v2061 = vrcp.pop %v2060
      %v2062 = vmul.f32 %v2057, %v2061
      %2063 = vrot.lane.b32.xlu0 %v1973, 96
      %v2064 = vpop.permute.xlu0 %2063
      %v2067 = vsel %vm1015, %v2062, 0
      %2069 = vmatprep.subr.mxu0 0.0
      %2070 = vmatpush1.msra.mxu0 0.0
      %2071 = vmatprep.subr.mxu0 0.0
      %2072 = vmatpush1.msra.mxu0 0.0
      %2073 = vmatprep.subr.mxu0 0.0
      %2074 = vmatpush1.msra.mxu0 0.0
      %2075 = vmatprep.subr.mxu0 0.0
      %2076 = vmatpush1.msra.mxu0 0.0
      %2077 = vmatprep.subr.mxu0 0.0
      %2078 = vmatpush1.msra.mxu0 0.0
      %2079 = vmatprep.subr.mxu0 0.0
      %2080 = vmatpush1.msra.mxu0 0.0
      %2081 = vmatprep.subr.mxu0 0.0
      %2082 = vmatpush1.msra.mxu0 0.0
      %2083 = vmatprep.subr.mxu0 0.0
      %2084 = vmatpush1.msra.mxu0 0.0
      %2085 = vmatprep.subr.mxu0 0.0
      %2086 = vmatpush1.msra.mxu0 0.0
      %2087 = vmatprep.subr.mxu0 0.0
      %2088 = vmatpush1.msra.mxu0 0.0
      %2089 = vmatprep.subr.mxu0 0.0
      %2090 = vmatpush1.msra.mxu0 0.0
      %2091 = vmatprep.subr.mxu0 0.0
      %2092 = vmatpush1.msra.mxu0 0.0
      %2093 = vmatprep.subr.mxu0 0.0
      %2094 = vmatpush1.msra.mxu0 0.0
      %2095 = vmatprep.subr.mxu0 0.0
      %2096 = vmatpush1.msra.mxu0 0.0
      %2097 = vmatprep.subr.mxu0 0.0
      %2098 = vmatpush1.msra.mxu0 0.0
      %2099 = vmatprep.subr.mxu0 0.0
      %2100 = vmatpush1.msra.mxu0 %v2064
      %2101 = vmatprep.subr.mxu0 0.0
      %2102 = vmatpush2.msra.mxu0 0.0
      %2103 = vmatprep.subr.mxu0 0.0
      %2104 = vmatpush2.msra.mxu0 0.0
      %2105 = vmatprep.subr.mxu0 0.0
      %2106 = vmatpush2.msra.mxu0 0.0
      %2107 = vmatprep.subr.mxu0 0.0
      %2108 = vmatpush2.msra.mxu0 0.0
      %2109 = vmatprep.subr.mxu0 0.0
      %2110 = vmatpush2.msra.mxu0 0.0
      %2111 = vmatprep.subr.mxu0 0.0
      %2112 = vmatpush2.msra.mxu0 0.0
      %2113 = vmatprep.subr.mxu0 0.0
      %2114 = vmatpush2.msra.mxu0 0.0
      %2115 = vmatprep.subr.mxu0 0.0
      %2116 = vmatpush2.msra.mxu0 0.0
      %2117 = vmatprep.subr.mxu0 0.0
      %2118 = vmatpush2.msra.mxu0 0.0
      %2119 = vmatprep.subr.mxu0 0.0
      %2120 = vmatpush2.msra.mxu0 0.0
      %2121 = vmatprep.subr.mxu0 0.0
      %2122 = vmatpush2.msra.mxu0 0.0
      %2123 = vmatprep.subr.mxu0 0.0
      %2124 = vmatpush2.msra.mxu0 0.0
      %2125 = vmatprep.subr.mxu0 0.0
      %2126 = vmatpush2.msra.mxu0 0.0
      %2127 = vmatprep.subr.mxu0 0.0
      %2128 = vmatpush2.msra.mxu0 0.0
      %2129 = vmatprep.subr.mxu0 0.0
      %2130 = vmatpush2.msra.mxu0 0.0
      %2131 = vmatprep.subr.mxu0 0.0
      %2132 = vmatpush2.msra.mxu0 0.0
      %2133 = vmatprep.mubr.f32.mxu0 0.0
      %2134 = vmatmul.mubr.f32.gmra.mxu0 %v2067
      %v2135 = vpop.f32.mrf.mxu0
      %v2136 = vadd.f32 0.0, %v2135
      %v2137 = vpop.f32.mrf.mxu0
      %2138 = vdwg.mxu0
      %2139 = vrot.lane.b32.xlu0 %v1896, 120
      %v2140 = vpop.permute.xlu0 %2139
      %2141 = vrot.lane.b32.xlu0 %v1973, 120
      %v2142 = vpop.permute.xlu0 %2141
      %v2143 = vsel %vm1015, %v2140, 0
      %v2145 = vsel %vm1015, %v2142, 0
      %2147 = vmatprep.subr.mxu0 0.0
      %2148 = vmatpush1.xpose.msra.mxu0 0.0
      %2149 = vmatprep.subr.mxu0 0.0
      %2150 = vmatpush1.xpose.msra.mxu0 0.0
      %2151 = vmatprep.subr.mxu0 0.0
      %2152 = vmatpush1.xpose.msra.mxu0 0.0
      %2153 = vmatprep.subr.mxu0 0.0
      %2154 = vmatpush1.xpose.msra.mxu0 0.0
      %2155 = vmatprep.subr.mxu0 0.0
      %2156 = vmatpush1.xpose.msra.mxu0 0.0
      %2157 = vmatprep.subr.mxu0 0.0
      %2158 = vmatpush1.xpose.msra.mxu0 0.0
      %2159 = vmatprep.subr.mxu0 0.0
      %2160 = vmatpush1.xpose.msra.mxu0 0.0
      %2161 = vmatprep.subr.mxu0 0.0
      %2162 = vmatpush1.xpose.msra.mxu0 0.0
      %2163 = vmatprep.subr.mxu0 0.0
      %2164 = vmatpush1.xpose.msra.mxu0 0.0
      %2165 = vmatprep.subr.mxu0 0.0
      %2166 = vmatpush1.xpose.msra.mxu0 0.0
      %2167 = vmatprep.subr.mxu0 0.0
      %2168 = vmatpush1.xpose.msra.mxu0 0.0
      %2169 = vmatprep.subr.mxu0 0.0
      %2170 = vmatpush1.xpose.msra.mxu0 0.0
      %2171 = vmatprep.subr.mxu0 0.0
      %2172 = vmatpush1.xpose.msra.mxu0 0.0
      %2173 = vmatprep.subr.mxu0 0.0
      %2174 = vmatpush1.xpose.msra.mxu0 0.0
      %2175 = vmatprep.subr.mxu0 0.0
      %2176 = vmatpush1.xpose.msra.mxu0 0.0
      %2177 = vmatprep.subr.mxu0 0.0
      %2178 = vmatpush1.xpose.msra.mxu0 %v2145
      %2179 = vmatprep.subr.mxu0 0.0
      %2180 = vmatpush2.xpose.msra.mxu0 0.0
      %2181 = vmatprep.subr.mxu0 0.0
      %2182 = vmatpush2.xpose.msra.mxu0 0.0
      %2183 = vmatprep.subr.mxu0 0.0
      %2184 = vmatpush2.xpose.msra.mxu0 0.0
      %2185 = vmatprep.subr.mxu0 0.0
      %2186 = vmatpush2.xpose.msra.mxu0 0.0
      %2187 = vmatprep.subr.mxu0 0.0
      %2188 = vmatpush2.xpose.msra.mxu0 0.0
      %2189 = vmatprep.subr.mxu0 0.0
      %2190 = vmatpush2.xpose.msra.mxu0 0.0
      %2191 = vmatprep.subr.mxu0 0.0
      %2192 = vmatpush2.xpose.msra.mxu0 0.0
      %2193 = vmatprep.subr.mxu0 0.0
      %2194 = vmatpush2.xpose.msra.mxu0 0.0
      %2195 = vmatprep.subr.mxu0 0.0
      %2196 = vmatpush2.xpose.msra.mxu0 0.0
      %2197 = vmatprep.subr.mxu0 0.0
      %2198 = vmatpush2.xpose.msra.mxu0 0.0
      %2199 = vmatprep.subr.mxu0 0.0
      %2200 = vmatpush2.xpose.msra.mxu0 0.0
      %2201 = vmatprep.subr.mxu0 0.0
      %2202 = vmatpush2.xpose.msra.mxu0 0.0
      %2203 = vmatprep.subr.mxu0 0.0
      %2204 = vmatpush2.xpose.msra.mxu0 0.0
      %2205 = vmatprep.subr.mxu0 0.0
      %2206 = vmatpush2.xpose.msra.mxu0 0.0
      %2207 = vmatprep.subr.mxu0 0.0
      %2208 = vmatpush2.xpose.msra.mxu0 0.0
      %2209 = vmatprep.subr.mxu0 0.0
      %2210 = vmatpush2.xpose.msra.mxu0 0.0
      %2211 = vmatprep.mubr.f32.mxu0 0.0
      %2212 = vmatmul.mubr.f32.gmra.mxu0 %v2143
      %v2213 = vpop.f32.mrf.mxu0
      %v2214 = vadd.f32 %v1799, %v2213
      %v2215 = vpop.f32.mrf.mxu0
      %2216 = vdwg.mxu0
      %v2217 = vsel %vm1015, %v2214, -inf
      %2218 = vmax.xlane.f32.xlu0 %v2217
      %v2219 = vpop.xlane.xlu0 %2218
      %v2220 = vsub.f32 %v2214, %v2219
      %v2221 = vmul.f32 %v2220, 1.442695
      %v2222 = vpow.pop %v2221
      %v2223 = vsel %vm1015, %v2222, 0.0
      %2224 = vadd.xlane.f32.xlu0 %v2223
      %v2225 = vpop.xlane.xlu0 %2224
      %v2226 = vrcp.pop %v2225
      %v2227 = vmul.f32 %v2222, %v2226
      %2228 = vrot.lane.b32.xlu0 %v1973, 88
      %v2229 = vpop.permute.xlu0 %2228
      %v2232 = vsel %vm1015, %v2227, 0
      %2234 = vmatprep.subr.mxu0 0.0
      %2235 = vmatpush1.msra.mxu0 0.0
      %2236 = vmatprep.subr.mxu0 0.0
      %2237 = vmatpush1.msra.mxu0 0.0
      %2238 = vmatprep.subr.mxu0 0.0
      %2239 = vmatpush1.msra.mxu0 0.0
      %2240 = vmatprep.subr.mxu0 0.0
      %2241 = vmatpush1.msra.mxu0 0.0
      %2242 = vmatprep.subr.mxu0 0.0
      %2243 = vmatpush1.msra.mxu0 0.0
      %2244 = vmatprep.subr.mxu0 0.0
      %2245 = vmatpush1.msra.mxu0 0.0
      %2246 = vmatprep.subr.mxu0 0.0
      %2247 = vmatpush1.msra.mxu0 0.0
      %2248 = vmatprep.subr.mxu0 0.0
      %2249 = vmatpush1.msra.mxu0 0.0
      %2250 = vmatprep.subr.mxu0 0.0
      %2251 = vmatpush1.msra.mxu0 0.0
      %2252 = vmatprep.subr.mxu0 0.0
      %2253 = vmatpush1.msra.mxu0 0.0
      %2254 = vmatprep.subr.mxu0 0.0
      %2255 = vmatpush1.msra.mxu0 0.0
      %2256 = vmatprep.subr.mxu0 0.0
      %2257 = vmatpush1.msra.mxu0 0.0
      %2258 = vmatprep.subr.mxu0 0.0
      %2259 = vmatpush1.msra.mxu0 0.0
      %2260 = vmatprep.subr.mxu0 0.0
      %2261 = vmatpush1.msra.mxu0 0.0
      %2262 = vmatprep.subr.mxu0 0.0
      %2263 = vmatpush1.msra.mxu0 0.0
      %2264 = vmatprep.subr.mxu0 0.0
      %2265 = vmatpush1.msra.mxu0 %v2229
      %2266 = vmatprep.subr.mxu0 0.0
      %2267 = vmatpush2.msra.mxu0 0.0
      %2268 = vmatprep.subr.mxu0 0.0
      %2269 = vmatpush2.msra.mxu0 0.0
      %2270 = vmatprep.subr.mxu0 0.0
      %2271 = vmatpush2.msra.mxu0 0.0
      %2272 = vmatprep.subr.mxu0 0.0
      %2273 = vmatpush2.msra.mxu0 0.0
      %2274 = vmatprep.subr.mxu0 0.0
      %2275 = vmatpush2.msra.mxu0 0.0
      %2276 = vmatprep.subr.mxu0 0.0
      %2277 = vmatpush2.msra.mxu0 0.0
      %2278 = vmatprep.subr.mxu0 0.0
      %2279 = vmatpush2.msra.mxu0 0.0
      %2280 = vmatprep.subr.mxu0 0.0
      %2281 = vmatpush2.msra.mxu0 0.0
      %2282 = vmatprep.subr.mxu0 0.0
      %2283 = vmatpush2.msra.mxu0 0.0
      %2284 = vmatprep.subr.mxu0 0.0
      %2285 = vmatpush2.msra.mxu0 0.0
      %2286 = vmatprep.subr.mxu0 0.0
      %2287 = vmatpush2.msra.mxu0 0.0
      %2288 = vmatprep.subr.mxu0 0.0
      %2289 = vmatpush2.msra.mxu0 0.0
      %2290 = vmatprep.subr.mxu0 0.0
      %2291 = vmatpush2.msra.mxu0 0.0
      %2292 = vmatprep.subr.mxu0 0.0
      %2293 = vmatpush2.msra.mxu0 0.0
      %2294 = vmatprep.subr.mxu0 0.0
      %2295 = vmatpush2.msra.mxu0 0.0
      %2296 = vmatprep.subr.mxu0 0.0
      %2297 = vmatpush2.msra.mxu0 0.0
      %2298 = vmatprep.mubr.f32.mxu0 0.0
      %2299 = vmatmul.mubr.f32.gmra.mxu0 %v2232
      %v2300 = vpop.f32.mrf.mxu0
      %v2301 = vadd.f32 0.0, %v2300
      %v2302 = vpop.f32.mrf.mxu0
      %2303 = vdwg.mxu0
      %2304 = vrot.lane.b32.xlu0 %v1896, 112
      %v2305 = vpop.permute.xlu0 %2304
      %2306 = vrot.lane.b32.xlu0 %v1973, 112
      %v2307 = vpop.permute.xlu0 %2306
      %v2308 = vsel %vm1015, %v2305, 0
      %v2310 = vsel %vm1015, %v2307, 0
      %2312 = vmatprep.subr.mxu0 0.0
      %2313 = vmatpush1.xpose.msra.mxu0 0.0
      %2314 = vmatprep.subr.mxu0 0.0
      %2315 = vmatpush1.xpose.msra.mxu0 0.0
      %2316 = vmatprep.subr.mxu0 0.0
      %2317 = vmatpush1.xpose.msra.mxu0 0.0
      %2318 = vmatprep.subr.mxu0 0.0
      %2319 = vmatpush1.xpose.msra.mxu0 0.0
      %2320 = vmatprep.subr.mxu0 0.0
      %2321 = vmatpush1.xpose.msra.mxu0 0.0
      %2322 = vmatprep.subr.mxu0 0.0
      %2323 = vmatpush1.xpose.msra.mxu0 0.0
      %2324 = vmatprep.subr.mxu0 0.0
      %2325 = vmatpush1.xpose.msra.mxu0 0.0
      %2326 = vmatprep.subr.mxu0 0.0
      %2327 = vmatpush1.xpose.msra.mxu0 0.0
      %2328 = vmatprep.subr.mxu0 0.0
      %2329 = vmatpush1.xpose.msra.mxu0 0.0
      %2330 = vmatprep.subr.mxu0 0.0
      %2331 = vmatpush1.xpose.msra.mxu0 0.0
      %2332 = vmatprep.subr.mxu0 0.0
      %2333 = vmatpush1.xpose.msra.mxu0 0.0
      %2334 = vmatprep.subr.mxu0 0.0
      %2335 = vmatpush1.xpose.msra.mxu0 0.0
      %2336 = vmatprep.subr.mxu0 0.0
      %2337 = vmatpush1.xpose.msra.mxu0 0.0
      %2338 = vmatprep.subr.mxu0 0.0
      %2339 = vmatpush1.xpose.msra.mxu0 0.0
      %2340 = vmatprep.subr.mxu0 0.0
      %2341 = vmatpush1.xpose.msra.mxu0 0.0
      %2342 = vmatprep.subr.mxu0 0.0
      %2343 = vmatpush1.xpose.msra.mxu0 %v2310
      %2344 = vmatprep.subr.mxu0 0.0
      %2345 = vmatpush2.xpose.msra.mxu0 0.0
      %2346 = vmatprep.subr.mxu0 0.0
      %2347 = vmatpush2.xpose.msra.mxu0 0.0
      %2348 = vmatprep.subr.mxu0 0.0
      %2349 = vmatpush2.xpose.msra.mxu0 0.0
      %2350 = vmatprep.subr.mxu0 0.0
      %2351 = vmatpush2.xpose.msra.mxu0 0.0
      %2352 = vmatprep.subr.mxu0 0.0
      %2353 = vmatpush2.xpose.msra.mxu0 0.0
      %2354 = vmatprep.subr.mxu0 0.0
      %2355 = vmatpush2.xpose.msra.mxu0 0.0
      %2356 = vmatprep.subr.mxu0 0.0
      %2357 = vmatpush2.xpose.msra.mxu0 0.0
      %2358 = vmatprep.subr.mxu0 0.0
      %2359 = vmatpush2.xpose.msra.mxu0 0.0
      %2360 = vmatprep.subr.mxu0 0.0
      %2361 = vmatpush2.xpose.msra.mxu0 0.0
      %2362 = vmatprep.subr.mxu0 0.0
      %2363 = vmatpush2.xpose.msra.mxu0 0.0
      %2364 = vmatprep.subr.mxu0 0.0
      %2365 = vmatpush2.xpose.msra.mxu0 0.0
      %2366 = vmatprep.subr.mxu0 0.0
      %2367 = vmatpush2.xpose.msra.mxu0 0.0
      %2368 = vmatprep.subr.mxu0 0.0
      %2369 = vmatpush2.xpose.msra.mxu0 0.0
      %2370 = vmatprep.subr.mxu0 0.0
      %2371 = vmatpush2.xpose.msra.mxu0 0.0
      %2372 = vmatprep.subr.mxu0 0.0
      %2373 = vmatpush2.xpose.msra.mxu0 0.0
      %2374 = vmatprep.subr.mxu0 0.0
      %2375 = vmatpush2.xpose.msra.mxu0 0.0
      %2376 = vmatprep.mubr.f32.mxu0 0.0
      %2377 = vmatmul.mubr.f32.gmra.mxu0 %v2308
      %v2378 = vpop.f32.mrf.mxu0
      %v2379 = vadd.f32 %v1799, %v2378
      %v2380 = vpop.f32.mrf.mxu0
      %2381 = vdwg.mxu0
      %v2382 = vsel %vm1015, %v2379, -inf
      %2383 = vmax.xlane.f32.xlu0 %v2382
      %v2384 = vpop.xlane.xlu0 %2383
      %v2385 = vsub.f32 %v2379, %v2384
      %v2386 = vmul.f32 %v2385, 1.442695
      %v2387 = vpow.pop %v2386
      %v2388 = vsel %vm1015, %v2387, 0.0
      %2389 = vadd.xlane.f32.xlu0 %v2388
      %v2390 = vpop.xlane.xlu0 %2389
      %v2391 = vrcp.pop %v2390
      %v2392 = vmul.f32 %v2387, %v2391
      %2393 = vrot.lane.b32.xlu0 %v1973, 80
      %v2394 = vpop.permute.xlu0 %2393
      %v2397 = vsel %vm1015, %v2392, 0
      %2399 = vmatprep.subr.mxu0 0.0
      %2400 = vmatpush1.msra.mxu0 0.0
      %2401 = vmatprep.subr.mxu0 0.0
      %2402 = vmatpush1.msra.mxu0 0.0
      %2403 = vmatprep.subr.mxu0 0.0
      %2404 = vmatpush1.msra.mxu0 0.0
      %2405 = vmatprep.subr.mxu0 0.0
      %2406 = vmatpush1.msra.mxu0 0.0
      %2407 = vmatprep.subr.mxu0 0.0
      %2408 = vmatpush1.msra.mxu0 0.0
      %2409 = vmatprep.subr.mxu0 0.0
      %2410 = vmatpush1.msra.mxu0 0.0
      %2411 = vmatprep.subr.mxu0 0.0
      %2412 = vmatpush1.msra.mxu0 0.0
      %2413 = vmatprep.subr.mxu0 0.0
      %2414 = vmatpush1.msra.mxu0 0.0
      %2415 = vmatprep.subr.mxu0 0.0
      %2416 = vmatpush1.msra.mxu0 0.0
      %2417 = vmatprep.subr.mxu0 0.0
      %2418 = vmatpush1.msra.mxu0 0.0
      %2419 = vmatprep.subr.mxu0 0.0
      %2420 = vmatpush1.msra.mxu0 0.0
      %2421 = vmatprep.subr.mxu0 0.0
      %2422 = vmatpush1.msra.mxu0 0.0
      %2423 = vmatprep.subr.mxu0 0.0
      %2424 = vmatpush1.msra.mxu0 0.0
      %2425 = vmatprep.subr.mxu0 0.0
      %2426 = vmatpush1.msra.mxu0 0.0
      %2427 = vmatprep.subr.mxu0 0.0
      %2428 = vmatpush1.msra.mxu0 0.0
      %2429 = vmatprep.subr.mxu0 0.0
      %2430 = vmatpush1.msra.mxu0 %v2394
      %2431 = vmatprep.subr.mxu0 0.0
      %2432 = vmatpush2.msra.mxu0 0.0
      %2433 = vmatprep.subr.mxu0 0.0
      %2434 = vmatpush2.msra.mxu0 0.0
      %2435 = vmatprep.subr.mxu0 0.0
      %2436 = vmatpush2.msra.mxu0 0.0
      %2437 = vmatprep.subr.mxu0 0.0
      %2438 = vmatpush2.msra.mxu0 0.0
      %2439 = vmatprep.subr.mxu0 0.0
      %2440 = vmatpush2.msra.mxu0 0.0
      %2441 = vmatprep.subr.mxu0 0.0
      %2442 = vmatpush2.msra.mxu0 0.0
      %2443 = vmatprep.subr.mxu0 0.0
      %2444 = vmatpush2.msra.mxu0 0.0
      %2445 = vmatprep.subr.mxu0 0.0
      %2446 = vmatpush2.msra.mxu0 0.0
      %2447 = vmatprep.subr.mxu0 0.0
      %2448 = vmatpush2.msra.mxu0 0.0
      %2449 = vmatprep.subr.mxu0 0.0
      %2450 = vmatpush2.msra.mxu0 0.0
      %2451 = vmatprep.subr.mxu0 0.0
      %2452 = vmatpush2.msra.mxu0 0.0
      %2453 = vmatprep.subr.mxu0 0.0
      %2454 = vmatpush2.msra.mxu0 0.0
      %2455 = vmatprep.subr.mxu0 0.0
      %2456 = vmatpush2.msra.mxu0 0.0
      %2457 = vmatprep.subr.mxu0 0.0
      %2458 = vmatpush2.msra.mxu0 0.0
      %2459 = vmatprep.subr.mxu0 0.0
      %2460 = vmatpush2.msra.mxu0 0.0
      %2461 = vmatprep.subr.mxu0 0.0
      %2462 = vmatpush2.msra.mxu0 0.0
      %2463 = vmatprep.mubr.f32.mxu0 0.0
      %2464 = vmatmul.mubr.f32.gmra.mxu0 %v2397
      %v2465 = vpop.f32.mrf.mxu0
      %v2466 = vadd.f32 0.0, %v2465
      %v2467 = vpop.f32.mrf.mxu0
      %2468 = vdwg.mxu0
      %2469 = vrot.lane.b32.xlu0 %v1896, 104
      %v2470 = vpop.permute.xlu0 %2469
      %2471 = vrot.lane.b32.xlu0 %v1973, 104
      %v2472 = vpop.permute.xlu0 %2471
      %v2473 = vsel %vm1015, %v2470, 0
      %v2475 = vsel %vm1015, %v2472, 0
      %2477 = vmatprep.subr.mxu0 0.0
      %2478 = vmatpush1.xpose.msra.mxu0 0.0
      %2479 = vmatprep.subr.mxu0 0.0
      %2480 = vmatpush1.xpose.msra.mxu0 0.0
      %2481 = vmatprep.subr.mxu0 0.0
      %2482 = vmatpush1.xpose.msra.mxu0 0.0
      %2483 = vmatprep.subr.mxu0 0.0
      %2484 = vmatpush1.xpose.msra.mxu0 0.0
      %2485 = vmatprep.subr.mxu0 0.0
      %2486 = vmatpush1.xpose.msra.mxu0 0.0
      %2487 = vmatprep.subr.mxu0 0.0
      %2488 = vmatpush1.xpose.msra.mxu0 0.0
      %2489 = vmatprep.subr.mxu0 0.0
      %2490 = vmatpush1.xpose.msra.mxu0 0.0
      %2491 = vmatprep.subr.mxu0 0.0
      %2492 = vmatpush1.xpose.msra.mxu0 0.0
      %2493 = vmatprep.subr.mxu0 0.0
      %2494 = vmatpush1.xpose.msra.mxu0 0.0
      %2495 = vmatprep.subr.mxu0 0.0
      %2496 = vmatpush1.xpose.msra.mxu0 0.0
      %2497 = vmatprep.subr.mxu0 0.0
      %2498 = vmatpush1.xpose.msra.mxu0 0.0
      %2499 = vmatprep.subr.mxu0 0.0
      %2500 = vmatpush1.xpose.msra.mxu0 0.0
      %2501 = vmatprep.subr.mxu0 0.0
      %2502 = vmatpush1.xpose.msra.mxu0 0.0
      %2503 = vmatprep.subr.mxu0 0.0
      %2504 = vmatpush1.xpose.msra.mxu0 0.0
      %2505 = vmatprep.subr.mxu0 0.0
      %2506 = vmatpush1.xpose.msra.mxu0 0.0
      %2507 = vmatprep.subr.mxu0 0.0
      %2508 = vmatpush1.xpose.msra.mxu0 %v2475
      %2509 = vmatprep.subr.mxu0 0.0
      %2510 = vmatpush2.xpose.msra.mxu0 0.0
      %2511 = vmatprep.subr.mxu0 0.0
      %2512 = vmatpush2.xpose.msra.mxu0 0.0
      %2513 = vmatprep.subr.mxu0 0.0
      %2514 = vmatpush2.xpose.msra.mxu0 0.0
      %2515 = vmatprep.subr.mxu0 0.0
      %2516 = vmatpush2.xpose.msra.mxu0 0.0
      %2517 = vmatprep.subr.mxu0 0.0
      %2518 = vmatpush2.xpose.msra.mxu0 0.0
      %2519 = vmatprep.subr.mxu0 0.0
      %2520 = vmatpush2.xpose.msra.mxu0 0.0
      %2521 = vmatprep.subr.mxu0 0.0
      %2522 = vmatpush2.xpose.msra.mxu0 0.0
      %2523 = vmatprep.subr.mxu0 0.0
      %2524 = vmatpush2.xpose.msra.mxu0 0.0
      %2525 = vmatprep.subr.mxu0 0.0
      %2526 = vmatpush2.xpose.msra.mxu0 0.0
      %2527 = vmatprep.subr.mxu0 0.0
      %2528 = vmatpush2.xpose.msra.mxu0 0.0
      %2529 = vmatprep.subr.mxu0 0.0
      %2530 = vmatpush2.xpose.msra.mxu0 0.0
      %2531 = vmatprep.subr.mxu0 0.0
      %2532 = vmatpush2.xpose.msra.mxu0 0.0
      %2533 = vmatprep.subr.mxu0 0.0
      %2534 = vmatpush2.xpose.msra.mxu0 0.0
      %2535 = vmatprep.subr.mxu0 0.0
      %2536 = vmatpush2.xpose.msra.mxu0 0.0
      %2537 = vmatprep.subr.mxu0 0.0
      %2538 = vmatpush2.xpose.msra.mxu0 0.0
      %2539 = vmatprep.subr.mxu0 0.0
      %2540 = vmatpush2.xpose.msra.mxu0 0.0
      %2541 = vmatprep.mubr.f32.mxu0 0.0
      %2542 = vmatmul.mubr.f32.gmra.mxu0 %v2473
      %v2543 = vpop.f32.mrf.mxu0
      %v2544 = vadd.f32 %v1799, %v2543
      %v2545 = vpop.f32.mrf.mxu0
      %2546 = vdwg.mxu0
      %v2547 = vsel %vm1015, %v2544, -inf
      %2548 = vmax.xlane.f32.xlu0 %v2547
      %v2549 = vpop.xlane.xlu0 %2548
      %v2550 = vsub.f32 %v2544, %v2549
      %v2551 = vmul.f32 %v2550, 1.442695
      %v2552 = vpow.pop %v2551
      %v2553 = vsel %vm1015, %v2552, 0.0
      %2554 = vadd.xlane.f32.xlu0 %v2553
      %v2555 = vpop.xlane.xlu0 %2554
      %v2556 = vrcp.pop %v2555
      %v2557 = vmul.f32 %v2552, %v2556
      %2558 = vrot.lane.b32.xlu0 %v1973, 72
      %v2559 = vpop.permute.xlu0 %2558
      %v2562 = vsel %vm1015, %v2557, 0
      %2564 = vmatprep.subr.mxu0 0.0
      %2565 = vmatpush1.msra.mxu0 0.0
      %2566 = vmatprep.subr.mxu0 0.0
      %2567 = vmatpush1.msra.mxu0 0.0
      %2568 = vmatprep.subr.mxu0 0.0
      %2569 = vmatpush1.msra.mxu0 0.0
      %2570 = vmatprep.subr.mxu0 0.0
      %2571 = vmatpush1.msra.mxu0 0.0
      %2572 = vmatprep.subr.mxu0 0.0
      %2573 = vmatpush1.msra.mxu0 0.0
      %2574 = vmatprep.subr.mxu0 0.0
      %2575 = vmatpush1.msra.mxu0 0.0
      %2576 = vmatprep.subr.mxu0 0.0
      %2577 = vmatpush1.msra.mxu0 0.0
      %2578 = vmatprep.subr.mxu0 0.0
      %2579 = vmatpush1.msra.mxu0 0.0
      %2580 = vmatprep.subr.mxu0 0.0
      %2581 = vmatpush1.msra.mxu0 0.0
      %2582 = vmatprep.subr.mxu0 0.0
      %2583 = vmatpush1.msra.mxu0 0.0
      %2584 = vmatprep.subr.mxu0 0.0
      %2585 = vmatpush1.msra.mxu0 0.0
      %2586 = vmatprep.subr.mxu0 0.0
      %2587 = vmatpush1.msra.mxu0 0.0
      %2588 = vmatprep.subr.mxu0 0.0
      %2589 = vmatpush1.msra.mxu0 0.0
      %2590 = vmatprep.subr.mxu0 0.0
      %2591 = vmatpush1.msra.mxu0 0.0
      %2592 = vmatprep.subr.mxu0 0.0
      %2593 = vmatpush1.msra.mxu0 0.0
      %2594 = vmatprep.subr.mxu0 0.0
      %2595 = vmatpush1.msra.mxu0 %v2559
      %2596 = vmatprep.subr.mxu0 0.0
      %2597 = vmatpush2.msra.mxu0 0.0
      %2598 = vmatprep.subr.mxu0 0.0
      %2599 = vmatpush2.msra.mxu0 0.0
      %2600 = vmatprep.subr.mxu0 0.0
      %2601 = vmatpush2.msra.mxu0 0.0
      %2602 = vmatprep.subr.mxu0 0.0
      %2603 = vmatpush2.msra.mxu0 0.0
      %2604 = vmatprep.subr.mxu0 0.0
      %2605 = vmatpush2.msra.mxu0 0.0
      %2606 = vmatprep.subr.mxu0 0.0
      %2607 = vmatpush2.msra.mxu0 0.0
      %2608 = vmatprep.subr.mxu0 0.0
      %2609 = vmatpush2.msra.mxu0 0.0
      %2610 = vmatprep.subr.mxu0 0.0
      %2611 = vmatpush2.msra.mxu0 0.0
      %2612 = vmatprep.subr.mxu0 0.0
      %2613 = vmatpush2.msra.mxu0 0.0
      %2614 = vmatprep.subr.mxu0 0.0
      %2615 = vmatpush2.msra.mxu0 0.0
      %2616 = vmatprep.subr.mxu0 0.0
      %2617 = vmatpush2.msra.mxu0 0.0
      %2618 = vmatprep.subr.mxu0 0.0
      %2619 = vmatpush2.msra.mxu0 0.0
      %2620 = vmatprep.subr.mxu0 0.0
      %2621 = vmatpush2.msra.mxu0 0.0
      %2622 = vmatprep.subr.mxu0 0.0
      %2623 = vmatpush2.msra.mxu0 0.0
      %2624 = vmatprep.subr.mxu0 0.0
      %2625 = vmatpush2.msra.mxu0 0.0
      %2626 = vmatprep.subr.mxu0 0.0
      %2627 = vmatpush2.msra.mxu0 0.0
      %2628 = vmatprep.mubr.f32.mxu0 0.0
      %2629 = vmatmul.mubr.f32.gmra.mxu0 %v2562
      %v2630 = vpop.f32.mrf.mxu0
      %v2631 = vadd.f32 0.0, %v2630
      %v2632 = vpop.f32.mrf.mxu0
      %2633 = vdwg.mxu0
      %2635 = vrot.lane.b32.xlu0 %v2301, 8
      %v2636 = vpop.permute.xlu0 %2635
      %2639 = vrot.lane.b32.xlu0 %v2466, 16
      %v2640 = vpop.permute.xlu0 %2639
      %2643 = vrot.lane.b32.xlu0 %v2631, 24
      %v2644 = vpop.permute.xlu0 %2643
      %v2646 = vsel %vm1015, %v2136, %v2636
      %v2647 = vsel %vm1687, %v2646, %v2640
      %v2648 = vsel %vm1689, %v2647, %v2644
      %v2650 = vlaneseq
      %v2651 = vshrl.u32 %v2650, 7
      %v2652 = vsub.s32 0, %v2651
      %v2653 = vrot.slane %v1814, %v2652
      %v2656 = vsel %vm864, %v2648, 0
      %2658 = vmatprep.subr.mxu0 0.0
      %2659 = vmatpush1.msra.mxu0 0.0
      %2660 = vmatprep.subr.mxu0 0.0
      %2661 = vmatpush1.msra.mxu0 0.0
      %2662 = vmatprep.subr.mxu0 0.0
      %2663 = vmatpush1.msra.mxu0 0.0
      %2664 = vmatprep.subr.mxu0 0.0
      %2665 = vmatpush1.msra.mxu0 0.0
      %2666 = vmatprep.subr.mxu0 0.0
      %2667 = vmatpush1.msra.mxu0 0.0
      %2668 = vmatprep.subr.mxu0 0.0
      %2669 = vmatpush1.msra.mxu0 0.0
      %2670 = vmatprep.subr.mxu0 0.0
      %2671 = vmatpush1.msra.mxu0 0.0
      %2672 = vmatprep.subr.mxu0 0.0
      %2673 = vmatpush1.msra.mxu0 0.0
      %2674 = vmatprep.subr.mxu0 0.0
      %2675 = vmatpush1.msra.mxu0 0.0
      %2676 = vmatprep.subr.mxu0 0.0
      %2677 = vmatpush1.msra.mxu0 0.0
      %2678 = vmatprep.subr.mxu0 0.0
      %2679 = vmatpush1.msra.mxu0 0.0
      %2680 = vmatprep.subr.mxu0 0.0
      %2681 = vmatpush1.msra.mxu0 0.0
      %2682 = vmatprep.subr.mxu0 0.0
      %2683 = vmatpush1.msra.mxu0 %v1813
      %2684 = vmatprep.subr.mxu0 0.0
      %2685 = vmatpush1.msra.mxu0 %v1812
      %2686 = vmatprep.subr.mxu0 0.0
      %2687 = vmatpush1.msra.mxu0 %v1811
      %2688 = vmatprep.subr.mxu0 0.0
      %2689 = vmatpush1.msra.mxu0 %v1810
      %2690 = vmatprep.subr.mxu0 0.0
      %2691 = vmatpush2.msra.mxu0 0.0
      %2692 = vmatprep.subr.mxu0 0.0
      %2693 = vmatpush2.msra.mxu0 0.0
      %2694 = vmatprep.subr.mxu0 0.0
      %2695 = vmatpush2.msra.mxu0 0.0
      %2696 = vmatprep.subr.mxu0 0.0
      %2697 = vmatpush2.msra.mxu0 0.0
      %2698 = vmatprep.subr.mxu0 0.0
      %2699 = vmatpush2.msra.mxu0 0.0
      %2700 = vmatprep.subr.mxu0 0.0
      %2701 = vmatpush2.msra.mxu0 0.0
      %2702 = vmatprep.subr.mxu0 0.0
      %2703 = vmatpush2.msra.mxu0 0.0
      %2704 = vmatprep.subr.mxu0 0.0
      %2705 = vmatpush2.msra.mxu0 0.0
      %2706 = vmatprep.subr.mxu0 0.0
      %2707 = vmatpush2.msra.mxu0 0.0
      %2708 = vmatprep.subr.mxu0 0.0
      %2709 = vmatpush2.msra.mxu0 0.0
      %2710 = vmatprep.subr.mxu0 0.0
      %2711 = vmatpush2.msra.mxu0 0.0
      %2712 = vmatprep.subr.mxu0 0.0
      %2713 = vmatpush2.msra.mxu0 0.0
      %2714 = vmatprep.subr.mxu0 0.0
      %2715 = vmatpush2.msra.mxu0 0.0
      %2716 = vmatprep.subr.mxu0 0.0
      %2717 = vmatpush2.msra.mxu0 0.0
      %2718 = vmatprep.subr.mxu0 0.0
      %2719 = vmatpush2.msra.mxu0 0.0
      %2720 = vmatprep.subr.mxu0 0.0
      %2721 = vmatpush2.msra.mxu0 0.0
      %2722 = vmatprep.mubr.f32.mxu0 0.0
      %2723 = vmatmul.mubr.f32.gmra.mxu0 %v2656
      %v2724 = vpop.f32.mrf.mxu0
      %v2725 = vadd.f32 %v2653, %v2724
      %v2726 = vpop.f32.mrf.mxu0
      %2727 = vdwg.mxu0
      %v2728 = vadd.f32 %v1798, %v2725
      %v2729 = vsel %vm864, %v2728, 0.0
      %2730 = vadd.xlane.f32.xlu0 %v2729
      %v2731 = vpop.xlane.xlu0 %2730
      %v2732 = vmul.f32 %v2731, %v1774
      %v2733 = vsub.f32 %v2728, %v2732
      %v2734 = vmul.f32 %v2733, %v2733
      %v2735 = vsel %vm864, %v2734, 0.0
      %2736 = vadd.xlane.f32.xlu0 %v2735
      %v2737 = vpop.xlane.xlu0 %2736
      %v2738 = vmul.f32 %v2737, %v1774
      %v2739 = vadd.f32 %v2738, 1e-12
      %v2740 = vrsqrt.pop %v2739
      %v2741 = vmul.f32 %v2733, %v2740
      %v2743 = vlaneseq
      %v2744 = vshrl.u32 %v2743, 7
      %v2745 = vsub.s32 0, %v2744
      %v2746 = vrot.slane %v1815, %v2745
      %v2748 = vmul.f32 %v2741, %v2746
      %v2750 = vlaneseq
      %v2751 = vshrl.u32 %v2750, 7
      %v2752 = vsub.s32 0, %v2751
      %v2753 = vrot.slane %v1816, %v2752
      %v2755 = vadd.f32 %v2748, %v2753
      %v2756 = vld [vmem:[%s20] sm:$0xff]
      %v2757 = vld [vmem:[%s20 + $0x8] sm:$0xff]
      %v2758 = vld [vmem:[%s20 + $0x10] sm:$0xff]
      %v2759 = vld [vmem:[%s20 + $0x18] sm:$0xff]
      %v2760 = vld [vmem:[%s21] sm:$0x1]
      %v2762 = vlaneseq
      %v2763 = vshrl.u32 %v2762, 7
      %v2764 = vsub.s32 0, %v2763
      %v2765 = vrot.slane %v2760, %v2764
      %v2768 = vsel %vm864, %v2755, 0
      %2770 = vmatprep.subr.mxu0 0.0
      %2771 = vmatpush1.msra.mxu0 0.0
      %2772 = vmatprep.subr.mxu0 0.0
      %2773 = vmatpush1.msra.mxu0 0.0
      %2774 = vmatprep.subr.mxu0 0.0
      %2775 = vmatpush1.msra.mxu0 0.0
      %2776 = vmatprep.subr.mxu0 0.0
      %2777 = vmatpush1.msra.mxu0 0.0
      %2778 = vmatprep.subr.mxu0 0.0
      %2779 = vmatpush1.msra.mxu0 0.0
      %2780 = vmatprep.subr.mxu0 0.0
      %2781 = vmatpush1.msra.mxu0 0.0
      %2782 = vmatprep.subr.mxu0 0.0
      %2783 = vmatpush1.msra.mxu0 0.0
      %2784 = vmatprep.subr.mxu0 0.0
      %2785 = vmatpush1.msra.mxu0 0.0
      %2786 = vmatprep.subr.mxu0 0.0
      %2787 = vmatpush1.msra.mxu0 0.0
      %2788 = vmatprep.subr.mxu0 0.0
      %2789 = vmatpush1.msra.mxu0 0.0
      %2790 = vmatprep.subr.mxu0 0.0
      %2791 = vmatpush1.msra.mxu0 0.0
      %2792 = vmatprep.subr.mxu0 0.0
      %2793 = vmatpush1.msra.mxu0 0.0
      %2794 = vmatprep.subr.mxu0 0.0
      %2795 = vmatpush1.msra.mxu0 %v2759
      %2796 = vmatprep.subr.mxu0 0.0
      %2797 = vmatpush1.msra.mxu0 %v2758
      %2798 = vmatprep.subr.mxu0 0.0
      %2799 = vmatpush1.msra.mxu0 %v2757
      %2800 = vmatprep.subr.mxu0 0.0
      %2801 = vmatpush1.msra.mxu0 %v2756
      %2802 = vmatprep.subr.mxu0 0.0
      %2803 = vmatpush2.msra.mxu0 0.0
      %2804 = vmatprep.subr.mxu0 0.0
      %2805 = vmatpush2.msra.mxu0 0.0
      %2806 = vmatprep.subr.mxu0 0.0
      %2807 = vmatpush2.msra.mxu0 0.0
      %2808 = vmatprep.subr.mxu0 0.0
      %2809 = vmatpush2.msra.mxu0 0.0
      %2810 = vmatprep.subr.mxu0 0.0
      %2811 = vmatpush2.msra.mxu0 0.0
      %2812 = vmatprep.subr.mxu0 0.0
      %2813 = vmatpush2.msra.mxu0 0.0
      %2814 = vmatprep.subr.mxu0 0.0
      %2815 = vmatpush2.msra.mxu0 0.0
      %2816 = vmatprep.subr.mxu0 0.0
      %2817 = vmatpush2.msra.mxu0 0.0
      %2818 = vmatprep.subr.mxu0 0.0
      %2819 = vmatpush2.msra.mxu0 0.0
      %2820 = vmatprep.subr.mxu0 0.0
      %2821 = vmatpush2.msra.mxu0 0.0
      %2822 = vmatprep.subr.mxu0 0.0
      %2823 = vmatpush2.msra.mxu0 0.0
      %2824 = vmatprep.subr.mxu0 0.0
      %2825 = vmatpush2.msra.mxu0 0.0
      %2826 = vmatprep.subr.mxu0 0.0
      %2827 = vmatpush2.msra.mxu0 0.0
      %2828 = vmatprep.subr.mxu0 0.0
      %2829 = vmatpush2.msra.mxu0 0.0
      %2830 = vmatprep.subr.mxu0 0.0
      %2831 = vmatpush2.msra.mxu0 0.0
      %2832 = vmatprep.subr.mxu0 0.0
      %2833 = vmatpush2.msra.mxu0 0.0
      %2834 = vmatprep.mubr.f32.mxu0 0.0
      %2835 = vmatmul.mubr.f32.gmra.mxu0 %v2768
      %v2836 = vpop.f32.mrf.mxu0
      %v2837 = vadd.f32 %v2765, %v2836
      %v2838 = vpop.f32.mrf.mxu0
      %2839 = vdwg.mxu0
      %v2840 = vmax.f32 %v2837, 0.0
      %v2841 = vld [vmem:[%s22] sm:$0xff]
      %v2842 = vld [vmem:[%s22 + $0x8] sm:$0xff]
      %v2843 = vld [vmem:[%s22 + $0x10] sm:$0xff]
      %v2844 = vld [vmem:[%s22 + $0x18] sm:$0xff]
      %v2845 = vld [vmem:[%s22 + $0x20] sm:$0xff]
      %v2846 = vld [vmem:[%s22 + $0x28] sm:$0xff]
      %v2847 = vld [vmem:[%s22 + $0x30] sm:$0xff]
      %v2848 = vld [vmem:[%s22 + $0x38] sm:$0xff]
      %vm2849 = vcmask 523264
      %v2851 = vsel %vm2849, %v2840, 0
      %2853 = vmatprep.subr.mxu0 0.0
      %2854 = vmatpush1.msra.mxu0 0.0
      %2855 = vmatprep.subr.mxu0 0.0
      %2856 = vmatpush1.msra.mxu0 0.0
      %2857 = vmatprep.subr.mxu0 0.0
      %2858 = vmatpush1.msra.mxu0 0.0
      %2859 = vmatprep.subr.mxu0 0.0
      %2860 = vmatpush1.msra.mxu0 0.0
      %2861 = vmatprep.subr.mxu0 0.0
      %2862 = vmatpush1.msra.mxu0 0.0
      %2863 = vmatprep.subr.mxu0 0.0
      %2864 = vmatpush1.msra.mxu0 0.0
      %2865 = vmatprep.subr.mxu0 0.0
      %2866 = vmatpush1.msra.mxu0 0.0
      %2867 = vmatprep.subr.mxu0 0.0
      %2868 = vmatpush1.msra.mxu0 0.0
      %2869 = vmatprep.subr.mxu0 0.0
      %2870 = vmatpush1.msra.mxu0 %v2848
      %2871 = vmatprep.subr.mxu0 0.0
      %2872 = vmatpush1.msra.mxu0 %v2847
      %2873 = vmatprep.subr.mxu0 0.0
      %2874 = vmatpush1.msra.mxu0 %v2846
      %2875 = vmatprep.subr.mxu0 0.0
      %2876 = vmatpush1.msra.mxu0 %v2845
      %2877 = vmatprep.subr.mxu0 0.0
      %2878 = vmatpush1.msra.mxu0 %v2844
      %2879 = vmatprep.subr.mxu0 0.0
      %2880 = vmatpush1.msra.mxu0 %v2843
      %2881 = vmatprep.subr.mxu0 0.0
      %2882 = vmatpush1.msra.mxu0 %v2842
      %2883 = vmatprep.subr.mxu0 0.0
      %2884 = vmatpush1.msra.mxu0 %v2841
      %2885 = vmatprep.subr.mxu0 0.0
      %2886 = vmatpush2.msra.mxu0 0.0
      %2887 = vmatprep.subr.mxu0 0.0
      %2888 = vmatpush2.msra.mxu0 0.0
      %2889 = vmatprep.subr.mxu0 0.0
      %2890 = vmatpush2.msra.mxu0 0.0
      %2891 = vmatprep.subr.mxu0 0.0
      %2892 = vmatpush2.msra.mxu0 0.0
      %2893 = vmatprep.subr.mxu0 0.0
      %2894 = vmatpush2.msra.mxu0 0.0
      %2895 = vmatprep.subr.mxu0 0.0
      %2896 = vmatpush2.msra.mxu0 0.0
      %2897 = vmatprep.subr.mxu0 0.0
      %2898 = vmatpush2.msra.mxu0 0.0
      %2899 = vmatprep.subr.mxu0 0.0
      %2900 = vmatpush2.msra.mxu0 0.0
      %2901 = vmatprep.subr.mxu0 0.0
      %2902 = vmatpush2.msra.mxu0 0.0
      %2903 = vmatprep.subr.mxu0 0.0
      %2904 = vmatpush2.msra.mxu0 0.0
      %2905 = vmatprep.subr.mxu0 0.0
      %2906 = vmatpush2.msra.mxu0 0.0
      %2907 = vmatprep.subr.mxu0 0.0
      %2908 = vmatpush2.msra.mxu0 0.0
      %2909 = vmatprep.subr.mxu0 0.0
      %2910 = vmatpush2.msra.mxu0 0.0
      %2911 = vmatprep.subr.mxu0 0.0
      %2912 = vmatpush2.msra.mxu0 0.0
      %2913 = vmatprep.subr.mxu0 0.0
      %2914 = vmatpush2.msra.mxu0 0.0
      %2915 = vmatprep.subr.mxu0 0.0
      %2916 = vmatpush2.msra.mxu0 0.0
      %2917 = vmatprep.mubr.f32.mxu0 0.0
      %2918 = vmatmul.mubr.f32.gmra.mxu0 %v2851
      %v2919 = vpop.f32.mrf.mxu0
      %v2920 = vadd.f32 0.0, %v2919
      %v2921 = vpop.f32.mrf.mxu0
      %2922 = vdwg.mxu0
      %v2923 = vadd.f32 %v2755, %v2920
      %v2924 = vld [vmem:[%s23] sm:$0x1]
      %v2926 = vlaneseq
      %v2927 = vshrl.u32 %v2926, 7
      %v2928 = vsub.s32 0, %v2927
      %v2929 = vrot.slane %v2924, %v2928
      %v2931 = vadd.f32 %v2923, %v2929
      %v2932 = vld [vmem:[%s24] sm:$0x1]
      %v2933 = vld [vmem:[%s25] sm:$0x1]
      %v2934 = vsel %vm864, %v2931, 0.0
      %2935 = vadd.xlane.f32.xlu0 %v2934
      %v2936 = vpop.xlane.xlu0 %2935
      %v2937 = vmul.f32 %v2936, %v1774
      %v2938 = vsub.f32 %v2931, %v2937
      %v2939 = vmul.f32 %v2938, %v2938
      %v2940 = vsel %vm864, %v2939, 0.0
      %2941 = vadd.xlane.f32.xlu0 %v2940
      %v2942 = vpop.xlane.xlu0 %2941
      %v2943 = vmul.f32 %v2942, %v1774
      %v2944 = vadd.f32 %v2943, 1e-12
      %v2945 = vrsqrt.pop %v2944
      %v2946 = vmul.f32 %v2938, %v2945
      %v2948 = vlaneseq
      %v2949 = vshrl.u32 %v2948, 7
      %v2950 = vsub.s32 0, %v2949
      %v2951 = vrot.slane %v2932, %v2950
      %v2953 = vmul.f32 %v2946, %v2951
      %v2955 = vlaneseq
      %v2956 = vshrl.u32 %v2955, 7
      %v2957 = vsub.s32 0, %v2956
      %v2958 = vrot.slane %v2933, %v2957
      %v2960 = vadd.f32 %v2953, %v2958
      %2961 = vst.msk [vmem:[%s837] sm:$0xff] %vm864, %v2960
      %p2962 = scmp.lt.s32.totalorder %s37, 1
      %s2963 = scalar_select %p2962, %s37, 1
      %s2964 = smul.addr %s2963, 8
      %s2965 = scalar_lea.vmem %s26, %s2964
      // Predicated region
      $region125: #{decoder_forward.3} parent=123 // pred_check
        %p2966 = pneg %p621
      $region126: #{decoder_forward.3} parent=123 // pred_check_branch
        %2968 = sbr.rel (%p2966) target = $region128
      $region127: #{decoder_forward.3} parent=123 // pred_region
        _
      $region128: #{decoder_forward.3} parent=123 // pred_fallthru
        _
    $region124: #{decoder_forward.3} parent=5 // pred_fallthru
      _
    %p2969 = scmp.le.s32.totalorder 2, %s32
    // Predicated region
    $region129: #{decoder_forward.3} parent=5 // pred_check
      %p2970 = pneg %p2969
    $region130: #{decoder_forward.3} parent=5 // pred_check_branch
      %2972 = sbr.rel (%p2970) target = $region132
    $region131: #{decoder_forward.3} parent=5 // pred_region
      %s2973 = ssub.s32 %s32, 2
      // Predicated region
      $region133: #{decoder_forward.3} parent=131 // pred_check
        %p2974 = pneg %p627
      $region134: #{decoder_forward.3} parent=131 // pred_check_branch
        %2976 = sbr.rel (%p2974) target = $region136
      $region135: #{decoder_forward.3} parent=131 // pred_region
        %p2977 = scmp.lt.s32.totalorder %s38, 1
        %s2978 = scalar_select %p2977, %s38, 1
        %s2979 = smul.addr %s2978, 8
        %s2980 = scalar_lea.vmem %s26, %s2979
      $region136: #{decoder_forward.3} parent=131 // pred_fallthru
        _
    $region132: #{decoder_forward.3} parent=5 // pred_fallthru
      _
  $region6: #{decoder_forward.3} parent=0 // loop_footer
    %s36 = sadd.s32 1, %s32
  $region7: #{decoder_forward.3} parent=0 // loop_footer_branch
    %31 = sbr.rel target = $region3
  $region8: #{decoder_forward.3} parent=0 // loop_exit
    _

</llo_original>
